<compile_context>
chip_gen: v7x
topology: tpu7x:2x2x1
jax: 0.10.0
libtpu: 0.0.40
codegen_flags: <defaults>
</compile_context>

<pallas_src>
import functools

import jax
import jax.numpy as jnp
from jax.experimental import pallas as pl
from jax.experimental.pallas import tpu as pltpu


# ------------------- Conv2d(5x5, padding=2) as one fat matmul -------------------
def _conv5x5_flat_kernel(x_ref, w_ref, b_ref, o_ref, *, H, W):
    """One image of a 5x5 'same' convolution in flat (channels, H*W) layout.

    x_ref: (1, Cin, HWP)   flat input, zero-padded with PAD = 2*W+2 lanes per side
    w_ref: (Cout, 25*Cin)  tap-major weight matrix, rows ordered (ky, kx, cin)
    b_ref: (Cout, 1)
    o_ref: (1, Cout, H*W)
    """
    HW = H * W
    PAD = 2 * W + 2
    x = x_ref[0]                                                  # (Cin, HWP)
    # lane index -> column (w) coordinate; W is a power of two so this is a mask
    col = jax.lax.broadcasted_iota(jnp.int32, (1, HW), 1) & (W - 1)

    pieces = []
    for ky in range(5):                                           # statically unrolled taps
        for kx in range(5):
            dy, dx = ky - 2, kx - 2
            s = dy * W + dx                                       # flat shift of this tap
            piece = x[:, PAD + s:PAD + s + HW]                    # (Cin, HW) static lane slice
            if dx != 0:
                # zero the lanes whose horizontal shift wrapped across a row boundary
                valid = jnp.logical_and(col + dx >= 0, col + dx < W)
                piece = jnp.where(valid, piece, 0.0)
            pieces.append(piece)
    stacked = jnp.concatenate(pieces, axis=0)                     # (25*Cin, HW)

    # Single MXU matmul: (Cout, 25*Cin) x (25*Cin, HW) -> (Cout, HW), bias fused.
    y = jnp.dot(w_ref[...], stacked, preferred_element_type=jnp.float32)
    o_ref[0] = y + b_ref[...]                                     # lane-dense store


def conv2d_same5_flat(x_flat, w_mat, b, *, H, W, Cin, Cout):
    """x_flat: (N, Cin, H*W + 2*(2W+2)) flat-padded activation -> (N, Cout, H*W)."""
    assert W & (W - 1) == 0, "W must be a power of two"
    N = x_flat.shape[0]
    HW = H * W
    HWP = HW + 2 * (2 * W + 2)
    assert x_flat.shape == (N, Cin, HWP), x_flat.shape
    assert w_mat.shape == (Cout, 25 * Cin), w_mat.shape

    kern = functools.partial(_conv5x5_flat_kernel, H=H, W=W)
    return pl.pallas_call(
        kern,
        out_shape=jax.ShapeDtypeStruct((N, Cout, HW), jnp.float32),
        grid=(N,),
        in_specs=[
            pl.BlockSpec((1, Cin, HWP), lambda n: (n, 0, 0)),
            pl.BlockSpec((Cout, 25 * Cin), lambda n: (0, 0)),
            pl.BlockSpec((Cout, 1), lambda n: (0, 0)),
        ],
        out_specs=pl.BlockSpec((1, Cout, HW), lambda n: (n, 0, 0)),
        compiler_params=pltpu.CompilerParams(
            dimension_semantics=("parallel",),          # batch across TensorCores
            vmem_limit_bytes=32 * 1024 * 1024,
        ),
    )(x_flat, w_mat, b.reshape(Cout, 1))


# ---------------- MaxPool2d(2) + next-layer halo pad (fused XLA pass) -----------
def maxpool2_and_repad(y_flat, *, H, W, pad_for_next):
    """(N, C, H*W) -> 2x2/stride-2 max pool -> (N, C, (H//2)*(W//2)); optionally
    appends the 2*(W//2)+2 zero halo needed by the next conv kernel (same pass)."""
    assert H % 2 == 0 and W % 2 == 0
    N, C, HW = y_flat.shape
    assert HW == H * W
    p = y_flat.reshape(N, C, H // 2, 2, W // 2, 2).max(axis=(3, 5))
    p = p.reshape(N, C, (H // 2) * (W // 2))
    if pad_for_next:
        pad = 2 * (W // 2) + 2
        p = jnp.pad(p, ((0, 0), (0, 0), (pad, pad)))
    return p


# ----------------------- Linear(1024,64) + Linear(64,10) ------------------------
def _mlp_kernel(x_ref, w1_ref, b1_ref, w2_ref, b2_ref, o_ref):
    h = jnp.dot(x_ref[...], w1_ref[...], preferred_element_type=jnp.float32) + b1_ref[...]
    o_ref[...] = jnp.dot(h, w2_ref[...], preferred_element_type=jnp.float32) + b2_ref[...]


def fused_mlp(x, w1, b1, w2, b2):
    """x: (M, K); w1: (K, F1); w2: (F1, F2). Both Linear layers in one kernel."""
    M, K = x.shape
    F1 = w1.shape[1]
    F2 = w2.shape[1]
    return pl.pallas_call(
        _mlp_kernel,
        out_shape=jax.ShapeDtypeStruct((M, F2), jnp.float32),
        grid=(1,),
        in_specs=[
            pl.BlockSpec((M, K), lambda i: (0, 0)),
            pl.BlockSpec((K, F1), lambda i: (0, 0)),
            pl.BlockSpec((1, F1), lambda i: (0, 0)),
            pl.BlockSpec((F1, F2), lambda i: (0, 0)),
            pl.BlockSpec((1, F2), lambda i: (0, 0)),
        ],
        out_specs=pl.BlockSpec((M, F2), lambda i: (0, 0)),
        compiler_params=pltpu.CompilerParams(vmem_limit_bytes=32 * 1024 * 1024),
    )(x, w1, b1.reshape(1, F1), w2, b2.reshape(1, F2))


# --------------------------------- parameters -----------------------------------
def init_params(key):
    """Parameters in PyTorch layouts: conv W (Cout, Cin, 5, 5), Linear W (out, in)."""
    ks = jax.random.split(key, 10)

    def conv_p(kw, kb, cin, cout):
        w = jax.random.normal(kw, (cout, cin, 5, 5), jnp.float32) / jnp.sqrt(25.0 * cin)
        b = jax.random.normal(kb, (cout,), jnp.float32) * 0.01
        return w, b

    def lin_p(kw, kb, fin, fout):
        w = jax.random.normal(kw, (fout, fin), jnp.float32) / jnp.sqrt(1.0 * fin)
        b = jax.random.normal(kb, (fout,), jnp.float32) * 0.01
        return w, b

    return {
        "c1": conv_p(ks[0], ks[1], 3, 32),
        "c2": conv_p(ks[2], ks[3], 32, 32),
        "c3": conv_p(ks[4], ks[5], 32, 64),
        "fc1": lin_p(ks[6], ks[7], 1024, 64),
        "fc2": lin_p(ks[8], ks[9], 64, 10),
    }


def _conv_weight_to_matrix(w, cin_padded):
    """(Cout, Cin, 5, 5) -> (Cout, 25*cin_padded), columns ordered (ky, kx, cin),
    zero-padding the input-channel axis for sublane (8) alignment."""
    cout, cin, kh, kw = w.shape
    wt = jnp.transpose(w, (0, 2, 3, 1))                           # (Cout, ky, kx, Cin)
    wt = jnp.pad(wt, ((0, 0), (0, 0), (0, 0), (0, cin_padded - cin)))
    return wt.reshape(cout, kh * kw * cin_padded)


def prepare_params(params):
    """One-time conversion of PyTorch-layout params into kernel layouts
    (tap-major conv weight matrices, transposed Linear weights)."""
    return {
        "c1": (_conv_weight_to_matrix(params["c1"][0], 8), params["c1"][1]),
        "c2": (_conv_weight_to_matrix(params["c2"][0], 32), params["c2"][1]),
        "c3": (_conv_weight_to_matrix(params["c3"][0], 32), params["c3"][1]),
        "fc1": (params["fc1"][0].T, params["fc1"][1]),            # (in, out)
        "fc2": (params["fc2"][0].T, params["fc2"][1]),
    }


# ----------------------------------- forward ------------------------------------
@jax.jit
def forward(kparams, x_nchw):
    """x_nchw: (N, 3, 32, 32) float32 (PyTorch NCHW). Returns (N, 10) logits.
    NOTE: the reference T_Module has no activation functions, so none are applied."""
    N = x_nchw.shape[0]
    x = x_nchw.astype(jnp.float32)

    # Input prep (one small fused XLA pass): pad channels 3 -> 8 for sublane
    # alignment, flatten spatial, add the flat zero halo for conv1.
    x = jnp.pad(x, ((0, 0), (0, 5), (0, 0), (0, 0)))                  # (N, 8, 32, 32)
    x = x.reshape(N, 8, 32 * 32)
    x = jnp.pad(x, ((0, 0), (0, 0), (2 * 32 + 2, 2 * 32 + 2)))        # (N, 8, 1156)

    x = conv2d_same5_flat(x, *kparams["c1"], H=32, W=32, Cin=8, Cout=32)   # (N, 32, 1024)
    x = maxpool2_and_repad(x, H=32, W=32, pad_for_next=True)               # (N, 32, 324)
    x = conv2d_same5_flat(x, *kparams["c2"], H=16, W=16, Cin=32, Cout=32)  # (N, 32, 256)
    x = maxpool2_and_repad(x, H=16, W=16, pad_for_next=True)               # (N, 32, 100)
    x = conv2d_same5_flat(x, *kparams["c3"], H=8, W=8, Cin=32, Cout=64)    # (N, 64, 64)
    x = maxpool2_and_repad(x, H=8, W=8, pad_for_next=False)                # (N, 64, 16)

    # Flatten: activations are already channels-first, so a plain reshape equals
    # PyTorch's NCHW flatten order (C, H, W) -- no transpose needed.
    x = x.reshape(N, 64 * 4 * 4)                                           # (N, 1024)
    return fused_mlp(x, kparams["fc1"][0], kparams["fc1"][1],
                     kparams["fc2"][0], kparams["fc2"][1])                 # (N, 10)


# ------------------------------ pure-JAX reference -------------------------------
def reference_forward(params, x):
    """Pure-JAX reference mirroring the PyTorch T_Module exactly."""
    hp = jax.lax.Precision.HIGHEST

    def conv(x, w, b):
        y = jax.lax.conv_general_dilated(
            x, w, window_strides=(1, 1), padding=((2, 2), (2, 2)),
            dimension_numbers=("NCHW", "OIHW", "NCHW"), precision=hp)
        return y + b[None, :, None, None]

    def pool(x):
        n, c, h, w = x.shape
        return x.reshape(n, c, h // 2, 2, w // 2, 2).max(axis=(3, 5))

    x = pool(conv(x, *params["c1"]))
    x = pool(conv(x, *params["c2"]))
    x = pool(conv(x, *params["c3"]))
    x = x.reshape(x.shape[0], -1)
    x = jnp.dot(x, params["fc1"][0].T, precision=hp) + params["fc1"][1]
    x = jnp.dot(x, params["fc2"][0].T, precision=hp) + params["fc2"][1]
    return x


if __name__ == "__main__":
    key = jax.random.PRNGKey(0)
    pkey, xkey = jax.random.split(key)
    params = init_params(pkey)
    kparams = prepare_params(params)          # one-time weight re-layout

    # The architecture requires 32x32 spatial input (Flatten -> 1024 features).
    x = jax.random.normal(xkey, (2, 3, 32, 32), jnp.float32)       # NCHW, like PyTorch
    out = jax.block_until_ready(forward(kparams, x))
    assert out.shape == (2, 10) and out.dtype == jnp.float32

    # Cross-check against a pure-JAX reference of the module.
    ref = jax.block_until_ready(jax.jit(reference_forward)(params, x))
    err = float(jnp.max(jnp.abs(out - ref)))
    assert err < 5e-2, f"kernel/reference mismatch: max abs err = {err}"
    print("KERNEL_OK")
</pallas_src>

<mosaic_0001>
module attributes {stable_mosaic.version = 11 : i64} {
  func.func @_conv5x5_flat_kernel(%arg0: i32, %arg1: memref<1x8x1156xf32, #tpu.memory_space<vmem>>, %arg2: memref<32x200xf32, #tpu.memory_space<vmem>>, %arg3: memref<32x1xf32, #tpu.memory_space<vmem>>, %arg4: memref<1x32x1024xf32, #tpu.memory_space<vmem>>) attributes {dimension_semantics = [#tpu.dimension_semantics<parallel>], iteration_bounds = array<i64: 2>, scalar_prefetch = 0 : i64, scratch_operands = 0 : i64, tpu.core_type = #tpu.core_type<tc>, window_params = [{transform_indices = @transform_0, window_bounds = array<i64: 1, 8, 1156>}, {pipeline_mode = #tpu.pipeline_mode<synchronous>, transform_indices = @transform_1, window_bounds = array<i64: 32, 200>}, {pipeline_mode = #tpu.pipeline_mode<synchronous>, transform_indices = @transform_2, window_bounds = array<i64: 32, 1>}, {transform_indices = @transform_3, window_bounds = array<i64: 1, 32, 1024>}]} {
    %c0 = arith.constant 0 : index
    %c0_0 = arith.constant 0 : index
    %c0_1 = arith.constant 0 : index
    %0 = vector.load %arg1[%c0, %c0_0, %c0_1] : memref<1x8x1156xf32, #tpu.memory_space<vmem>>, vector<1x8x1156xf32>
    %1 = vector.shape_cast %0 : vector<1x8x1156xf32> to vector<8x1156xf32>
    %2 = tpu.iota {dimensions = array<i32: 1>} : vector<1x1024xi32>
    %c31_i32 = arith.constant 31 : i32
    %3 = vector.broadcast %c31_i32 : i32 to vector<1x1024xi32>
    %4 = arith.andi %2, %3 : vector<1x1024xi32>
    %5 = vector.extract_strided_slice %1 {offsets = [0, 0], sizes = [8, 1024], strides = [1, 1]} : vector<8x1156xf32> to vector<8x1024xf32>
    %c-2_i32 = arith.constant -2 : i32
    %6 = vector.broadcast %c-2_i32 : i32 to vector<1x1024xi32>
    %7 = arith.addi %4, %6 : vector<1x1024xi32>
    %c0_i32 = arith.constant 0 : i32
    %8 = vector.broadcast %c0_i32 : i32 to vector<1x1024xi32>
    %9 = arith.cmpi sge, %7, %8 : vector<1x1024xi32>
    %c-2_i32_2 = arith.constant -2 : i32
    %10 = vector.broadcast %c-2_i32_2 : i32 to vector<1x1024xi32>
    %11 = arith.addi %4, %10 : vector<1x1024xi32>
    %c32_i32 = arith.constant 32 : i32
    %12 = vector.broadcast %c32_i32 : i32 to vector<1x1024xi32>
    %13 = arith.cmpi slt, %11, %12 : vector<1x1024xi32>
    %14 = arith.andi %9, %13 : vector<1x1024xi1>
    %cst = arith.constant 0.000000e+00 : f32
    %15 = vector.shape_cast %14 : vector<1x1024xi1> to vector<1x1024xi1>
    %16 = vector.broadcast %15 : vector<1x1024xi1> to vector<8x1024xi1>
    %17 = vector.broadcast %cst : f32 to vector<8x1024xf32>
    %18 = arith.select %16, %5, %17 : vector<8x1024xi1>, vector<8x1024xf32>
    %19 = vector.extract_strided_slice %1 {offsets = [0, 1], sizes = [8, 1024], strides = [1, 1]} : vector<8x1156xf32> to vector<8x1024xf32>
    %c-1_i32 = arith.constant -1 : i32
    %20 = vector.broadcast %c-1_i32 : i32 to vector<1x1024xi32>
    %21 = arith.addi %4, %20 : vector<1x1024xi32>
    %c0_i32_3 = arith.constant 0 : i32
    %22 = vector.broadcast %c0_i32_3 : i32 to vector<1x1024xi32>
    %23 = arith.cmpi sge, %21, %22 : vector<1x1024xi32>
    %c-1_i32_4 = arith.constant -1 : i32
    %24 = vector.broadcast %c-1_i32_4 : i32 to vector<1x1024xi32>
    %25 = arith.addi %4, %24 : vector<1x1024xi32>
    %c32_i32_5 = arith.constant 32 : i32
    %26 = vector.broadcast %c32_i32_5 : i32 to vector<1x1024xi32>
    %27 = arith.cmpi slt, %25, %26 : vector<1x1024xi32>
    %28 = arith.andi %23, %27 : vector<1x1024xi1>
    %cst_6 = arith.constant 0.000000e+00 : f32
    %29 = vector.shape_cast %28 : vector<1x1024xi1> to vector<1x1024xi1>
    %30 = vector.broadcast %29 : vector<1x1024xi1> to vector<8x1024xi1>
    %31 = vector.broadcast %cst_6 : f32 to vector<8x1024xf32>
    %32 = arith.select %30, %19, %31 : vector<8x1024xi1>, vector<8x1024xf32>
    %33 = vector.extract_strided_slice %1 {offsets = [0, 2], sizes = [8, 1024], strides = [1, 1]} : vector<8x1156xf32> to vector<8x1024xf32>
    %34 = vector.extract_strided_slice %1 {offsets = [0, 3], sizes = [8, 1024], strides = [1, 1]} : vector<8x1156xf32> to vector<8x1024xf32>
    %c1_i32 = arith.constant 1 : i32
    %35 = vector.broadcast %c1_i32 : i32 to vector<1x1024xi32>
    %36 = arith.addi %4, %35 : vector<1x1024xi32>
    %c0_i32_7 = arith.constant 0 : i32
    %37 = vector.broadcast %c0_i32_7 : i32 to vector<1x1024xi32>
    %38 = arith.cmpi sge, %36, %37 : vector<1x1024xi32>
    %c1_i32_8 = arith.constant 1 : i32
    %39 = vector.broadcast %c1_i32_8 : i32 to vector<1x1024xi32>
    %40 = arith.addi %4, %39 : vector<1x1024xi32>
    %c32_i32_9 = arith.constant 32 : i32
    %41 = vector.broadcast %c32_i32_9 : i32 to vector<1x1024xi32>
    %42 = arith.cmpi slt, %40, %41 : vector<1x1024xi32>
    %43 = arith.andi %38, %42 : vector<1x1024xi1>
    %cst_10 = arith.constant 0.000000e+00 : f32
    %44 = vector.shape_cast %43 : vector<1x1024xi1> to vector<1x1024xi1>
    %45 = vector.broadcast %44 : vector<1x1024xi1> to vector<8x1024xi1>
    %46 = vector.broadcast %cst_10 : f32 to vector<8x1024xf32>
    %47 = arith.select %45, %34, %46 : vector<8x1024xi1>, vector<8x1024xf32>
    %48 = vector.extract_strided_slice %1 {offsets = [0, 4], sizes = [8, 1024], strides = [1, 1]} : vector<8x1156xf32> to vector<8x1024xf32>
    %c2_i32 = arith.constant 2 : i32
    %49 = vector.broadcast %c2_i32 : i32 to vector<1x1024xi32>
    %50 = arith.addi %4, %49 : vector<1x1024xi32>
    %c0_i32_11 = arith.constant 0 : i32
    %51 = vector.broadcast %c0_i32_11 : i32 to vector<1x1024xi32>
    %52 = arith.cmpi sge, %50, %51 : vector<1x1024xi32>
    %c2_i32_12 = arith.constant 2 : i32
    %53 = vector.broadcast %c2_i32_12 : i32 to vector<1x1024xi32>
    %54 = arith.addi %4, %53 : vector<1x1024xi32>
    %c32_i32_13 = arith.constant 32 : i32
    %55 = vector.broadcast %c32_i32_13 : i32 to vector<1x1024xi32>
    %56 = arith.cmpi slt, %54, %55 : vector<1x1024xi32>
    %57 = arith.andi %52, %56 : vector<1x1024xi1>
    %cst_14 = arith.constant 0.000000e+00 : f32
    %58 = vector.shape_cast %57 : vector<1x1024xi1> to vector<1x1024xi1>
    %59 = vector.broadcast %58 : vector<1x1024xi1> to vector<8x1024xi1>
    %60 = vector.broadcast %cst_14 : f32 to vector<8x1024xf32>
    %61 = arith.select %59, %48, %60 : vector<8x1024xi1>, vector<8x1024xf32>
    %62 = vector.extract_strided_slice %1 {offsets = [0, 32], sizes = [8, 1024], strides = [1, 1]} : vector<8x1156xf32> to vector<8x1024xf32>
    %c-2_i32_15 = arith.constant -2 : i32
    %63 = vector.broadcast %c-2_i32_15 : i32 to vector<1x1024xi32>
    %64 = arith.addi %4, %63 : vector<1x1024xi32>
    %c0_i32_16 = arith.constant 0 : i32
    %65 = vector.broadcast %c0_i32_16 : i32 to vector<1x1024xi32>
    %66 = arith.cmpi sge, %64, %65 : vector<1x1024xi32>
    %c-2_i32_17 = arith.constant -2 : i32
    %67 = vector.broadcast %c-2_i32_17 : i32 to vector<1x1024xi32>
    %68 = arith.addi %4, %67 : vector<1x1024xi32>
    %c32_i32_18 = arith.constant 32 : i32
    %69 = vector.broadcast %c32_i32_18 : i32 to vector<1x1024xi32>
    %70 = arith.cmpi slt, %68, %69 : vector<1x1024xi32>
    %71 = arith.andi %66, %70 : vector<1x1024xi1>
    %cst_19 = arith.constant 0.000000e+00 : f32
    %72 = vector.shape_cast %71 : vector<1x1024xi1> to vector<1x1024xi1>
    %73 = vector.broadcast %72 : vector<1x1024xi1> to vector<8x1024xi1>
    %74 = vector.broadcast %cst_19 : f32 to vector<8x1024xf32>
    %75 = arith.select %73, %62, %74 : vector<8x1024xi1>, vector<8x1024xf32>
    %76 = vector.extract_strided_slice %1 {offsets = [0, 33], sizes = [8, 1024], strides = [1, 1]} : vector<8x1156xf32> to vector<8x1024xf32>
    %c-1_i32_20 = arith.constant -1 : i32
    %77 = vector.broadcast %c-1_i32_20 : i32 to vector<1x1024xi32>
    %78 = arith.addi %4, %77 : vector<1x1024xi32>
    %c0_i32_21 = arith.constant 0 : i32
    %79 = vector.broadcast %c0_i32_21 : i32 to vector<1x1024xi32>
    %80 = arith.cmpi sge, %78, %79 : vector<1x1024xi32>
    %c-1_i32_22 = arith.constant -1 : i32
    %81 = vector.broadcast %c-1_i32_22 : i32 to vector<1x1024xi32>
    %82 = arith.addi %4, %81 : vector<1x1024xi32>
    %c32_i32_23 = arith.constant 32 : i32
    %83 = vector.broadcast %c32_i32_23 : i32 to vector<1x1024xi32>
    %84 = arith.cmpi slt, %82, %83 : vector<1x1024xi32>
    %85 = arith.andi %80, %84 : vector<1x1024xi1>
    %cst_24 = arith.constant 0.000000e+00 : f32
    %86 = vector.shape_cast %85 : vector<1x1024xi1> to vector<1x1024xi1>
    %87 = vector.broadcast %86 : vector<1x1024xi1> to vector<8x1024xi1>
    %88 = vector.broadcast %cst_24 : f32 to vector<8x1024xf32>
    %89 = arith.select %87, %76, %88 : vector<8x1024xi1>, vector<8x1024xf32>
    %90 = vector.extract_strided_slice %1 {offsets = [0, 34], sizes = [8, 1024], strides = [1, 1]} : vector<8x1156xf32> to vector<8x1024xf32>
    %91 = vector.extract_strided_slice %1 {offsets = [0, 35], sizes = [8, 1024], strides = [1, 1]} : vector<8x1156xf32> to vector<8x1024xf32>
    %c1_i32_25 = arith.constant 1 : i32
    %92 = vector.broadcast %c1_i32_25 : i32 to vector<1x1024xi32>
    %93 = arith.addi %4, %92 : vector<1x1024xi32>
    %c0_i32_26 = arith.constant 0 : i32
    %94 = vector.broadcast %c0_i32_26 : i32 to vector<1x1024xi32>
    %95 = arith.cmpi sge, %93, %94 : vector<1x1024xi32>
    %c1_i32_27 = arith.constant 1 : i32
    %96 = vector.broadcast %c1_i32_27 : i32 to vector<1x1024xi32>
    %97 = arith.addi %4, %96 : vector<1x1024xi32>
    %c32_i32_28 = arith.constant 32 : i32
    %98 = vector.broadcast %c32_i32_28 : i32 to vector<1x1024xi32>
    %99 = arith.cmpi slt, %97, %98 : vector<1x1024xi32>
    %100 = arith.andi %95, %99 : vector<1x1024xi1>
    %cst_29 = arith.constant 0.000000e+00 : f32
    %101 = vector.shape_cast %100 : vector<1x1024xi1> to vector<1x1024xi1>
    %102 = vector.broadcast %101 : vector<1x1024xi1> to vector<8x1024xi1>
    %103 = vector.broadcast %cst_29 : f32 to vector<8x1024xf32>
    %104 = arith.select %102, %91, %103 : vector<8x1024xi1>, vector<8x1024xf32>
    %105 = vector.extract_strided_slice %1 {offsets = [0, 36], sizes = [8, 1024], strides = [1, 1]} : vector<8x1156xf32> to vector<8x1024xf32>
    %c2_i32_30 = arith.constant 2 : i32
    %106 = vector.broadcast %c2_i32_30 : i32 to vector<1x1024xi32>
    %107 = arith.addi %4, %106 : vector<1x1024xi32>
    %c0_i32_31 = arith.constant 0 : i32
    %108 = vector.broadcast %c0_i32_31 : i32 to vector<1x1024xi32>
    %109 = arith.cmpi sge, %107, %108 : vector<1x1024xi32>
    %c2_i32_32 = arith.constant 2 : i32
    %110 = vector.broadcast %c2_i32_32 : i32 to vector<1x1024xi32>
    %111 = arith.addi %4, %110 : vector<1x1024xi32>
    %c32_i32_33 = arith.constant 32 : i32
    %112 = vector.broadcast %c32_i32_33 : i32 to vector<1x1024xi32>
    %113 = arith.cmpi slt, %111, %112 : vector<1x1024xi32>
    %114 = arith.andi %109, %113 : vector<1x1024xi1>
    %cst_34 = arith.constant 0.000000e+00 : f32
    %115 = vector.shape_cast %114 : vector<1x1024xi1> to vector<1x1024xi1>
    %116 = vector.broadcast %115 : vector<1x1024xi1> to vector<8x1024xi1>
    %117 = vector.broadcast %cst_34 : f32 to vector<8x1024xf32>
    %118 = arith.select %116, %105, %117 : vector<8x1024xi1>, vector<8x1024xf32>
    %119 = vector.extract_strided_slice %1 {offsets = [0, 64], sizes = [8, 1024], strides = [1, 1]} : vector<8x1156xf32> to vector<8x1024xf32>
    %c-2_i32_35 = arith.constant -2 : i32
    %120 = vector.broadcast %c-2_i32_35 : i32 to vector<1x1024xi32>
    %121 = arith.addi %4, %120 : vector<1x1024xi32>
    %c0_i32_36 = arith.constant 0 : i32
    %122 = vector.broadcast %c0_i32_36 : i32 to vector<1x1024xi32>
    %123 = arith.cmpi sge, %121, %122 : vector<1x1024xi32>
    %c-2_i32_37 = arith.constant -2 : i32
    %124 = vector.broadcast %c-2_i32_37 : i32 to vector<1x1024xi32>
    %125 = arith.addi %4, %124 : vector<1x1024xi32>
    %c32_i32_38 = arith.constant 32 : i32
    %126 = vector.broadcast %c32_i32_38 : i32 to vector<1x1024xi32>
    %127 = arith.cmpi slt, %125, %126 : vector<1x1024xi32>
    %128 = arith.andi %123, %127 : vector<1x1024xi1>
    %cst_39 = arith.constant 0.000000e+00 : f32
    %129 = vector.shape_cast %128 : vector<1x1024xi1> to vector<1x1024xi1>
    %130 = vector.broadcast %129 : vector<1x1024xi1> to vector<8x1024xi1>
    %131 = vector.broadcast %cst_39 : f32 to vector<8x1024xf32>
    %132 = arith.select %130, %119, %131 : vector<8x1024xi1>, vector<8x1024xf32>
    %133 = vector.extract_strided_slice %1 {offsets = [0, 65], sizes = [8, 1024], strides = [1, 1]} : vector<8x1156xf32> to vector<8x1024xf32>
    %c-1_i32_40 = arith.constant -1 : i32
    %134 = vector.broadcast %c-1_i32_40 : i32 to vector<1x1024xi32>
    %135 = arith.addi %4, %134 : vector<1x1024xi32>
    %c0_i32_41 = arith.constant 0 : i32
    %136 = vector.broadcast %c0_i32_41 : i32 to vector<1x1024xi32>
    %137 = arith.cmpi sge, %135, %136 : vector<1x1024xi32>
    %c-1_i32_42 = arith.constant -1 : i32
    %138 = vector.broadcast %c-1_i32_42 : i32 to vector<1x1024xi32>
    %139 = arith.addi %4, %138 : vector<1x1024xi32>
    %c32_i32_43 = arith.constant 32 : i32
    %140 = vector.broadcast %c32_i32_43 : i32 to vector<1x1024xi32>
    %141 = arith.cmpi slt, %139, %140 : vector<1x1024xi32>
    %142 = arith.andi %137, %141 : vector<1x1024xi1>
    %cst_44 = arith.constant 0.000000e+00 : f32
    %143 = vector.shape_cast %142 : vector<1x1024xi1> to vector<1x1024xi1>
    %144 = vector.broadcast %143 : vector<1x1024xi1> to vector<8x1024xi1>
    %145 = vector.broadcast %cst_44 : f32 to vector<8x1024xf32>
    %146 = arith.select %144, %133, %145 : vector<8x1024xi1>, vector<8x1024xf32>
    %147 = vector.extract_strided_slice %1 {offsets = [0, 66], sizes = [8, 1024], strides = [1, 1]} : vector<8x1156xf32> to vector<8x1024xf32>
    %148 = vector.extract_strided_slice %1 {offsets = [0, 67], sizes = [8, 1024], strides = [1, 1]} : vector<8x1156xf32> to vector<8x1024xf32>
    %c1_i32_45 = arith.constant 1 : i32
    %149 = vector.broadcast %c1_i32_45 : i32 to vector<1x1024xi32>
    %150 = arith.addi %4, %149 : vector<1x1024xi32>
    %c0_i32_46 = arith.constant 0 : i32
    %151 = vector.broadcast %c0_i32_46 : i32 to vector<1x1024xi32>
    %152 = arith.cmpi sge, %150, %151 : vector<1x1024xi32>
    %c1_i32_47 = arith.constant 1 : i32
    %153 = vector.broadcast %c1_i32_47 : i32 to vector<1x1024xi32>
    %154 = arith.addi %4, %153 : vector<1x1024xi32>
    %c32_i32_48 = arith.constant 32 : i32
    %155 = vector.broadcast %c32_i32_48 : i32 to vector<1x1024xi32>
    %156 = arith.cmpi slt, %154, %155 : vector<1x1024xi32>
    %157 = arith.andi %152, %156 : vector<1x1024xi1>
    %cst_49 = arith.constant 0.000000e+00 : f32
    %158 = vector.shape_cast %157 : vector<1x1024xi1> to vector<1x1024xi1>
    %159 = vector.broadcast %158 : vector<1x1024xi1> to vector<8x1024xi1>
    %160 = vector.broadcast %cst_49 : f32 to vector<8x1024xf32>
    %161 = arith.select %159, %148, %160 : vector<8x1024xi1>, vector<8x1024xf32>
    %162 = vector.extract_strided_slice %1 {offsets = [0, 68], sizes = [8, 1024], strides = [1, 1]} : vector<8x1156xf32> to vector<8x1024xf32>
    %c2_i32_50 = arith.constant 2 : i32
    %163 = vector.broadcast %c2_i32_50 : i32 to vector<1x1024xi32>
    %164 = arith.addi %4, %163 : vector<1x1024xi32>
    %c0_i32_51 = arith.constant 0 : i32
    %165 = vector.broadcast %c0_i32_51 : i32 to vector<1x1024xi32>
    %166 = arith.cmpi sge, %164, %165 : vector<1x1024xi32>
    %c2_i32_52 = arith.constant 2 : i32
    %167 = vector.broadcast %c2_i32_52 : i32 to vector<1x1024xi32>
    %168 = arith.addi %4, %167 : vector<1x1024xi32>
    %c32_i32_53 = arith.constant 32 : i32
    %169 = vector.broadcast %c32_i32_53 : i32 to vector<1x1024xi32>
    %170 = arith.cmpi slt, %168, %169 : vector<1x1024xi32>
    %171 = arith.andi %166, %170 : vector<1x1024xi1>
    %cst_54 = arith.constant 0.000000e+00 : f32
    %172 = vector.shape_cast %171 : vector<1x1024xi1> to vector<1x1024xi1>
    %173 = vector.broadcast %172 : vector<1x1024xi1> to vector<8x1024xi1>
    %174 = vector.broadcast %cst_54 : f32 to vector<8x1024xf32>
    %175 = arith.select %173, %162, %174 : vector<8x1024xi1>, vector<8x1024xf32>
    %176 = vector.extract_strided_slice %1 {offsets = [0, 96], sizes = [8, 1024], strides = [1, 1]} : vector<8x1156xf32> to vector<8x1024xf32>
    %c-2_i32_55 = arith.constant -2 : i32
    %177 = vector.broadcast %c-2_i32_55 : i32 to vector<1x1024xi32>
    %178 = arith.addi %4, %177 : vector<1x1024xi32>
    %c0_i32_56 = arith.constant 0 : i32
    %179 = vector.broadcast %c0_i32_56 : i32 to vector<1x1024xi32>
    %180 = arith.cmpi sge, %178, %179 : vector<1x1024xi32>
    %c-2_i32_57 = arith.constant -2 : i32
    %181 = vector.broadcast %c-2_i32_57 : i32 to vector<1x1024xi32>
    %182 = arith.addi %4, %181 : vector<1x1024xi32>
    %c32_i32_58 = arith.constant 32 : i32
    %183 = vector.broadcast %c32_i32_58 : i32 to vector<1x1024xi32>
    %184 = arith.cmpi slt, %182, %183 : vector<1x1024xi32>
    %185 = arith.andi %180, %184 : vector<1x1024xi1>
    %cst_59 = arith.constant 0.000000e+00 : f32
    %186 = vector.shape_cast %185 : vector<1x1024xi1> to vector<1x1024xi1>
    %187 = vector.broadcast %186 : vector<1x1024xi1> to vector<8x1024xi1>
    %188 = vector.broadcast %cst_59 : f32 to vector<8x1024xf32>
    %189 = arith.select %187, %176, %188 : vector<8x1024xi1>, vector<8x1024xf32>
    %190 = vector.extract_strided_slice %1 {offsets = [0, 97], sizes = [8, 1024], strides = [1, 1]} : vector<8x1156xf32> to vector<8x1024xf32>
    %c-1_i32_60 = arith.constant -1 : i32
    %191 = vector.broadcast %c-1_i32_60 : i32 to vector<1x1024xi32>
    %192 = arith.addi %4, %191 : vector<1x1024xi32>
    %c0_i32_61 = arith.constant 0 : i32
    %193 = vector.broadcast %c0_i32_61 : i32 to vector<1x1024xi32>
    %194 = arith.cmpi sge, %192, %193 : vector<1x1024xi32>
    %c-1_i32_62 = arith.constant -1 : i32
    %195 = vector.broadcast %c-1_i32_62 : i32 to vector<1x1024xi32>
    %196 = arith.addi %4, %195 : vector<1x1024xi32>
    %c32_i32_63 = arith.constant 32 : i32
    %197 = vector.broadcast %c32_i32_63 : i32 to vector<1x1024xi32>
    %198 = arith.cmpi slt, %196, %197 : vector<1x1024xi32>
    %199 = arith.andi %194, %198 : vector<1x1024xi1>
    %cst_64 = arith.constant 0.000000e+00 : f32
    %200 = vector.shape_cast %199 : vector<1x1024xi1> to vector<1x1024xi1>
    %201 = vector.broadcast %200 : vector<1x1024xi1> to vector<8x1024xi1>
    %202 = vector.broadcast %cst_64 : f32 to vector<8x1024xf32>
    %203 = arith.select %201, %190, %202 : vector<8x1024xi1>, vector<8x1024xf32>
    %204 = vector.extract_strided_slice %1 {offsets = [0, 98], sizes = [8, 1024], strides = [1, 1]} : vector<8x1156xf32> to vector<8x1024xf32>
    %205 = vector.extract_strided_slice %1 {offsets = [0, 99], sizes = [8, 1024], strides = [1, 1]} : vector<8x1156xf32> to vector<8x1024xf32>
    %c1_i32_65 = arith.constant 1 : i32
    %206 = vector.broadcast %c1_i32_65 : i32 to vector<1x1024xi32>
    %207 = arith.addi %4, %206 : vector<1x1024xi32>
    %c0_i32_66 = arith.constant 0 : i32
    %208 = vector.broadcast %c0_i32_66 : i32 to vector<1x1024xi32>
    %209 = arith.cmpi sge, %207, %208 : vector<1x1024xi32>
    %c1_i32_67 = arith.constant 1 : i32
    %210 = vector.broadcast %c1_i32_67 : i32 to vector<1x1024xi32>
    %211 = arith.addi %4, %210 : vector<1x1024xi32>
    %c32_i32_68 = arith.constant 32 : i32
    %212 = vector.broadcast %c32_i32_68 : i32 to vector<1x1024xi32>
    %213 = arith.cmpi slt, %211, %212 : vector<1x1024xi32>
    %214 = arith.andi %209, %213 : vector<1x1024xi1>
    %cst_69 = arith.constant 0.000000e+00 : f32
    %215 = vector.shape_cast %214 : vector<1x1024xi1> to vector<1x1024xi1>
    %216 = vector.broadcast %215 : vector<1x1024xi1> to vector<8x1024xi1>
    %217 = vector.broadcast %cst_69 : f32 to vector<8x1024xf32>
    %218 = arith.select %216, %205, %217 : vector<8x1024xi1>, vector<8x1024xf32>
    %219 = vector.extract_strided_slice %1 {offsets = [0, 100], sizes = [8, 1024], strides = [1, 1]} : vector<8x1156xf32> to vector<8x1024xf32>
    %c2_i32_70 = arith.constant 2 : i32
    %220 = vector.broadcast %c2_i32_70 : i32 to vector<1x1024xi32>
    %221 = arith.addi %4, %220 : vector<1x1024xi32>
    %c0_i32_71 = arith.constant 0 : i32
    %222 = vector.broadcast %c0_i32_71 : i32 to vector<1x1024xi32>
    %223 = arith.cmpi sge, %221, %222 : vector<1x1024xi32>
    %c2_i32_72 = arith.constant 2 : i32
    %224 = vector.broadcast %c2_i32_72 : i32 to vector<1x1024xi32>
    %225 = arith.addi %4, %224 : vector<1x1024xi32>
    %c32_i32_73 = arith.constant 32 : i32
    %226 = vector.broadcast %c32_i32_73 : i32 to vector<1x1024xi32>
    %227 = arith.cmpi slt, %225, %226 : vector<1x1024xi32>
    %228 = arith.andi %223, %227 : vector<1x1024xi1>
    %cst_74 = arith.constant 0.000000e+00 : f32
    %229 = vector.shape_cast %228 : vector<1x1024xi1> to vector<1x1024xi1>
    %230 = vector.broadcast %229 : vector<1x1024xi1> to vector<8x1024xi1>
    %231 = vector.broadcast %cst_74 : f32 to vector<8x1024xf32>
    %232 = arith.select %230, %219, %231 : vector<8x1024xi1>, vector<8x1024xf32>
    %233 = vector.extract_strided_slice %1 {offsets = [0, 128], sizes = [8, 1024], strides = [1, 1]} : vector<8x1156xf32> to vector<8x1024xf32>
    %c-2_i32_75 = arith.constant -2 : i32
    %234 = vector.broadcast %c-2_i32_75 : i32 to vector<1x1024xi32>
    %235 = arith.addi %4, %234 : vector<1x1024xi32>
    %c0_i32_76 = arith.constant 0 : i32
    %236 = vector.broadcast %c0_i32_76 : i32 to vector<1x1024xi32>
    %237 = arith.cmpi sge, %235, %236 : vector<1x1024xi32>
    %c-2_i32_77 = arith.constant -2 : i32
    %238 = vector.broadcast %c-2_i32_77 : i32 to vector<1x1024xi32>
    %239 = arith.addi %4, %238 : vector<1x1024xi32>
    %c32_i32_78 = arith.constant 32 : i32
    %240 = vector.broadcast %c32_i32_78 : i32 to vector<1x1024xi32>
    %241 = arith.cmpi slt, %239, %240 : vector<1x1024xi32>
    %242 = arith.andi %237, %241 : vector<1x1024xi1>
    %cst_79 = arith.constant 0.000000e+00 : f32
    %243 = vector.shape_cast %242 : vector<1x1024xi1> to vector<1x1024xi1>
    %244 = vector.broadcast %243 : vector<1x1024xi1> to vector<8x1024xi1>
    %245 = vector.broadcast %cst_79 : f32 to vector<8x1024xf32>
    %246 = arith.select %244, %233, %245 : vector<8x1024xi1>, vector<8x1024xf32>
    %247 = vector.extract_strided_slice %1 {offsets = [0, 129], sizes = [8, 1024], strides = [1, 1]} : vector<8x1156xf32> to vector<8x1024xf32>
    %c-1_i32_80 = arith.constant -1 : i32
    %248 = vector.broadcast %c-1_i32_80 : i32 to vector<1x1024xi32>
    %249 = arith.addi %4, %248 : vector<1x1024xi32>
    %c0_i32_81 = arith.constant 0 : i32
    %250 = vector.broadcast %c0_i32_81 : i32 to vector<1x1024xi32>
    %251 = arith.cmpi sge, %249, %250 : vector<1x1024xi32>
    %c-1_i32_82 = arith.constant -1 : i32
    %252 = vector.broadcast %c-1_i32_82 : i32 to vector<1x1024xi32>
    %253 = arith.addi %4, %252 : vector<1x1024xi32>
    %c32_i32_83 = arith.constant 32 : i32
    %254 = vector.broadcast %c32_i32_83 : i32 to vector<1x1024xi32>
    %255 = arith.cmpi slt, %253, %254 : vector<1x1024xi32>
    %256 = arith.andi %251, %255 : vector<1x1024xi1>
    %cst_84 = arith.constant 0.000000e+00 : f32
    %257 = vector.shape_cast %256 : vector<1x1024xi1> to vector<1x1024xi1>
    %258 = vector.broadcast %257 : vector<1x1024xi1> to vector<8x1024xi1>
    %259 = vector.broadcast %cst_84 : f32 to vector<8x1024xf32>
    %260 = arith.select %258, %247, %259 : vector<8x1024xi1>, vector<8x1024xf32>
    %261 = vector.extract_strided_slice %1 {offsets = [0, 130], sizes = [8, 1024], strides = [1, 1]} : vector<8x1156xf32> to vector<8x1024xf32>
    %262 = vector.extract_strided_slice %1 {offsets = [0, 131], sizes = [8, 1024], strides = [1, 1]} : vector<8x1156xf32> to vector<8x1024xf32>
    %c1_i32_85 = arith.constant 1 : i32
    %263 = vector.broadcast %c1_i32_85 : i32 to vector<1x1024xi32>
    %264 = arith.addi %4, %263 : vector<1x1024xi32>
    %c0_i32_86 = arith.constant 0 : i32
    %265 = vector.broadcast %c0_i32_86 : i32 to vector<1x1024xi32>
    %266 = arith.cmpi sge, %264, %265 : vector<1x1024xi32>
    %c1_i32_87 = arith.constant 1 : i32
    %267 = vector.broadcast %c1_i32_87 : i32 to vector<1x1024xi32>
    %268 = arith.addi %4, %267 : vector<1x1024xi32>
    %c32_i32_88 = arith.constant 32 : i32
    %269 = vector.broadcast %c32_i32_88 : i32 to vector<1x1024xi32>
    %270 = arith.cmpi slt, %268, %269 : vector<1x1024xi32>
    %271 = arith.andi %266, %270 : vector<1x1024xi1>
    %cst_89 = arith.constant 0.000000e+00 : f32
    %272 = vector.shape_cast %271 : vector<1x1024xi1> to vector<1x1024xi1>
    %273 = vector.broadcast %272 : vector<1x1024xi1> to vector<8x1024xi1>
    %274 = vector.broadcast %cst_89 : f32 to vector<8x1024xf32>
    %275 = arith.select %273, %262, %274 : vector<8x1024xi1>, vector<8x1024xf32>
    %276 = vector.extract_strided_slice %1 {offsets = [0, 132], sizes = [8, 1024], strides = [1, 1]} : vector<8x1156xf32> to vector<8x1024xf32>
    %c2_i32_90 = arith.constant 2 : i32
    %277 = vector.broadcast %c2_i32_90 : i32 to vector<1x1024xi32>
    %278 = arith.addi %4, %277 : vector<1x1024xi32>
    %c0_i32_91 = arith.constant 0 : i32
    %279 = vector.broadcast %c0_i32_91 : i32 to vector<1x1024xi32>
    %280 = arith.cmpi sge, %278, %279 : vector<1x1024xi32>
    %c2_i32_92 = arith.constant 2 : i32
    %281 = vector.broadcast %c2_i32_92 : i32 to vector<1x1024xi32>
    %282 = arith.addi %4, %281 : vector<1x1024xi32>
    %c32_i32_93 = arith.constant 32 : i32
    %283 = vector.broadcast %c32_i32_93 : i32 to vector<1x1024xi32>
    %284 = arith.cmpi slt, %282, %283 : vector<1x1024xi32>
    %285 = arith.andi %280, %284 : vector<1x1024xi1>
    %cst_94 = arith.constant 0.000000e+00 : f32
    %286 = vector.shape_cast %285 : vector<1x1024xi1> to vector<1x1024xi1>
    %287 = vector.broadcast %286 : vector<1x1024xi1> to vector<8x1024xi1>
    %288 = vector.broadcast %cst_94 : f32 to vector<8x1024xf32>
    %289 = arith.select %287, %276, %288 : vector<8x1024xi1>, vector<8x1024xf32>
    %290 = tpu.concatenate %18, %32, %33, %47, %61, %75, %89, %90, %104, %118, %132, %146, %147, %161, %175, %189 in 0 : vector<8x1024xf32>, vector<8x1024xf32>, vector<8x1024xf32>, vector<8x1024xf32>, vector<8x1024xf32>, vector<8x1024xf32>, vector<8x1024xf32>, vector<8x1024xf32>, vector<8x1024xf32>, vector<8x1024xf32>, vector<8x1024xf32>, vector<8x1024xf32>, vector<8x1024xf32>, vector<8x1024xf32>, vector<8x1024xf32>, vector<8x1024xf32> -> vector<128x1024xf32>
    %291 = tpu.concatenate %203, %204, %218, %232, %246, %260, %261, %275, %289 in 0 : vector<8x1024xf32>, vector<8x1024xf32>, vector<8x1024xf32>, vector<8x1024xf32>, vector<8x1024xf32>, vector<8x1024xf32>, vector<8x1024xf32>, vector<8x1024xf32>, vector<8x1024xf32> -> vector<72x1024xf32>
    %292 = tpu.concatenate %290, %291 in 0 : vector<128x1024xf32>, vector<72x1024xf32> -> vector<200x1024xf32>
    %c0_95 = arith.constant 0 : index
    %c0_96 = arith.constant 0 : index
    %293 = vector.load %arg2[%c0_95, %c0_96] : memref<32x200xf32, #tpu.memory_space<vmem>>, vector<32x200xf32>
    %cst_97 = arith.constant dense<0.000000e+00> : vector<32x1024xf32>
    %294 = tpu.matmul %293, %292, %cst_97 {dimension_numbers = #tpu.dot_dimension_numbers<[1], [0], [0], [1], [0, 0, 1, 1], [], []>} : vector<32x200xf32>, vector<200x1024xf32>, vector<32x1024xf32> -> vector<32x1024xf32>
    %c0_98 = arith.constant 0 : index
    %c0_99 = arith.constant 0 : index
    %295 = vector.load %arg3[%c0_98, %c0_99] : memref<32x1xf32, #tpu.memory_space<vmem>>, vector<32x1xf32>
    %296 = vector.broadcast %295 : vector<32x1xf32> to vector<32x1024xf32>
    %297 = arith.addf %294, %296 : vector<32x1024xf32>
    %c0_100 = arith.constant 0 : index
    %c0_101 = arith.constant 0 : index
    %c0_102 = arith.constant 0 : index
    %298 = vector.load %arg4[%c0_100, %c0_101, %c0_102] : memref<1x32x1024xf32, #tpu.memory_space<vmem>>, vector<1x32x1024xf32>
    %299 = vector.shape_cast %298 : vector<1x32x1024xf32> to vector<32x1024xf32>
    %300 = vector.shape_cast %297 : vector<32x1024xf32> to vector<1x32x1024xf32>
    tpu.vector_store %arg4[%c0_100, %c0_101, %c0_102], %300 {strides = array<i32>} : memref<1x32x1024xf32, #tpu.memory_space<vmem>>, vector<1x32x1024xf32>,
    return
  }
  func.func @transform_0(%arg0: i32) -> (i32, i32, i32) {
    %c0_i32 = arith.constant 0 : i32
    %c0_i32_0 = arith.constant 0 : i32
    %c0_i32_1 = arith.constant 0 : i32
    return %arg0, %c0_i32, %c0_i32_0 : i32, i32, i32
  }
  func.func @transform_1(%arg0: i32) -> (i32, i32) {
    %c0_i32 = arith.constant 0 : i32
    %c0_i32_0 = arith.constant 0 : i32
    %c0_i32_1 = arith.constant 0 : i32
    return %c0_i32, %c0_i32_0 : i32, i32
  }
  func.func @transform_2(%arg0: i32) -> (i32, i32) {
    %c0_i32 = arith.constant 0 : i32
    %c0_i32_0 = arith.constant 0 : i32
    %c0_i32_1 = arith.constant 0 : i32
    return %c0_i32, %c0_i32_0 : i32, i32
  }
  func.func @transform_3(%arg0: i32) -> (i32, i32, i32) {
    %c0_i32 = arith.constant 0 : i32
    %c0_i32_0 = arith.constant 0 : i32
    %c0_i32_1 = arith.constant 0 : i32
    return %arg0, %c0_i32, %c0_i32_0 : i32, i32, i32
  }
}

module attributes {stable_mosaic.version = 11 : i64} {
  func.func @_conv5x5_flat_kernel(%arg0: i32, %arg1: memref<1x32x324xf32, #tpu.memory_space<vmem>>, %arg2: memref<32x800xf32, #tpu.memory_space<vmem>>, %arg3: memref<32x1xf32, #tpu.memory_space<vmem>>, %arg4: memref<1x32x256xf32, #tpu.memory_space<vmem>>) attributes {dimension_semantics = [#tpu.dimension_semantics<parallel>], iteration_bounds = array<i64: 2>, scalar_prefetch = 0 : i64, scratch_operands = 0 : i64, tpu.core_type = #tpu.core_type<tc>, window_params = [{transform_indices = @transform_0, window_bounds = array<i64: 1, 32, 324>}, {pipeline_mode = #tpu.pipeline_mode<synchronous>, transform_indices = @transform_1, window_bounds = array<i64: 32, 800>}, {pipeline_mode = #tpu.pipeline_mode<synchronous>, transform_indices = @transform_2, window_bounds = array<i64: 32, 1>}, {transform_indices = @transform_3, window_bounds = array<i64: 1, 32, 256>}]} {
    %c0 = arith.constant 0 : index
    %c0_0 = arith.constant 0 : index
    %c0_1 = arith.constant 0 : index
    %0 = vector.load %arg1[%c0, %c0_0, %c0_1] : memref<1x32x324xf32, #tpu.memory_space<vmem>>, vector<1x32x324xf32>
    %1 = vector.shape_cast %0 : vector<1x32x324xf32> to vector<32x324xf32>
    %2 = tpu.iota {dimensions = array<i32: 1>} : vector<1x256xi32>
    %c15_i32 = arith.constant 15 : i32
    %3 = vector.broadcast %c15_i32 : i32 to vector<1x256xi32>
    %4 = arith.andi %2, %3 : vector<1x256xi32>
    %5 = vector.extract_strided_slice %1 {offsets = [0, 0], sizes = [32, 256], strides = [1, 1]} : vector<32x324xf32> to vector<32x256xf32>
    %c-2_i32 = arith.constant -2 : i32
    %6 = vector.broadcast %c-2_i32 : i32 to vector<1x256xi32>
    %7 = arith.addi %4, %6 : vector<1x256xi32>
    %c0_i32 = arith.constant 0 : i32
    %8 = vector.broadcast %c0_i32 : i32 to vector<1x256xi32>
    %9 = arith.cmpi sge, %7, %8 : vector<1x256xi32>
    %c-2_i32_2 = arith.constant -2 : i32
    %10 = vector.broadcast %c-2_i32_2 : i32 to vector<1x256xi32>
    %11 = arith.addi %4, %10 : vector<1x256xi32>
    %c16_i32 = arith.constant 16 : i32
    %12 = vector.broadcast %c16_i32 : i32 to vector<1x256xi32>
    %13 = arith.cmpi slt, %11, %12 : vector<1x256xi32>
    %14 = arith.andi %9, %13 : vector<1x256xi1>
    %cst = arith.constant 0.000000e+00 : f32
    %15 = vector.shape_cast %14 : vector<1x256xi1> to vector<1x256xi1>
    %16 = vector.broadcast %15 : vector<1x256xi1> to vector<32x256xi1>
    %17 = vector.broadcast %cst : f32 to vector<32x256xf32>
    %18 = arith.select %16, %5, %17 : vector<32x256xi1>, vector<32x256xf32>
    %19 = vector.extract_strided_slice %1 {offsets = [0, 1], sizes = [32, 256], strides = [1, 1]} : vector<32x324xf32> to vector<32x256xf32>
    %c-1_i32 = arith.constant -1 : i32
    %20 = vector.broadcast %c-1_i32 : i32 to vector<1x256xi32>
    %21 = arith.addi %4, %20 : vector<1x256xi32>
    %c0_i32_3 = arith.constant 0 : i32
    %22 = vector.broadcast %c0_i32_3 : i32 to vector<1x256xi32>
    %23 = arith.cmpi sge, %21, %22 : vector<1x256xi32>
    %c-1_i32_4 = arith.constant -1 : i32
    %24 = vector.broadcast %c-1_i32_4 : i32 to vector<1x256xi32>
    %25 = arith.addi %4, %24 : vector<1x256xi32>
    %c16_i32_5 = arith.constant 16 : i32
    %26 = vector.broadcast %c16_i32_5 : i32 to vector<1x256xi32>
    %27 = arith.cmpi slt, %25, %26 : vector<1x256xi32>
    %28 = arith.andi %23, %27 : vector<1x256xi1>
    %cst_6 = arith.constant 0.000000e+00 : f32
    %29 = vector.shape_cast %28 : vector<1x256xi1> to vector<1x256xi1>
    %30 = vector.broadcast %29 : vector<1x256xi1> to vector<32x256xi1>
    %31 = vector.broadcast %cst_6 : f32 to vector<32x256xf32>
    %32 = arith.select %30, %19, %31 : vector<32x256xi1>, vector<32x256xf32>
    %33 = vector.extract_strided_slice %1 {offsets = [0, 2], sizes = [32, 256], strides = [1, 1]} : vector<32x324xf32> to vector<32x256xf32>
    %34 = vector.extract_strided_slice %1 {offsets = [0, 3], sizes = [32, 256], strides = [1, 1]} : vector<32x324xf32> to vector<32x256xf32>
    %c1_i32 = arith.constant 1 : i32
    %35 = vector.broadcast %c1_i32 : i32 to vector<1x256xi32>
    %36 = arith.addi %4, %35 : vector<1x256xi32>
    %c0_i32_7 = arith.constant 0 : i32
    %37 = vector.broadcast %c0_i32_7 : i32 to vector<1x256xi32>
    %38 = arith.cmpi sge, %36, %37 : vector<1x256xi32>
    %c1_i32_8 = arith.constant 1 : i32
    %39 = vector.broadcast %c1_i32_8 : i32 to vector<1x256xi32>
    %40 = arith.addi %4, %39 : vector<1x256xi32>
    %c16_i32_9 = arith.constant 16 : i32
    %41 = vector.broadcast %c16_i32_9 : i32 to vector<1x256xi32>
    %42 = arith.cmpi slt, %40, %41 : vector<1x256xi32>
    %43 = arith.andi %38, %42 : vector<1x256xi1>
    %cst_10 = arith.constant 0.000000e+00 : f32
    %44 = vector.shape_cast %43 : vector<1x256xi1> to vector<1x256xi1>
    %45 = vector.broadcast %44 : vector<1x256xi1> to vector<32x256xi1>
    %46 = vector.broadcast %cst_10 : f32 to vector<32x256xf32>
    %47 = arith.select %45, %34, %46 : vector<32x256xi1>, vector<32x256xf32>
    %48 = vector.extract_strided_slice %1 {offsets = [0, 4], sizes = [32, 256], strides = [1, 1]} : vector<32x324xf32> to vector<32x256xf32>
    %c2_i32 = arith.constant 2 : i32
    %49 = vector.broadcast %c2_i32 : i32 to vector<1x256xi32>
    %50 = arith.addi %4, %49 : vector<1x256xi32>
    %c0_i32_11 = arith.constant 0 : i32
    %51 = vector.broadcast %c0_i32_11 : i32 to vector<1x256xi32>
    %52 = arith.cmpi sge, %50, %51 : vector<1x256xi32>
    %c2_i32_12 = arith.constant 2 : i32
    %53 = vector.broadcast %c2_i32_12 : i32 to vector<1x256xi32>
    %54 = arith.addi %4, %53 : vector<1x256xi32>
    %c16_i32_13 = arith.constant 16 : i32
    %55 = vector.broadcast %c16_i32_13 : i32 to vector<1x256xi32>
    %56 = arith.cmpi slt, %54, %55 : vector<1x256xi32>
    %57 = arith.andi %52, %56 : vector<1x256xi1>
    %cst_14 = arith.constant 0.000000e+00 : f32
    %58 = vector.shape_cast %57 : vector<1x256xi1> to vector<1x256xi1>
    %59 = vector.broadcast %58 : vector<1x256xi1> to vector<32x256xi1>
    %60 = vector.broadcast %cst_14 : f32 to vector<32x256xf32>
    %61 = arith.select %59, %48, %60 : vector<32x256xi1>, vector<32x256xf32>
    %62 = vector.extract_strided_slice %1 {offsets = [0, 16], sizes = [32, 256], strides = [1, 1]} : vector<32x324xf32> to vector<32x256xf32>
    %c-2_i32_15 = arith.constant -2 : i32
    %63 = vector.broadcast %c-2_i32_15 : i32 to vector<1x256xi32>
    %64 = arith.addi %4, %63 : vector<1x256xi32>
    %c0_i32_16 = arith.constant 0 : i32
    %65 = vector.broadcast %c0_i32_16 : i32 to vector<1x256xi32>
    %66 = arith.cmpi sge, %64, %65 : vector<1x256xi32>
    %c-2_i32_17 = arith.constant -2 : i32
    %67 = vector.broadcast %c-2_i32_17 : i32 to vector<1x256xi32>
    %68 = arith.addi %4, %67 : vector<1x256xi32>
    %c16_i32_18 = arith.constant 16 : i32
    %69 = vector.broadcast %c16_i32_18 : i32 to vector<1x256xi32>
    %70 = arith.cmpi slt, %68, %69 : vector<1x256xi32>
    %71 = arith.andi %66, %70 : vector<1x256xi1>
    %cst_19 = arith.constant 0.000000e+00 : f32
    %72 = vector.shape_cast %71 : vector<1x256xi1> to vector<1x256xi1>
    %73 = vector.broadcast %72 : vector<1x256xi1> to vector<32x256xi1>
    %74 = vector.broadcast %cst_19 : f32 to vector<32x256xf32>
    %75 = arith.select %73, %62, %74 : vector<32x256xi1>, vector<32x256xf32>
    %76 = vector.extract_strided_slice %1 {offsets = [0, 17], sizes = [32, 256], strides = [1, 1]} : vector<32x324xf32> to vector<32x256xf32>
    %c-1_i32_20 = arith.constant -1 : i32
    %77 = vector.broadcast %c-1_i32_20 : i32 to vector<1x256xi32>
    %78 = arith.addi %4, %77 : vector<1x256xi32>
    %c0_i32_21 = arith.constant 0 : i32
    %79 = vector.broadcast %c0_i32_21 : i32 to vector<1x256xi32>
    %80 = arith.cmpi sge, %78, %79 : vector<1x256xi32>
    %c-1_i32_22 = arith.constant -1 : i32
    %81 = vector.broadcast %c-1_i32_22 : i32 to vector<1x256xi32>
    %82 = arith.addi %4, %81 : vector<1x256xi32>
    %c16_i32_23 = arith.constant 16 : i32
    %83 = vector.broadcast %c16_i32_23 : i32 to vector<1x256xi32>
    %84 = arith.cmpi slt, %82, %83 : vector<1x256xi32>
    %85 = arith.andi %80, %84 : vector<1x256xi1>
    %cst_24 = arith.constant 0.000000e+00 : f32
    %86 = vector.shape_cast %85 : vector<1x256xi1> to vector<1x256xi1>
    %87 = vector.broadcast %86 : vector<1x256xi1> to vector<32x256xi1>
    %88 = vector.broadcast %cst_24 : f32 to vector<32x256xf32>
    %89 = arith.select %87, %76, %88 : vector<32x256xi1>, vector<32x256xf32>
    %90 = vector.extract_strided_slice %1 {offsets = [0, 18], sizes = [32, 256], strides = [1, 1]} : vector<32x324xf32> to vector<32x256xf32>
    %91 = vector.extract_strided_slice %1 {offsets = [0, 19], sizes = [32, 256], strides = [1, 1]} : vector<32x324xf32> to vector<32x256xf32>
    %c1_i32_25 = arith.constant 1 : i32
    %92 = vector.broadcast %c1_i32_25 : i32 to vector<1x256xi32>
    %93 = arith.addi %4, %92 : vector<1x256xi32>
    %c0_i32_26 = arith.constant 0 : i32
    %94 = vector.broadcast %c0_i32_26 : i32 to vector<1x256xi32>
    %95 = arith.cmpi sge, %93, %94 : vector<1x256xi32>
    %c1_i32_27 = arith.constant 1 : i32
    %96 = vector.broadcast %c1_i32_27 : i32 to vector<1x256xi32>
    %97 = arith.addi %4, %96 : vector<1x256xi32>
    %c16_i32_28 = arith.constant 16 : i32
    %98 = vector.broadcast %c16_i32_28 : i32 to vector<1x256xi32>
    %99 = arith.cmpi slt, %97, %98 : vector<1x256xi32>
    %100 = arith.andi %95, %99 : vector<1x256xi1>
    %cst_29 = arith.constant 0.000000e+00 : f32
    %101 = vector.shape_cast %100 : vector<1x256xi1> to vector<1x256xi1>
    %102 = vector.broadcast %101 : vector<1x256xi1> to vector<32x256xi1>
    %103 = vector.broadcast %cst_29 : f32 to vector<32x256xf32>
    %104 = arith.select %102, %91, %103 : vector<32x256xi1>, vector<32x256xf32>
    %105 = vector.extract_strided_slice %1 {offsets = [0, 20], sizes = [32, 256], strides = [1, 1]} : vector<32x324xf32> to vector<32x256xf32>
    %c2_i32_30 = arith.constant 2 : i32
    %106 = vector.broadcast %c2_i32_30 : i32 to vector<1x256xi32>
    %107 = arith.addi %4, %106 : vector<1x256xi32>
    %c0_i32_31 = arith.constant 0 : i32
    %108 = vector.broadcast %c0_i32_31 : i32 to vector<1x256xi32>
    %109 = arith.cmpi sge, %107, %108 : vector<1x256xi32>
    %c2_i32_32 = arith.constant 2 : i32
    %110 = vector.broadcast %c2_i32_32 : i32 to vector<1x256xi32>
    %111 = arith.addi %4, %110 : vector<1x256xi32>
    %c16_i32_33 = arith.constant 16 : i32
    %112 = vector.broadcast %c16_i32_33 : i32 to vector<1x256xi32>
    %113 = arith.cmpi slt, %111, %112 : vector<1x256xi32>
    %114 = arith.andi %109, %113 : vector<1x256xi1>
    %cst_34 = arith.constant 0.000000e+00 : f32
    %115 = vector.shape_cast %114 : vector<1x256xi1> to vector<1x256xi1>
    %116 = vector.broadcast %115 : vector<1x256xi1> to vector<32x256xi1>
    %117 = vector.broadcast %cst_34 : f32 to vector<32x256xf32>
    %118 = arith.select %116, %105, %117 : vector<32x256xi1>, vector<32x256xf32>
    %119 = vector.extract_strided_slice %1 {offsets = [0, 32], sizes = [32, 256], strides = [1, 1]} : vector<32x324xf32> to vector<32x256xf32>
    %c-2_i32_35 = arith.constant -2 : i32
    %120 = vector.broadcast %c-2_i32_35 : i32 to vector<1x256xi32>
    %121 = arith.addi %4, %120 : vector<1x256xi32>
    %c0_i32_36 = arith.constant 0 : i32
    %122 = vector.broadcast %c0_i32_36 : i32 to vector<1x256xi32>
    %123 = arith.cmpi sge, %121, %122 : vector<1x256xi32>
    %c-2_i32_37 = arith.constant -2 : i32
    %124 = vector.broadcast %c-2_i32_37 : i32 to vector<1x256xi32>
    %125 = arith.addi %4, %124 : vector<1x256xi32>
    %c16_i32_38 = arith.constant 16 : i32
    %126 = vector.broadcast %c16_i32_38 : i32 to vector<1x256xi32>
    %127 = arith.cmpi slt, %125, %126 : vector<1x256xi32>
    %128 = arith.andi %123, %127 : vector<1x256xi1>
    %cst_39 = arith.constant 0.000000e+00 : f32
    %129 = vector.shape_cast %128 : vector<1x256xi1> to vector<1x256xi1>
    %130 = vector.broadcast %129 : vector<1x256xi1> to vector<32x256xi1>
    %131 = vector.broadcast %cst_39 : f32 to vector<32x256xf32>
    %132 = arith.select %130, %119, %131 : vector<32x256xi1>, vector<32x256xf32>
    %133 = vector.extract_strided_slice %1 {offsets = [0, 33], sizes = [32, 256], strides = [1, 1]} : vector<32x324xf32> to vector<32x256xf32>
    %c-1_i32_40 = arith.constant -1 : i32
    %134 = vector.broadcast %c-1_i32_40 : i32 to vector<1x256xi32>
    %135 = arith.addi %4, %134 : vector<1x256xi32>
    %c0_i32_41 = arith.constant 0 : i32
    %136 = vector.broadcast %c0_i32_41 : i32 to vector<1x256xi32>
    %137 = arith.cmpi sge, %135, %136 : vector<1x256xi32>
    %c-1_i32_42 = arith.constant -1 : i32
    %138 = vector.broadcast %c-1_i32_42 : i32 to vector<1x256xi32>
    %139 = arith.addi %4, %138 : vector<1x256xi32>
    %c16_i32_43 = arith.constant 16 : i32
    %140 = vector.broadcast %c16_i32_43 : i32 to vector<1x256xi32>
    %141 = arith.cmpi slt, %139, %140 : vector<1x256xi32>
    %142 = arith.andi %137, %141 : vector<1x256xi1>
    %cst_44 = arith.constant 0.000000e+00 : f32
    %143 = vector.shape_cast %142 : vector<1x256xi1> to vector<1x256xi1>
    %144 = vector.broadcast %143 : vector<1x256xi1> to vector<32x256xi1>
    %145 = vector.broadcast %cst_44 : f32 to vector<32x256xf32>
    %146 = arith.select %144, %133, %145 : vector<32x256xi1>, vector<32x256xf32>
    %147 = vector.extract_strided_slice %1 {offsets = [0, 34], sizes = [32, 256], strides = [1, 1]} : vector<32x324xf32> to vector<32x256xf32>
    %148 = vector.extract_strided_slice %1 {offsets = [0, 35], sizes = [32, 256], strides = [1, 1]} : vector<32x324xf32> to vector<32x256xf32>
    %c1_i32_45 = arith.constant 1 : i32
    %149 = vector.broadcast %c1_i32_45 : i32 to vector<1x256xi32>
    %150 = arith.addi %4, %149 : vector<1x256xi32>
    %c0_i32_46 = arith.constant 0 : i32
    %151 = vector.broadcast %c0_i32_46 : i32 to vector<1x256xi32>
    %152 = arith.cmpi sge, %150, %151 : vector<1x256xi32>
    %c1_i32_47 = arith.constant 1 : i32
    %153 = vector.broadcast %c1_i32_47 : i32 to vector<1x256xi32>
    %154 = arith.addi %4, %153 : vector<1x256xi32>
    %c16_i32_48 = arith.constant 16 : i32
    %155 = vector.broadcast %c16_i32_48 : i32 to vector<1x256xi32>
    %156 = arith.cmpi slt, %154, %155 : vector<1x256xi32>
    %157 = arith.andi %152, %156 : vector<1x256xi1>
    %cst_49 = arith.constant 0.000000e+00 : f32
    %158 = vector.shape_cast %157 : vector<1x256xi1> to vector<1x256xi1>
    %159 = vector.broadcast %158 : vector<1x256xi1> to vector<32x256xi1>
    %160 = vector.broadcast %cst_49 : f32 to vector<32x256xf32>
    %161 = arith.select %159, %148, %160 : vector<32x256xi1>, vector<32x256xf32>
    %162 = vector.extract_strided_slice %1 {offsets = [0, 36], sizes = [32, 256], strides = [1, 1]} : vector<32x324xf32> to vector<32x256xf32>
    %c2_i32_50 = arith.constant 2 : i32
    %163 = vector.broadcast %c2_i32_50 : i32 to vector<1x256xi32>
    %164 = arith.addi %4, %163 : vector<1x256xi32>
    %c0_i32_51 = arith.constant 0 : i32
    %165 = vector.broadcast %c0_i32_51 : i32 to vector<1x256xi32>
    %166 = arith.cmpi sge, %164, %165 : vector<1x256xi32>
    %c2_i32_52 = arith.constant 2 : i32
    %167 = vector.broadcast %c2_i32_52 : i32 to vector<1x256xi32>
    %168 = arith.addi %4, %167 : vector<1x256xi32>
    %c16_i32_53 = arith.constant 16 : i32
    %169 = vector.broadcast %c16_i32_53 : i32 to vector<1x256xi32>
    %170 = arith.cmpi slt, %168, %169 : vector<1x256xi32>
    %171 = arith.andi %166, %170 : vector<1x256xi1>
    %cst_54 = arith.constant 0.000000e+00 : f32
    %172 = vector.shape_cast %171 : vector<1x256xi1> to vector<1x256xi1>
    %173 = vector.broadcast %172 : vector<1x256xi1> to vector<32x256xi1>
    %174 = vector.broadcast %cst_54 : f32 to vector<32x256xf32>
    %175 = arith.select %173, %162, %174 : vector<32x256xi1>, vector<32x256xf32>
    %176 = vector.extract_strided_slice %1 {offsets = [0, 48], sizes = [32, 256], strides = [1, 1]} : vector<32x324xf32> to vector<32x256xf32>
    %c-2_i32_55 = arith.constant -2 : i32
    %177 = vector.broadcast %c-2_i32_55 : i32 to vector<1x256xi32>
    %178 = arith.addi %4, %177 : vector<1x256xi32>
    %c0_i32_56 = arith.constant 0 : i32
    %179 = vector.broadcast %c0_i32_56 : i32 to vector<1x256xi32>
    %180 = arith.cmpi sge, %178, %179 : vector<1x256xi32>
    %c-2_i32_57 = arith.constant -2 : i32
    %181 = vector.broadcast %c-2_i32_57 : i32 to vector<1x256xi32>
    %182 = arith.addi %4, %181 : vector<1x256xi32>
    %c16_i32_58 = arith.constant 16 : i32
    %183 = vector.broadcast %c16_i32_58 : i32 to vector<1x256xi32>
    %184 = arith.cmpi slt, %182, %183 : vector<1x256xi32>
    %185 = arith.andi %180, %184 : vector<1x256xi1>
    %cst_59 = arith.constant 0.000000e+00 : f32
    %186 = vector.shape_cast %185 : vector<1x256xi1> to vector<1x256xi1>
    %187 = vector.broadcast %186 : vector<1x256xi1> to vector<32x256xi1>
    %188 = vector.broadcast %cst_59 : f32 to vector<32x256xf32>
    %189 = arith.select %187, %176, %188 : vector<32x256xi1>, vector<32x256xf32>
    %190 = vector.extract_strided_slice %1 {offsets = [0, 49], sizes = [32, 256], strides = [1, 1]} : vector<32x324xf32> to vector<32x256xf32>
    %c-1_i32_60 = arith.constant -1 : i32
    %191 = vector.broadcast %c-1_i32_60 : i32 to vector<1x256xi32>
    %192 = arith.addi %4, %191 : vector<1x256xi32>
    %c0_i32_61 = arith.constant 0 : i32
    %193 = vector.broadcast %c0_i32_61 : i32 to vector<1x256xi32>
    %194 = arith.cmpi sge, %192, %193 : vector<1x256xi32>
    %c-1_i32_62 = arith.constant -1 : i32
    %195 = vector.broadcast %c-1_i32_62 : i32 to vector<1x256xi32>
    %196 = arith.addi %4, %195 : vector<1x256xi32>
    %c16_i32_63 = arith.constant 16 : i32
    %197 = vector.broadcast %c16_i32_63 : i32 to vector<1x256xi32>
    %198 = arith.cmpi slt, %196, %197 : vector<1x256xi32>
    %199 = arith.andi %194, %198 : vector<1x256xi1>
    %cst_64 = arith.constant 0.000000e+00 : f32
    %200 = vector.shape_cast %199 : vector<1x256xi1> to vector<1x256xi1>
    %201 = vector.broadcast %200 : vector<1x256xi1> to vector<32x256xi1>
    %202 = vector.broadcast %cst_64 : f32 to vector<32x256xf32>
    %203 = arith.select %201, %190, %202 : vector<32x256xi1>, vector<32x256xf32>
    %204 = vector.extract_strided_slice %1 {offsets = [0, 50], sizes = [32, 256], strides = [1, 1]} : vector<32x324xf32> to vector<32x256xf32>
    %205 = vector.extract_strided_slice %1 {offsets = [0, 51], sizes = [32, 256], strides = [1, 1]} : vector<32x324xf32> to vector<32x256xf32>
    %c1_i32_65 = arith.constant 1 : i32
    %206 = vector.broadcast %c1_i32_65 : i32 to vector<1x256xi32>
    %207 = arith.addi %4, %206 : vector<1x256xi32>
    %c0_i32_66 = arith.constant 0 : i32
    %208 = vector.broadcast %c0_i32_66 : i32 to vector<1x256xi32>
    %209 = arith.cmpi sge, %207, %208 : vector<1x256xi32>
    %c1_i32_67 = arith.constant 1 : i32
    %210 = vector.broadcast %c1_i32_67 : i32 to vector<1x256xi32>
    %211 = arith.addi %4, %210 : vector<1x256xi32>
    %c16_i32_68 = arith.constant 16 : i32
    %212 = vector.broadcast %c16_i32_68 : i32 to vector<1x256xi32>
    %213 = arith.cmpi slt, %211, %212 : vector<1x256xi32>
    %214 = arith.andi %209, %213 : vector<1x256xi1>
    %cst_69 = arith.constant 0.000000e+00 : f32
    %215 = vector.shape_cast %214 : vector<1x256xi1> to vector<1x256xi1>
    %216 = vector.broadcast %215 : vector<1x256xi1> to vector<32x256xi1>
    %217 = vector.broadcast %cst_69 : f32 to vector<32x256xf32>
    %218 = arith.select %216, %205, %217 : vector<32x256xi1>, vector<32x256xf32>
    %219 = vector.extract_strided_slice %1 {offsets = [0, 52], sizes = [32, 256], strides = [1, 1]} : vector<32x324xf32> to vector<32x256xf32>
    %c2_i32_70 = arith.constant 2 : i32
    %220 = vector.broadcast %c2_i32_70 : i32 to vector<1x256xi32>
    %221 = arith.addi %4, %220 : vector<1x256xi32>
    %c0_i32_71 = arith.constant 0 : i32
    %222 = vector.broadcast %c0_i32_71 : i32 to vector<1x256xi32>
    %223 = arith.cmpi sge, %221, %222 : vector<1x256xi32>
    %c2_i32_72 = arith.constant 2 : i32
    %224 = vector.broadcast %c2_i32_72 : i32 to vector<1x256xi32>
    %225 = arith.addi %4, %224 : vector<1x256xi32>
    %c16_i32_73 = arith.constant 16 : i32
    %226 = vector.broadcast %c16_i32_73 : i32 to vector<1x256xi32>
    %227 = arith.cmpi slt, %225, %226 : vector<1x256xi32>
    %228 = arith.andi %223, %227 : vector<1x256xi1>
    %cst_74 = arith.constant 0.000000e+00 : f32
    %229 = vector.shape_cast %228 : vector<1x256xi1> to vector<1x256xi1>
    %230 = vector.broadcast %229 : vector<1x256xi1> to vector<32x256xi1>
    %231 = vector.broadcast %cst_74 : f32 to vector<32x256xf32>
    %232 = arith.select %230, %219, %231 : vector<32x256xi1>, vector<32x256xf32>
    %233 = vector.extract_strided_slice %1 {offsets = [0, 64], sizes = [32, 256], strides = [1, 1]} : vector<32x324xf32> to vector<32x256xf32>
    %c-2_i32_75 = arith.constant -2 : i32
    %234 = vector.broadcast %c-2_i32_75 : i32 to vector<1x256xi32>
    %235 = arith.addi %4, %234 : vector<1x256xi32>
    %c0_i32_76 = arith.constant 0 : i32
    %236 = vector.broadcast %c0_i32_76 : i32 to vector<1x256xi32>
    %237 = arith.cmpi sge, %235, %236 : vector<1x256xi32>
    %c-2_i32_77 = arith.constant -2 : i32
    %238 = vector.broadcast %c-2_i32_77 : i32 to vector<1x256xi32>
    %239 = arith.addi %4, %238 : vector<1x256xi32>
    %c16_i32_78 = arith.constant 16 : i32
    %240 = vector.broadcast %c16_i32_78 : i32 to vector<1x256xi32>
    %241 = arith.cmpi slt, %239, %240 : vector<1x256xi32>
    %242 = arith.andi %237, %241 : vector<1x256xi1>
    %cst_79 = arith.constant 0.000000e+00 : f32
    %243 = vector.shape_cast %242 : vector<1x256xi1> to vector<1x256xi1>
    %244 = vector.broadcast %243 : vector<1x256xi1> to vector<32x256xi1>
    %245 = vector.broadcast %cst_79 : f32 to vector<32x256xf32>
    %246 = arith.select %244, %233, %245 : vector<32x256xi1>, vector<32x256xf32>
    %247 = vector.extract_strided_slice %1 {offsets = [0, 65], sizes = [32, 256], strides = [1, 1]} : vector<32x324xf32> to vector<32x256xf32>
    %c-1_i32_80 = arith.constant -1 : i32
    %248 = vector.broadcast %c-1_i32_80 : i32 to vector<1x256xi32>
    %249 = arith.addi %4, %248 : vector<1x256xi32>
    %c0_i32_81 = arith.constant 0 : i32
    %250 = vector.broadcast %c0_i32_81 : i32 to vector<1x256xi32>
    %251 = arith.cmpi sge, %249, %250 : vector<1x256xi32>
    %c-1_i32_82 = arith.constant -1 : i32
    %252 = vector.broadcast %c-1_i32_82 : i32 to vector<1x256xi32>
    %253 = arith.addi %4, %252 : vector<1x256xi32>
    %c16_i32_83 = arith.constant 16 : i32
    %254 = vector.broadcast %c16_i32_83 : i32 to vector<1x256xi32>
    %255 = arith.cmpi slt, %253, %254 : vector<1x256xi32>
    %256 = arith.andi %251, %255 : vector<1x256xi1>
    %cst_84 = arith.constant 0.000000e+00 : f32
    %257 = vector.shape_cast %256 : vector<1x256xi1> to vector<1x256xi1>
    %258 = vector.broadcast %257 : vector<1x256xi1> to vector<32x256xi1>
    %259 = vector.broadcast %cst_84 : f32 to vector<32x256xf32>
    %260 = arith.select %258, %247, %259 : vector<32x256xi1>, vector<32x256xf32>
    %261 = vector.extract_strided_slice %1 {offsets = [0, 66], sizes = [32, 256], strides = [1, 1]} : vector<32x324xf32> to vector<32x256xf32>
    %262 = vector.extract_strided_slice %1 {offsets = [0, 67], sizes = [32, 256], strides = [1, 1]} : vector<32x324xf32> to vector<32x256xf32>
    %c1_i32_85 = arith.constant 1 : i32
    %263 = vector.broadcast %c1_i32_85 : i32 to vector<1x256xi32>
    %264 = arith.addi %4, %263 : vector<1x256xi32>
    %c0_i32_86 = arith.constant 0 : i32
    %265 = vector.broadcast %c0_i32_86 : i32 to vector<1x256xi32>
    %266 = arith.cmpi sge, %264, %265 : vector<1x256xi32>
    %c1_i32_87 = arith.constant 1 : i32
    %267 = vector.broadcast %c1_i32_87 : i32 to vector<1x256xi32>
    %268 = arith.addi %4, %267 : vector<1x256xi32>
    %c16_i32_88 = arith.constant 16 : i32
    %269 = vector.broadcast %c16_i32_88 : i32 to vector<1x256xi32>
    %270 = arith.cmpi slt, %268, %269 : vector<1x256xi32>
    %271 = arith.andi %266, %270 : vector<1x256xi1>
    %cst_89 = arith.constant 0.000000e+00 : f32
    %272 = vector.shape_cast %271 : vector<1x256xi1> to vector<1x256xi1>
    %273 = vector.broadcast %272 : vector<1x256xi1> to vector<32x256xi1>
    %274 = vector.broadcast %cst_89 : f32 to vector<32x256xf32>
    %275 = arith.select %273, %262, %274 : vector<32x256xi1>, vector<32x256xf32>
    %276 = vector.extract_strided_slice %1 {offsets = [0, 68], sizes = [32, 256], strides = [1, 1]} : vector<32x324xf32> to vector<32x256xf32>
    %c2_i32_90 = arith.constant 2 : i32
    %277 = vector.broadcast %c2_i32_90 : i32 to vector<1x256xi32>
    %278 = arith.addi %4, %277 : vector<1x256xi32>
    %c0_i32_91 = arith.constant 0 : i32
    %279 = vector.broadcast %c0_i32_91 : i32 to vector<1x256xi32>
    %280 = arith.cmpi sge, %278, %279 : vector<1x256xi32>
    %c2_i32_92 = arith.constant 2 : i32
    %281 = vector.broadcast %c2_i32_92 : i32 to vector<1x256xi32>
    %282 = arith.addi %4, %281 : vector<1x256xi32>
    %c16_i32_93 = arith.constant 16 : i32
    %283 = vector.broadcast %c16_i32_93 : i32 to vector<1x256xi32>
    %284 = arith.cmpi slt, %282, %283 : vector<1x256xi32>
    %285 = arith.andi %280, %284 : vector<1x256xi1>
    %cst_94 = arith.constant 0.000000e+00 : f32
    %286 = vector.shape_cast %285 : vector<1x256xi1> to vector<1x256xi1>
    %287 = vector.broadcast %286 : vector<1x256xi1> to vector<32x256xi1>
    %288 = vector.broadcast %cst_94 : f32 to vector<32x256xf32>
    %289 = arith.select %287, %276, %288 : vector<32x256xi1>, vector<32x256xf32>
    %290 = tpu.concatenate %18, %32, %33, %47, %61, %75, %89, %90, %104, %118, %132, %146, %147, %161, %175, %189 in 0 : vector<32x256xf32>, vector<32x256xf32>, vector<32x256xf32>, vector<32x256xf32>, vector<32x256xf32>, vector<32x256xf32>, vector<32x256xf32>, vector<32x256xf32>, vector<32x256xf32>, vector<32x256xf32>, vector<32x256xf32>, vector<32x256xf32>, vector<32x256xf32>, vector<32x256xf32>, vector<32x256xf32>, vector<32x256xf32> -> vector<512x256xf32>
    %291 = tpu.concatenate %203, %204, %218, %232, %246, %260, %261, %275, %289 in 0 : vector<32x256xf32>, vector<32x256xf32>, vector<32x256xf32>, vector<32x256xf32>, vector<32x256xf32>, vector<32x256xf32>, vector<32x256xf32>, vector<32x256xf32>, vector<32x256xf32> -> vector<288x256xf32>
    %292 = tpu.concatenate %290, %291 in 0 : vector<512x256xf32>, vector<288x256xf32> -> vector<800x256xf32>
    %c0_95 = arith.constant 0 : index
    %c0_96 = arith.constant 0 : index
    %293 = vector.load %arg2[%c0_95, %c0_96] : memref<32x800xf32, #tpu.memory_space<vmem>>, vector<32x800xf32>
    %cst_97 = arith.constant dense<0.000000e+00> : vector<32x256xf32>
    %294 = tpu.matmul %293, %292, %cst_97 {dimension_numbers = #tpu.dot_dimension_numbers<[1], [0], [0], [1], [0, 0, 1, 1], [], []>} : vector<32x800xf32>, vector<800x256xf32>, vector<32x256xf32> -> vector<32x256xf32>
    %c0_98 = arith.constant 0 : index
    %c0_99 = arith.constant 0 : index
    %295 = vector.load %arg3[%c0_98, %c0_99] : memref<32x1xf32, #tpu.memory_space<vmem>>, vector<32x1xf32>
    %296 = vector.broadcast %295 : vector<32x1xf32> to vector<32x256xf32>
    %297 = arith.addf %294, %296 : vector<32x256xf32>
    %c0_100 = arith.constant 0 : index
    %c0_101 = arith.constant 0 : index
    %c0_102 = arith.constant 0 : index
    %298 = vector.load %arg4[%c0_100, %c0_101, %c0_102] : memref<1x32x256xf32, #tpu.memory_space<vmem>>, vector<1x32x256xf32>
    %299 = vector.shape_cast %298 : vector<1x32x256xf32> to vector<32x256xf32>
    %300 = vector.shape_cast %297 : vector<32x256xf32> to vector<1x32x256xf32>
    tpu.vector_store %arg4[%c0_100, %c0_101, %c0_102], %300 {strides = array<i32>} : memref<1x32x256xf32, #tpu.memory_space<vmem>>, vector<1x32x256xf32>,
    return
  }
  func.func @transform_0(%arg0: i32) -> (i32, i32, i32) {
    %c0_i32 = arith.constant 0 : i32
    %c0_i32_0 = arith.constant 0 : i32
    %c0_i32_1 = arith.constant 0 : i32
    return %arg0, %c0_i32, %c0_i32_0 : i32, i32, i32
  }
  func.func @transform_1(%arg0: i32) -> (i32, i32) {
    %c0_i32 = arith.constant 0 : i32
    %c0_i32_0 = arith.constant 0 : i32
    %c0_i32_1 = arith.constant 0 : i32
    return %c0_i32, %c0_i32_0 : i32, i32
  }
  func.func @transform_2(%arg0: i32) -> (i32, i32) {
    %c0_i32 = arith.constant 0 : i32
    %c0_i32_0 = arith.constant 0 : i32
    %c0_i32_1 = arith.constant 0 : i32
    return %c0_i32, %c0_i32_0 : i32, i32
  }
  func.func @transform_3(%arg0: i32) -> (i32, i32, i32) {
    %c0_i32 = arith.constant 0 : i32
    %c0_i32_0 = arith.constant 0 : i32
    %c0_i32_1 = arith.constant 0 : i32
    return %arg0, %c0_i32, %c0_i32_0 : i32, i32, i32
  }
}

module attributes {stable_mosaic.version = 11 : i64} {
  func.func @_conv5x5_flat_kernel(%arg0: i32, %arg1: memref<1x32x100xf32, #tpu.memory_space<vmem>>, %arg2: memref<64x800xf32, #tpu.memory_space<vmem>>, %arg3: memref<64x1xf32, #tpu.memory_space<vmem>>, %arg4: memref<1x64x64xf32, #tpu.memory_space<vmem>>) attributes {dimension_semantics = [#tpu.dimension_semantics<parallel>], iteration_bounds = array<i64: 2>, scalar_prefetch = 0 : i64, scratch_operands = 0 : i64, tpu.core_type = #tpu.core_type<tc>, window_params = [{transform_indices = @transform_0, window_bounds = array<i64: 1, 32, 100>}, {pipeline_mode = #tpu.pipeline_mode<synchronous>, transform_indices = @transform_1, window_bounds = array<i64: 64, 800>}, {pipeline_mode = #tpu.pipeline_mode<synchronous>, transform_indices = @transform_2, window_bounds = array<i64: 64, 1>}, {transform_indices = @transform_3, window_bounds = array<i64: 1, 64, 64>}]} {
    %c0 = arith.constant 0 : index
    %c0_0 = arith.constant 0 : index
    %c0_1 = arith.constant 0 : index
    %0 = vector.load %arg1[%c0, %c0_0, %c0_1] : memref<1x32x100xf32, #tpu.memory_space<vmem>>, vector<1x32x100xf32>
    %1 = vector.shape_cast %0 : vector<1x32x100xf32> to vector<32x100xf32>
    %2 = tpu.iota {dimensions = array<i32: 1>} : vector<1x64xi32>
    %c7_i32 = arith.constant 7 : i32
    %3 = vector.broadcast %c7_i32 : i32 to vector<1x64xi32>
    %4 = arith.andi %2, %3 : vector<1x64xi32>
    %5 = vector.extract_strided_slice %1 {offsets = [0, 0], sizes = [32, 64], strides = [1, 1]} : vector<32x100xf32> to vector<32x64xf32>
    %c-2_i32 = arith.constant -2 : i32
    %6 = vector.broadcast %c-2_i32 : i32 to vector<1x64xi32>
    %7 = arith.addi %4, %6 : vector<1x64xi32>
    %c0_i32 = arith.constant 0 : i32
    %8 = vector.broadcast %c0_i32 : i32 to vector<1x64xi32>
    %9 = arith.cmpi sge, %7, %8 : vector<1x64xi32>
    %c-2_i32_2 = arith.constant -2 : i32
    %10 = vector.broadcast %c-2_i32_2 : i32 to vector<1x64xi32>
    %11 = arith.addi %4, %10 : vector<1x64xi32>
    %c8_i32 = arith.constant 8 : i32
    %12 = vector.broadcast %c8_i32 : i32 to vector<1x64xi32>
    %13 = arith.cmpi slt, %11, %12 : vector<1x64xi32>
    %14 = arith.andi %9, %13 : vector<1x64xi1>
    %cst = arith.constant 0.000000e+00 : f32
    %15 = vector.shape_cast %14 : vector<1x64xi1> to vector<1x64xi1>
    %16 = vector.broadcast %15 : vector<1x64xi1> to vector<32x64xi1>
    %17 = vector.broadcast %cst : f32 to vector<32x64xf32>
    %18 = arith.select %16, %5, %17 : vector<32x64xi1>, vector<32x64xf32>
    %19 = vector.extract_strided_slice %1 {offsets = [0, 1], sizes = [32, 64], strides = [1, 1]} : vector<32x100xf32> to vector<32x64xf32>
    %c-1_i32 = arith.constant -1 : i32
    %20 = vector.broadcast %c-1_i32 : i32 to vector<1x64xi32>
    %21 = arith.addi %4, %20 : vector<1x64xi32>
    %c0_i32_3 = arith.constant 0 : i32
    %22 = vector.broadcast %c0_i32_3 : i32 to vector<1x64xi32>
    %23 = arith.cmpi sge, %21, %22 : vector<1x64xi32>
    %c-1_i32_4 = arith.constant -1 : i32
    %24 = vector.broadcast %c-1_i32_4 : i32 to vector<1x64xi32>
    %25 = arith.addi %4, %24 : vector<1x64xi32>
    %c8_i32_5 = arith.constant 8 : i32
    %26 = vector.broadcast %c8_i32_5 : i32 to vector<1x64xi32>
    %27 = arith.cmpi slt, %25, %26 : vector<1x64xi32>
    %28 = arith.andi %23, %27 : vector<1x64xi1>
    %cst_6 = arith.constant 0.000000e+00 : f32
    %29 = vector.shape_cast %28 : vector<1x64xi1> to vector<1x64xi1>
    %30 = vector.broadcast %29 : vector<1x64xi1> to vector<32x64xi1>
    %31 = vector.broadcast %cst_6 : f32 to vector<32x64xf32>
    %32 = arith.select %30, %19, %31 : vector<32x64xi1>, vector<32x64xf32>
    %33 = vector.extract_strided_slice %1 {offsets = [0, 2], sizes = [32, 64], strides = [1, 1]} : vector<32x100xf32> to vector<32x64xf32>
    %34 = vector.extract_strided_slice %1 {offsets = [0, 3], sizes = [32, 64], strides = [1, 1]} : vector<32x100xf32> to vector<32x64xf32>
    %c1_i32 = arith.constant 1 : i32
    %35 = vector.broadcast %c1_i32 : i32 to vector<1x64xi32>
    %36 = arith.addi %4, %35 : vector<1x64xi32>
    %c0_i32_7 = arith.constant 0 : i32
    %37 = vector.broadcast %c0_i32_7 : i32 to vector<1x64xi32>
    %38 = arith.cmpi sge, %36, %37 : vector<1x64xi32>
    %c1_i32_8 = arith.constant 1 : i32
    %39 = vector.broadcast %c1_i32_8 : i32 to vector<1x64xi32>
    %40 = arith.addi %4, %39 : vector<1x64xi32>
    %c8_i32_9 = arith.constant 8 : i32
    %41 = vector.broadcast %c8_i32_9 : i32 to vector<1x64xi32>
    %42 = arith.cmpi slt, %40, %41 : vector<1x64xi32>
    %43 = arith.andi %38, %42 : vector<1x64xi1>
    %cst_10 = arith.constant 0.000000e+00 : f32
    %44 = vector.shape_cast %43 : vector<1x64xi1> to vector<1x64xi1>
    %45 = vector.broadcast %44 : vector<1x64xi1> to vector<32x64xi1>
    %46 = vector.broadcast %cst_10 : f32 to vector<32x64xf32>
    %47 = arith.select %45, %34, %46 : vector<32x64xi1>, vector<32x64xf32>
    %48 = vector.extract_strided_slice %1 {offsets = [0, 4], sizes = [32, 64], strides = [1, 1]} : vector<32x100xf32> to vector<32x64xf32>
    %c2_i32 = arith.constant 2 : i32
    %49 = vector.broadcast %c2_i32 : i32 to vector<1x64xi32>
    %50 = arith.addi %4, %49 : vector<1x64xi32>
    %c0_i32_11 = arith.constant 0 : i32
    %51 = vector.broadcast %c0_i32_11 : i32 to vector<1x64xi32>
    %52 = arith.cmpi sge, %50, %51 : vector<1x64xi32>
    %c2_i32_12 = arith.constant 2 : i32
    %53 = vector.broadcast %c2_i32_12 : i32 to vector<1x64xi32>
    %54 = arith.addi %4, %53 : vector<1x64xi32>
    %c8_i32_13 = arith.constant 8 : i32
    %55 = vector.broadcast %c8_i32_13 : i32 to vector<1x64xi32>
    %56 = arith.cmpi slt, %54, %55 : vector<1x64xi32>
    %57 = arith.andi %52, %56 : vector<1x64xi1>
    %cst_14 = arith.constant 0.000000e+00 : f32
    %58 = vector.shape_cast %57 : vector<1x64xi1> to vector<1x64xi1>
    %59 = vector.broadcast %58 : vector<1x64xi1> to vector<32x64xi1>
    %60 = vector.broadcast %cst_14 : f32 to vector<32x64xf32>
    %61 = arith.select %59, %48, %60 : vector<32x64xi1>, vector<32x64xf32>
    %62 = vector.extract_strided_slice %1 {offsets = [0, 8], sizes = [32, 64], strides = [1, 1]} : vector<32x100xf32> to vector<32x64xf32>
    %c-2_i32_15 = arith.constant -2 : i32
    %63 = vector.broadcast %c-2_i32_15 : i32 to vector<1x64xi32>
    %64 = arith.addi %4, %63 : vector<1x64xi32>
    %c0_i32_16 = arith.constant 0 : i32
    %65 = vector.broadcast %c0_i32_16 : i32 to vector<1x64xi32>
    %66 = arith.cmpi sge, %64, %65 : vector<1x64xi32>
    %c-2_i32_17 = arith.constant -2 : i32
    %67 = vector.broadcast %c-2_i32_17 : i32 to vector<1x64xi32>
    %68 = arith.addi %4, %67 : vector<1x64xi32>
    %c8_i32_18 = arith.constant 8 : i32
    %69 = vector.broadcast %c8_i32_18 : i32 to vector<1x64xi32>
    %70 = arith.cmpi slt, %68, %69 : vector<1x64xi32>
    %71 = arith.andi %66, %70 : vector<1x64xi1>
    %cst_19 = arith.constant 0.000000e+00 : f32
    %72 = vector.shape_cast %71 : vector<1x64xi1> to vector<1x64xi1>
    %73 = vector.broadcast %72 : vector<1x64xi1> to vector<32x64xi1>
    %74 = vector.broadcast %cst_19 : f32 to vector<32x64xf32>
    %75 = arith.select %73, %62, %74 : vector<32x64xi1>, vector<32x64xf32>
    %76 = vector.extract_strided_slice %1 {offsets = [0, 9], sizes = [32, 64], strides = [1, 1]} : vector<32x100xf32> to vector<32x64xf32>
    %c-1_i32_20 = arith.constant -1 : i32
    %77 = vector.broadcast %c-1_i32_20 : i32 to vector<1x64xi32>
    %78 = arith.addi %4, %77 : vector<1x64xi32>
    %c0_i32_21 = arith.constant 0 : i32
    %79 = vector.broadcast %c0_i32_21 : i32 to vector<1x64xi32>
    %80 = arith.cmpi sge, %78, %79 : vector<1x64xi32>
    %c-1_i32_22 = arith.constant -1 : i32
    %81 = vector.broadcast %c-1_i32_22 : i32 to vector<1x64xi32>
    %82 = arith.addi %4, %81 : vector<1x64xi32>
    %c8_i32_23 = arith.constant 8 : i32
    %83 = vector.broadcast %c8_i32_23 : i32 to vector<1x64xi32>
    %84 = arith.cmpi slt, %82, %83 : vector<1x64xi32>
    %85 = arith.andi %80, %84 : vector<1x64xi1>
    %cst_24 = arith.constant 0.000000e+00 : f32
    %86 = vector.shape_cast %85 : vector<1x64xi1> to vector<1x64xi1>
    %87 = vector.broadcast %86 : vector<1x64xi1> to vector<32x64xi1>
    %88 = vector.broadcast %cst_24 : f32 to vector<32x64xf32>
    %89 = arith.select %87, %76, %88 : vector<32x64xi1>, vector<32x64xf32>
    %90 = vector.extract_strided_slice %1 {offsets = [0, 10], sizes = [32, 64], strides = [1, 1]} : vector<32x100xf32> to vector<32x64xf32>
    %91 = vector.extract_strided_slice %1 {offsets = [0, 11], sizes = [32, 64], strides = [1, 1]} : vector<32x100xf32> to vector<32x64xf32>
    %c1_i32_25 = arith.constant 1 : i32
    %92 = vector.broadcast %c1_i32_25 : i32 to vector<1x64xi32>
    %93 = arith.addi %4, %92 : vector<1x64xi32>
    %c0_i32_26 = arith.constant 0 : i32
    %94 = vector.broadcast %c0_i32_26 : i32 to vector<1x64xi32>
    %95 = arith.cmpi sge, %93, %94 : vector<1x64xi32>
    %c1_i32_27 = arith.constant 1 : i32
    %96 = vector.broadcast %c1_i32_27 : i32 to vector<1x64xi32>
    %97 = arith.addi %4, %96 : vector<1x64xi32>
    %c8_i32_28 = arith.constant 8 : i32
    %98 = vector.broadcast %c8_i32_28 : i32 to vector<1x64xi32>
    %99 = arith.cmpi slt, %97, %98 : vector<1x64xi32>
    %100 = arith.andi %95, %99 : vector<1x64xi1>
    %cst_29 = arith.constant 0.000000e+00 : f32
    %101 = vector.shape_cast %100 : vector<1x64xi1> to vector<1x64xi1>
    %102 = vector.broadcast %101 : vector<1x64xi1> to vector<32x64xi1>
    %103 = vector.broadcast %cst_29 : f32 to vector<32x64xf32>
    %104 = arith.select %102, %91, %103 : vector<32x64xi1>, vector<32x64xf32>
    %105 = vector.extract_strided_slice %1 {offsets = [0, 12], sizes = [32, 64], strides = [1, 1]} : vector<32x100xf32> to vector<32x64xf32>
    %c2_i32_30 = arith.constant 2 : i32
    %106 = vector.broadcast %c2_i32_30 : i32 to vector<1x64xi32>
    %107 = arith.addi %4, %106 : vector<1x64xi32>
    %c0_i32_31 = arith.constant 0 : i32
    %108 = vector.broadcast %c0_i32_31 : i32 to vector<1x64xi32>
    %109 = arith.cmpi sge, %107, %108 : vector<1x64xi32>
    %c2_i32_32 = arith.constant 2 : i32
    %110 = vector.broadcast %c2_i32_32 : i32 to vector<1x64xi32>
    %111 = arith.addi %4, %110 : vector<1x64xi32>
    %c8_i32_33 = arith.constant 8 : i32
    %112 = vector.broadcast %c8_i32_33 : i32 to vector<1x64xi32>
    %113 = arith.cmpi slt, %111, %112 : vector<1x64xi32>
    %114 = arith.andi %109, %113 : vector<1x64xi1>
    %cst_34 = arith.constant 0.000000e+00 : f32
    %115 = vector.shape_cast %114 : vector<1x64xi1> to vector<1x64xi1>
    %116 = vector.broadcast %115 : vector<1x64xi1> to vector<32x64xi1>
    %117 = vector.broadcast %cst_34 : f32 to vector<32x64xf32>
    %118 = arith.select %116, %105, %117 : vector<32x64xi1>, vector<32x64xf32>
    %119 = vector.extract_strided_slice %1 {offsets = [0, 16], sizes = [32, 64], strides = [1, 1]} : vector<32x100xf32> to vector<32x64xf32>
    %c-2_i32_35 = arith.constant -2 : i32
    %120 = vector.broadcast %c-2_i32_35 : i32 to vector<1x64xi32>
    %121 = arith.addi %4, %120 : vector<1x64xi32>
    %c0_i32_36 = arith.constant 0 : i32
    %122 = vector.broadcast %c0_i32_36 : i32 to vector<1x64xi32>
    %123 = arith.cmpi sge, %121, %122 : vector<1x64xi32>
    %c-2_i32_37 = arith.constant -2 : i32
    %124 = vector.broadcast %c-2_i32_37 : i32 to vector<1x64xi32>
    %125 = arith.addi %4, %124 : vector<1x64xi32>
    %c8_i32_38 = arith.constant 8 : i32
    %126 = vector.broadcast %c8_i32_38 : i32 to vector<1x64xi32>
    %127 = arith.cmpi slt, %125, %126 : vector<1x64xi32>
    %128 = arith.andi %123, %127 : vector<1x64xi1>
    %cst_39 = arith.constant 0.000000e+00 : f32
    %129 = vector.shape_cast %128 : vector<1x64xi1> to vector<1x64xi1>
    %130 = vector.broadcast %129 : vector<1x64xi1> to vector<32x64xi1>
    %131 = vector.broadcast %cst_39 : f32 to vector<32x64xf32>
    %132 = arith.select %130, %119, %131 : vector<32x64xi1>, vector<32x64xf32>
    %133 = vector.extract_strided_slice %1 {offsets = [0, 17], sizes = [32, 64], strides = [1, 1]} : vector<32x100xf32> to vector<32x64xf32>
    %c-1_i32_40 = arith.constant -1 : i32
    %134 = vector.broadcast %c-1_i32_40 : i32 to vector<1x64xi32>
    %135 = arith.addi %4, %134 : vector<1x64xi32>
    %c0_i32_41 = arith.constant 0 : i32
    %136 = vector.broadcast %c0_i32_41 : i32 to vector<1x64xi32>
    %137 = arith.cmpi sge, %135, %136 : vector<1x64xi32>
    %c-1_i32_42 = arith.constant -1 : i32
    %138 = vector.broadcast %c-1_i32_42 : i32 to vector<1x64xi32>
    %139 = arith.addi %4, %138 : vector<1x64xi32>
    %c8_i32_43 = arith.constant 8 : i32
    %140 = vector.broadcast %c8_i32_43 : i32 to vector<1x64xi32>
    %141 = arith.cmpi slt, %139, %140 : vector<1x64xi32>
    %142 = arith.andi %137, %141 : vector<1x64xi1>
    %cst_44 = arith.constant 0.000000e+00 : f32
    %143 = vector.shape_cast %142 : vector<1x64xi1> to vector<1x64xi1>
    %144 = vector.broadcast %143 : vector<1x64xi1> to vector<32x64xi1>
    %145 = vector.broadcast %cst_44 : f32 to vector<32x64xf32>
    %146 = arith.select %144, %133, %145 : vector<32x64xi1>, vector<32x64xf32>
    %147 = vector.extract_strided_slice %1 {offsets = [0, 18], sizes = [32, 64], strides = [1, 1]} : vector<32x100xf32> to vector<32x64xf32>
    %148 = vector.extract_strided_slice %1 {offsets = [0, 19], sizes = [32, 64], strides = [1, 1]} : vector<32x100xf32> to vector<32x64xf32>
    %c1_i32_45 = arith.constant 1 : i32
    %149 = vector.broadcast %c1_i32_45 : i32 to vector<1x64xi32>
    %150 = arith.addi %4, %149 : vector<1x64xi32>
    %c0_i32_46 = arith.constant 0 : i32
    %151 = vector.broadcast %c0_i32_46 : i32 to vector<1x64xi32>
    %152 = arith.cmpi sge, %150, %151 : vector<1x64xi32>
    %c1_i32_47 = arith.constant 1 : i32
    %153 = vector.broadcast %c1_i32_47 : i32 to vector<1x64xi32>
    %154 = arith.addi %4, %153 : vector<1x64xi32>
    %c8_i32_48 = arith.constant 8 : i32
    %155 = vector.broadcast %c8_i32_48 : i32 to vector<1x64xi32>
    %156 = arith.cmpi slt, %154, %155 : vector<1x64xi32>
    %157 = arith.andi %152, %156 : vector<1x64xi1>
    %cst_49 = arith.constant 0.000000e+00 : f32
    %158 = vector.shape_cast %157 : vector<1x64xi1> to vector<1x64xi1>
    %159 = vector.broadcast %158 : vector<1x64xi1> to vector<32x64xi1>
    %160 = vector.broadcast %cst_49 : f32 to vector<32x64xf32>
    %161 = arith.select %159, %148, %160 : vector<32x64xi1>, vector<32x64xf32>
    %162 = vector.extract_strided_slice %1 {offsets = [0, 20], sizes = [32, 64], strides = [1, 1]} : vector<32x100xf32> to vector<32x64xf32>
    %c2_i32_50 = arith.constant 2 : i32
    %163 = vector.broadcast %c2_i32_50 : i32 to vector<1x64xi32>
    %164 = arith.addi %4, %163 : vector<1x64xi32>
    %c0_i32_51 = arith.constant 0 : i32
    %165 = vector.broadcast %c0_i32_51 : i32 to vector<1x64xi32>
    %166 = arith.cmpi sge, %164, %165 : vector<1x64xi32>
    %c2_i32_52 = arith.constant 2 : i32
    %167 = vector.broadcast %c2_i32_52 : i32 to vector<1x64xi32>
    %168 = arith.addi %4, %167 : vector<1x64xi32>
    %c8_i32_53 = arith.constant 8 : i32
    %169 = vector.broadcast %c8_i32_53 : i32 to vector<1x64xi32>
    %170 = arith.cmpi slt, %168, %169 : vector<1x64xi32>
    %171 = arith.andi %166, %170 : vector<1x64xi1>
    %cst_54 = arith.constant 0.000000e+00 : f32
    %172 = vector.shape_cast %171 : vector<1x64xi1> to vector<1x64xi1>
    %173 = vector.broadcast %172 : vector<1x64xi1> to vector<32x64xi1>
    %174 = vector.broadcast %cst_54 : f32 to vector<32x64xf32>
    %175 = arith.select %173, %162, %174 : vector<32x64xi1>, vector<32x64xf32>
    %176 = vector.extract_strided_slice %1 {offsets = [0, 24], sizes = [32, 64], strides = [1, 1]} : vector<32x100xf32> to vector<32x64xf32>
    %c-2_i32_55 = arith.constant -2 : i32
    %177 = vector.broadcast %c-2_i32_55 : i32 to vector<1x64xi32>
    %178 = arith.addi %4, %177 : vector<1x64xi32>
    %c0_i32_56 = arith.constant 0 : i32
    %179 = vector.broadcast %c0_i32_56 : i32 to vector<1x64xi32>
    %180 = arith.cmpi sge, %178, %179 : vector<1x64xi32>
    %c-2_i32_57 = arith.constant -2 : i32
    %181 = vector.broadcast %c-2_i32_57 : i32 to vector<1x64xi32>
    %182 = arith.addi %4, %181 : vector<1x64xi32>
    %c8_i32_58 = arith.constant 8 : i32
    %183 = vector.broadcast %c8_i32_58 : i32 to vector<1x64xi32>
    %184 = arith.cmpi slt, %182, %183 : vector<1x64xi32>
    %185 = arith.andi %180, %184 : vector<1x64xi1>
    %cst_59 = arith.constant 0.000000e+00 : f32
    %186 = vector.shape_cast %185 : vector<1x64xi1> to vector<1x64xi1>
    %187 = vector.broadcast %186 : vector<1x64xi1> to vector<32x64xi1>
    %188 = vector.broadcast %cst_59 : f32 to vector<32x64xf32>
    %189 = arith.select %187, %176, %188 : vector<32x64xi1>, vector<32x64xf32>
    %190 = vector.extract_strided_slice %1 {offsets = [0, 25], sizes = [32, 64], strides = [1, 1]} : vector<32x100xf32> to vector<32x64xf32>
    %c-1_i32_60 = arith.constant -1 : i32
    %191 = vector.broadcast %c-1_i32_60 : i32 to vector<1x64xi32>
    %192 = arith.addi %4, %191 : vector<1x64xi32>
    %c0_i32_61 = arith.constant 0 : i32
    %193 = vector.broadcast %c0_i32_61 : i32 to vector<1x64xi32>
    %194 = arith.cmpi sge, %192, %193 : vector<1x64xi32>
    %c-1_i32_62 = arith.constant -1 : i32
    %195 = vector.broadcast %c-1_i32_62 : i32 to vector<1x64xi32>
    %196 = arith.addi %4, %195 : vector<1x64xi32>
    %c8_i32_63 = arith.constant 8 : i32
    %197 = vector.broadcast %c8_i32_63 : i32 to vector<1x64xi32>
    %198 = arith.cmpi slt, %196, %197 : vector<1x64xi32>
    %199 = arith.andi %194, %198 : vector<1x64xi1>
    %cst_64 = arith.constant 0.000000e+00 : f32
    %200 = vector.shape_cast %199 : vector<1x64xi1> to vector<1x64xi1>
    %201 = vector.broadcast %200 : vector<1x64xi1> to vector<32x64xi1>
    %202 = vector.broadcast %cst_64 : f32 to vector<32x64xf32>
    %203 = arith.select %201, %190, %202 : vector<32x64xi1>, vector<32x64xf32>
    %204 = vector.extract_strided_slice %1 {offsets = [0, 26], sizes = [32, 64], strides = [1, 1]} : vector<32x100xf32> to vector<32x64xf32>
    %205 = vector.extract_strided_slice %1 {offsets = [0, 27], sizes = [32, 64], strides = [1, 1]} : vector<32x100xf32> to vector<32x64xf32>
    %c1_i32_65 = arith.constant 1 : i32
    %206 = vector.broadcast %c1_i32_65 : i32 to vector<1x64xi32>
    %207 = arith.addi %4, %206 : vector<1x64xi32>
    %c0_i32_66 = arith.constant 0 : i32
    %208 = vector.broadcast %c0_i32_66 : i32 to vector<1x64xi32>
    %209 = arith.cmpi sge, %207, %208 : vector<1x64xi32>
    %c1_i32_67 = arith.constant 1 : i32
    %210 = vector.broadcast %c1_i32_67 : i32 to vector<1x64xi32>
    %211 = arith.addi %4, %210 : vector<1x64xi32>
    %c8_i32_68 = arith.constant 8 : i32
    %212 = vector.broadcast %c8_i32_68 : i32 to vector<1x64xi32>
    %213 = arith.cmpi slt, %211, %212 : vector<1x64xi32>
    %214 = arith.andi %209, %213 : vector<1x64xi1>
    %cst_69 = arith.constant 0.000000e+00 : f32
    %215 = vector.shape_cast %214 : vector<1x64xi1> to vector<1x64xi1>
    %216 = vector.broadcast %215 : vector<1x64xi1> to vector<32x64xi1>
    %217 = vector.broadcast %cst_69 : f32 to vector<32x64xf32>
    %218 = arith.select %216, %205, %217 : vector<32x64xi1>, vector<32x64xf32>
    %219 = vector.extract_strided_slice %1 {offsets = [0, 28], sizes = [32, 64], strides = [1, 1]} : vector<32x100xf32> to vector<32x64xf32>
    %c2_i32_70 = arith.constant 2 : i32
    %220 = vector.broadcast %c2_i32_70 : i32 to vector<1x64xi32>
    %221 = arith.addi %4, %220 : vector<1x64xi32>
    %c0_i32_71 = arith.constant 0 : i32
    %222 = vector.broadcast %c0_i32_71 : i32 to vector<1x64xi32>
    %223 = arith.cmpi sge, %221, %222 : vector<1x64xi32>
    %c2_i32_72 = arith.constant 2 : i32
    %224 = vector.broadcast %c2_i32_72 : i32 to vector<1x64xi32>
    %225 = arith.addi %4, %224 : vector<1x64xi32>
    %c8_i32_73 = arith.constant 8 : i32
    %226 = vector.broadcast %c8_i32_73 : i32 to vector<1x64xi32>
    %227 = arith.cmpi slt, %225, %226 : vector<1x64xi32>
    %228 = arith.andi %223, %227 : vector<1x64xi1>
    %cst_74 = arith.constant 0.000000e+00 : f32
    %229 = vector.shape_cast %228 : vector<1x64xi1> to vector<1x64xi1>
    %230 = vector.broadcast %229 : vector<1x64xi1> to vector<32x64xi1>
    %231 = vector.broadcast %cst_74 : f32 to vector<32x64xf32>
    %232 = arith.select %230, %219, %231 : vector<32x64xi1>, vector<32x64xf32>
    %233 = vector.extract_strided_slice %1 {offsets = [0, 32], sizes = [32, 64], strides = [1, 1]} : vector<32x100xf32> to vector<32x64xf32>
    %c-2_i32_75 = arith.constant -2 : i32
    %234 = vector.broadcast %c-2_i32_75 : i32 to vector<1x64xi32>
    %235 = arith.addi %4, %234 : vector<1x64xi32>
    %c0_i32_76 = arith.constant 0 : i32
    %236 = vector.broadcast %c0_i32_76 : i32 to vector<1x64xi32>
    %237 = arith.cmpi sge, %235, %236 : vector<1x64xi32>
    %c-2_i32_77 = arith.constant -2 : i32
    %238 = vector.broadcast %c-2_i32_77 : i32 to vector<1x64xi32>
    %239 = arith.addi %4, %238 : vector<1x64xi32>
    %c8_i32_78 = arith.constant 8 : i32
    %240 = vector.broadcast %c8_i32_78 : i32 to vector<1x64xi32>
    %241 = arith.cmpi slt, %239, %240 : vector<1x64xi32>
    %242 = arith.andi %237, %241 : vector<1x64xi1>
    %cst_79 = arith.constant 0.000000e+00 : f32
    %243 = vector.shape_cast %242 : vector<1x64xi1> to vector<1x64xi1>
    %244 = vector.broadcast %243 : vector<1x64xi1> to vector<32x64xi1>
    %245 = vector.broadcast %cst_79 : f32 to vector<32x64xf32>
    %246 = arith.select %244, %233, %245 : vector<32x64xi1>, vector<32x64xf32>
    %247 = vector.extract_strided_slice %1 {offsets = [0, 33], sizes = [32, 64], strides = [1, 1]} : vector<32x100xf32> to vector<32x64xf32>
    %c-1_i32_80 = arith.constant -1 : i32
    %248 = vector.broadcast %c-1_i32_80 : i32 to vector<1x64xi32>
    %249 = arith.addi %4, %248 : vector<1x64xi32>
    %c0_i32_81 = arith.constant 0 : i32
    %250 = vector.broadcast %c0_i32_81 : i32 to vector<1x64xi32>
    %251 = arith.cmpi sge, %249, %250 : vector<1x64xi32>
    %c-1_i32_82 = arith.constant -1 : i32
    %252 = vector.broadcast %c-1_i32_82 : i32 to vector<1x64xi32>
    %253 = arith.addi %4, %252 : vector<1x64xi32>
    %c8_i32_83 = arith.constant 8 : i32
    %254 = vector.broadcast %c8_i32_83 : i32 to vector<1x64xi32>
    %255 = arith.cmpi slt, %253, %254 : vector<1x64xi32>
    %256 = arith.andi %251, %255 : vector<1x64xi1>
    %cst_84 = arith.constant 0.000000e+00 : f32
    %257 = vector.shape_cast %256 : vector<1x64xi1> to vector<1x64xi1>
    %258 = vector.broadcast %257 : vector<1x64xi1> to vector<32x64xi1>
    %259 = vector.broadcast %cst_84 : f32 to vector<32x64xf32>
    %260 = arith.select %258, %247, %259 : vector<32x64xi1>, vector<32x64xf32>
    %261 = vector.extract_strided_slice %1 {offsets = [0, 34], sizes = [32, 64], strides = [1, 1]} : vector<32x100xf32> to vector<32x64xf32>
    %262 = vector.extract_strided_slice %1 {offsets = [0, 35], sizes = [32, 64], strides = [1, 1]} : vector<32x100xf32> to vector<32x64xf32>
    %c1_i32_85 = arith.constant 1 : i32
    %263 = vector.broadcast %c1_i32_85 : i32 to vector<1x64xi32>
    %264 = arith.addi %4, %263 : vector<1x64xi32>
    %c0_i32_86 = arith.constant 0 : i32
    %265 = vector.broadcast %c0_i32_86 : i32 to vector<1x64xi32>
    %266 = arith.cmpi sge, %264, %265 : vector<1x64xi32>
    %c1_i32_87 = arith.constant 1 : i32
    %267 = vector.broadcast %c1_i32_87 : i32 to vector<1x64xi32>
    %268 = arith.addi %4, %267 : vector<1x64xi32>
    %c8_i32_88 = arith.constant 8 : i32
    %269 = vector.broadcast %c8_i32_88 : i32 to vector<1x64xi32>
    %270 = arith.cmpi slt, %268, %269 : vector<1x64xi32>
    %271 = arith.andi %266, %270 : vector<1x64xi1>
    %cst_89 = arith.constant 0.000000e+00 : f32
    %272 = vector.shape_cast %271 : vector<1x64xi1> to vector<1x64xi1>
    %273 = vector.broadcast %272 : vector<1x64xi1> to vector<32x64xi1>
    %274 = vector.broadcast %cst_89 : f32 to vector<32x64xf32>
    %275 = arith.select %273, %262, %274 : vector<32x64xi1>, vector<32x64xf32>
    %276 = vector.extract_strided_slice %1 {offsets = [0, 36], sizes = [32, 64], strides = [1, 1]} : vector<32x100xf32> to vector<32x64xf32>
    %c2_i32_90 = arith.constant 2 : i32
    %277 = vector.broadcast %c2_i32_90 : i32 to vector<1x64xi32>
    %278 = arith.addi %4, %277 : vector<1x64xi32>
    %c0_i32_91 = arith.constant 0 : i32
    %279 = vector.broadcast %c0_i32_91 : i32 to vector<1x64xi32>
    %280 = arith.cmpi sge, %278, %279 : vector<1x64xi32>
    %c2_i32_92 = arith.constant 2 : i32
    %281 = vector.broadcast %c2_i32_92 : i32 to vector<1x64xi32>
    %282 = arith.addi %4, %281 : vector<1x64xi32>
    %c8_i32_93 = arith.constant 8 : i32
    %283 = vector.broadcast %c8_i32_93 : i32 to vector<1x64xi32>
    %284 = arith.cmpi slt, %282, %283 : vector<1x64xi32>
    %285 = arith.andi %280, %284 : vector<1x64xi1>
    %cst_94 = arith.constant 0.000000e+00 : f32
    %286 = vector.shape_cast %285 : vector<1x64xi1> to vector<1x64xi1>
    %287 = vector.broadcast %286 : vector<1x64xi1> to vector<32x64xi1>
    %288 = vector.broadcast %cst_94 : f32 to vector<32x64xf32>
    %289 = arith.select %287, %276, %288 : vector<32x64xi1>, vector<32x64xf32>
    %290 = tpu.concatenate %18, %32, %33, %47, %61, %75, %89, %90, %104, %118, %132, %146, %147, %161, %175, %189 in 0 : vector<32x64xf32>, vector<32x64xf32>, vector<32x64xf32>, vector<32x64xf32>, vector<32x64xf32>, vector<32x64xf32>, vector<32x64xf32>, vector<32x64xf32>, vector<32x64xf32>, vector<32x64xf32>, vector<32x64xf32>, vector<32x64xf32>, vector<32x64xf32>, vector<32x64xf32>, vector<32x64xf32>, vector<32x64xf32> -> vector<512x64xf32>
    %291 = tpu.concatenate %203, %204, %218, %232, %246, %260, %261, %275, %289 in 0 : vector<32x64xf32>, vector<32x64xf32>, vector<32x64xf32>, vector<32x64xf32>, vector<32x64xf32>, vector<32x64xf32>, vector<32x64xf32>, vector<32x64xf32>, vector<32x64xf32> -> vector<288x64xf32>
    %292 = tpu.concatenate %290, %291 in 0 : vector<512x64xf32>, vector<288x64xf32> -> vector<800x64xf32>
    %c0_95 = arith.constant 0 : index
    %c0_96 = arith.constant 0 : index
    %293 = vector.load %arg2[%c0_95, %c0_96] : memref<64x800xf32, #tpu.memory_space<vmem>>, vector<64x800xf32>
    %cst_97 = arith.constant dense<0.000000e+00> : vector<64x64xf32>
    %294 = tpu.matmul %293, %292, %cst_97 {dimension_numbers = #tpu.dot_dimension_numbers<[1], [0], [0], [1], [0, 0, 1, 1], [], []>} : vector<64x800xf32>, vector<800x64xf32>, vector<64x64xf32> -> vector<64x64xf32>
    %c0_98 = arith.constant 0 : index
    %c0_99 = arith.constant 0 : index
    %295 = vector.load %arg3[%c0_98, %c0_99] : memref<64x1xf32, #tpu.memory_space<vmem>>, vector<64x1xf32>
    %296 = vector.broadcast %295 : vector<64x1xf32> to vector<64x64xf32>
    %297 = arith.addf %294, %296 : vector<64x64xf32>
    %c0_100 = arith.constant 0 : index
    %c0_101 = arith.constant 0 : index
    %c0_102 = arith.constant 0 : index
    %298 = vector.load %arg4[%c0_100, %c0_101, %c0_102] : memref<1x64x64xf32, #tpu.memory_space<vmem>>, vector<1x64x64xf32>
    %299 = vector.shape_cast %298 : vector<1x64x64xf32> to vector<64x64xf32>
    %300 = vector.shape_cast %297 : vector<64x64xf32> to vector<1x64x64xf32>
    tpu.vector_store %arg4[%c0_100, %c0_101, %c0_102], %300 {strides = array<i32>} : memref<1x64x64xf32, #tpu.memory_space<vmem>>, vector<1x64x64xf32>,
    return
  }
  func.func @transform_0(%arg0: i32) -> (i32, i32, i32) {
    %c0_i32 = arith.constant 0 : i32
    %c0_i32_0 = arith.constant 0 : i32
    %c0_i32_1 = arith.constant 0 : i32
    return %arg0, %c0_i32, %c0_i32_0 : i32, i32, i32
  }
  func.func @transform_1(%arg0: i32) -> (i32, i32) {
    %c0_i32 = arith.constant 0 : i32
    %c0_i32_0 = arith.constant 0 : i32
    %c0_i32_1 = arith.constant 0 : i32
    return %c0_i32, %c0_i32_0 : i32, i32
  }
  func.func @transform_2(%arg0: i32) -> (i32, i32) {
    %c0_i32 = arith.constant 0 : i32
    %c0_i32_0 = arith.constant 0 : i32
    %c0_i32_1 = arith.constant 0 : i32
    return %c0_i32, %c0_i32_0 : i32, i32
  }
  func.func @transform_3(%arg0: i32) -> (i32, i32, i32) {
    %c0_i32 = arith.constant 0 : i32
    %c0_i32_0 = arith.constant 0 : i32
    %c0_i32_1 = arith.constant 0 : i32
    return %arg0, %c0_i32, %c0_i32_0 : i32, i32, i32
  }
}

module attributes {stable_mosaic.version = 11 : i64} {
  func.func @_mlp_kernel(%arg0: i32, %arg1: memref<2x1024xf32, #tpu.memory_space<vmem>>, %arg2: memref<1024x64xf32, #tpu.memory_space<vmem>>, %arg3: memref<1x64xf32, #tpu.memory_space<vmem>>, %arg4: memref<64x10xf32, #tpu.memory_space<vmem>>, %arg5: memref<1x10xf32, #tpu.memory_space<vmem>>, %arg6: memref<2x10xf32, #tpu.memory_space<vmem>>) attributes {dimension_semantics = [#tpu.dimension_semantics<arbitrary>], iteration_bounds = array<i64: 1>, scalar_prefetch = 0 : i64, scratch_operands = 0 : i64, tpu.core_type = #tpu.core_type<tc>, window_params = [{pipeline_mode = #tpu.pipeline_mode<synchronous>, transform_indices = @transform_0, window_bounds = array<i64: 2, 1024>}, {pipeline_mode = #tpu.pipeline_mode<synchronous>, transform_indices = @transform_1, window_bounds = array<i64: 1024, 64>}, {pipeline_mode = #tpu.pipeline_mode<synchronous>, transform_indices = @transform_2, window_bounds = array<i64: 1, 64>}, {pipeline_mode = #tpu.pipeline_mode<synchronous>, transform_indices = @transform_3, window_bounds = array<i64: 64, 10>}, {pipeline_mode = #tpu.pipeline_mode<synchronous>, transform_indices = @transform_4, window_bounds = array<i64: 1, 10>}, {pipeline_mode = #tpu.pipeline_mode<synchronous>, transform_indices = @transform_5, window_bounds = array<i64: 2, 10>}]} {
    %c0 = arith.constant 0 : index
    %c0_0 = arith.constant 0 : index
    %0 = vector.load %arg1[%c0, %c0_0] : memref<2x1024xf32, #tpu.memory_space<vmem>>, vector<2x1024xf32>
    %c0_1 = arith.constant 0 : index
    %c0_2 = arith.constant 0 : index
    %1 = vector.load %arg2[%c0_1, %c0_2] : memref<1024x64xf32, #tpu.memory_space<vmem>>, vector<1024x64xf32>
    %cst = arith.constant dense<0.000000e+00> : vector<2x64xf32>
    %2 = tpu.matmul %0, %1, %cst {dimension_numbers = #tpu.dot_dimension_numbers<[1], [0], [0], [1], [0, 0, 1, 1], [], []>} : vector<2x1024xf32>, vector<1024x64xf32>, vector<2x64xf32> -> vector<2x64xf32>
    %c0_3 = arith.constant 0 : index
    %c0_4 = arith.constant 0 : index
    %3 = vector.load %arg3[%c0_3, %c0_4] : memref<1x64xf32, #tpu.memory_space<vmem>>, vector<1x64xf32>
    %4 = vector.broadcast %3 : vector<1x64xf32> to vector<2x64xf32>
    %5 = arith.addf %2, %4 : vector<2x64xf32>
    %c0_5 = arith.constant 0 : index
    %c0_6 = arith.constant 0 : index
    %6 = vector.load %arg4[%c0_5, %c0_6] : memref<64x10xf32, #tpu.memory_space<vmem>>, vector<64x10xf32>
    %cst_7 = arith.constant dense<0.000000e+00> : vector<2x10xf32>
    %7 = tpu.matmul %5, %6, %cst_7 {dimension_numbers = #tpu.dot_dimension_numbers<[1], [0], [0], [1], [0, 0, 1, 1], [], []>} : vector<2x64xf32>, vector<64x10xf32>, vector<2x10xf32> -> vector<2x10xf32>
    %c0_8 = arith.constant 0 : index
    %c0_9 = arith.constant 0 : index
    %8 = vector.load %arg5[%c0_8, %c0_9] : memref<1x10xf32, #tpu.memory_space<vmem>>, vector<1x10xf32>
    %9 = vector.broadcast %8 : vector<1x10xf32> to vector<2x10xf32>
    %10 = arith.addf %7, %9 : vector<2x10xf32>
    %c0_10 = arith.constant 0 : index
    %c0_11 = arith.constant 0 : index
    %11 = vector.load %arg6[%c0_10, %c0_11] : memref<2x10xf32, #tpu.memory_space<vmem>>, vector<2x10xf32>
    tpu.vector_store %arg6[%c0_10, %c0_11], %10 {strides = array<i32>} : memref<2x10xf32, #tpu.memory_space<vmem>>, vector<2x10xf32>,
    return
  }
  func.func @transform_0(%arg0: i32) -> (i32, i32) {
    %c0_i32 = arith.constant 0 : i32
    %c0_i32_0 = arith.constant 0 : i32
    %c0_i32_1 = arith.constant 0 : i32
    return %c0_i32, %c0_i32_0 : i32, i32
  }
  func.func @transform_1(%arg0: i32) -> (i32, i32) {
    %c0_i32 = arith.constant 0 : i32
    %c0_i32_0 = arith.constant 0 : i32
    %c0_i32_1 = arith.constant 0 : i32
    return %c0_i32, %c0_i32_0 : i32, i32
  }
  func.func @transform_2(%arg0: i32) -> (i32, i32) {
    %c0_i32 = arith.constant 0 : i32
    %c0_i32_0 = arith.constant 0 : i32
    %c0_i32_1 = arith.constant 0 : i32
    return %c0_i32, %c0_i32_0 : i32, i32
  }
  func.func @transform_3(%arg0: i32) -> (i32, i32) {
    %c0_i32 = arith.constant 0 : i32
    %c0_i32_0 = arith.constant 0 : i32
    %c0_i32_1 = arith.constant 0 : i32
    return %c0_i32, %c0_i32_0 : i32, i32
  }
  func.func @transform_4(%arg0: i32) -> (i32, i32) {
    %c0_i32 = arith.constant 0 : i32
    %c0_i32_0 = arith.constant 0 : i32
    %c0_i32_1 = arith.constant 0 : i32
    return %c0_i32, %c0_i32_0 : i32, i32
  }
  func.func @transform_5(%arg0: i32) -> (i32, i32) {
    %c0_i32 = arith.constant 0 : i32
    %c0_i32_0 = arith.constant 0 : i32
    %c0_i32_1 = arith.constant 0 : i32
    return %c0_i32, %c0_i32_0 : i32, i32
  }
}

</mosaic_0001>

<llo_original>
// kernel: forward.4
$region0: #{forward.4}
  #allocation0 [shape = 'u32[]', space=smem, size = 0x4, offset = 0x4, fixed_abs, tag = 'smem constant byte address 0x4 - core index']
  #allocation1 [shape = 'u32[144,128]{1,0:T(1,128)}', space=vmem, size = 0x12000, scoped, tag = 'internal scratch']
  %s0 = inlined_call_operand.vmem [shape: f32[2,8,1156], index: 0, kind: input, shape index: {}]
  %s1 = inlined_call_operand.vmem [shape: f32[32,200], index: 1, kind: input, shape index: {}]
  %s2 = inlined_call_operand.vmem [shape: f32[32,1], index: 2, kind: input, shape index: {}]
  %s3 = inlined_call_operand.vmem [shape: f32[2,32,1024], index: 3, kind: output, shape index: {}]
  %s4 = sld [smem:[#allocation0]]
  $region45: #{forward.4} parent=0
    _
  %s6 = ssub.s32 1, %s4
  %s7 = scalar_select 0, %s6, %s4
  loop: start=0, step=1, limit=4
  $region2: #{forward.4} parent=0 // loop_pre_header
    _
  $region3: #{forward.4} parent=0 // loop_header
    %s9 = sphi 0, %s13
    %p10 = scmp.ge.s32.totalorder %s9, 4
    %s19 = sphi 0, %s21
    %s22 = sphi 0, %s19
    %s23 = sphi 0, %s22
    %s39 = sphi 0, %s23
    %s43 = sphi 0, %s43
    %s45 = sphi 0, %s43
    %s46 = sphi 0, %s45
    %s60 = sphi 0, %s46
    %s64 = sphi 0, %s64
    %s66 = sphi 0, %s64
    %s67 = sphi 0, %s66
    %s81 = sphi 0, %s67
    %s87 = sphi 0, %s89
    %s90 = sphi 0, %s87
    %s91 = sphi 0, %s90
    %s107 = sphi 0, %s91
  $region4: #{forward.4} parent=0 // loop_header_branch
    %12 = sbr.rel (%p10) target = $region8
  $region5: #{forward.4} parent=0 // loop_body
    %s14 = ssub.s32 %s9, 1
    %s15 = ssub.s32 %s9, 2
    %s16 = sadd.s32 %s9, 1
    %s17 = ssub.s32 %s9, %s16
    %p18 = scmp.eq.s32.totalorder %s17, 0
    %s20 = sadd.s32 %s19, 1
    %s21 = scalar_select %p18, %s19, %s20
    %p24 = pneg %p18
    %p25 = scmp.eq.s32.totalorder %s9, 1
    %p26 = por %p24, %p25
    %p27 = scmp.ne.s32.totalorder %s19, %s22
    %p28 = scmp.eq.s32.totalorder %s9, 0
    %p29 = por %p27, %p28
    %p30 = scmp.ne.s32.totalorder %s19, %s22
    %p31 = scmp.eq.s32.totalorder %s14, 1
    %p32 = por %p30, %p31
    %p33 = scmp.ne.s32.totalorder %s22, %s23
    %p34 = scmp.eq.s32.totalorder %s14, 0
    %p35 = por %p33, %p34
    %p36 = scmp.ne.s32.totalorder %s22, %s23
    %p37 = scmp.eq.s32.totalorder %s15, 1
    %p38 = por %p36, %p37
    %p40 = scmp.ne.s32.totalorder %s23, %s39
    %p41 = scmp.eq.s32.totalorder %s15, 0
    %p42 = por %p40, %p41
    %s44 = sadd.s32 %s43, 1
    %p47 = scmp.eq.s32.totalorder %s9, 1
    %p48 = scmp.ne.s32.totalorder %s43, %s45
    %p49 = scmp.eq.s32.totalorder %s9, 0
    %p50 = por %p48, %p49
    %p51 = scmp.ne.s32.totalorder %s43, %s45
    %p52 = scmp.eq.s32.totalorder %s14, 1
    %p53 = por %p51, %p52
    %p54 = scmp.ne.s32.totalorder %s45, %s46
    %p55 = scmp.eq.s32.totalorder %s14, 0
    %p56 = por %p54, %p55
    %p57 = scmp.ne.s32.totalorder %s45, %s46
    %p58 = scmp.eq.s32.totalorder %s15, 1
    %p59 = por %p57, %p58
    %p61 = scmp.ne.s32.totalorder %s46, %s60
    %p62 = scmp.eq.s32.totalorder %s15, 0
    %p63 = por %p61, %p62
    %s65 = sadd.s32 %s64, 1
    %p68 = scmp.eq.s32.totalorder %s9, 1
    %p69 = scmp.ne.s32.totalorder %s64, %s66
    %p70 = scmp.eq.s32.totalorder %s9, 0
    %p71 = por %p69, %p70
    %p72 = scmp.ne.s32.totalorder %s64, %s66
    %p73 = scmp.eq.s32.totalorder %s14, 1
    %p74 = por %p72, %p73
    %p75 = scmp.ne.s32.totalorder %s66, %s67
    %p76 = scmp.eq.s32.totalorder %s14, 0
    %p77 = por %p75, %p76
    %p78 = scmp.ne.s32.totalorder %s66, %s67
    %p79 = scmp.eq.s32.totalorder %s15, 1
    %p80 = por %p78, %p79
    %p82 = scmp.ne.s32.totalorder %s67, %s81
    %p83 = scmp.eq.s32.totalorder %s15, 0
    %p84 = por %p82, %p83
    %s85 = ssub.s32 %s9, %s16
    %p86 = scmp.eq.s32.totalorder %s85, 0
    %s88 = sadd.s32 %s87, 1
    %s89 = scalar_select %p86, %s87, %s88
    %p92 = pneg %p86
    %p93 = scmp.eq.s32.totalorder %s9, 1
    %p94 = por %p92, %p93
    %p95 = scmp.ne.s32.totalorder %s87, %s90
    %p96 = scmp.eq.s32.totalorder %s9, 0
    %p97 = por %p95, %p96
    %p98 = scmp.ne.s32.totalorder %s87, %s90
    %p99 = scmp.eq.s32.totalorder %s14, 1
    %p100 = por %p98, %p99
    %p101 = scmp.ne.s32.totalorder %s90, %s91
    %p102 = scmp.eq.s32.totalorder %s14, 0
    %p103 = por %p101, %p102
    %p104 = scmp.ne.s32.totalorder %s90, %s91
    %p105 = scmp.eq.s32.totalorder %s15, 1
    %p106 = por %p104, %p105
    %p108 = scmp.ne.s32.totalorder %s91, %s107
    %p109 = scmp.eq.s32.totalorder %s15, 0
    %p110 = por %p108, %p109
    %p111 = scmp.le.s32.totalorder 1, %s9
    %p112 = scmp.lt.s32.totalorder %s9, 3
    %p113 = pnand %p111, %p112
    %p114 = pneg %p113
    // Predicated region
    $region9: #{forward.4} parent=5 // pred_check
      _
    $region10: #{forward.4} parent=5 // pred_check_branch
      %116 = sbr.rel (%p113) target = $region12
    $region11: #{forward.4} parent=5 // pred_region
      %s117 = ssub.s32 %s9, 1
      // Predicated region
      $region13: #{forward.4} parent=11 // pred_check
        %p118 = pneg %p56
      $region14: #{forward.4} parent=11 // pred_check_branch
        %120 = sbr.rel (%p118) target = $region16
      $region15: #{forward.4} parent=11 // pred_region
        _
      $region16: #{forward.4} parent=11 // pred_fallthru
        _
      // Predicated region
      $region17: #{forward.4} parent=11 // pred_check
        %p121 = pneg %p77
      $region18: #{forward.4} parent=11 // pred_check_branch
        %123 = sbr.rel (%p121) target = $region20
      $region19: #{forward.4} parent=11 // pred_region
        _
      $region20: #{forward.4} parent=11 // pred_fallthru
        _
    $region12: #{forward.4} parent=5 // pred_fallthru
      _
    %p124 = scmp.lt.s32.totalorder %s9, 2
    // Predicated region
    $region21: #{forward.4} parent=5 // pred_check
      %p125 = pneg %p124
    $region22: #{forward.4} parent=5 // pred_check_branch
      %127 = sbr.rel (%p125) target = $region24
    $region23: #{forward.4} parent=5 // pred_region
      // Predicated region
      $region25: #{forward.4} parent=23 // pred_check
        %p128 = pneg %p29
      $region26: #{forward.4} parent=23 // pred_check_branch
        %130 = sbr.rel (%p128) target = $region28
      $region27: #{forward.4} parent=23 // pred_region
        %p131 = scmp.lt.s32.totalorder %s9, 1
        %s132 = scalar_select %p131, %s9, 1
        %s133 = smul.addr %s132, 10
        %s134 = smul.addr %s133, 8
        %s135 = scalar_lea.vmem %s0, %s134
      $region28: #{forward.4} parent=23 // pred_fallthru
        _
    $region24: #{forward.4} parent=5 // pred_fallthru
      _
    %p136 = scmp.le.s32.totalorder 1, %s9
    %p137 = scmp.lt.s32.totalorder %s9, 3
    %p138 = pnand %p136, %p137
    %p139 = pneg %p138
    // Predicated region
    $region29: #{forward.4} parent=5 // pred_check
      _
    $region30: #{forward.4} parent=5 // pred_check_branch
      %141 = sbr.rel (%p138) target = $region32
    $region31: #{forward.4} parent=5 // pred_region
      %s142 = ssub.s32 %s9, 1
      %p143 = scmp.lt.s32.totalorder %s14, 1
      %s144 = scalar_select %p143, %s14, 1
      %s145 = smul.addr %s144, 10
      %s146 = smul.addr %s145, 8
      %s147 = scalar_lea.vmem %s0, %s146
      %p148 = pneg %p35
      %p149 = pneg %p32
      %p150 = pneg %p56
      %p151 = pneg %p53
      %p152 = pneg %p77
      %p153 = pneg %p74
      %p154 = pneg %p103
      %p155 = pneg %p100
      %p156 = scmp.lt.s32.totalorder %s14, 1
      %s157 = scalar_select %p156, %s14, 1
      %s158 = smul.addr %s157, 32
      %s159 = smul.addr %s158, 8
      %s160 = scalar_lea.vmem %s3, %s159
      %p161 = scmp.lt.s32.totalorder %s14, 1
      %s162 = scalar_select %p161, %s14, 1
      %s163 = smul.addr %s162, 10
      %s164 = smul.addr %s163, 8
      %s165 = scalar_lea.vmem %s0, %s164
      %p166 = scmp.lt.s32.totalorder %s14, 1
      %s167 = scalar_select %p166, %s14, 1
      %s168 = smul.addr %s167, 32
      %s169 = smul.addr %s168, 8
      %s170 = scalar_lea.vmem %s3, %s169
      %v171 = vld [vmem:[%s165] sm:$0xff]
      %v172 = vld [vmem:[%s165 + $0x8] sm:$0xff]
      %v173 = vld [vmem:[%s165 + $0x10] sm:$0xff]
      %v174 = vld [vmem:[%s165 + $0x18] sm:$0xff]
      %v175 = vld [vmem:[%s165 + $0x20] sm:$0xff]
      %v176 = vld [vmem:[%s165 + $0x28] sm:$0xff]
      %v177 = vld [vmem:[%s165 + $0x30] sm:$0xff]
      %v178 = vld [vmem:[%s165 + $0x38] sm:$0xff]
      %v179 = vld [vmem:[%s165 + $0x40] sm:$0xff]
      %v180 = vld [vmem:[%s165 + $0x48] sm:$0xff]
      %v181 = vlaneseq
      %v182 = vand.u32 %v181, 127
      %v183 = vadd.s32 %v182, 128
      %v184 = vadd.s32 %v182, 256
      %v185 = vadd.s32 %v182, 384
      %v186 = vadd.s32 %v182, 512
      %v187 = vadd.s32 %v182, 640
      %v188 = vadd.s32 %v182, 768
      %v189 = vadd.s32 %v182, 896
      %v190 = vand.u32 %v182, 31
      %v191 = vand.u32 %v183, 31
      %v192 = vand.u32 %v184, 31
      %v193 = vand.u32 %v185, 31
      %v194 = vand.u32 %v186, 31
      %v195 = vand.u32 %v187, 31
      %v196 = vand.u32 %v188, 31
      %v197 = vand.u32 %v189, 31
      %v198 = vadd.s32 %v190, 4294967294
      %v199 = vadd.s32 %v191, 4294967294
      %v200 = vadd.s32 %v192, 4294967294
      %v201 = vadd.s32 %v193, 4294967294
      %v202 = vadd.s32 %v194, 4294967294
      %v203 = vadd.s32 %v195, 4294967294
      %v204 = vadd.s32 %v196, 4294967294
      %v205 = vadd.s32 %v197, 4294967294
      %vm206 = vcmp.ge.s32.totalorder %v198, 0
      %vm207 = vcmp.ge.s32.totalorder %v199, 0
      %vm208 = vcmp.ge.s32.totalorder %v200, 0
      %vm209 = vcmp.ge.s32.totalorder %v201, 0
      %vm210 = vcmp.ge.s32.totalorder %v202, 0
      %vm211 = vcmp.ge.s32.totalorder %v203, 0
      %vm212 = vcmp.ge.s32.totalorder %v204, 0
      %vm213 = vcmp.ge.s32.totalorder %v205, 0
      %vm214 = vcmp.lt.s32.totalorder %v198, 32
      %vm215 = vcmp.lt.s32.totalorder %v199, 32
      %vm216 = vcmp.lt.s32.totalorder %v200, 32
      %vm217 = vcmp.lt.s32.totalorder %v201, 32
      %vm218 = vcmp.lt.s32.totalorder %v202, 32
      %vm219 = vcmp.lt.s32.totalorder %v203, 32
      %vm220 = vcmp.lt.s32.totalorder %v204, 32
      %vm221 = vcmp.lt.s32.totalorder %v205, 32
      %vm222 = vmand %vm206, %vm214
      %vm223 = vmand %vm207, %vm215
      %vm224 = vmand %vm208, %vm216
      %vm225 = vmand %vm209, %vm217
      %vm226 = vmand %vm210, %vm218
      %vm227 = vmand %vm211, %vm219
      %vm228 = vmand %vm212, %vm220
      %vm229 = vmand %vm213, %vm221
      %v230 = vsel %vm222, 1, 0
      %v231 = vsel %vm223, 1, 0
      %v232 = vsel %vm224, 1, 0
      %v233 = vsel %vm225, 1, 0
      %v234 = vsel %vm226, 1, 0
      %v235 = vsel %vm227, 1, 0
      %v236 = vsel %vm228, 1, 0
      %v237 = vsel %vm229, 1, 0
      %vm238 = vcmp.eq.s32.totalorder %v230, 1
      %vm239 = vcmp.eq.s32.totalorder %v231, 1
      %vm240 = vcmp.eq.s32.totalorder %v232, 1
      %vm241 = vcmp.eq.s32.totalorder %v233, 1
      %vm242 = vcmp.eq.s32.totalorder %v234, 1
      %vm243 = vcmp.eq.s32.totalorder %v235, 1
      %vm244 = vcmp.eq.s32.totalorder %v236, 1
      %vm245 = vcmp.eq.s32.totalorder %v237, 1
      %v246 = vsel %vm238, %v171, 0.0
      %v247 = vsel %vm239, %v172, 0.0
      %v248 = vsel %vm240, %v173, 0.0
      %v249 = vsel %vm241, %v174, 0.0
      %v250 = vsel %vm242, %v175, 0.0
      %v251 = vsel %vm243, %v176, 0.0
      %v252 = vsel %vm244, %v177, 0.0
      %v253 = vsel %vm245, %v178, 0.0
      %v254 = vadd.s32 %v190, 4294967295
      %v255 = vadd.s32 %v191, 4294967295
      %v256 = vadd.s32 %v192, 4294967295
      %v257 = vadd.s32 %v193, 4294967295
      %v258 = vadd.s32 %v194, 4294967295
      %v259 = vadd.s32 %v195, 4294967295
      %v260 = vadd.s32 %v196, 4294967295
      %v261 = vadd.s32 %v197, 4294967295
      %vm262 = vcmp.ge.s32.totalorder %v254, 0
      %vm263 = vcmp.ge.s32.totalorder %v255, 0
      %vm264 = vcmp.ge.s32.totalorder %v256, 0
      %vm265 = vcmp.ge.s32.totalorder %v257, 0
      %vm266 = vcmp.ge.s32.totalorder %v258, 0
      %vm267 = vcmp.ge.s32.totalorder %v259, 0
      %vm268 = vcmp.ge.s32.totalorder %v260, 0
      %vm269 = vcmp.ge.s32.totalorder %v261, 0
      %vm270 = vcmp.lt.s32.totalorder %v254, 32
      %vm271 = vcmp.lt.s32.totalorder %v255, 32
      %vm272 = vcmp.lt.s32.totalorder %v256, 32
      %vm273 = vcmp.lt.s32.totalorder %v257, 32
      %vm274 = vcmp.lt.s32.totalorder %v258, 32
      %vm275 = vcmp.lt.s32.totalorder %v259, 32
      %vm276 = vcmp.lt.s32.totalorder %v260, 32
      %vm277 = vcmp.lt.s32.totalorder %v261, 32
      %vm278 = vmand %vm262, %vm270
      %vm279 = vmand %vm263, %vm271
      %vm280 = vmand %vm264, %vm272
      %vm281 = vmand %vm265, %vm273
      %vm282 = vmand %vm266, %vm274
      %vm283 = vmand %vm267, %vm275
      %vm284 = vmand %vm268, %vm276
      %vm285 = vmand %vm269, %vm277
      %v286 = vsel %vm278, 1, 0
      %v287 = vsel %vm279, 1, 0
      %v288 = vsel %vm280, 1, 0
      %v289 = vsel %vm281, 1, 0
      %v290 = vsel %vm282, 1, 0
      %v291 = vsel %vm283, 1, 0
      %v292 = vsel %vm284, 1, 0
      %v293 = vsel %vm285, 1, 0
      %vm294 = vcmp.eq.s32.totalorder %v286, 1
      %vm295 = vcmp.eq.s32.totalorder %v287, 1
      %vm296 = vcmp.eq.s32.totalorder %v288, 1
      %vm297 = vcmp.eq.s32.totalorder %v289, 1
      %vm298 = vcmp.eq.s32.totalorder %v290, 1
      %vm299 = vcmp.eq.s32.totalorder %v291, 1
      %vm300 = vcmp.eq.s32.totalorder %v292, 1
      %vm301 = vcmp.eq.s32.totalorder %v293, 1
      %311 = vrot.lane.b32.xlu0 %v171, 127
      %v312 = vpop.permute.xlu0 %311
      %313 = vrot.lane.b32.xlu0 %v172, 127
      %v314 = vpop.permute.xlu0 %313
      %315 = vrot.lane.b32.xlu0 %v173, 127
      %v316 = vpop.permute.xlu0 %315
      %317 = vrot.lane.b32.xlu0 %v174, 127
      %v318 = vpop.permute.xlu0 %317
      %319 = vrot.lane.b32.xlu0 %v175, 127
      %v320 = vpop.permute.xlu0 %319
      %321 = vrot.lane.b32.xlu0 %v176, 127
      %v322 = vpop.permute.xlu0 %321
      %323 = vrot.lane.b32.xlu0 %v177, 127
      %v324 = vpop.permute.xlu0 %323
      %325 = vrot.lane.b32.xlu0 %v178, 127
      %v326 = vpop.permute.xlu0 %325
      %327 = vrot.lane.b32.xlu0 %v179, 127
      %v328 = vpop.permute.xlu0 %327
      %vm329 = vcmask 1039360
      %v330 = vsel %vm329, %v312, %v314
      %v331 = vsel %vm329, %v314, %v316
      %v332 = vsel %vm329, %v316, %v318
      %v333 = vsel %vm329, %v318, %v320
      %v334 = vsel %vm329, %v320, %v322
      %v335 = vsel %vm329, %v322, %v324
      %v336 = vsel %vm329, %v324, %v326
      %v337 = vsel %vm329, %v326, %v328
      %v346 = vsel %vm294, %v330, 0.0
      %v347 = vsel %vm295, %v331, 0.0
      %v348 = vsel %vm296, %v332, 0.0
      %v349 = vsel %vm297, %v333, 0.0
      %v350 = vsel %vm298, %v334, 0.0
      %v351 = vsel %vm299, %v335, 0.0
      %v352 = vsel %vm300, %v336, 0.0
      %v353 = vsel %vm301, %v337, 0.0
      %v354 = vadd.s32 %v190, 1
      %v355 = vadd.s32 %v191, 1
      %v356 = vadd.s32 %v192, 1
      %v357 = vadd.s32 %v193, 1
      %v358 = vadd.s32 %v194, 1
      %v359 = vadd.s32 %v195, 1
      %v360 = vadd.s32 %v196, 1
      %v361 = vadd.s32 %v197, 1
      %vm362 = vcmp.ge.s32.totalorder %v354, 0
      %vm363 = vcmp.ge.s32.totalorder %v355, 0
      %vm364 = vcmp.ge.s32.totalorder %v356, 0
      %vm365 = vcmp.ge.s32.totalorder %v357, 0
      %vm366 = vcmp.ge.s32.totalorder %v358, 0
      %vm367 = vcmp.ge.s32.totalorder %v359, 0
      %vm368 = vcmp.ge.s32.totalorder %v360, 0
      %vm369 = vcmp.ge.s32.totalorder %v361, 0
      %vm370 = vcmp.lt.s32.totalorder %v354, 32
      %vm371 = vcmp.lt.s32.totalorder %v355, 32
      %vm372 = vcmp.lt.s32.totalorder %v356, 32
      %vm373 = vcmp.lt.s32.totalorder %v357, 32
      %vm374 = vcmp.lt.s32.totalorder %v358, 32
      %vm375 = vcmp.lt.s32.totalorder %v359, 32
      %vm376 = vcmp.lt.s32.totalorder %v360, 32
      %vm377 = vcmp.lt.s32.totalorder %v361, 32
      %vm378 = vmand %vm362, %vm370
      %vm379 = vmand %vm363, %vm371
      %vm380 = vmand %vm364, %vm372
      %vm381 = vmand %vm365, %vm373
      %vm382 = vmand %vm366, %vm374
      %vm383 = vmand %vm367, %vm375
      %vm384 = vmand %vm368, %vm376
      %vm385 = vmand %vm369, %vm377
      %v386 = vsel %vm378, 1, 0
      %v387 = vsel %vm379, 1, 0
      %v388 = vsel %vm380, 1, 0
      %v389 = vsel %vm381, 1, 0
      %v390 = vsel %vm382, 1, 0
      %v391 = vsel %vm383, 1, 0
      %v392 = vsel %vm384, 1, 0
      %v393 = vsel %vm385, 1, 0
      %vm394 = vcmp.eq.s32.totalorder %v386, 1
      %vm395 = vcmp.eq.s32.totalorder %v387, 1
      %vm396 = vcmp.eq.s32.totalorder %v388, 1
      %vm397 = vcmp.eq.s32.totalorder %v389, 1
      %vm398 = vcmp.eq.s32.totalorder %v390, 1
      %vm399 = vcmp.eq.s32.totalorder %v391, 1
      %vm400 = vcmp.eq.s32.totalorder %v392, 1
      %vm401 = vcmp.eq.s32.totalorder %v393, 1
      %402 = vrot.lane.b32.xlu0 %v171, 125
      %v403 = vpop.permute.xlu0 %402
      %404 = vrot.lane.b32.xlu0 %v172, 125
      %v405 = vpop.permute.xlu0 %404
      %406 = vrot.lane.b32.xlu0 %v173, 125
      %v407 = vpop.permute.xlu0 %406
      %408 = vrot.lane.b32.xlu0 %v174, 125
      %v409 = vpop.permute.xlu0 %408
      %410 = vrot.lane.b32.xlu0 %v175, 125
      %v411 = vpop.permute.xlu0 %410
      %412 = vrot.lane.b32.xlu0 %v176, 125
      %v413 = vpop.permute.xlu0 %412
      %414 = vrot.lane.b32.xlu0 %v177, 125
      %v415 = vpop.permute.xlu0 %414
      %416 = vrot.lane.b32.xlu0 %v178, 125
      %v417 = vpop.permute.xlu0 %416
      %418 = vrot.lane.b32.xlu0 %v179, 125
      %v419 = vpop.permute.xlu0 %418
      %vm420 = vcmask 1022976
      %v421 = vsel %vm420, %v403, %v405
      %v422 = vsel %vm420, %v405, %v407
      %v423 = vsel %vm420, %v407, %v409
      %v424 = vsel %vm420, %v409, %v411
      %v425 = vsel %vm420, %v411, %v413
      %v426 = vsel %vm420, %v413, %v415
      %v427 = vsel %vm420, %v415, %v417
      %v428 = vsel %vm420, %v417, %v419
      %v437 = vsel %vm394, %v421, 0.0
      %v438 = vsel %vm395, %v422, 0.0
      %v439 = vsel %vm396, %v423, 0.0
      %v440 = vsel %vm397, %v424, 0.0
      %v441 = vsel %vm398, %v425, 0.0
      %v442 = vsel %vm399, %v426, 0.0
      %v443 = vsel %vm400, %v427, 0.0
      %v444 = vsel %vm401, %v428, 0.0
      %v445 = vadd.s32 %v190, 2
      %v446 = vadd.s32 %v191, 2
      %v447 = vadd.s32 %v192, 2
      %v448 = vadd.s32 %v193, 2
      %v449 = vadd.s32 %v194, 2
      %v450 = vadd.s32 %v195, 2
      %v451 = vadd.s32 %v196, 2
      %v452 = vadd.s32 %v197, 2
      %vm453 = vcmp.ge.s32.totalorder %v445, 0
      %vm454 = vcmp.ge.s32.totalorder %v446, 0
      %vm455 = vcmp.ge.s32.totalorder %v447, 0
      %vm456 = vcmp.ge.s32.totalorder %v448, 0
      %vm457 = vcmp.ge.s32.totalorder %v449, 0
      %vm458 = vcmp.ge.s32.totalorder %v450, 0
      %vm459 = vcmp.ge.s32.totalorder %v451, 0
      %vm460 = vcmp.ge.s32.totalorder %v452, 0
      %vm461 = vcmp.lt.s32.totalorder %v445, 32
      %vm462 = vcmp.lt.s32.totalorder %v446, 32
      %vm463 = vcmp.lt.s32.totalorder %v447, 32
      %vm464 = vcmp.lt.s32.totalorder %v448, 32
      %vm465 = vcmp.lt.s32.totalorder %v449, 32
      %vm466 = vcmp.lt.s32.totalorder %v450, 32
      %vm467 = vcmp.lt.s32.totalorder %v451, 32
      %vm468 = vcmp.lt.s32.totalorder %v452, 32
      %vm469 = vmand %vm453, %vm461
      %vm470 = vmand %vm454, %vm462
      %vm471 = vmand %vm455, %vm463
      %vm472 = vmand %vm456, %vm464
      %vm473 = vmand %vm457, %vm465
      %vm474 = vmand %vm458, %vm466
      %vm475 = vmand %vm459, %vm467
      %vm476 = vmand %vm460, %vm468
      %v477 = vsel %vm469, 1, 0
      %v478 = vsel %vm470, 1, 0
      %v479 = vsel %vm471, 1, 0
      %v480 = vsel %vm472, 1, 0
      %v481 = vsel %vm473, 1, 0
      %v482 = vsel %vm474, 1, 0
      %v483 = vsel %vm475, 1, 0
      %v484 = vsel %vm476, 1, 0
      %vm485 = vcmp.eq.s32.totalorder %v477, 1
      %vm486 = vcmp.eq.s32.totalorder %v478, 1
      %vm487 = vcmp.eq.s32.totalorder %v479, 1
      %vm488 = vcmp.eq.s32.totalorder %v480, 1
      %vm489 = vcmp.eq.s32.totalorder %v481, 1
      %vm490 = vcmp.eq.s32.totalorder %v482, 1
      %vm491 = vcmp.eq.s32.totalorder %v483, 1
      %vm492 = vcmp.eq.s32.totalorder %v484, 1
      %493 = vrot.lane.b32.xlu0 %v171, 124
      %v494 = vpop.permute.xlu0 %493
      %495 = vrot.lane.b32.xlu0 %v172, 124
      %v496 = vpop.permute.xlu0 %495
      %497 = vrot.lane.b32.xlu0 %v173, 124
      %v498 = vpop.permute.xlu0 %497
      %499 = vrot.lane.b32.xlu0 %v174, 124
      %v500 = vpop.permute.xlu0 %499
      %501 = vrot.lane.b32.xlu0 %v175, 124
      %v502 = vpop.permute.xlu0 %501
      %503 = vrot.lane.b32.xlu0 %v176, 124
      %v504 = vpop.permute.xlu0 %503
      %505 = vrot.lane.b32.xlu0 %v177, 124
      %v506 = vpop.permute.xlu0 %505
      %507 = vrot.lane.b32.xlu0 %v178, 124
      %v508 = vpop.permute.xlu0 %507
      %509 = vrot.lane.b32.xlu0 %v179, 124
      %v510 = vpop.permute.xlu0 %509
      %vm511 = vcmask 1014784
      %v512 = vsel %vm511, %v494, %v496
      %v513 = vsel %vm511, %v496, %v498
      %v514 = vsel %vm511, %v498, %v500
      %v515 = vsel %vm511, %v500, %v502
      %v516 = vsel %vm511, %v502, %v504
      %v517 = vsel %vm511, %v504, %v506
      %v518 = vsel %vm511, %v506, %v508
      %v519 = vsel %vm511, %v508, %v510
      %v528 = vsel %vm485, %v512, 0.0
      %v529 = vsel %vm486, %v513, 0.0
      %v530 = vsel %vm487, %v514, 0.0
      %v531 = vsel %vm488, %v515, 0.0
      %v532 = vsel %vm489, %v516, 0.0
      %v533 = vsel %vm490, %v517, 0.0
      %v534 = vsel %vm491, %v518, 0.0
      %v535 = vsel %vm492, %v519, 0.0
      %536 = vrot.lane.b32.xlu0 %v171, 96
      %v537 = vpop.permute.xlu0 %536
      %538 = vrot.lane.b32.xlu0 %v172, 96
      %v539 = vpop.permute.xlu0 %538
      %540 = vrot.lane.b32.xlu0 %v173, 96
      %v541 = vpop.permute.xlu0 %540
      %542 = vrot.lane.b32.xlu0 %v174, 96
      %v543 = vpop.permute.xlu0 %542
      %544 = vrot.lane.b32.xlu0 %v175, 96
      %v545 = vpop.permute.xlu0 %544
      %546 = vrot.lane.b32.xlu0 %v176, 96
      %v547 = vpop.permute.xlu0 %546
      %548 = vrot.lane.b32.xlu0 %v177, 96
      %v549 = vpop.permute.xlu0 %548
      %550 = vrot.lane.b32.xlu0 %v178, 96
      %v551 = vpop.permute.xlu0 %550
      %552 = vrot.lane.b32.xlu0 %v179, 96
      %v553 = vpop.permute.xlu0 %552
      %vm554 = vcmask 785408
      %v555 = vsel %vm554, %v537, %v539
      %v556 = vsel %vm554, %v539, %v541
      %v557 = vsel %vm554, %v541, %v543
      %v558 = vsel %vm554, %v543, %v545
      %v559 = vsel %vm554, %v545, %v547
      %v560 = vsel %vm554, %v547, %v549
      %v561 = vsel %vm554, %v549, %v551
      %v562 = vsel %vm554, %v551, %v553
      %v571 = vsel %vm238, %v555, 0.0
      %v572 = vsel %vm239, %v556, 0.0
      %v573 = vsel %vm240, %v557, 0.0
      %v574 = vsel %vm241, %v558, 0.0
      %v575 = vsel %vm242, %v559, 0.0
      %v576 = vsel %vm243, %v560, 0.0
      %v577 = vsel %vm244, %v561, 0.0
      %v578 = vsel %vm245, %v562, 0.0
      %579 = vrot.lane.b32.xlu0 %v171, 95
      %v580 = vpop.permute.xlu0 %579
      %581 = vrot.lane.b32.xlu0 %v172, 95
      %v582 = vpop.permute.xlu0 %581
      %583 = vrot.lane.b32.xlu0 %v173, 95
      %v584 = vpop.permute.xlu0 %583
      %585 = vrot.lane.b32.xlu0 %v174, 95
      %v586 = vpop.permute.xlu0 %585
      %587 = vrot.lane.b32.xlu0 %v175, 95
      %v588 = vpop.permute.xlu0 %587
      %589 = vrot.lane.b32.xlu0 %v176, 95
      %v590 = vpop.permute.xlu0 %589
      %591 = vrot.lane.b32.xlu0 %v177, 95
      %v592 = vpop.permute.xlu0 %591
      %593 = vrot.lane.b32.xlu0 %v178, 95
      %v594 = vpop.permute.xlu0 %593
      %595 = vrot.lane.b32.xlu0 %v179, 95
      %v596 = vpop.permute.xlu0 %595
      %vm597 = vcmask 777216
      %v598 = vsel %vm597, %v580, %v582
      %v599 = vsel %vm597, %v582, %v584
      %v600 = vsel %vm597, %v584, %v586
      %v601 = vsel %vm597, %v586, %v588
      %v602 = vsel %vm597, %v588, %v590
      %v603 = vsel %vm597, %v590, %v592
      %v604 = vsel %vm597, %v592, %v594
      %v605 = vsel %vm597, %v594, %v596
      %v614 = vsel %vm294, %v598, 0.0
      %v615 = vsel %vm295, %v599, 0.0
      %v616 = vsel %vm296, %v600, 0.0
      %v617 = vsel %vm297, %v601, 0.0
      %v618 = vsel %vm298, %v602, 0.0
      %v619 = vsel %vm299, %v603, 0.0
      %v620 = vsel %vm300, %v604, 0.0
      %v621 = vsel %vm301, %v605, 0.0
      %622 = vrot.lane.b32.xlu0 %v171, 93
      %v623 = vpop.permute.xlu0 %622
      %624 = vrot.lane.b32.xlu0 %v172, 93
      %v625 = vpop.permute.xlu0 %624
      %626 = vrot.lane.b32.xlu0 %v173, 93
      %v627 = vpop.permute.xlu0 %626
      %628 = vrot.lane.b32.xlu0 %v174, 93
      %v629 = vpop.permute.xlu0 %628
      %630 = vrot.lane.b32.xlu0 %v175, 93
      %v631 = vpop.permute.xlu0 %630
      %632 = vrot.lane.b32.xlu0 %v176, 93
      %v633 = vpop.permute.xlu0 %632
      %634 = vrot.lane.b32.xlu0 %v177, 93
      %v635 = vpop.permute.xlu0 %634
      %636 = vrot.lane.b32.xlu0 %v178, 93
      %v637 = vpop.permute.xlu0 %636
      %638 = vrot.lane.b32.xlu0 %v179, 93
      %v639 = vpop.permute.xlu0 %638
      %vm640 = vcmask 760832
      %v641 = vsel %vm640, %v623, %v625
      %v642 = vsel %vm640, %v625, %v627
      %v643 = vsel %vm640, %v627, %v629
      %v644 = vsel %vm640, %v629, %v631
      %v645 = vsel %vm640, %v631, %v633
      %v646 = vsel %vm640, %v633, %v635
      %v647 = vsel %vm640, %v635, %v637
      %v648 = vsel %vm640, %v637, %v639
      %v657 = vsel %vm394, %v641, 0.0
      %v658 = vsel %vm395, %v642, 0.0
      %v659 = vsel %vm396, %v643, 0.0
      %v660 = vsel %vm397, %v644, 0.0
      %v661 = vsel %vm398, %v645, 0.0
      %v662 = vsel %vm399, %v646, 0.0
      %v663 = vsel %vm400, %v647, 0.0
      %v664 = vsel %vm401, %v648, 0.0
      %665 = vrot.lane.b32.xlu0 %v171, 92
      %v666 = vpop.permute.xlu0 %665
      %667 = vrot.lane.b32.xlu0 %v172, 92
      %v668 = vpop.permute.xlu0 %667
      %669 = vrot.lane.b32.xlu0 %v173, 92
      %v670 = vpop.permute.xlu0 %669
      %671 = vrot.lane.b32.xlu0 %v174, 92
      %v672 = vpop.permute.xlu0 %671
      %673 = vrot.lane.b32.xlu0 %v175, 92
      %v674 = vpop.permute.xlu0 %673
      %675 = vrot.lane.b32.xlu0 %v176, 92
      %v676 = vpop.permute.xlu0 %675
      %677 = vrot.lane.b32.xlu0 %v177, 92
      %v678 = vpop.permute.xlu0 %677
      %679 = vrot.lane.b32.xlu0 %v178, 92
      %v680 = vpop.permute.xlu0 %679
      %681 = vrot.lane.b32.xlu0 %v179, 92
      %v682 = vpop.permute.xlu0 %681
      %vm683 = vcmask 752640
      %v684 = vsel %vm683, %v666, %v668
      %v685 = vsel %vm683, %v668, %v670
      %v686 = vsel %vm683, %v670, %v672
      %v687 = vsel %vm683, %v672, %v674
      %v688 = vsel %vm683, %v674, %v676
      %v689 = vsel %vm683, %v676, %v678
      %v690 = vsel %vm683, %v678, %v680
      %v691 = vsel %vm683, %v680, %v682
      %v700 = vsel %vm485, %v684, 0.0
      %v701 = vsel %vm486, %v685, 0.0
      %v702 = vsel %vm487, %v686, 0.0
      %v703 = vsel %vm488, %v687, 0.0
      %v704 = vsel %vm489, %v688, 0.0
      %v705 = vsel %vm490, %v689, 0.0
      %v706 = vsel %vm491, %v690, 0.0
      %v707 = vsel %vm492, %v691, 0.0
      %708 = vrot.lane.b32.xlu0 %v171, 64
      %v709 = vpop.permute.xlu0 %708
      %710 = vrot.lane.b32.xlu0 %v172, 64
      %v711 = vpop.permute.xlu0 %710
      %712 = vrot.lane.b32.xlu0 %v173, 64
      %v713 = vpop.permute.xlu0 %712
      %714 = vrot.lane.b32.xlu0 %v174, 64
      %v715 = vpop.permute.xlu0 %714
      %716 = vrot.lane.b32.xlu0 %v175, 64
      %v717 = vpop.permute.xlu0 %716
      %718 = vrot.lane.b32.xlu0 %v176, 64
      %v719 = vpop.permute.xlu0 %718
      %720 = vrot.lane.b32.xlu0 %v177, 64
      %v721 = vpop.permute.xlu0 %720
      %722 = vrot.lane.b32.xlu0 %v178, 64
      %v723 = vpop.permute.xlu0 %722
      %724 = vrot.lane.b32.xlu0 %v179, 64
      %v725 = vpop.permute.xlu0 %724
      %vm726 = vcmask 523264
      %v727 = vsel %vm726, %v709, %v711
      %v728 = vsel %vm726, %v711, %v713
      %v729 = vsel %vm726, %v713, %v715
      %v730 = vsel %vm726, %v715, %v717
      %v731 = vsel %vm726, %v717, %v719
      %v732 = vsel %vm726, %v719, %v721
      %v733 = vsel %vm726, %v721, %v723
      %v734 = vsel %vm726, %v723, %v725
      %v743 = vsel %vm238, %v727, 0.0
      %v744 = vsel %vm239, %v728, 0.0
      %v745 = vsel %vm240, %v729, 0.0
      %v746 = vsel %vm241, %v730, 0.0
      %v747 = vsel %vm242, %v731, 0.0
      %v748 = vsel %vm243, %v732, 0.0
      %v749 = vsel %vm244, %v733, 0.0
      %v750 = vsel %vm245, %v734, 0.0
      %751 = vrot.lane.b32.xlu0 %v171, 63
      %v752 = vpop.permute.xlu0 %751
      %753 = vrot.lane.b32.xlu0 %v172, 63
      %v754 = vpop.permute.xlu0 %753
      %755 = vrot.lane.b32.xlu0 %v173, 63
      %v756 = vpop.permute.xlu0 %755
      %757 = vrot.lane.b32.xlu0 %v174, 63
      %v758 = vpop.permute.xlu0 %757
      %759 = vrot.lane.b32.xlu0 %v175, 63
      %v760 = vpop.permute.xlu0 %759
      %761 = vrot.lane.b32.xlu0 %v176, 63
      %v762 = vpop.permute.xlu0 %761
      %763 = vrot.lane.b32.xlu0 %v177, 63
      %v764 = vpop.permute.xlu0 %763
      %765 = vrot.lane.b32.xlu0 %v178, 63
      %v766 = vpop.permute.xlu0 %765
      %767 = vrot.lane.b32.xlu0 %v179, 63
      %v768 = vpop.permute.xlu0 %767
      %vm769 = vcmask 515072
      %v770 = vsel %vm769, %v752, %v754
      %v771 = vsel %vm769, %v754, %v756
      %v772 = vsel %vm769, %v756, %v758
      %v773 = vsel %vm769, %v758, %v760
      %v774 = vsel %vm769, %v760, %v762
      %v775 = vsel %vm769, %v762, %v764
      %v776 = vsel %vm769, %v764, %v766
      %v777 = vsel %vm769, %v766, %v768
      %v786 = vsel %vm294, %v770, 0.0
      %v787 = vsel %vm295, %v771, 0.0
      %v788 = vsel %vm296, %v772, 0.0
      %v789 = vsel %vm297, %v773, 0.0
      %v790 = vsel %vm298, %v774, 0.0
      %v791 = vsel %vm299, %v775, 0.0
      %v792 = vsel %vm300, %v776, 0.0
      %v793 = vsel %vm301, %v777, 0.0
      %794 = vrot.lane.b32.xlu0 %v171, 61
      %v795 = vpop.permute.xlu0 %794
      %796 = vrot.lane.b32.xlu0 %v172, 61
      %v797 = vpop.permute.xlu0 %796
      %798 = vrot.lane.b32.xlu0 %v173, 61
      %v799 = vpop.permute.xlu0 %798
      %800 = vrot.lane.b32.xlu0 %v174, 61
      %v801 = vpop.permute.xlu0 %800
      %802 = vrot.lane.b32.xlu0 %v175, 61
      %v803 = vpop.permute.xlu0 %802
      %804 = vrot.lane.b32.xlu0 %v176, 61
      %v805 = vpop.permute.xlu0 %804
      %806 = vrot.lane.b32.xlu0 %v177, 61
      %v807 = vpop.permute.xlu0 %806
      %808 = vrot.lane.b32.xlu0 %v178, 61
      %v809 = vpop.permute.xlu0 %808
      %810 = vrot.lane.b32.xlu0 %v179, 61
      %v811 = vpop.permute.xlu0 %810
      %vm812 = vcmask 498688
      %v813 = vsel %vm812, %v795, %v797
      %v814 = vsel %vm812, %v797, %v799
      %v815 = vsel %vm812, %v799, %v801
      %v816 = vsel %vm812, %v801, %v803
      %v817 = vsel %vm812, %v803, %v805
      %v818 = vsel %vm812, %v805, %v807
      %v819 = vsel %vm812, %v807, %v809
      %v820 = vsel %vm812, %v809, %v811
      %v829 = vsel %vm394, %v813, 0.0
      %v830 = vsel %vm395, %v814, 0.0
      %v831 = vsel %vm396, %v815, 0.0
      %v832 = vsel %vm397, %v816, 0.0
      %v833 = vsel %vm398, %v817, 0.0
      %v834 = vsel %vm399, %v818, 0.0
      %v835 = vsel %vm400, %v819, 0.0
      %v836 = vsel %vm401, %v820, 0.0
      %837 = vrot.lane.b32.xlu0 %v171, 60
      %v838 = vpop.permute.xlu0 %837
      %839 = vrot.lane.b32.xlu0 %v172, 60
      %v840 = vpop.permute.xlu0 %839
      %841 = vrot.lane.b32.xlu0 %v173, 60
      %v842 = vpop.permute.xlu0 %841
      %843 = vrot.lane.b32.xlu0 %v174, 60
      %v844 = vpop.permute.xlu0 %843
      %845 = vrot.lane.b32.xlu0 %v175, 60
      %v846 = vpop.permute.xlu0 %845
      %847 = vrot.lane.b32.xlu0 %v176, 60
      %v848 = vpop.permute.xlu0 %847
      %849 = vrot.lane.b32.xlu0 %v177, 60
      %v850 = vpop.permute.xlu0 %849
      %851 = vrot.lane.b32.xlu0 %v178, 60
      %v852 = vpop.permute.xlu0 %851
      %853 = vrot.lane.b32.xlu0 %v179, 60
      %v854 = vpop.permute.xlu0 %853
      %vm855 = vcmask 490496
      %v856 = vsel %vm855, %v838, %v840
      %v857 = vsel %vm855, %v840, %v842
      %v858 = vsel %vm855, %v842, %v844
      %v859 = vsel %vm855, %v844, %v846
      %v860 = vsel %vm855, %v846, %v848
      %v861 = vsel %vm855, %v848, %v850
      %v862 = vsel %vm855, %v850, %v852
      %v863 = vsel %vm855, %v852, %v854
      %v872 = vsel %vm485, %v856, 0.0
      %v873 = vsel %vm486, %v857, 0.0
      %v874 = vsel %vm487, %v858, 0.0
      %v875 = vsel %vm488, %v859, 0.0
      %v876 = vsel %vm489, %v860, 0.0
      %v877 = vsel %vm490, %v861, 0.0
      %v878 = vsel %vm491, %v862, 0.0
      %v879 = vsel %vm492, %v863, 0.0
      %880 = vrot.lane.b32.xlu0 %v171, 32
      %v881 = vpop.permute.xlu0 %880
      %882 = vrot.lane.b32.xlu0 %v172, 32
      %v883 = vpop.permute.xlu0 %882
      %884 = vrot.lane.b32.xlu0 %v173, 32
      %v885 = vpop.permute.xlu0 %884
      %886 = vrot.lane.b32.xlu0 %v174, 32
      %v887 = vpop.permute.xlu0 %886
      %888 = vrot.lane.b32.xlu0 %v175, 32
      %v889 = vpop.permute.xlu0 %888
      %890 = vrot.lane.b32.xlu0 %v176, 32
      %v891 = vpop.permute.xlu0 %890
      %892 = vrot.lane.b32.xlu0 %v177, 32
      %v893 = vpop.permute.xlu0 %892
      %894 = vrot.lane.b32.xlu0 %v178, 32
      %v895 = vpop.permute.xlu0 %894
      %896 = vrot.lane.b32.xlu0 %v179, 32
      %v897 = vpop.permute.xlu0 %896
      %vm898 = vcmask 261120
      %v899 = vsel %vm898, %v881, %v883
      %v900 = vsel %vm898, %v883, %v885
      %v901 = vsel %vm898, %v885, %v887
      %v902 = vsel %vm898, %v887, %v889
      %v903 = vsel %vm898, %v889, %v891
      %v904 = vsel %vm898, %v891, %v893
      %v905 = vsel %vm898, %v893, %v895
      %v906 = vsel %vm898, %v895, %v897
      %v915 = vsel %vm238, %v899, 0.0
      %v916 = vsel %vm239, %v900, 0.0
      %v917 = vsel %vm240, %v901, 0.0
      %v918 = vsel %vm241, %v902, 0.0
      %v919 = vsel %vm242, %v903, 0.0
      %v920 = vsel %vm243, %v904, 0.0
      %v921 = vsel %vm244, %v905, 0.0
      %v922 = vsel %vm245, %v906, 0.0
      %923 = vrot.lane.b32.xlu0 %v171, 31
      %v924 = vpop.permute.xlu0 %923
      %925 = vrot.lane.b32.xlu0 %v172, 31
      %v926 = vpop.permute.xlu0 %925
      %927 = vrot.lane.b32.xlu0 %v173, 31
      %v928 = vpop.permute.xlu0 %927
      %929 = vrot.lane.b32.xlu0 %v174, 31
      %v930 = vpop.permute.xlu0 %929
      %931 = vrot.lane.b32.xlu0 %v175, 31
      %v932 = vpop.permute.xlu0 %931
      %933 = vrot.lane.b32.xlu0 %v176, 31
      %v934 = vpop.permute.xlu0 %933
      %935 = vrot.lane.b32.xlu0 %v177, 31
      %v936 = vpop.permute.xlu0 %935
      %937 = vrot.lane.b32.xlu0 %v178, 31
      %v938 = vpop.permute.xlu0 %937
      %939 = vrot.lane.b32.xlu0 %v179, 31
      %v940 = vpop.permute.xlu0 %939
      %vm941 = vcmask 252928
      %v942 = vsel %vm941, %v924, %v926
      %v943 = vsel %vm941, %v926, %v928
      %v944 = vsel %vm941, %v928, %v930
      %v945 = vsel %vm941, %v930, %v932
      %v946 = vsel %vm941, %v932, %v934
      %v947 = vsel %vm941, %v934, %v936
      %v948 = vsel %vm941, %v936, %v938
      %v949 = vsel %vm941, %v938, %v940
      %v958 = vsel %vm294, %v942, 0.0
      %v959 = vsel %vm295, %v943, 0.0
      %v960 = vsel %vm296, %v944, 0.0
      %v961 = vsel %vm297, %v945, 0.0
      %v962 = vsel %vm298, %v946, 0.0
      %v963 = vsel %vm299, %v947, 0.0
      %v964 = vsel %vm300, %v948, 0.0
      %v965 = vsel %vm301, %v949, 0.0
      %966 = vrot.lane.b32.xlu0 %v171, 29
      %v967 = vpop.permute.xlu0 %966
      %968 = vrot.lane.b32.xlu0 %v172, 29
      %v969 = vpop.permute.xlu0 %968
      %970 = vrot.lane.b32.xlu0 %v173, 29
      %v971 = vpop.permute.xlu0 %970
      %972 = vrot.lane.b32.xlu0 %v174, 29
      %v973 = vpop.permute.xlu0 %972
      %974 = vrot.lane.b32.xlu0 %v175, 29
      %v975 = vpop.permute.xlu0 %974
      %976 = vrot.lane.b32.xlu0 %v176, 29
      %v977 = vpop.permute.xlu0 %976
      %978 = vrot.lane.b32.xlu0 %v177, 29
      %v979 = vpop.permute.xlu0 %978
      %980 = vrot.lane.b32.xlu0 %v178, 29
      %v981 = vpop.permute.xlu0 %980
      %982 = vrot.lane.b32.xlu0 %v179, 29
      %v983 = vpop.permute.xlu0 %982
      %vm984 = vcmask 236544
      %v985 = vsel %vm984, %v967, %v969
      %v986 = vsel %vm984, %v969, %v971
      %v987 = vsel %vm984, %v971, %v973
      %v988 = vsel %vm984, %v973, %v975
      %v989 = vsel %vm984, %v975, %v977
      %v990 = vsel %vm984, %v977, %v979
      %v991 = vsel %vm984, %v979, %v981
      %v992 = vsel %vm984, %v981, %v983
      %v1001 = vsel %vm394, %v985, 0.0
      %v1002 = vsel %vm395, %v986, 0.0
      %v1003 = vsel %vm396, %v987, 0.0
      %v1004 = vsel %vm397, %v988, 0.0
      %v1005 = vsel %vm398, %v989, 0.0
      %v1006 = vsel %vm399, %v990, 0.0
      %v1007 = vsel %vm400, %v991, 0.0
      %v1008 = vsel %vm401, %v992, 0.0
      %1009 = vrot.lane.b32.xlu0 %v171, 28
      %v1010 = vpop.permute.xlu0 %1009
      %1011 = vrot.lane.b32.xlu0 %v172, 28
      %v1012 = vpop.permute.xlu0 %1011
      %1013 = vrot.lane.b32.xlu0 %v173, 28
      %v1014 = vpop.permute.xlu0 %1013
      %1015 = vrot.lane.b32.xlu0 %v174, 28
      %v1016 = vpop.permute.xlu0 %1015
      %1017 = vrot.lane.b32.xlu0 %v175, 28
      %v1018 = vpop.permute.xlu0 %1017
      %1019 = vrot.lane.b32.xlu0 %v176, 28
      %v1020 = vpop.permute.xlu0 %1019
      %1021 = vrot.lane.b32.xlu0 %v177, 28
      %v1022 = vpop.permute.xlu0 %1021
      %1023 = vrot.lane.b32.xlu0 %v178, 28
      %v1024 = vpop.permute.xlu0 %1023
      %1025 = vrot.lane.b32.xlu0 %v179, 28
      %v1026 = vpop.permute.xlu0 %1025
      %vm1027 = vcmask 228352
      %v1028 = vsel %vm1027, %v1010, %v1012
      %v1029 = vsel %vm1027, %v1012, %v1014
      %v1030 = vsel %vm1027, %v1014, %v1016
      %v1031 = vsel %vm1027, %v1016, %v1018
      %v1032 = vsel %vm1027, %v1018, %v1020
      %v1033 = vsel %vm1027, %v1020, %v1022
      %v1034 = vsel %vm1027, %v1022, %v1024
      %v1035 = vsel %vm1027, %v1024, %v1026
      %v1044 = vsel %vm485, %v1028, 0.0
      %v1045 = vsel %vm486, %v1029, 0.0
      %v1046 = vsel %vm487, %v1030, 0.0
      %v1047 = vsel %vm488, %v1031, 0.0
      %v1048 = vsel %vm489, %v1032, 0.0
      %v1049 = vsel %vm490, %v1033, 0.0
      %v1050 = vsel %vm491, %v1034, 0.0
      %v1051 = vsel %vm492, %v1035, 0.0
      %v1052 = vsel %vm238, %v172, 0.0
      %v1053 = vsel %vm239, %v173, 0.0
      %v1054 = vsel %vm240, %v174, 0.0
      %v1055 = vsel %vm241, %v175, 0.0
      %v1056 = vsel %vm242, %v176, 0.0
      %v1057 = vsel %vm243, %v177, 0.0
      %v1058 = vsel %vm244, %v178, 0.0
      %v1059 = vsel %vm245, %v179, 0.0
      %1061 = vrot.lane.b32.xlu0 %v180, 127
      %v1062 = vpop.permute.xlu0 %1061
      %v1063 = vsel %vm329, %v328, %v1062
      %v1065 = vsel %vm294, %v331, 0.0
      %v1066 = vsel %vm295, %v332, 0.0
      %v1067 = vsel %vm296, %v333, 0.0
      %v1068 = vsel %vm297, %v334, 0.0
      %v1069 = vsel %vm298, %v335, 0.0
      %v1070 = vsel %vm299, %v336, 0.0
      %v1071 = vsel %vm300, %v337, 0.0
      %v1072 = vsel %vm301, %v1063, 0.0
      %1073 = vrot.lane.b32.xlu0 %v180, 125
      %v1074 = vpop.permute.xlu0 %1073
      %v1075 = vsel %vm420, %v419, %v1074
      %v1077 = vsel %vm394, %v422, 0.0
      %v1078 = vsel %vm395, %v423, 0.0
      %v1079 = vsel %vm396, %v424, 0.0
      %v1080 = vsel %vm397, %v425, 0.0
      %v1081 = vsel %vm398, %v426, 0.0
      %v1082 = vsel %vm399, %v427, 0.0
      %v1083 = vsel %vm400, %v428, 0.0
      %v1084 = vsel %vm401, %v1075, 0.0
      %1085 = vrot.lane.b32.xlu0 %v180, 124
      %v1086 = vpop.permute.xlu0 %1085
      %v1087 = vsel %vm511, %v510, %v1086
      %v1089 = vsel %vm485, %v513, 0.0
      %v1090 = vsel %vm486, %v514, 0.0
      %v1091 = vsel %vm487, %v515, 0.0
      %v1092 = vsel %vm488, %v516, 0.0
      %v1093 = vsel %vm489, %v517, 0.0
      %v1094 = vsel %vm490, %v518, 0.0
      %v1095 = vsel %vm491, %v519, 0.0
      %v1096 = vsel %vm492, %v1087, 0.0
      %1097 = vrot.lane.b32.xlu0 %v171, 126
      %v1098 = vpop.permute.xlu0 %1097
      %1099 = vrot.lane.b32.xlu0 %v172, 126
      %v1100 = vpop.permute.xlu0 %1099
      %1101 = vrot.lane.b32.xlu0 %v173, 126
      %v1102 = vpop.permute.xlu0 %1101
      %1103 = vrot.lane.b32.xlu0 %v174, 126
      %v1104 = vpop.permute.xlu0 %1103
      %1105 = vrot.lane.b32.xlu0 %v175, 126
      %v1106 = vpop.permute.xlu0 %1105
      %1107 = vrot.lane.b32.xlu0 %v176, 126
      %v1108 = vpop.permute.xlu0 %1107
      %1109 = vrot.lane.b32.xlu0 %v177, 126
      %v1110 = vpop.permute.xlu0 %1109
      %1111 = vrot.lane.b32.xlu0 %v178, 126
      %v1112 = vpop.permute.xlu0 %1111
      %1113 = vrot.lane.b32.xlu0 %v179, 126
      %v1114 = vpop.permute.xlu0 %1113
      %vm1115 = vcmask 1031168
      %v1116 = vsel %vm1115, %v1098, %v1100
      %v1117 = vsel %vm1115, %v1100, %v1102
      %v1118 = vsel %vm1115, %v1102, %v1104
      %v1119 = vsel %vm1115, %v1104, %v1106
      %v1120 = vsel %vm1115, %v1106, %v1108
      %v1121 = vsel %vm1115, %v1108, %v1110
      %v1122 = vsel %vm1115, %v1110, %v1112
      %v1123 = vsel %vm1115, %v1112, %v1114
      %1132 = vrot.lane.b32.xlu0 %v171, 94
      %v1133 = vpop.permute.xlu0 %1132
      %1134 = vrot.lane.b32.xlu0 %v172, 94
      %v1135 = vpop.permute.xlu0 %1134
      %1136 = vrot.lane.b32.xlu0 %v173, 94
      %v1137 = vpop.permute.xlu0 %1136
      %1138 = vrot.lane.b32.xlu0 %v174, 94
      %v1139 = vpop.permute.xlu0 %1138
      %1140 = vrot.lane.b32.xlu0 %v175, 94
      %v1141 = vpop.permute.xlu0 %1140
      %1142 = vrot.lane.b32.xlu0 %v176, 94
      %v1143 = vpop.permute.xlu0 %1142
      %1144 = vrot.lane.b32.xlu0 %v177, 94
      %v1145 = vpop.permute.xlu0 %1144
      %1146 = vrot.lane.b32.xlu0 %v178, 94
      %v1147 = vpop.permute.xlu0 %1146
      %1148 = vrot.lane.b32.xlu0 %v179, 94
      %v1149 = vpop.permute.xlu0 %1148
      %vm1150 = vcmask 769024
      %v1151 = vsel %vm1150, %v1133, %v1135
      %v1152 = vsel %vm1150, %v1135, %v1137
      %v1153 = vsel %vm1150, %v1137, %v1139
      %v1154 = vsel %vm1150, %v1139, %v1141
      %v1155 = vsel %vm1150, %v1141, %v1143
      %v1156 = vsel %vm1150, %v1143, %v1145
      %v1157 = vsel %vm1150, %v1145, %v1147
      %v1158 = vsel %vm1150, %v1147, %v1149
      %1167 = vrot.lane.b32.xlu0 %v171, 62
      %v1168 = vpop.permute.xlu0 %1167
      %1169 = vrot.lane.b32.xlu0 %v172, 62
      %v1170 = vpop.permute.xlu0 %1169
      %1171 = vrot.lane.b32.xlu0 %v173, 62
      %v1172 = vpop.permute.xlu0 %1171
      %1173 = vrot.lane.b32.xlu0 %v174, 62
      %v1174 = vpop.permute.xlu0 %1173
      %1175 = vrot.lane.b32.xlu0 %v175, 62
      %v1176 = vpop.permute.xlu0 %1175
      %1177 = vrot.lane.b32.xlu0 %v176, 62
      %v1178 = vpop.permute.xlu0 %1177
      %1179 = vrot.lane.b32.xlu0 %v177, 62
      %v1180 = vpop.permute.xlu0 %1179
      %1181 = vrot.lane.b32.xlu0 %v178, 62
      %v1182 = vpop.permute.xlu0 %1181
      %1183 = vrot.lane.b32.xlu0 %v179, 62
      %v1184 = vpop.permute.xlu0 %1183
      %vm1185 = vcmask 506880
      %v1186 = vsel %vm1185, %v1168, %v1170
      %v1187 = vsel %vm1185, %v1170, %v1172
      %v1188 = vsel %vm1185, %v1172, %v1174
      %v1189 = vsel %vm1185, %v1174, %v1176
      %v1190 = vsel %vm1185, %v1176, %v1178
      %v1191 = vsel %vm1185, %v1178, %v1180
      %v1192 = vsel %vm1185, %v1180, %v1182
      %v1193 = vsel %vm1185, %v1182, %v1184
      %1202 = vrot.lane.b32.xlu0 %v171, 30
      %v1203 = vpop.permute.xlu0 %1202
      %1204 = vrot.lane.b32.xlu0 %v172, 30
      %v1205 = vpop.permute.xlu0 %1204
      %1206 = vrot.lane.b32.xlu0 %v173, 30
      %v1207 = vpop.permute.xlu0 %1206
      %1208 = vrot.lane.b32.xlu0 %v174, 30
      %v1209 = vpop.permute.xlu0 %1208
      %1210 = vrot.lane.b32.xlu0 %v175, 30
      %v1211 = vpop.permute.xlu0 %1210
      %1212 = vrot.lane.b32.xlu0 %v176, 30
      %v1213 = vpop.permute.xlu0 %1212
      %1214 = vrot.lane.b32.xlu0 %v177, 30
      %v1215 = vpop.permute.xlu0 %1214
      %1216 = vrot.lane.b32.xlu0 %v178, 30
      %v1217 = vpop.permute.xlu0 %1216
      %1218 = vrot.lane.b32.xlu0 %v179, 30
      %v1219 = vpop.permute.xlu0 %1218
      %vm1220 = vcmask 244736
      %v1221 = vsel %vm1220, %v1203, %v1205
      %v1222 = vsel %vm1220, %v1205, %v1207
      %v1223 = vsel %vm1220, %v1207, %v1209
      %v1224 = vsel %vm1220, %v1209, %v1211
      %v1225 = vsel %vm1220, %v1211, %v1213
      %v1226 = vsel %vm1220, %v1213, %v1215
      %v1227 = vsel %vm1220, %v1215, %v1217
      %v1228 = vsel %vm1220, %v1217, %v1219
      %1237 = vrot.lane.b32.xlu0 %v180, 126
      %v1238 = vpop.permute.xlu0 %1237
      %v1239 = vsel %vm1115, %v1114, %v1238
      %v1241 = vld [vmem:[%s1] sm:$0xff]
      %v1242 = vld [vmem:[%s1 + $0x8] sm:$0xff]
      %v1243 = vld [vmem:[%s1 + $0x10] sm:$0xff]
      %v1244 = vld [vmem:[%s1 + $0x18] sm:$0xff]
      %v1245 = vld [vmem:[%s1 + $0x20] sm:$0xff]
      %v1246 = vld [vmem:[%s1 + $0x28] sm:$0xff]
      %v1247 = vld [vmem:[%s1 + $0x30] sm:$0xff]
      %v1248 = vld [vmem:[%s1 + $0x38] sm:$0xff]
      %v1249 = vld [vmem:[%s2] sm:$0xff]
      %v1250 = vld [vmem:[%s2 + $0x8] sm:$0xff]
      %v1251 = vld [vmem:[%s2 + $0x10] sm:$0xff]
      %v1252 = vld [vmem:[%s2 + $0x18] sm:$0xff]
      %1254 = vset.pattern.permute.xlu0 0
      %1255 = vperm.xlu0 %1254, %v1249
      %v1256 = vpop.permute.xlu0 %1255
      %1259 = vset.pattern.permute.xlu0 0
      %1260 = vperm.xlu0 %1259, %v1250
      %v1261 = vpop.permute.xlu0 %1260
      %1264 = vset.pattern.permute.xlu0 0
      %1265 = vperm.xlu0 %1264, %v1251
      %v1266 = vpop.permute.xlu0 %1265
      %1269 = vset.pattern.permute.xlu0 0
      %1270 = vperm.xlu0 %1269, %v1252
      %v1271 = vpop.permute.xlu0 %1270
      %vm1273 = vcmask 588800
      %v1275 = vsel %vm1273, %v1242, 0
      %v1278 = vsel %vm1273, %v1244, 0
      %v1281 = vsel %vm1273, %v1246, 0
      %v1284 = vsel %vm1273, %v1248, 0
      %1286 = vmatprep.subr.mxu0 %v247
      %1287 = vmatpush1.msra.mxu0 %v246
      %1288 = vmatprep.subr.mxu0 %v347
      %1289 = vmatpush1.msra.mxu0 %v346
      %1290 = vmatprep.subr.mxu0 %v1117
      %1291 = vmatpush1.msra.mxu0 %v1116
      %1292 = vmatprep.subr.mxu0 %v438
      %1293 = vmatpush1.msra.mxu0 %v437
      %1294 = vmatprep.subr.mxu0 %v529
      %1295 = vmatpush1.msra.mxu0 %v528
      %1296 = vmatprep.subr.mxu0 %v572
      %1297 = vmatpush1.msra.mxu0 %v571
      %1298 = vmatprep.subr.mxu0 %v615
      %1299 = vmatpush1.msra.mxu0 %v614
      %1300 = vmatprep.subr.mxu0 %v1152
      %1301 = vmatpush1.msra.mxu0 %v1151
      %1302 = vmatprep.subr.mxu0 %v658
      %1303 = vmatpush1.msra.mxu0 %v657
      %1304 = vmatprep.subr.mxu0 %v701
      %1305 = vmatpush1.msra.mxu0 %v700
      %1306 = vmatprep.subr.mxu0 %v744
      %1307 = vmatpush1.msra.mxu0 %v743
      %1308 = vmatprep.subr.mxu0 %v787
      %1309 = vmatpush1.msra.mxu0 %v786
      %1310 = vmatprep.subr.mxu0 %v1187
      %1311 = vmatpush1.msra.mxu0 %v1186
      %1312 = vmatprep.subr.mxu0 %v830
      %1313 = vmatpush1.msra.mxu0 %v829
      %1314 = vmatprep.subr.mxu0 %v873
      %1315 = vmatpush1.msra.mxu0 %v872
      %1316 = vmatprep.subr.mxu0 %v916
      %1317 = vmatpush1.msra.mxu0 %v915
      %1318 = vmatprep.subr.mxu0 %v959
      %1319 = vmatpush1.msra.mxu0 %v958
      %1320 = vmatprep.subr.mxu0 %v1222
      %1321 = vmatpush1.msra.mxu0 %v1221
      %1322 = vmatprep.subr.mxu0 %v1002
      %1323 = vmatpush1.msra.mxu0 %v1001
      %1324 = vmatprep.subr.mxu0 %v1045
      %1325 = vmatpush1.msra.mxu0 %v1044
      %1326 = vmatprep.subr.mxu0 %v1053
      %1327 = vmatpush1.msra.mxu0 %v1052
      %1328 = vmatprep.subr.mxu0 %v1066
      %1329 = vmatpush1.msra.mxu0 %v1065
      %1330 = vmatprep.subr.mxu0 %v1118
      %1331 = vmatpush1.msra.mxu0 %v1117
      %1332 = vmatprep.subr.mxu0 %v1078
      %1333 = vmatpush1.msra.mxu0 %v1077
      %1334 = vmatprep.subr.mxu0 %v1090
      %1335 = vmatpush1.msra.mxu0 %v1089
      %1336 = vmatprep.subr.mxu0 0.0
      %1337 = vmatpush1.msra.mxu0 0.0
      %1338 = vmatprep.subr.mxu0 0.0
      %1339 = vmatpush1.msra.mxu0 0.0
      %1340 = vmatprep.subr.mxu0 0.0
      %1341 = vmatpush1.msra.mxu0 0.0
      %1342 = vmatprep.subr.mxu0 0.0
      %1343 = vmatpush1.msra.mxu0 0.0
      %1344 = vmatprep.subr.mxu0 0.0
      %1345 = vmatpush1.msra.mxu0 0.0
      %1346 = vmatprep.subr.mxu0 0.0
      %1347 = vmatpush1.msra.mxu0 0.0
      %1348 = vmatprep.subr.mxu0 0.0
      %1349 = vmatpush1.msra.mxu0 0.0
      %1350 = vmatprep.mubr.f32.mxu0 %v1275
      %1351 = vmatmul.mubr.f32.gmra.mrb[0].mxu0 %v1241
      %v1352 = vpop.f32.mrb[0].mxu0
      %v1353 = vadd.f32 %v1256, %v1352
      %v1354 = vpop.f32.mrb[0].mxu0
      %v1355 = vadd.f32 %v1256, %v1354
      %1356 = vmatprep.mubr.f32.mxu0 %v1278
      %1357 = vmatmul.mubr.f32.gmra.mrb[0].mxu0 %v1243
      %v1358 = vpop.f32.mrb[0].mxu0
      %v1359 = vadd.f32 %v1261, %v1358
      %v1360 = vpop.f32.mrb[0].mxu0
      %v1361 = vadd.f32 %v1261, %v1360
      %1362 = vmatprep.mubr.f32.mxu0 %v1281
      %1363 = vmatmul.mubr.f32.gmra.mrb[0].mxu0 %v1245
      %v1364 = vpop.f32.mrb[0].mxu0
      %v1365 = vadd.f32 %v1266, %v1364
      %v1366 = vpop.f32.mrb[0].mxu0
      %v1367 = vadd.f32 %v1266, %v1366
      %1368 = vmatprep.mubr.f32.mxu0 %v1284
      %1369 = vmatmul.mubr.f32.gmra.mrb[0].mxu0 %v1247
      %v1370 = vpop.f32.mrb[0].mxu0
      %v1371 = vadd.f32 %v1271, %v1370
      %v1372 = vpop.f32.mrb[0].mxu0
      %v1373 = vadd.f32 %v1271, %v1372
      %1374 = vdwg.mxu0
      %1375 = vmatprep.subr.mxu0 %v249
      %1376 = vmatpush1.msra.mxu0 %v248
      %1377 = vmatprep.subr.mxu0 %v349
      %1378 = vmatpush1.msra.mxu0 %v348
      %1379 = vmatprep.subr.mxu0 %v1119
      %1380 = vmatpush1.msra.mxu0 %v1118
      %1381 = vmatprep.subr.mxu0 %v440
      %1382 = vmatpush1.msra.mxu0 %v439
      %1383 = vmatprep.subr.mxu0 %v531
      %1384 = vmatpush1.msra.mxu0 %v530
      %1385 = vmatprep.subr.mxu0 %v574
      %1386 = vmatpush1.msra.mxu0 %v573
      %1387 = vmatprep.subr.mxu0 %v617
      %1388 = vmatpush1.msra.mxu0 %v616
      %1389 = vmatprep.subr.mxu0 %v1154
      %1390 = vmatpush1.msra.mxu0 %v1153
      %1391 = vmatprep.subr.mxu0 %v660
      %1392 = vmatpush1.msra.mxu0 %v659
      %1393 = vmatprep.subr.mxu0 %v703
      %1394 = vmatpush1.msra.mxu0 %v702
      %1395 = vmatprep.subr.mxu0 %v746
      %1396 = vmatpush1.msra.mxu0 %v745
      %1397 = vmatprep.subr.mxu0 %v789
      %1398 = vmatpush1.msra.mxu0 %v788
      %1399 = vmatprep.subr.mxu0 %v1189
      %1400 = vmatpush1.msra.mxu0 %v1188
      %1401 = vmatprep.subr.mxu0 %v832
      %1402 = vmatpush1.msra.mxu0 %v831
      %1403 = vmatprep.subr.mxu0 %v875
      %1404 = vmatpush1.msra.mxu0 %v874
      %1405 = vmatprep.subr.mxu0 %v918
      %1406 = vmatpush1.msra.mxu0 %v917
      %1407 = vmatprep.subr.mxu0 %v961
      %1408 = vmatpush1.msra.mxu0 %v960
      %1409 = vmatprep.subr.mxu0 %v1224
      %1410 = vmatpush1.msra.mxu0 %v1223
      %1411 = vmatprep.subr.mxu0 %v1004
      %1412 = vmatpush1.msra.mxu0 %v1003
      %1413 = vmatprep.subr.mxu0 %v1047
      %1414 = vmatpush1.msra.mxu0 %v1046
      %1415 = vmatprep.subr.mxu0 %v1055
      %1416 = vmatpush1.msra.mxu0 %v1054
      %1417 = vmatprep.subr.mxu0 %v1068
      %1418 = vmatpush1.msra.mxu0 %v1067
      %1419 = vmatprep.subr.mxu0 %v1120
      %1420 = vmatpush1.msra.mxu0 %v1119
      %1421 = vmatprep.subr.mxu0 %v1080
      %1422 = vmatpush1.msra.mxu0 %v1079
      %1423 = vmatprep.subr.mxu0 %v1092
      %1424 = vmatpush1.msra.mxu0 %v1091
      %1425 = vmatprep.subr.mxu0 0.0
      %1426 = vmatpush1.msra.mxu0 0.0
      %1427 = vmatprep.subr.mxu0 0.0
      %1428 = vmatpush1.msra.mxu0 0.0
      %1429 = vmatprep.subr.mxu0 0.0
      %1430 = vmatpush1.msra.mxu0 0.0
      %1431 = vmatprep.subr.mxu0 0.0
      %1432 = vmatpush1.msra.mxu0 0.0
      %1433 = vmatprep.subr.mxu0 0.0
      %1434 = vmatpush1.msra.mxu0 0.0
      %1435 = vmatprep.subr.mxu0 0.0
      %1436 = vmatpush1.msra.mxu0 0.0
      %1437 = vmatprep.subr.mxu0 0.0
      %1438 = vmatpush1.msra.mxu0 0.0
      %1439 = vmatprep.mubr.f32.mxu0 %v1275
      %1440 = vmatmul.mubr.f32.gmra.mrb[0].mxu0 %v1241
      %v1441 = vpop.f32.mrb[0].mxu0
      %v1442 = vadd.f32 %v1256, %v1441
      %v1443 = vpop.f32.mrb[0].mxu0
      %v1444 = vadd.f32 %v1256, %v1443
      %1445 = vmatprep.mubr.f32.mxu0 %v1278
      %1446 = vmatmul.mubr.f32.gmra.mrb[0].mxu0 %v1243
      %v1447 = vpop.f32.mrb[0].mxu0
      %v1448 = vadd.f32 %v1261, %v1447
      %v1449 = vpop.f32.mrb[0].mxu0
      %v1450 = vadd.f32 %v1261, %v1449
      %1451 = vmatprep.mubr.f32.mxu0 %v1281
      %1452 = vmatmul.mubr.f32.gmra.mrb[0].mxu0 %v1245
      %v1453 = vpop.f32.mrb[0].mxu0
      %v1454 = vadd.f32 %v1266, %v1453
      %v1455 = vpop.f32.mrb[0].mxu0
      %v1456 = vadd.f32 %v1266, %v1455
      %1457 = vmatprep.mubr.f32.mxu0 %v1284
      %1458 = vmatmul.mubr.f32.gmra.mrb[0].mxu0 %v1247
      %v1459 = vpop.f32.mrb[0].mxu0
      %v1460 = vadd.f32 %v1271, %v1459
      %v1461 = vpop.f32.mrb[0].mxu0
      %v1462 = vadd.f32 %v1271, %v1461
      %1463 = vdwg.mxu0
      %1464 = vmatprep.subr.mxu0 %v251
      %1465 = vmatpush1.msra.mxu0 %v250
      %1466 = vmatprep.subr.mxu0 %v351
      %1467 = vmatpush1.msra.mxu0 %v350
      %1468 = vmatprep.subr.mxu0 %v1121
      %1469 = vmatpush1.msra.mxu0 %v1120
      %1470 = vmatprep.subr.mxu0 %v442
      %1471 = vmatpush1.msra.mxu0 %v441
      %1472 = vmatprep.subr.mxu0 %v533
      %1473 = vmatpush1.msra.mxu0 %v532
      %1474 = vmatprep.subr.mxu0 %v576
      %1475 = vmatpush1.msra.mxu0 %v575
      %1476 = vmatprep.subr.mxu0 %v619
      %1477 = vmatpush1.msra.mxu0 %v618
      %1478 = vmatprep.subr.mxu0 %v1156
      %1479 = vmatpush1.msra.mxu0 %v1155
      %1480 = vmatprep.subr.mxu0 %v662
      %1481 = vmatpush1.msra.mxu0 %v661
      %1482 = vmatprep.subr.mxu0 %v705
      %1483 = vmatpush1.msra.mxu0 %v704
      %1484 = vmatprep.subr.mxu0 %v748
      %1485 = vmatpush1.msra.mxu0 %v747
      %1486 = vmatprep.subr.mxu0 %v791
      %1487 = vmatpush1.msra.mxu0 %v790
      %1488 = vmatprep.subr.mxu0 %v1191
      %1489 = vmatpush1.msra.mxu0 %v1190
      %1490 = vmatprep.subr.mxu0 %v834
      %1491 = vmatpush1.msra.mxu0 %v833
      %1492 = vmatprep.subr.mxu0 %v877
      %1493 = vmatpush1.msra.mxu0 %v876
      %1494 = vmatprep.subr.mxu0 %v920
      %1495 = vmatpush1.msra.mxu0 %v919
      %1496 = vmatprep.subr.mxu0 %v963
      %1497 = vmatpush1.msra.mxu0 %v962
      %1498 = vmatprep.subr.mxu0 %v1226
      %1499 = vmatpush1.msra.mxu0 %v1225
      %1500 = vmatprep.subr.mxu0 %v1006
      %1501 = vmatpush1.msra.mxu0 %v1005
      %1502 = vmatprep.subr.mxu0 %v1049
      %1503 = vmatpush1.msra.mxu0 %v1048
      %1504 = vmatprep.subr.mxu0 %v1057
      %1505 = vmatpush1.msra.mxu0 %v1056
      %1506 = vmatprep.subr.mxu0 %v1070
      %1507 = vmatpush1.msra.mxu0 %v1069
      %1508 = vmatprep.subr.mxu0 %v1122
      %1509 = vmatpush1.msra.mxu0 %v1121
      %1510 = vmatprep.subr.mxu0 %v1082
      %1511 = vmatpush1.msra.mxu0 %v1081
      %1512 = vmatprep.subr.mxu0 %v1094
      %1513 = vmatpush1.msra.mxu0 %v1093
      %1514 = vmatprep.subr.mxu0 0.0
      %1515 = vmatpush1.msra.mxu0 0.0
      %1516 = vmatprep.subr.mxu0 0.0
      %1517 = vmatpush1.msra.mxu0 0.0
      %1518 = vmatprep.subr.mxu0 0.0
      %1519 = vmatpush1.msra.mxu0 0.0
      %1520 = vmatprep.subr.mxu0 0.0
      %1521 = vmatpush1.msra.mxu0 0.0
      %1522 = vmatprep.subr.mxu0 0.0
      %1523 = vmatpush1.msra.mxu0 0.0
      %1524 = vmatprep.subr.mxu0 0.0
      %1525 = vmatpush1.msra.mxu0 0.0
      %1526 = vmatprep.subr.mxu0 0.0
      %1527 = vmatpush1.msra.mxu0 0.0
      %1528 = vmatprep.mubr.f32.mxu0 %v1275
      %1529 = vmatmul.mubr.f32.gmra.mrb[0].mxu0 %v1241
      %v1530 = vpop.f32.mrb[0].mxu0
      %v1531 = vadd.f32 %v1256, %v1530
      %v1532 = vpop.f32.mrb[0].mxu0
      %v1533 = vadd.f32 %v1256, %v1532
      %1534 = vmatprep.mubr.f32.mxu0 %v1278
      %1535 = vmatmul.mubr.f32.gmra.mrb[0].mxu0 %v1243
      %v1536 = vpop.f32.mrb[0].mxu0
      %v1537 = vadd.f32 %v1261, %v1536
      %v1538 = vpop.f32.mrb[0].mxu0
      %v1539 = vadd.f32 %v1261, %v1538
      %1540 = vmatprep.mubr.f32.mxu0 %v1281
      %1541 = vmatmul.mubr.f32.gmra.mrb[0].mxu0 %v1245
      %v1542 = vpop.f32.mrb[0].mxu0
      %v1543 = vadd.f32 %v1266, %v1542
      %v1544 = vpop.f32.mrb[0].mxu0
      %v1545 = vadd.f32 %v1266, %v1544
      %1546 = vmatprep.mubr.f32.mxu0 %v1284
      %1547 = vmatmul.mubr.f32.gmra.mrb[0].mxu0 %v1247
      %v1548 = vpop.f32.mrb[0].mxu0
      %v1549 = vadd.f32 %v1271, %v1548
      %v1550 = vpop.f32.mrb[0].mxu0
      %v1551 = vadd.f32 %v1271, %v1550
      %1552 = vdwg.mxu0
      %1553 = vmatprep.subr.mxu0 %v253
      %1554 = vmatpush1.msra.mxu0 %v252
      %1555 = vmatprep.subr.mxu0 %v353
      %1556 = vmatpush1.msra.mxu0 %v352
      %1557 = vmatprep.subr.mxu0 %v1123
      %1558 = vmatpush1.msra.mxu0 %v1122
      %1559 = vmatprep.subr.mxu0 %v444
      %1560 = vmatpush1.msra.mxu0 %v443
      %1561 = vmatprep.subr.mxu0 %v535
      %1562 = vmatpush1.msra.mxu0 %v534
      %1563 = vmatprep.subr.mxu0 %v578
      %1564 = vmatpush1.msra.mxu0 %v577
      %1565 = vmatprep.subr.mxu0 %v621
      %1566 = vmatpush1.msra.mxu0 %v620
      %1567 = vmatprep.subr.mxu0 %v1158
      %1568 = vmatpush1.msra.mxu0 %v1157
      %1569 = vmatprep.subr.mxu0 %v664
      %1570 = vmatpush1.msra.mxu0 %v663
      %1571 = vmatprep.subr.mxu0 %v707
      %1572 = vmatpush1.msra.mxu0 %v706
      %1573 = vmatprep.subr.mxu0 %v750
      %1574 = vmatpush1.msra.mxu0 %v749
      %1575 = vmatprep.subr.mxu0 %v793
      %1576 = vmatpush1.msra.mxu0 %v792
      %1577 = vmatprep.subr.mxu0 %v1193
      %1578 = vmatpush1.msra.mxu0 %v1192
      %1579 = vmatprep.subr.mxu0 %v836
      %1580 = vmatpush1.msra.mxu0 %v835
      %1581 = vmatprep.subr.mxu0 %v879
      %1582 = vmatpush1.msra.mxu0 %v878
      %1583 = vmatprep.subr.mxu0 %v922
      %1584 = vmatpush1.msra.mxu0 %v921
      %1585 = vmatprep.subr.mxu0 %v965
      %1586 = vmatpush1.msra.mxu0 %v964
      %1587 = vmatprep.subr.mxu0 %v1228
      %1588 = vmatpush1.msra.mxu0 %v1227
      %1589 = vmatprep.subr.mxu0 %v1008
      %1590 = vmatpush1.msra.mxu0 %v1007
      %1591 = vmatprep.subr.mxu0 %v1051
      %1592 = vmatpush1.msra.mxu0 %v1050
      %1593 = vmatprep.subr.mxu0 %v1059
      %1594 = vmatpush1.msra.mxu0 %v1058
      %1595 = vmatprep.subr.mxu0 %v1072
      %1596 = vmatpush1.msra.mxu0 %v1071
      %1597 = vmatprep.subr.mxu0 %v1239
      %1598 = vmatpush1.msra.mxu0 %v1123
      %1599 = vmatprep.subr.mxu0 %v1084
      %1600 = vmatpush1.msra.mxu0 %v1083
      %1601 = vmatprep.subr.mxu0 %v1096
      %1602 = vmatpush1.msra.mxu0 %v1095
      %1603 = vmatprep.subr.mxu0 0.0
      %1604 = vmatpush1.msra.mxu0 0.0
      %1605 = vmatprep.subr.mxu0 0.0
      %1606 = vmatpush1.msra.mxu0 0.0
      %1607 = vmatprep.subr.mxu0 0.0
      %1608 = vmatpush1.msra.mxu0 0.0
      %1609 = vmatprep.subr.mxu0 0.0
      %1610 = vmatpush1.msra.mxu0 0.0
      %1611 = vmatprep.subr.mxu0 0.0
      %1612 = vmatpush1.msra.mxu0 0.0
      %1613 = vmatprep.subr.mxu0 0.0
      %1614 = vmatpush1.msra.mxu0 0.0
      %1615 = vmatprep.subr.mxu0 0.0
      %1616 = vmatpush1.msra.mxu0 0.0
      %1617 = vmatprep.mubr.f32.mxu0 %v1275
      %1618 = vmatmul.mubr.f32.gmra.mrb[0].mxu0 %v1241
      %v1619 = vpop.f32.mrb[0].mxu0
      %v1620 = vadd.f32 %v1256, %v1619
      %v1621 = vpop.f32.mrb[0].mxu0
      %v1622 = vadd.f32 %v1256, %v1621
      %1623 = vmatprep.mubr.f32.mxu0 %v1278
      %1624 = vmatmul.mubr.f32.gmra.mrb[0].mxu0 %v1243
      %v1625 = vpop.f32.mrb[0].mxu0
      %v1626 = vadd.f32 %v1261, %v1625
      %v1627 = vpop.f32.mrb[0].mxu0
      %v1628 = vadd.f32 %v1261, %v1627
      %1629 = vmatprep.mubr.f32.mxu0 %v1281
      %1630 = vmatmul.mubr.f32.gmra.mrb[0].mxu0 %v1245
      %v1631 = vpop.f32.mrb[0].mxu0
      %v1632 = vadd.f32 %v1266, %v1631
      %v1633 = vpop.f32.mrb[0].mxu0
      %v1634 = vadd.f32 %v1266, %v1633
      %1635 = vmatprep.mubr.f32.mxu0 %v1284
      %1636 = vmatmul.mubr.f32.gmra.mrb[0].mxu0 %v1247
      %v1637 = vpop.f32.mrb[0].mxu0
      %v1638 = vadd.f32 %v1271, %v1637
      %v1639 = vpop.f32.mrb[0].mxu0
      %v1640 = vadd.f32 %v1271, %v1639
      %1641 = vdwg.mxu0
      %1642 = vst [vmem:[%s170] sm:$0xff] %v1353
      %1643 = vst [vmem:[%s170 + $0x8] sm:$0xff] %v1355
      %1644 = vst [vmem:[%s170 + $0x10] sm:$0xff] %v1442
      %1645 = vst [vmem:[%s170 + $0x18] sm:$0xff] %v1444
      %1646 = vst [vmem:[%s170 + $0x20] sm:$0xff] %v1531
      %1647 = vst [vmem:[%s170 + $0x28] sm:$0xff] %v1533
      %1648 = vst [vmem:[%s170 + $0x30] sm:$0xff] %v1620
      %1649 = vst [vmem:[%s170 + $0x38] sm:$0xff] %v1622
      %1650 = vst [vmem:[%s170 + $0x40] sm:$0xff] %v1359
      %1651 = vst [vmem:[%s170 + $0x48] sm:$0xff] %v1361
      %1652 = vst [vmem:[%s170 + $0x50] sm:$0xff] %v1448
      %1653 = vst [vmem:[%s170 + $0x58] sm:$0xff] %v1450
      %1654 = vst [vmem:[%s170 + $0x60] sm:$0xff] %v1537
      %1655 = vst [vmem:[%s170 + $0x68] sm:$0xff] %v1539
      %1656 = vst [vmem:[%s170 + $0x70] sm:$0xff] %v1626
      %1657 = vst [vmem:[%s170 + $0x78] sm:$0xff] %v1628
      %1658 = vst [vmem:[%s170 + $0x80] sm:$0xff] %v1365
      %1659 = vst [vmem:[%s170 + $0x88] sm:$0xff] %v1367
      %1660 = vst [vmem:[%s170 + $0x90] sm:$0xff] %v1454
      %1661 = vst [vmem:[%s170 + $0x98] sm:$0xff] %v1456
      %1662 = vst [vmem:[%s170 + $0xa0] sm:$0xff] %v1543
      %1663 = vst [vmem:[%s170 + $0xa8] sm:$0xff] %v1545
      %1664 = vst [vmem:[%s170 + $0xb0] sm:$0xff] %v1632
      %1665 = vst [vmem:[%s170 + $0xb8] sm:$0xff] %v1634
      %1666 = vst [vmem:[%s170 + $0xc0] sm:$0xff] %v1371
      %1667 = vst [vmem:[%s170 + $0xc8] sm:$0xff] %v1373
      %1668 = vst [vmem:[%s170 + $0xd0] sm:$0xff] %v1460
      %1669 = vst [vmem:[%s170 + $0xd8] sm:$0xff] %v1462
      %1670 = vst [vmem:[%s170 + $0xe0] sm:$0xff] %v1549
      %1671 = vst [vmem:[%s170 + $0xe8] sm:$0xff] %v1551
      %1672 = vst [vmem:[%s170 + $0xf0] sm:$0xff] %v1638
      %1673 = vst [vmem:[%s170 + $0xf8] sm:$0xff] %v1640
      %p1674 = scmp.lt.s32.totalorder %s14, 1
      %s1675 = scalar_select %p1674, %s14, 1
      %s1676 = smul.addr %s1675, 32
      %s1677 = smul.addr %s1676, 8
      %s1678 = scalar_lea.vmem %s3, %s1677
      // Predicated region
      $region33: #{forward.4} parent=31 // pred_check
        %p1679 = pneg %p100
      $region34: #{forward.4} parent=31 // pred_check_branch
        %1681 = sbr.rel (%p1679) target = $region36
      $region35: #{forward.4} parent=31 // pred_region
        _
      $region36: #{forward.4} parent=31 // pred_fallthru
        _
    $region32: #{forward.4} parent=5 // pred_fallthru
      _
    %p1682 = scmp.le.s32.totalorder 2, %s9
    // Predicated region
    $region37: #{forward.4} parent=5 // pred_check
      %p1683 = pneg %p1682
    $region38: #{forward.4} parent=5 // pred_check_branch
      %1685 = sbr.rel (%p1683) target = $region40
    $region39: #{forward.4} parent=5 // pred_region
      %s1686 = ssub.s32 %s9, 2
      // Predicated region
      $region41: #{forward.4} parent=39 // pred_check
        %p1687 = pneg %p106
      $region42: #{forward.4} parent=39 // pred_check_branch
        %1689 = sbr.rel (%p1687) target = $region44
      $region43: #{forward.4} parent=39 // pred_region
        %p1690 = scmp.lt.s32.totalorder %s15, 1
        %s1691 = scalar_select %p1690, %s15, 1
        %s1692 = smul.addr %s1691, 32
        %s1693 = smul.addr %s1692, 8
        %s1694 = scalar_lea.vmem %s3, %s1693
      $region44: #{forward.4} parent=39 // pred_fallthru
        _
    $region40: #{forward.4} parent=5 // pred_fallthru
      _
  $region6: #{forward.4} parent=0 // loop_footer
    %s13 = sadd.s32 1, %s9
  $region7: #{forward.4} parent=0 // loop_footer_branch
    %8 = sbr.rel target = $region3
  $region8: #{forward.4} parent=0 // loop_exit
    _

// kernel: forward.5
$region0: #{forward.5}
  #allocation0 [shape = 'u32[]', space=smem, size = 0x4, offset = 0x4, fixed_abs, tag = 'smem constant byte address 0x4 - core index']
  #allocation1 [shape = 'u32[144,128]{1,0:T(1,128)}', space=vmem, size = 0x12000, scoped, tag = 'internal scratch']
  %s0 = inlined_call_operand.vmem [shape: f32[2,32,324], index: 0, kind: input, shape index: {}]
  %s1 = inlined_call_operand.vmem [shape: f32[32,800], index: 1, kind: input, shape index: {}]
  %s2 = inlined_call_operand.vmem [shape: f32[32,1], index: 2, kind: input, shape index: {}]
  %s3 = inlined_call_operand.vmem [shape: f32[2,32,256], index: 3, kind: output, shape index: {}]
  %s4 = sld [smem:[#allocation0]]
  $region45: #{forward.5} parent=0
    _
  %s6 = ssub.s32 1, %s4
  %s7 = scalar_select 0, %s6, %s4
  loop: start=0, step=1, limit=4
  $region2: #{forward.5} parent=0 // loop_pre_header
    _
  $region3: #{forward.5} parent=0 // loop_header
    %s9 = sphi 0, %s13
    %p10 = scmp.ge.s32.totalorder %s9, 4
    %s19 = sphi 0, %s21
    %s22 = sphi 0, %s19
    %s23 = sphi 0, %s22
    %s39 = sphi 0, %s23
    %s43 = sphi 0, %s43
    %s45 = sphi 0, %s43
    %s46 = sphi 0, %s45
    %s60 = sphi 0, %s46
    %s64 = sphi 0, %s64
    %s66 = sphi 0, %s64
    %s67 = sphi 0, %s66
    %s81 = sphi 0, %s67
    %s87 = sphi 0, %s89
    %s90 = sphi 0, %s87
    %s91 = sphi 0, %s90
    %s107 = sphi 0, %s91
  $region4: #{forward.5} parent=0 // loop_header_branch
    %12 = sbr.rel (%p10) target = $region8
  $region5: #{forward.5} parent=0 // loop_body
    %s14 = ssub.s32 %s9, 1
    %s15 = ssub.s32 %s9, 2
    %s16 = sadd.s32 %s9, 1
    %s17 = ssub.s32 %s9, %s16
    %p18 = scmp.eq.s32.totalorder %s17, 0
    %s20 = sadd.s32 %s19, 1
    %s21 = scalar_select %p18, %s19, %s20
    %p24 = pneg %p18
    %p25 = scmp.eq.s32.totalorder %s9, 1
    %p26 = por %p24, %p25
    %p27 = scmp.ne.s32.totalorder %s19, %s22
    %p28 = scmp.eq.s32.totalorder %s9, 0
    %p29 = por %p27, %p28
    %p30 = scmp.ne.s32.totalorder %s19, %s22
    %p31 = scmp.eq.s32.totalorder %s14, 1
    %p32 = por %p30, %p31
    %p33 = scmp.ne.s32.totalorder %s22, %s23
    %p34 = scmp.eq.s32.totalorder %s14, 0
    %p35 = por %p33, %p34
    %p36 = scmp.ne.s32.totalorder %s22, %s23
    %p37 = scmp.eq.s32.totalorder %s15, 1
    %p38 = por %p36, %p37
    %p40 = scmp.ne.s32.totalorder %s23, %s39
    %p41 = scmp.eq.s32.totalorder %s15, 0
    %p42 = por %p40, %p41
    %s44 = sadd.s32 %s43, 1
    %p47 = scmp.eq.s32.totalorder %s9, 1
    %p48 = scmp.ne.s32.totalorder %s43, %s45
    %p49 = scmp.eq.s32.totalorder %s9, 0
    %p50 = por %p48, %p49
    %p51 = scmp.ne.s32.totalorder %s43, %s45
    %p52 = scmp.eq.s32.totalorder %s14, 1
    %p53 = por %p51, %p52
    %p54 = scmp.ne.s32.totalorder %s45, %s46
    %p55 = scmp.eq.s32.totalorder %s14, 0
    %p56 = por %p54, %p55
    %p57 = scmp.ne.s32.totalorder %s45, %s46
    %p58 = scmp.eq.s32.totalorder %s15, 1
    %p59 = por %p57, %p58
    %p61 = scmp.ne.s32.totalorder %s46, %s60
    %p62 = scmp.eq.s32.totalorder %s15, 0
    %p63 = por %p61, %p62
    %s65 = sadd.s32 %s64, 1
    %p68 = scmp.eq.s32.totalorder %s9, 1
    %p69 = scmp.ne.s32.totalorder %s64, %s66
    %p70 = scmp.eq.s32.totalorder %s9, 0
    %p71 = por %p69, %p70
    %p72 = scmp.ne.s32.totalorder %s64, %s66
    %p73 = scmp.eq.s32.totalorder %s14, 1
    %p74 = por %p72, %p73
    %p75 = scmp.ne.s32.totalorder %s66, %s67
    %p76 = scmp.eq.s32.totalorder %s14, 0
    %p77 = por %p75, %p76
    %p78 = scmp.ne.s32.totalorder %s66, %s67
    %p79 = scmp.eq.s32.totalorder %s15, 1
    %p80 = por %p78, %p79
    %p82 = scmp.ne.s32.totalorder %s67, %s81
    %p83 = scmp.eq.s32.totalorder %s15, 0
    %p84 = por %p82, %p83
    %s85 = ssub.s32 %s9, %s16
    %p86 = scmp.eq.s32.totalorder %s85, 0
    %s88 = sadd.s32 %s87, 1
    %s89 = scalar_select %p86, %s87, %s88
    %p92 = pneg %p86
    %p93 = scmp.eq.s32.totalorder %s9, 1
    %p94 = por %p92, %p93
    %p95 = scmp.ne.s32.totalorder %s87, %s90
    %p96 = scmp.eq.s32.totalorder %s9, 0
    %p97 = por %p95, %p96
    %p98 = scmp.ne.s32.totalorder %s87, %s90
    %p99 = scmp.eq.s32.totalorder %s14, 1
    %p100 = por %p98, %p99
    %p101 = scmp.ne.s32.totalorder %s90, %s91
    %p102 = scmp.eq.s32.totalorder %s14, 0
    %p103 = por %p101, %p102
    %p104 = scmp.ne.s32.totalorder %s90, %s91
    %p105 = scmp.eq.s32.totalorder %s15, 1
    %p106 = por %p104, %p105
    %p108 = scmp.ne.s32.totalorder %s91, %s107
    %p109 = scmp.eq.s32.totalorder %s15, 0
    %p110 = por %p108, %p109
    %p111 = scmp.le.s32.totalorder 1, %s9
    %p112 = scmp.lt.s32.totalorder %s9, 3
    %p113 = pnand %p111, %p112
    %p114 = pneg %p113
    // Predicated region
    $region9: #{forward.5} parent=5 // pred_check
      _
    $region10: #{forward.5} parent=5 // pred_check_branch
      %116 = sbr.rel (%p113) target = $region12
    $region11: #{forward.5} parent=5 // pred_region
      %s117 = ssub.s32 %s9, 1
      // Predicated region
      $region13: #{forward.5} parent=11 // pred_check
        %p118 = pneg %p56
      $region14: #{forward.5} parent=11 // pred_check_branch
        %120 = sbr.rel (%p118) target = $region16
      $region15: #{forward.5} parent=11 // pred_region
        _
      $region16: #{forward.5} parent=11 // pred_fallthru
        _
      // Predicated region
      $region17: #{forward.5} parent=11 // pred_check
        %p121 = pneg %p77
      $region18: #{forward.5} parent=11 // pred_check_branch
        %123 = sbr.rel (%p121) target = $region20
      $region19: #{forward.5} parent=11 // pred_region
        _
      $region20: #{forward.5} parent=11 // pred_fallthru
        _
    $region12: #{forward.5} parent=5 // pred_fallthru
      _
    %p124 = scmp.lt.s32.totalorder %s9, 2
    // Predicated region
    $region21: #{forward.5} parent=5 // pred_check
      %p125 = pneg %p124
    $region22: #{forward.5} parent=5 // pred_check_branch
      %127 = sbr.rel (%p125) target = $region24
    $region23: #{forward.5} parent=5 // pred_region
      // Predicated region
      $region25: #{forward.5} parent=23 // pred_check
        %p128 = pneg %p29
      $region26: #{forward.5} parent=23 // pred_check_branch
        %130 = sbr.rel (%p128) target = $region28
      $region27: #{forward.5} parent=23 // pred_region
        %p131 = scmp.lt.s32.totalorder %s9, 1
        %s132 = scalar_select %p131, %s9, 1
        %s133 = smul.addr %s132, 12
        %s134 = smul.addr %s133, 8
        %s135 = scalar_lea.vmem %s0, %s134
      $region28: #{forward.5} parent=23 // pred_fallthru
        _
    $region24: #{forward.5} parent=5 // pred_fallthru
      _
    %p136 = scmp.le.s32.totalorder 1, %s9
    %p137 = scmp.lt.s32.totalorder %s9, 3
    %p138 = pnand %p136, %p137
    %p139 = pneg %p138
    // Predicated region
    $region29: #{forward.5} parent=5 // pred_check
      _
    $region30: #{forward.5} parent=5 // pred_check_branch
      %141 = sbr.rel (%p138) target = $region32
    $region31: #{forward.5} parent=5 // pred_region
      %s142 = ssub.s32 %s9, 1
      %p143 = scmp.lt.s32.totalorder %s14, 1
      %s144 = scalar_select %p143, %s14, 1
      %s145 = smul.addr %s144, 12
      %s146 = smul.addr %s145, 8
      %s147 = scalar_lea.vmem %s0, %s146
      %p148 = pneg %p35
      %p149 = pneg %p32
      %p150 = pneg %p56
      %p151 = pneg %p53
      %p152 = pneg %p77
      %p153 = pneg %p74
      %p154 = pneg %p103
      %p155 = pneg %p100
      %p156 = scmp.lt.s32.totalorder %s14, 1
      %s157 = scalar_select %p156, %s14, 1
      %s158 = smul.addr %s157, 8
      %s159 = smul.addr %s158, 8
      %s160 = scalar_lea.vmem %s3, %s159
      %p161 = scmp.lt.s32.totalorder %s14, 1
      %s162 = scalar_select %p161, %s14, 1
      %s163 = smul.addr %s162, 12
      %s164 = smul.addr %s163, 8
      %s165 = scalar_lea.vmem %s0, %s164
      %p166 = scmp.lt.s32.totalorder %s14, 1
      %s167 = scalar_select %p166, %s14, 1
      %s168 = smul.addr %s167, 8
      %s169 = smul.addr %s168, 8
      %s170 = scalar_lea.vmem %s3, %s169
      %v171 = vld [vmem:[%s165] sm:$0xff]
      %v172 = vld [vmem:[%s165 + $0x8] sm:$0xff]
      %v173 = vld [vmem:[%s165 + $0x10] sm:$0xff]
      %v174 = vld [vmem:[%s165 + $0x18] sm:$0xff]
      %v175 = vld [vmem:[%s165 + $0x20] sm:$0xff]
      %v176 = vld [vmem:[%s165 + $0x28] sm:$0xff]
      %v177 = vld [vmem:[%s165 + $0x30] sm:$0xff]
      %v178 = vld [vmem:[%s165 + $0x38] sm:$0xff]
      %v179 = vld [vmem:[%s165 + $0x40] sm:$0xff]
      %v180 = vld [vmem:[%s165 + $0x48] sm:$0xff]
      %v181 = vld [vmem:[%s165 + $0x50] sm:$0xff]
      %v182 = vld [vmem:[%s165 + $0x58] sm:$0xff]
      %v183 = vlaneseq
      %v184 = vand.u32 %v183, 127
      %v185 = vadd.s32 %v184, 128
      %v186 = vand.u32 %v184, 15
      %v187 = vand.u32 %v185, 15
      %v188 = vadd.s32 %v186, 4294967294
      %v189 = vadd.s32 %v187, 4294967294
      %vm190 = vcmp.ge.s32.totalorder %v188, 0
      %vm191 = vcmp.ge.s32.totalorder %v189, 0
      %vm192 = vcmp.lt.s32.totalorder %v188, 16
      %vm193 = vcmp.lt.s32.totalorder %v189, 16
      %vm194 = vmand %vm190, %vm192
      %vm195 = vmand %vm191, %vm193
      %v196 = vsel %vm194, 1, 0
      %v197 = vsel %vm195, 1, 0
      %vm198 = vcmp.eq.s32.totalorder %v196, 1
      %vm199 = vcmp.eq.s32.totalorder %v197, 1
      %v200 = vsel %vm198, %v171, 0.0
      %v201 = vsel %vm199, %v172, 0.0
      %v202 = vsel %vm198, %v174, 0.0
      %v203 = vsel %vm199, %v175, 0.0
      %v204 = vsel %vm198, %v177, 0.0
      %v205 = vsel %vm199, %v178, 0.0
      %v206 = vsel %vm198, %v180, 0.0
      %v207 = vsel %vm199, %v181, 0.0
      %v208 = vadd.s32 %v186, 4294967295
      %v209 = vadd.s32 %v187, 4294967295
      %vm210 = vcmp.ge.s32.totalorder %v208, 0
      %vm211 = vcmp.ge.s32.totalorder %v209, 0
      %vm212 = vcmp.lt.s32.totalorder %v208, 16
      %vm213 = vcmp.lt.s32.totalorder %v209, 16
      %vm214 = vmand %vm210, %vm212
      %vm215 = vmand %vm211, %vm213
      %v216 = vsel %vm214, 1, 0
      %v217 = vsel %vm215, 1, 0
      %vm218 = vcmp.eq.s32.totalorder %v216, 1
      %vm219 = vcmp.eq.s32.totalorder %v217, 1
      %232 = vrot.lane.b32.xlu0 %v171, 127
      %v233 = vpop.permute.xlu0 %232
      %234 = vrot.lane.b32.xlu0 %v172, 127
      %v235 = vpop.permute.xlu0 %234
      %236 = vrot.lane.b32.xlu0 %v173, 127
      %v237 = vpop.permute.xlu0 %236
      %238 = vrot.lane.b32.xlu0 %v174, 127
      %v239 = vpop.permute.xlu0 %238
      %240 = vrot.lane.b32.xlu0 %v175, 127
      %v241 = vpop.permute.xlu0 %240
      %242 = vrot.lane.b32.xlu0 %v176, 127
      %v243 = vpop.permute.xlu0 %242
      %244 = vrot.lane.b32.xlu0 %v177, 127
      %v245 = vpop.permute.xlu0 %244
      %246 = vrot.lane.b32.xlu0 %v178, 127
      %v247 = vpop.permute.xlu0 %246
      %248 = vrot.lane.b32.xlu0 %v179, 127
      %v249 = vpop.permute.xlu0 %248
      %250 = vrot.lane.b32.xlu0 %v180, 127
      %v251 = vpop.permute.xlu0 %250
      %252 = vrot.lane.b32.xlu0 %v181, 127
      %v253 = vpop.permute.xlu0 %252
      %254 = vrot.lane.b32.xlu0 %v182, 127
      %v255 = vpop.permute.xlu0 %254
      %vm256 = vcmask 1039360
      %v257 = vsel %vm256, %v233, %v235
      %v258 = vsel %vm256, %v235, %v237
      %v259 = vsel %vm256, %v239, %v241
      %v260 = vsel %vm256, %v241, %v243
      %v261 = vsel %vm256, %v245, %v247
      %v262 = vsel %vm256, %v247, %v249
      %v263 = vsel %vm256, %v251, %v253
      %v264 = vsel %vm256, %v253, %v255
      %v273 = vsel %vm218, %v257, 0.0
      %v274 = vsel %vm219, %v258, 0.0
      %v275 = vsel %vm218, %v259, 0.0
      %v276 = vsel %vm219, %v260, 0.0
      %v277 = vsel %vm218, %v261, 0.0
      %v278 = vsel %vm219, %v262, 0.0
      %v279 = vsel %vm218, %v263, 0.0
      %v280 = vsel %vm219, %v264, 0.0
      %v281 = vadd.s32 %v186, 1
      %v282 = vadd.s32 %v187, 1
      %vm283 = vcmp.ge.s32.totalorder %v281, 0
      %vm284 = vcmp.ge.s32.totalorder %v282, 0
      %vm285 = vcmp.lt.s32.totalorder %v281, 16
      %vm286 = vcmp.lt.s32.totalorder %v282, 16
      %vm287 = vmand %vm283, %vm285
      %vm288 = vmand %vm284, %vm286
      %v289 = vsel %vm287, 1, 0
      %v290 = vsel %vm288, 1, 0
      %vm291 = vcmp.eq.s32.totalorder %v289, 1
      %vm292 = vcmp.eq.s32.totalorder %v290, 1
      %293 = vrot.lane.b32.xlu0 %v171, 125
      %v294 = vpop.permute.xlu0 %293
      %295 = vrot.lane.b32.xlu0 %v172, 125
      %v296 = vpop.permute.xlu0 %295
      %297 = vrot.lane.b32.xlu0 %v173, 125
      %v298 = vpop.permute.xlu0 %297
      %299 = vrot.lane.b32.xlu0 %v174, 125
      %v300 = vpop.permute.xlu0 %299
      %301 = vrot.lane.b32.xlu0 %v175, 125
      %v302 = vpop.permute.xlu0 %301
      %303 = vrot.lane.b32.xlu0 %v176, 125
      %v304 = vpop.permute.xlu0 %303
      %305 = vrot.lane.b32.xlu0 %v177, 125
      %v306 = vpop.permute.xlu0 %305
      %307 = vrot.lane.b32.xlu0 %v178, 125
      %v308 = vpop.permute.xlu0 %307
      %309 = vrot.lane.b32.xlu0 %v179, 125
      %v310 = vpop.permute.xlu0 %309
      %311 = vrot.lane.b32.xlu0 %v180, 125
      %v312 = vpop.permute.xlu0 %311
      %313 = vrot.lane.b32.xlu0 %v181, 125
      %v314 = vpop.permute.xlu0 %313
      %315 = vrot.lane.b32.xlu0 %v182, 125
      %v316 = vpop.permute.xlu0 %315
      %vm317 = vcmask 1022976
      %v318 = vsel %vm317, %v294, %v296
      %v319 = vsel %vm317, %v296, %v298
      %v320 = vsel %vm317, %v300, %v302
      %v321 = vsel %vm317, %v302, %v304
      %v322 = vsel %vm317, %v306, %v308
      %v323 = vsel %vm317, %v308, %v310
      %v324 = vsel %vm317, %v312, %v314
      %v325 = vsel %vm317, %v314, %v316
      %v334 = vsel %vm291, %v318, 0.0
      %v335 = vsel %vm292, %v319, 0.0
      %v336 = vsel %vm291, %v320, 0.0
      %v337 = vsel %vm292, %v321, 0.0
      %v338 = vsel %vm291, %v322, 0.0
      %v339 = vsel %vm292, %v323, 0.0
      %v340 = vsel %vm291, %v324, 0.0
      %v341 = vsel %vm292, %v325, 0.0
      %v342 = vadd.s32 %v186, 2
      %v343 = vadd.s32 %v187, 2
      %vm344 = vcmp.ge.s32.totalorder %v342, 0
      %vm345 = vcmp.ge.s32.totalorder %v343, 0
      %vm346 = vcmp.lt.s32.totalorder %v342, 16
      %vm347 = vcmp.lt.s32.totalorder %v343, 16
      %vm348 = vmand %vm344, %vm346
      %vm349 = vmand %vm345, %vm347
      %v350 = vsel %vm348, 1, 0
      %v351 = vsel %vm349, 1, 0
      %vm352 = vcmp.eq.s32.totalorder %v350, 1
      %vm353 = vcmp.eq.s32.totalorder %v351, 1
      %354 = vrot.lane.b32.xlu0 %v171, 124
      %v355 = vpop.permute.xlu0 %354
      %356 = vrot.lane.b32.xlu0 %v172, 124
      %v357 = vpop.permute.xlu0 %356
      %358 = vrot.lane.b32.xlu0 %v173, 124
      %v359 = vpop.permute.xlu0 %358
      %360 = vrot.lane.b32.xlu0 %v174, 124
      %v361 = vpop.permute.xlu0 %360
      %362 = vrot.lane.b32.xlu0 %v175, 124
      %v363 = vpop.permute.xlu0 %362
      %364 = vrot.lane.b32.xlu0 %v176, 124
      %v365 = vpop.permute.xlu0 %364
      %366 = vrot.lane.b32.xlu0 %v177, 124
      %v367 = vpop.permute.xlu0 %366
      %368 = vrot.lane.b32.xlu0 %v178, 124
      %v369 = vpop.permute.xlu0 %368
      %370 = vrot.lane.b32.xlu0 %v179, 124
      %v371 = vpop.permute.xlu0 %370
      %372 = vrot.lane.b32.xlu0 %v180, 124
      %v373 = vpop.permute.xlu0 %372
      %374 = vrot.lane.b32.xlu0 %v181, 124
      %v375 = vpop.permute.xlu0 %374
      %376 = vrot.lane.b32.xlu0 %v182, 124
      %v377 = vpop.permute.xlu0 %376
      %vm378 = vcmask 1014784
      %v379 = vsel %vm378, %v355, %v357
      %v380 = vsel %vm378, %v357, %v359
      %v381 = vsel %vm378, %v361, %v363
      %v382 = vsel %vm378, %v363, %v365
      %v383 = vsel %vm378, %v367, %v369
      %v384 = vsel %vm378, %v369, %v371
      %v385 = vsel %vm378, %v373, %v375
      %v386 = vsel %vm378, %v375, %v377
      %v395 = vsel %vm352, %v379, 0.0
      %v396 = vsel %vm353, %v380, 0.0
      %v397 = vsel %vm352, %v381, 0.0
      %v398 = vsel %vm353, %v382, 0.0
      %v399 = vsel %vm352, %v383, 0.0
      %v400 = vsel %vm353, %v384, 0.0
      %v401 = vsel %vm352, %v385, 0.0
      %v402 = vsel %vm353, %v386, 0.0
      %403 = vrot.lane.b32.xlu0 %v171, 112
      %v404 = vpop.permute.xlu0 %403
      %405 = vrot.lane.b32.xlu0 %v172, 112
      %v406 = vpop.permute.xlu0 %405
      %407 = vrot.lane.b32.xlu0 %v173, 112
      %v408 = vpop.permute.xlu0 %407
      %409 = vrot.lane.b32.xlu0 %v174, 112
      %v410 = vpop.permute.xlu0 %409
      %411 = vrot.lane.b32.xlu0 %v175, 112
      %v412 = vpop.permute.xlu0 %411
      %413 = vrot.lane.b32.xlu0 %v176, 112
      %v414 = vpop.permute.xlu0 %413
      %415 = vrot.lane.b32.xlu0 %v177, 112
      %v416 = vpop.permute.xlu0 %415
      %417 = vrot.lane.b32.xlu0 %v178, 112
      %v418 = vpop.permute.xlu0 %417
      %419 = vrot.lane.b32.xlu0 %v179, 112
      %v420 = vpop.permute.xlu0 %419
      %421 = vrot.lane.b32.xlu0 %v180, 112
      %v422 = vpop.permute.xlu0 %421
      %423 = vrot.lane.b32.xlu0 %v181, 112
      %v424 = vpop.permute.xlu0 %423
      %425 = vrot.lane.b32.xlu0 %v182, 112
      %v426 = vpop.permute.xlu0 %425
      %vm427 = vcmask 916480
      %v428 = vsel %vm427, %v404, %v406
      %v429 = vsel %vm427, %v406, %v408
      %v430 = vsel %vm427, %v410, %v412
      %v431 = vsel %vm427, %v412, %v414
      %v432 = vsel %vm427, %v416, %v418
      %v433 = vsel %vm427, %v418, %v420
      %v434 = vsel %vm427, %v422, %v424
      %v435 = vsel %vm427, %v424, %v426
      %v444 = vsel %vm198, %v428, 0.0
      %v445 = vsel %vm199, %v429, 0.0
      %v446 = vsel %vm198, %v430, 0.0
      %v447 = vsel %vm199, %v431, 0.0
      %v448 = vsel %vm198, %v432, 0.0
      %v449 = vsel %vm199, %v433, 0.0
      %v450 = vsel %vm198, %v434, 0.0
      %v451 = vsel %vm199, %v435, 0.0
      %452 = vrot.lane.b32.xlu0 %v171, 111
      %v453 = vpop.permute.xlu0 %452
      %454 = vrot.lane.b32.xlu0 %v172, 111
      %v455 = vpop.permute.xlu0 %454
      %456 = vrot.lane.b32.xlu0 %v173, 111
      %v457 = vpop.permute.xlu0 %456
      %458 = vrot.lane.b32.xlu0 %v174, 111
      %v459 = vpop.permute.xlu0 %458
      %460 = vrot.lane.b32.xlu0 %v175, 111
      %v461 = vpop.permute.xlu0 %460
      %462 = vrot.lane.b32.xlu0 %v176, 111
      %v463 = vpop.permute.xlu0 %462
      %464 = vrot.lane.b32.xlu0 %v177, 111
      %v465 = vpop.permute.xlu0 %464
      %466 = vrot.lane.b32.xlu0 %v178, 111
      %v467 = vpop.permute.xlu0 %466
      %468 = vrot.lane.b32.xlu0 %v179, 111
      %v469 = vpop.permute.xlu0 %468
      %470 = vrot.lane.b32.xlu0 %v180, 111
      %v471 = vpop.permute.xlu0 %470
      %472 = vrot.lane.b32.xlu0 %v181, 111
      %v473 = vpop.permute.xlu0 %472
      %474 = vrot.lane.b32.xlu0 %v182, 111
      %v475 = vpop.permute.xlu0 %474
      %vm476 = vcmask 908288
      %v477 = vsel %vm476, %v453, %v455
      %v478 = vsel %vm476, %v455, %v457
      %v479 = vsel %vm476, %v459, %v461
      %v480 = vsel %vm476, %v461, %v463
      %v481 = vsel %vm476, %v465, %v467
      %v482 = vsel %vm476, %v467, %v469
      %v483 = vsel %vm476, %v471, %v473
      %v484 = vsel %vm476, %v473, %v475
      %v493 = vsel %vm218, %v477, 0.0
      %v494 = vsel %vm219, %v478, 0.0
      %v495 = vsel %vm218, %v479, 0.0
      %v496 = vsel %vm219, %v480, 0.0
      %v497 = vsel %vm218, %v481, 0.0
      %v498 = vsel %vm219, %v482, 0.0
      %v499 = vsel %vm218, %v483, 0.0
      %v500 = vsel %vm219, %v484, 0.0
      %501 = vrot.lane.b32.xlu0 %v171, 109
      %v502 = vpop.permute.xlu0 %501
      %503 = vrot.lane.b32.xlu0 %v172, 109
      %v504 = vpop.permute.xlu0 %503
      %505 = vrot.lane.b32.xlu0 %v173, 109
      %v506 = vpop.permute.xlu0 %505
      %507 = vrot.lane.b32.xlu0 %v174, 109
      %v508 = vpop.permute.xlu0 %507
      %509 = vrot.lane.b32.xlu0 %v175, 109
      %v510 = vpop.permute.xlu0 %509
      %511 = vrot.lane.b32.xlu0 %v176, 109
      %v512 = vpop.permute.xlu0 %511
      %513 = vrot.lane.b32.xlu0 %v177, 109
      %v514 = vpop.permute.xlu0 %513
      %515 = vrot.lane.b32.xlu0 %v178, 109
      %v516 = vpop.permute.xlu0 %515
      %517 = vrot.lane.b32.xlu0 %v179, 109
      %v518 = vpop.permute.xlu0 %517
      %519 = vrot.lane.b32.xlu0 %v180, 109
      %v520 = vpop.permute.xlu0 %519
      %521 = vrot.lane.b32.xlu0 %v181, 109
      %v522 = vpop.permute.xlu0 %521
      %523 = vrot.lane.b32.xlu0 %v182, 109
      %v524 = vpop.permute.xlu0 %523
      %vm525 = vcmask 891904
      %v526 = vsel %vm525, %v502, %v504
      %v527 = vsel %vm525, %v504, %v506
      %v528 = vsel %vm525, %v508, %v510
      %v529 = vsel %vm525, %v510, %v512
      %v530 = vsel %vm525, %v514, %v516
      %v531 = vsel %vm525, %v516, %v518
      %v532 = vsel %vm525, %v520, %v522
      %v533 = vsel %vm525, %v522, %v524
      %v542 = vsel %vm291, %v526, 0.0
      %v543 = vsel %vm292, %v527, 0.0
      %v544 = vsel %vm291, %v528, 0.0
      %v545 = vsel %vm292, %v529, 0.0
      %v546 = vsel %vm291, %v530, 0.0
      %v547 = vsel %vm292, %v531, 0.0
      %v548 = vsel %vm291, %v532, 0.0
      %v549 = vsel %vm292, %v533, 0.0
      %550 = vrot.lane.b32.xlu0 %v171, 108
      %v551 = vpop.permute.xlu0 %550
      %552 = vrot.lane.b32.xlu0 %v172, 108
      %v553 = vpop.permute.xlu0 %552
      %554 = vrot.lane.b32.xlu0 %v173, 108
      %v555 = vpop.permute.xlu0 %554
      %556 = vrot.lane.b32.xlu0 %v174, 108
      %v557 = vpop.permute.xlu0 %556
      %558 = vrot.lane.b32.xlu0 %v175, 108
      %v559 = vpop.permute.xlu0 %558
      %560 = vrot.lane.b32.xlu0 %v176, 108
      %v561 = vpop.permute.xlu0 %560
      %562 = vrot.lane.b32.xlu0 %v177, 108
      %v563 = vpop.permute.xlu0 %562
      %564 = vrot.lane.b32.xlu0 %v178, 108
      %v565 = vpop.permute.xlu0 %564
      %566 = vrot.lane.b32.xlu0 %v179, 108
      %v567 = vpop.permute.xlu0 %566
      %568 = vrot.lane.b32.xlu0 %v180, 108
      %v569 = vpop.permute.xlu0 %568
      %570 = vrot.lane.b32.xlu0 %v181, 108
      %v571 = vpop.permute.xlu0 %570
      %572 = vrot.lane.b32.xlu0 %v182, 108
      %v573 = vpop.permute.xlu0 %572
      %vm574 = vcmask 883712
      %v575 = vsel %vm574, %v551, %v553
      %v576 = vsel %vm574, %v553, %v555
      %v577 = vsel %vm574, %v557, %v559
      %v578 = vsel %vm574, %v559, %v561
      %v579 = vsel %vm574, %v563, %v565
      %v580 = vsel %vm574, %v565, %v567
      %v581 = vsel %vm574, %v569, %v571
      %v582 = vsel %vm574, %v571, %v573
      %v591 = vsel %vm352, %v575, 0.0
      %v592 = vsel %vm353, %v576, 0.0
      %v593 = vsel %vm352, %v577, 0.0
      %v594 = vsel %vm353, %v578, 0.0
      %v595 = vsel %vm352, %v579, 0.0
      %v596 = vsel %vm353, %v580, 0.0
      %v597 = vsel %vm352, %v581, 0.0
      %v598 = vsel %vm353, %v582, 0.0
      %599 = vrot.lane.b32.xlu0 %v171, 96
      %v600 = vpop.permute.xlu0 %599
      %601 = vrot.lane.b32.xlu0 %v172, 96
      %v602 = vpop.permute.xlu0 %601
      %603 = vrot.lane.b32.xlu0 %v173, 96
      %v604 = vpop.permute.xlu0 %603
      %605 = vrot.lane.b32.xlu0 %v174, 96
      %v606 = vpop.permute.xlu0 %605
      %607 = vrot.lane.b32.xlu0 %v175, 96
      %v608 = vpop.permute.xlu0 %607
      %609 = vrot.lane.b32.xlu0 %v176, 96
      %v610 = vpop.permute.xlu0 %609
      %611 = vrot.lane.b32.xlu0 %v177, 96
      %v612 = vpop.permute.xlu0 %611
      %613 = vrot.lane.b32.xlu0 %v178, 96
      %v614 = vpop.permute.xlu0 %613
      %615 = vrot.lane.b32.xlu0 %v179, 96
      %v616 = vpop.permute.xlu0 %615
      %617 = vrot.lane.b32.xlu0 %v180, 96
      %v618 = vpop.permute.xlu0 %617
      %619 = vrot.lane.b32.xlu0 %v181, 96
      %v620 = vpop.permute.xlu0 %619
      %621 = vrot.lane.b32.xlu0 %v182, 96
      %v622 = vpop.permute.xlu0 %621
      %vm623 = vcmask 785408
      %v624 = vsel %vm623, %v600, %v602
      %v625 = vsel %vm623, %v602, %v604
      %v626 = vsel %vm623, %v606, %v608
      %v627 = vsel %vm623, %v608, %v610
      %v628 = vsel %vm623, %v612, %v614
      %v629 = vsel %vm623, %v614, %v616
      %v630 = vsel %vm623, %v618, %v620
      %v631 = vsel %vm623, %v620, %v622
      %v640 = vsel %vm198, %v624, 0.0
      %v641 = vsel %vm199, %v625, 0.0
      %v642 = vsel %vm198, %v626, 0.0
      %v643 = vsel %vm199, %v627, 0.0
      %v644 = vsel %vm198, %v628, 0.0
      %v645 = vsel %vm199, %v629, 0.0
      %v646 = vsel %vm198, %v630, 0.0
      %v647 = vsel %vm199, %v631, 0.0
      %648 = vrot.lane.b32.xlu0 %v171, 95
      %v649 = vpop.permute.xlu0 %648
      %650 = vrot.lane.b32.xlu0 %v172, 95
      %v651 = vpop.permute.xlu0 %650
      %652 = vrot.lane.b32.xlu0 %v173, 95
      %v653 = vpop.permute.xlu0 %652
      %654 = vrot.lane.b32.xlu0 %v174, 95
      %v655 = vpop.permute.xlu0 %654
      %656 = vrot.lane.b32.xlu0 %v175, 95
      %v657 = vpop.permute.xlu0 %656
      %658 = vrot.lane.b32.xlu0 %v176, 95
      %v659 = vpop.permute.xlu0 %658
      %660 = vrot.lane.b32.xlu0 %v177, 95
      %v661 = vpop.permute.xlu0 %660
      %662 = vrot.lane.b32.xlu0 %v178, 95
      %v663 = vpop.permute.xlu0 %662
      %664 = vrot.lane.b32.xlu0 %v179, 95
      %v665 = vpop.permute.xlu0 %664
      %666 = vrot.lane.b32.xlu0 %v180, 95
      %v667 = vpop.permute.xlu0 %666
      %668 = vrot.lane.b32.xlu0 %v181, 95
      %v669 = vpop.permute.xlu0 %668
      %670 = vrot.lane.b32.xlu0 %v182, 95
      %v671 = vpop.permute.xlu0 %670
      %vm672 = vcmask 777216
      %v673 = vsel %vm672, %v649, %v651
      %v674 = vsel %vm672, %v651, %v653
      %v675 = vsel %vm672, %v655, %v657
      %v676 = vsel %vm672, %v657, %v659
      %v677 = vsel %vm672, %v661, %v663
      %v678 = vsel %vm672, %v663, %v665
      %v679 = vsel %vm672, %v667, %v669
      %v680 = vsel %vm672, %v669, %v671
      %v689 = vsel %vm218, %v673, 0.0
      %v690 = vsel %vm219, %v674, 0.0
      %v691 = vsel %vm218, %v675, 0.0
      %v692 = vsel %vm219, %v676, 0.0
      %v693 = vsel %vm218, %v677, 0.0
      %v694 = vsel %vm219, %v678, 0.0
      %v695 = vsel %vm218, %v679, 0.0
      %v696 = vsel %vm219, %v680, 0.0
      %697 = vrot.lane.b32.xlu0 %v171, 93
      %v698 = vpop.permute.xlu0 %697
      %699 = vrot.lane.b32.xlu0 %v172, 93
      %v700 = vpop.permute.xlu0 %699
      %701 = vrot.lane.b32.xlu0 %v173, 93
      %v702 = vpop.permute.xlu0 %701
      %703 = vrot.lane.b32.xlu0 %v174, 93
      %v704 = vpop.permute.xlu0 %703
      %705 = vrot.lane.b32.xlu0 %v175, 93
      %v706 = vpop.permute.xlu0 %705
      %707 = vrot.lane.b32.xlu0 %v176, 93
      %v708 = vpop.permute.xlu0 %707
      %709 = vrot.lane.b32.xlu0 %v177, 93
      %v710 = vpop.permute.xlu0 %709
      %711 = vrot.lane.b32.xlu0 %v178, 93
      %v712 = vpop.permute.xlu0 %711
      %713 = vrot.lane.b32.xlu0 %v179, 93
      %v714 = vpop.permute.xlu0 %713
      %715 = vrot.lane.b32.xlu0 %v180, 93
      %v716 = vpop.permute.xlu0 %715
      %717 = vrot.lane.b32.xlu0 %v181, 93
      %v718 = vpop.permute.xlu0 %717
      %719 = vrot.lane.b32.xlu0 %v182, 93
      %v720 = vpop.permute.xlu0 %719
      %vm721 = vcmask 760832
      %v722 = vsel %vm721, %v698, %v700
      %v723 = vsel %vm721, %v700, %v702
      %v724 = vsel %vm721, %v704, %v706
      %v725 = vsel %vm721, %v706, %v708
      %v726 = vsel %vm721, %v710, %v712
      %v727 = vsel %vm721, %v712, %v714
      %v728 = vsel %vm721, %v716, %v718
      %v729 = vsel %vm721, %v718, %v720
      %v738 = vsel %vm291, %v722, 0.0
      %v739 = vsel %vm292, %v723, 0.0
      %v740 = vsel %vm291, %v724, 0.0
      %v741 = vsel %vm292, %v725, 0.0
      %v742 = vsel %vm291, %v726, 0.0
      %v743 = vsel %vm292, %v727, 0.0
      %v744 = vsel %vm291, %v728, 0.0
      %v745 = vsel %vm292, %v729, 0.0
      %746 = vrot.lane.b32.xlu0 %v171, 92
      %v747 = vpop.permute.xlu0 %746
      %748 = vrot.lane.b32.xlu0 %v172, 92
      %v749 = vpop.permute.xlu0 %748
      %750 = vrot.lane.b32.xlu0 %v173, 92
      %v751 = vpop.permute.xlu0 %750
      %752 = vrot.lane.b32.xlu0 %v174, 92
      %v753 = vpop.permute.xlu0 %752
      %754 = vrot.lane.b32.xlu0 %v175, 92
      %v755 = vpop.permute.xlu0 %754
      %756 = vrot.lane.b32.xlu0 %v176, 92
      %v757 = vpop.permute.xlu0 %756
      %758 = vrot.lane.b32.xlu0 %v177, 92
      %v759 = vpop.permute.xlu0 %758
      %760 = vrot.lane.b32.xlu0 %v178, 92
      %v761 = vpop.permute.xlu0 %760
      %762 = vrot.lane.b32.xlu0 %v179, 92
      %v763 = vpop.permute.xlu0 %762
      %764 = vrot.lane.b32.xlu0 %v180, 92
      %v765 = vpop.permute.xlu0 %764
      %766 = vrot.lane.b32.xlu0 %v181, 92
      %v767 = vpop.permute.xlu0 %766
      %768 = vrot.lane.b32.xlu0 %v182, 92
      %v769 = vpop.permute.xlu0 %768
      %vm770 = vcmask 752640
      %v771 = vsel %vm770, %v747, %v749
      %v772 = vsel %vm770, %v749, %v751
      %v773 = vsel %vm770, %v753, %v755
      %v774 = vsel %vm770, %v755, %v757
      %v775 = vsel %vm770, %v759, %v761
      %v776 = vsel %vm770, %v761, %v763
      %v777 = vsel %vm770, %v765, %v767
      %v778 = vsel %vm770, %v767, %v769
      %v787 = vsel %vm352, %v771, 0.0
      %v788 = vsel %vm353, %v772, 0.0
      %v789 = vsel %vm352, %v773, 0.0
      %v790 = vsel %vm353, %v774, 0.0
      %v791 = vsel %vm352, %v775, 0.0
      %v792 = vsel %vm353, %v776, 0.0
      %v793 = vsel %vm352, %v777, 0.0
      %v794 = vsel %vm353, %v778, 0.0
      %795 = vrot.lane.b32.xlu0 %v171, 80
      %v796 = vpop.permute.xlu0 %795
      %797 = vrot.lane.b32.xlu0 %v172, 80
      %v798 = vpop.permute.xlu0 %797
      %799 = vrot.lane.b32.xlu0 %v173, 80
      %v800 = vpop.permute.xlu0 %799
      %801 = vrot.lane.b32.xlu0 %v174, 80
      %v802 = vpop.permute.xlu0 %801
      %803 = vrot.lane.b32.xlu0 %v175, 80
      %v804 = vpop.permute.xlu0 %803
      %805 = vrot.lane.b32.xlu0 %v176, 80
      %v806 = vpop.permute.xlu0 %805
      %807 = vrot.lane.b32.xlu0 %v177, 80
      %v808 = vpop.permute.xlu0 %807
      %809 = vrot.lane.b32.xlu0 %v178, 80
      %v810 = vpop.permute.xlu0 %809
      %811 = vrot.lane.b32.xlu0 %v179, 80
      %v812 = vpop.permute.xlu0 %811
      %813 = vrot.lane.b32.xlu0 %v180, 80
      %v814 = vpop.permute.xlu0 %813
      %815 = vrot.lane.b32.xlu0 %v181, 80
      %v816 = vpop.permute.xlu0 %815
      %817 = vrot.lane.b32.xlu0 %v182, 80
      %v818 = vpop.permute.xlu0 %817
      %vm819 = vcmask 654336
      %v820 = vsel %vm819, %v796, %v798
      %v821 = vsel %vm819, %v798, %v800
      %v822 = vsel %vm819, %v802, %v804
      %v823 = vsel %vm819, %v804, %v806
      %v824 = vsel %vm819, %v808, %v810
      %v825 = vsel %vm819, %v810, %v812
      %v826 = vsel %vm819, %v814, %v816
      %v827 = vsel %vm819, %v816, %v818
      %v836 = vsel %vm198, %v820, 0.0
      %v837 = vsel %vm199, %v821, 0.0
      %v838 = vsel %vm198, %v822, 0.0
      %v839 = vsel %vm199, %v823, 0.0
      %v840 = vsel %vm198, %v824, 0.0
      %v841 = vsel %vm199, %v825, 0.0
      %v842 = vsel %vm198, %v826, 0.0
      %v843 = vsel %vm199, %v827, 0.0
      %844 = vrot.lane.b32.xlu0 %v171, 79
      %v845 = vpop.permute.xlu0 %844
      %846 = vrot.lane.b32.xlu0 %v172, 79
      %v847 = vpop.permute.xlu0 %846
      %848 = vrot.lane.b32.xlu0 %v173, 79
      %v849 = vpop.permute.xlu0 %848
      %850 = vrot.lane.b32.xlu0 %v174, 79
      %v851 = vpop.permute.xlu0 %850
      %852 = vrot.lane.b32.xlu0 %v175, 79
      %v853 = vpop.permute.xlu0 %852
      %854 = vrot.lane.b32.xlu0 %v176, 79
      %v855 = vpop.permute.xlu0 %854
      %856 = vrot.lane.b32.xlu0 %v177, 79
      %v857 = vpop.permute.xlu0 %856
      %858 = vrot.lane.b32.xlu0 %v178, 79
      %v859 = vpop.permute.xlu0 %858
      %860 = vrot.lane.b32.xlu0 %v179, 79
      %v861 = vpop.permute.xlu0 %860
      %862 = vrot.lane.b32.xlu0 %v180, 79
      %v863 = vpop.permute.xlu0 %862
      %864 = vrot.lane.b32.xlu0 %v181, 79
      %v865 = vpop.permute.xlu0 %864
      %866 = vrot.lane.b32.xlu0 %v182, 79
      %v867 = vpop.permute.xlu0 %866
      %vm868 = vcmask 646144
      %v869 = vsel %vm868, %v845, %v847
      %v870 = vsel %vm868, %v847, %v849
      %v871 = vsel %vm868, %v851, %v853
      %v872 = vsel %vm868, %v853, %v855
      %v873 = vsel %vm868, %v857, %v859
      %v874 = vsel %vm868, %v859, %v861
      %v875 = vsel %vm868, %v863, %v865
      %v876 = vsel %vm868, %v865, %v867
      %v885 = vsel %vm218, %v869, 0.0
      %v886 = vsel %vm219, %v870, 0.0
      %v887 = vsel %vm218, %v871, 0.0
      %v888 = vsel %vm219, %v872, 0.0
      %v889 = vsel %vm218, %v873, 0.0
      %v890 = vsel %vm219, %v874, 0.0
      %v891 = vsel %vm218, %v875, 0.0
      %v892 = vsel %vm219, %v876, 0.0
      %893 = vrot.lane.b32.xlu0 %v171, 77
      %v894 = vpop.permute.xlu0 %893
      %895 = vrot.lane.b32.xlu0 %v172, 77
      %v896 = vpop.permute.xlu0 %895
      %897 = vrot.lane.b32.xlu0 %v173, 77
      %v898 = vpop.permute.xlu0 %897
      %899 = vrot.lane.b32.xlu0 %v174, 77
      %v900 = vpop.permute.xlu0 %899
      %901 = vrot.lane.b32.xlu0 %v175, 77
      %v902 = vpop.permute.xlu0 %901
      %903 = vrot.lane.b32.xlu0 %v176, 77
      %v904 = vpop.permute.xlu0 %903
      %905 = vrot.lane.b32.xlu0 %v177, 77
      %v906 = vpop.permute.xlu0 %905
      %907 = vrot.lane.b32.xlu0 %v178, 77
      %v908 = vpop.permute.xlu0 %907
      %909 = vrot.lane.b32.xlu0 %v179, 77
      %v910 = vpop.permute.xlu0 %909
      %911 = vrot.lane.b32.xlu0 %v180, 77
      %v912 = vpop.permute.xlu0 %911
      %913 = vrot.lane.b32.xlu0 %v181, 77
      %v914 = vpop.permute.xlu0 %913
      %915 = vrot.lane.b32.xlu0 %v182, 77
      %v916 = vpop.permute.xlu0 %915
      %vm917 = vcmask 629760
      %v918 = vsel %vm917, %v894, %v896
      %v919 = vsel %vm917, %v896, %v898
      %v920 = vsel %vm917, %v900, %v902
      %v921 = vsel %vm917, %v902, %v904
      %v922 = vsel %vm917, %v906, %v908
      %v923 = vsel %vm917, %v908, %v910
      %v924 = vsel %vm917, %v912, %v914
      %v925 = vsel %vm917, %v914, %v916
      %v934 = vsel %vm291, %v918, 0.0
      %v935 = vsel %vm292, %v919, 0.0
      %v936 = vsel %vm291, %v920, 0.0
      %v937 = vsel %vm292, %v921, 0.0
      %v938 = vsel %vm291, %v922, 0.0
      %v939 = vsel %vm292, %v923, 0.0
      %v940 = vsel %vm291, %v924, 0.0
      %v941 = vsel %vm292, %v925, 0.0
      %942 = vrot.lane.b32.xlu0 %v171, 76
      %v943 = vpop.permute.xlu0 %942
      %944 = vrot.lane.b32.xlu0 %v172, 76
      %v945 = vpop.permute.xlu0 %944
      %946 = vrot.lane.b32.xlu0 %v173, 76
      %v947 = vpop.permute.xlu0 %946
      %948 = vrot.lane.b32.xlu0 %v174, 76
      %v949 = vpop.permute.xlu0 %948
      %950 = vrot.lane.b32.xlu0 %v175, 76
      %v951 = vpop.permute.xlu0 %950
      %952 = vrot.lane.b32.xlu0 %v176, 76
      %v953 = vpop.permute.xlu0 %952
      %954 = vrot.lane.b32.xlu0 %v177, 76
      %v955 = vpop.permute.xlu0 %954
      %956 = vrot.lane.b32.xlu0 %v178, 76
      %v957 = vpop.permute.xlu0 %956
      %958 = vrot.lane.b32.xlu0 %v179, 76
      %v959 = vpop.permute.xlu0 %958
      %960 = vrot.lane.b32.xlu0 %v180, 76
      %v961 = vpop.permute.xlu0 %960
      %962 = vrot.lane.b32.xlu0 %v181, 76
      %v963 = vpop.permute.xlu0 %962
      %964 = vrot.lane.b32.xlu0 %v182, 76
      %v965 = vpop.permute.xlu0 %964
      %vm966 = vcmask 621568
      %v967 = vsel %vm966, %v943, %v945
      %v968 = vsel %vm966, %v945, %v947
      %v969 = vsel %vm966, %v949, %v951
      %v970 = vsel %vm966, %v951, %v953
      %v971 = vsel %vm966, %v955, %v957
      %v972 = vsel %vm966, %v957, %v959
      %v973 = vsel %vm966, %v961, %v963
      %v974 = vsel %vm966, %v963, %v965
      %v983 = vsel %vm352, %v967, 0.0
      %v984 = vsel %vm353, %v968, 0.0
      %v985 = vsel %vm352, %v969, 0.0
      %v986 = vsel %vm353, %v970, 0.0
      %v987 = vsel %vm352, %v971, 0.0
      %v988 = vsel %vm353, %v972, 0.0
      %v989 = vsel %vm352, %v973, 0.0
      %v990 = vsel %vm353, %v974, 0.0
      %991 = vrot.lane.b32.xlu0 %v171, 64
      %v992 = vpop.permute.xlu0 %991
      %993 = vrot.lane.b32.xlu0 %v172, 64
      %v994 = vpop.permute.xlu0 %993
      %995 = vrot.lane.b32.xlu0 %v173, 64
      %v996 = vpop.permute.xlu0 %995
      %997 = vrot.lane.b32.xlu0 %v174, 64
      %v998 = vpop.permute.xlu0 %997
      %999 = vrot.lane.b32.xlu0 %v175, 64
      %v1000 = vpop.permute.xlu0 %999
      %1001 = vrot.lane.b32.xlu0 %v176, 64
      %v1002 = vpop.permute.xlu0 %1001
      %1003 = vrot.lane.b32.xlu0 %v177, 64
      %v1004 = vpop.permute.xlu0 %1003
      %1005 = vrot.lane.b32.xlu0 %v178, 64
      %v1006 = vpop.permute.xlu0 %1005
      %1007 = vrot.lane.b32.xlu0 %v179, 64
      %v1008 = vpop.permute.xlu0 %1007
      %1009 = vrot.lane.b32.xlu0 %v180, 64
      %v1010 = vpop.permute.xlu0 %1009
      %1011 = vrot.lane.b32.xlu0 %v181, 64
      %v1012 = vpop.permute.xlu0 %1011
      %1013 = vrot.lane.b32.xlu0 %v182, 64
      %v1014 = vpop.permute.xlu0 %1013
      %vm1015 = vcmask 523264
      %v1016 = vsel %vm1015, %v992, %v994
      %v1017 = vsel %vm1015, %v994, %v996
      %v1018 = vsel %vm1015, %v998, %v1000
      %v1019 = vsel %vm1015, %v1000, %v1002
      %v1020 = vsel %vm1015, %v1004, %v1006
      %v1021 = vsel %vm1015, %v1006, %v1008
      %v1022 = vsel %vm1015, %v1010, %v1012
      %v1023 = vsel %vm1015, %v1012, %v1014
      %v1032 = vsel %vm198, %v1016, 0.0
      %v1033 = vsel %vm199, %v1017, 0.0
      %v1034 = vsel %vm198, %v1018, 0.0
      %v1035 = vsel %vm199, %v1019, 0.0
      %v1036 = vsel %vm198, %v1020, 0.0
      %v1037 = vsel %vm199, %v1021, 0.0
      %v1038 = vsel %vm198, %v1022, 0.0
      %v1039 = vsel %vm199, %v1023, 0.0
      %1040 = vrot.lane.b32.xlu0 %v171, 63
      %v1041 = vpop.permute.xlu0 %1040
      %1042 = vrot.lane.b32.xlu0 %v172, 63
      %v1043 = vpop.permute.xlu0 %1042
      %1044 = vrot.lane.b32.xlu0 %v173, 63
      %v1045 = vpop.permute.xlu0 %1044
      %1046 = vrot.lane.b32.xlu0 %v174, 63
      %v1047 = vpop.permute.xlu0 %1046
      %1048 = vrot.lane.b32.xlu0 %v175, 63
      %v1049 = vpop.permute.xlu0 %1048
      %1050 = vrot.lane.b32.xlu0 %v176, 63
      %v1051 = vpop.permute.xlu0 %1050
      %1052 = vrot.lane.b32.xlu0 %v177, 63
      %v1053 = vpop.permute.xlu0 %1052
      %1054 = vrot.lane.b32.xlu0 %v178, 63
      %v1055 = vpop.permute.xlu0 %1054
      %1056 = vrot.lane.b32.xlu0 %v179, 63
      %v1057 = vpop.permute.xlu0 %1056
      %1058 = vrot.lane.b32.xlu0 %v180, 63
      %v1059 = vpop.permute.xlu0 %1058
      %1060 = vrot.lane.b32.xlu0 %v181, 63
      %v1061 = vpop.permute.xlu0 %1060
      %1062 = vrot.lane.b32.xlu0 %v182, 63
      %v1063 = vpop.permute.xlu0 %1062
      %vm1064 = vcmask 515072
      %v1065 = vsel %vm1064, %v1041, %v1043
      %v1066 = vsel %vm1064, %v1043, %v1045
      %v1067 = vsel %vm1064, %v1047, %v1049
      %v1068 = vsel %vm1064, %v1049, %v1051
      %v1069 = vsel %vm1064, %v1053, %v1055
      %v1070 = vsel %vm1064, %v1055, %v1057
      %v1071 = vsel %vm1064, %v1059, %v1061
      %v1072 = vsel %vm1064, %v1061, %v1063
      %v1081 = vsel %vm218, %v1065, 0.0
      %v1082 = vsel %vm219, %v1066, 0.0
      %v1083 = vsel %vm218, %v1067, 0.0
      %v1084 = vsel %vm219, %v1068, 0.0
      %v1085 = vsel %vm218, %v1069, 0.0
      %v1086 = vsel %vm219, %v1070, 0.0
      %v1087 = vsel %vm218, %v1071, 0.0
      %v1088 = vsel %vm219, %v1072, 0.0
      %1089 = vrot.lane.b32.xlu0 %v171, 61
      %v1090 = vpop.permute.xlu0 %1089
      %1091 = vrot.lane.b32.xlu0 %v172, 61
      %v1092 = vpop.permute.xlu0 %1091
      %1093 = vrot.lane.b32.xlu0 %v173, 61
      %v1094 = vpop.permute.xlu0 %1093
      %1095 = vrot.lane.b32.xlu0 %v174, 61
      %v1096 = vpop.permute.xlu0 %1095
      %1097 = vrot.lane.b32.xlu0 %v175, 61
      %v1098 = vpop.permute.xlu0 %1097
      %1099 = vrot.lane.b32.xlu0 %v176, 61
      %v1100 = vpop.permute.xlu0 %1099
      %1101 = vrot.lane.b32.xlu0 %v177, 61
      %v1102 = vpop.permute.xlu0 %1101
      %1103 = vrot.lane.b32.xlu0 %v178, 61
      %v1104 = vpop.permute.xlu0 %1103
      %1105 = vrot.lane.b32.xlu0 %v179, 61
      %v1106 = vpop.permute.xlu0 %1105
      %1107 = vrot.lane.b32.xlu0 %v180, 61
      %v1108 = vpop.permute.xlu0 %1107
      %1109 = vrot.lane.b32.xlu0 %v181, 61
      %v1110 = vpop.permute.xlu0 %1109
      %1111 = vrot.lane.b32.xlu0 %v182, 61
      %v1112 = vpop.permute.xlu0 %1111
      %vm1113 = vcmask 498688
      %v1114 = vsel %vm1113, %v1090, %v1092
      %v1115 = vsel %vm1113, %v1092, %v1094
      %v1116 = vsel %vm1113, %v1096, %v1098
      %v1117 = vsel %vm1113, %v1098, %v1100
      %v1118 = vsel %vm1113, %v1102, %v1104
      %v1119 = vsel %vm1113, %v1104, %v1106
      %v1120 = vsel %vm1113, %v1108, %v1110
      %v1121 = vsel %vm1113, %v1110, %v1112
      %v1130 = vsel %vm291, %v1114, 0.0
      %v1131 = vsel %vm292, %v1115, 0.0
      %v1132 = vsel %vm291, %v1116, 0.0
      %v1133 = vsel %vm292, %v1117, 0.0
      %v1134 = vsel %vm291, %v1118, 0.0
      %v1135 = vsel %vm292, %v1119, 0.0
      %v1136 = vsel %vm291, %v1120, 0.0
      %v1137 = vsel %vm292, %v1121, 0.0
      %1138 = vrot.lane.b32.xlu0 %v171, 60
      %v1139 = vpop.permute.xlu0 %1138
      %1140 = vrot.lane.b32.xlu0 %v172, 60
      %v1141 = vpop.permute.xlu0 %1140
      %1142 = vrot.lane.b32.xlu0 %v173, 60
      %v1143 = vpop.permute.xlu0 %1142
      %1144 = vrot.lane.b32.xlu0 %v174, 60
      %v1145 = vpop.permute.xlu0 %1144
      %1146 = vrot.lane.b32.xlu0 %v175, 60
      %v1147 = vpop.permute.xlu0 %1146
      %1148 = vrot.lane.b32.xlu0 %v176, 60
      %v1149 = vpop.permute.xlu0 %1148
      %1150 = vrot.lane.b32.xlu0 %v177, 60
      %v1151 = vpop.permute.xlu0 %1150
      %1152 = vrot.lane.b32.xlu0 %v178, 60
      %v1153 = vpop.permute.xlu0 %1152
      %1154 = vrot.lane.b32.xlu0 %v179, 60
      %v1155 = vpop.permute.xlu0 %1154
      %1156 = vrot.lane.b32.xlu0 %v180, 60
      %v1157 = vpop.permute.xlu0 %1156
      %1158 = vrot.lane.b32.xlu0 %v181, 60
      %v1159 = vpop.permute.xlu0 %1158
      %1160 = vrot.lane.b32.xlu0 %v182, 60
      %v1161 = vpop.permute.xlu0 %1160
      %vm1162 = vcmask 490496
      %v1163 = vsel %vm1162, %v1139, %v1141
      %v1164 = vsel %vm1162, %v1141, %v1143
      %v1165 = vsel %vm1162, %v1145, %v1147
      %v1166 = vsel %vm1162, %v1147, %v1149
      %v1167 = vsel %vm1162, %v1151, %v1153
      %v1168 = vsel %vm1162, %v1153, %v1155
      %v1169 = vsel %vm1162, %v1157, %v1159
      %v1170 = vsel %vm1162, %v1159, %v1161
      %v1179 = vsel %vm352, %v1163, 0.0
      %v1180 = vsel %vm353, %v1164, 0.0
      %v1181 = vsel %vm352, %v1165, 0.0
      %v1182 = vsel %vm353, %v1166, 0.0
      %v1183 = vsel %vm352, %v1167, 0.0
      %v1184 = vsel %vm353, %v1168, 0.0
      %v1185 = vsel %vm352, %v1169, 0.0
      %v1186 = vsel %vm353, %v1170, 0.0
      %1187 = vrot.lane.b32.xlu0 %v171, 126
      %v1188 = vpop.permute.xlu0 %1187
      %1189 = vrot.lane.b32.xlu0 %v172, 126
      %v1190 = vpop.permute.xlu0 %1189
      %1191 = vrot.lane.b32.xlu0 %v173, 126
      %v1192 = vpop.permute.xlu0 %1191
      %1193 = vrot.lane.b32.xlu0 %v174, 126
      %v1194 = vpop.permute.xlu0 %1193
      %1195 = vrot.lane.b32.xlu0 %v175, 126
      %v1196 = vpop.permute.xlu0 %1195
      %1197 = vrot.lane.b32.xlu0 %v176, 126
      %v1198 = vpop.permute.xlu0 %1197
      %1199 = vrot.lane.b32.xlu0 %v177, 126
      %v1200 = vpop.permute.xlu0 %1199
      %1201 = vrot.lane.b32.xlu0 %v178, 126
      %v1202 = vpop.permute.xlu0 %1201
      %1203 = vrot.lane.b32.xlu0 %v179, 126
      %v1204 = vpop.permute.xlu0 %1203
      %1205 = vrot.lane.b32.xlu0 %v180, 126
      %v1206 = vpop.permute.xlu0 %1205
      %1207 = vrot.lane.b32.xlu0 %v181, 126
      %v1208 = vpop.permute.xlu0 %1207
      %1209 = vrot.lane.b32.xlu0 %v182, 126
      %v1210 = vpop.permute.xlu0 %1209
      %vm1211 = vcmask 1031168
      %v1212 = vsel %vm1211, %v1188, %v1190
      %v1213 = vsel %vm1211, %v1190, %v1192
      %v1214 = vsel %vm1211, %v1194, %v1196
      %v1215 = vsel %vm1211, %v1196, %v1198
      %v1216 = vsel %vm1211, %v1200, %v1202
      %v1217 = vsel %vm1211, %v1202, %v1204
      %v1218 = vsel %vm1211, %v1206, %v1208
      %v1219 = vsel %vm1211, %v1208, %v1210
      %1228 = vrot.lane.b32.xlu0 %v171, 110
      %v1229 = vpop.permute.xlu0 %1228
      %1230 = vrot.lane.b32.xlu0 %v172, 110
      %v1231 = vpop.permute.xlu0 %1230
      %1232 = vrot.lane.b32.xlu0 %v173, 110
      %v1233 = vpop.permute.xlu0 %1232
      %1234 = vrot.lane.b32.xlu0 %v174, 110
      %v1235 = vpop.permute.xlu0 %1234
      %1236 = vrot.lane.b32.xlu0 %v175, 110
      %v1237 = vpop.permute.xlu0 %1236
      %1238 = vrot.lane.b32.xlu0 %v176, 110
      %v1239 = vpop.permute.xlu0 %1238
      %1240 = vrot.lane.b32.xlu0 %v177, 110
      %v1241 = vpop.permute.xlu0 %1240
      %1242 = vrot.lane.b32.xlu0 %v178, 110
      %v1243 = vpop.permute.xlu0 %1242
      %1244 = vrot.lane.b32.xlu0 %v179, 110
      %v1245 = vpop.permute.xlu0 %1244
      %1246 = vrot.lane.b32.xlu0 %v180, 110
      %v1247 = vpop.permute.xlu0 %1246
      %1248 = vrot.lane.b32.xlu0 %v181, 110
      %v1249 = vpop.permute.xlu0 %1248
      %1250 = vrot.lane.b32.xlu0 %v182, 110
      %v1251 = vpop.permute.xlu0 %1250
      %vm1252 = vcmask 900096
      %v1253 = vsel %vm1252, %v1229, %v1231
      %v1254 = vsel %vm1252, %v1231, %v1233
      %v1255 = vsel %vm1252, %v1235, %v1237
      %v1256 = vsel %vm1252, %v1237, %v1239
      %v1257 = vsel %vm1252, %v1241, %v1243
      %v1258 = vsel %vm1252, %v1243, %v1245
      %v1259 = vsel %vm1252, %v1247, %v1249
      %v1260 = vsel %vm1252, %v1249, %v1251
      %1269 = vrot.lane.b32.xlu0 %v171, 94
      %v1270 = vpop.permute.xlu0 %1269
      %1271 = vrot.lane.b32.xlu0 %v172, 94
      %v1272 = vpop.permute.xlu0 %1271
      %1273 = vrot.lane.b32.xlu0 %v173, 94
      %v1274 = vpop.permute.xlu0 %1273
      %1275 = vrot.lane.b32.xlu0 %v174, 94
      %v1276 = vpop.permute.xlu0 %1275
      %1277 = vrot.lane.b32.xlu0 %v175, 94
      %v1278 = vpop.permute.xlu0 %1277
      %1279 = vrot.lane.b32.xlu0 %v176, 94
      %v1280 = vpop.permute.xlu0 %1279
      %1281 = vrot.lane.b32.xlu0 %v177, 94
      %v1282 = vpop.permute.xlu0 %1281
      %1283 = vrot.lane.b32.xlu0 %v178, 94
      %v1284 = vpop.permute.xlu0 %1283
      %1285 = vrot.lane.b32.xlu0 %v179, 94
      %v1286 = vpop.permute.xlu0 %1285
      %1287 = vrot.lane.b32.xlu0 %v180, 94
      %v1288 = vpop.permute.xlu0 %1287
      %1289 = vrot.lane.b32.xlu0 %v181, 94
      %v1290 = vpop.permute.xlu0 %1289
      %1291 = vrot.lane.b32.xlu0 %v182, 94
      %v1292 = vpop.permute.xlu0 %1291
      %vm1293 = vcmask 769024
      %v1294 = vsel %vm1293, %v1270, %v1272
      %v1295 = vsel %vm1293, %v1272, %v1274
      %v1296 = vsel %vm1293, %v1276, %v1278
      %v1297 = vsel %vm1293, %v1278, %v1280
      %v1298 = vsel %vm1293, %v1282, %v1284
      %v1299 = vsel %vm1293, %v1284, %v1286
      %v1300 = vsel %vm1293, %v1288, %v1290
      %v1301 = vsel %vm1293, %v1290, %v1292
      %1310 = vrot.lane.b32.xlu0 %v171, 78
      %v1311 = vpop.permute.xlu0 %1310
      %1312 = vrot.lane.b32.xlu0 %v172, 78
      %v1313 = vpop.permute.xlu0 %1312
      %1314 = vrot.lane.b32.xlu0 %v173, 78
      %v1315 = vpop.permute.xlu0 %1314
      %1316 = vrot.lane.b32.xlu0 %v174, 78
      %v1317 = vpop.permute.xlu0 %1316
      %1318 = vrot.lane.b32.xlu0 %v175, 78
      %v1319 = vpop.permute.xlu0 %1318
      %1320 = vrot.lane.b32.xlu0 %v176, 78
      %v1321 = vpop.permute.xlu0 %1320
      %1322 = vrot.lane.b32.xlu0 %v177, 78
      %v1323 = vpop.permute.xlu0 %1322
      %1324 = vrot.lane.b32.xlu0 %v178, 78
      %v1325 = vpop.permute.xlu0 %1324
      %1326 = vrot.lane.b32.xlu0 %v179, 78
      %v1327 = vpop.permute.xlu0 %1326
      %1328 = vrot.lane.b32.xlu0 %v180, 78
      %v1329 = vpop.permute.xlu0 %1328
      %1330 = vrot.lane.b32.xlu0 %v181, 78
      %v1331 = vpop.permute.xlu0 %1330
      %1332 = vrot.lane.b32.xlu0 %v182, 78
      %v1333 = vpop.permute.xlu0 %1332
      %vm1334 = vcmask 637952
      %v1335 = vsel %vm1334, %v1311, %v1313
      %v1336 = vsel %vm1334, %v1313, %v1315
      %v1337 = vsel %vm1334, %v1317, %v1319
      %v1338 = vsel %vm1334, %v1319, %v1321
      %v1339 = vsel %vm1334, %v1323, %v1325
      %v1340 = vsel %vm1334, %v1325, %v1327
      %v1341 = vsel %vm1334, %v1329, %v1331
      %v1342 = vsel %vm1334, %v1331, %v1333
      %1351 = vrot.lane.b32.xlu0 %v171, 62
      %v1352 = vpop.permute.xlu0 %1351
      %1353 = vrot.lane.b32.xlu0 %v172, 62
      %v1354 = vpop.permute.xlu0 %1353
      %1355 = vrot.lane.b32.xlu0 %v173, 62
      %v1356 = vpop.permute.xlu0 %1355
      %1357 = vrot.lane.b32.xlu0 %v174, 62
      %v1358 = vpop.permute.xlu0 %1357
      %1359 = vrot.lane.b32.xlu0 %v175, 62
      %v1360 = vpop.permute.xlu0 %1359
      %1361 = vrot.lane.b32.xlu0 %v176, 62
      %v1362 = vpop.permute.xlu0 %1361
      %1363 = vrot.lane.b32.xlu0 %v177, 62
      %v1364 = vpop.permute.xlu0 %1363
      %1365 = vrot.lane.b32.xlu0 %v178, 62
      %v1366 = vpop.permute.xlu0 %1365
      %1367 = vrot.lane.b32.xlu0 %v179, 62
      %v1368 = vpop.permute.xlu0 %1367
      %1369 = vrot.lane.b32.xlu0 %v180, 62
      %v1370 = vpop.permute.xlu0 %1369
      %1371 = vrot.lane.b32.xlu0 %v181, 62
      %v1372 = vpop.permute.xlu0 %1371
      %1373 = vrot.lane.b32.xlu0 %v182, 62
      %v1374 = vpop.permute.xlu0 %1373
      %vm1375 = vcmask 506880
      %v1376 = vsel %vm1375, %v1352, %v1354
      %v1377 = vsel %vm1375, %v1354, %v1356
      %v1378 = vsel %vm1375, %v1358, %v1360
      %v1379 = vsel %vm1375, %v1360, %v1362
      %v1380 = vsel %vm1375, %v1364, %v1366
      %v1381 = vsel %vm1375, %v1366, %v1368
      %v1382 = vsel %vm1375, %v1370, %v1372
      %v1383 = vsel %vm1375, %v1372, %v1374
      %v1392 = vld [vmem:[%s1] sm:$0xff]
      %v1393 = vld [vmem:[%s1 + $0x8] sm:$0xff]
      %v1394 = vld [vmem:[%s1 + $0x10] sm:$0xff]
      %v1395 = vld [vmem:[%s1 + $0x18] sm:$0xff]
      %v1396 = vld [vmem:[%s1 + $0x20] sm:$0xff]
      %v1397 = vld [vmem:[%s1 + $0x28] sm:$0xff]
      %v1398 = vld [vmem:[%s1 + $0x30] sm:$0xff]
      %v1399 = vld [vmem:[%s1 + $0x38] sm:$0xff]
      %v1400 = vld [vmem:[%s1 + $0x40] sm:$0xff]
      %v1401 = vld [vmem:[%s1 + $0x48] sm:$0xff]
      %v1402 = vld [vmem:[%s1 + $0x50] sm:$0xff]
      %v1403 = vld [vmem:[%s1 + $0x58] sm:$0xff]
      %v1404 = vld [vmem:[%s1 + $0x60] sm:$0xff]
      %v1405 = vld [vmem:[%s1 + $0x68] sm:$0xff]
      %v1406 = vld [vmem:[%s1 + $0x70] sm:$0xff]
      %v1407 = vld [vmem:[%s1 + $0x78] sm:$0xff]
      %v1408 = vld [vmem:[%s1 + $0x80] sm:$0xff]
      %v1409 = vld [vmem:[%s1 + $0x88] sm:$0xff]
      %v1410 = vld [vmem:[%s1 + $0x90] sm:$0xff]
      %v1411 = vld [vmem:[%s1 + $0x98] sm:$0xff]
      %v1412 = vld [vmem:[%s1 + $0xa0] sm:$0xff]
      %v1413 = vld [vmem:[%s1 + $0xa8] sm:$0xff]
      %v1414 = vld [vmem:[%s1 + $0xb0] sm:$0xff]
      %v1415 = vld [vmem:[%s1 + $0xb8] sm:$0xff]
      %v1416 = vld [vmem:[%s1 + $0xc0] sm:$0xff]
      %v1417 = vld [vmem:[%s1 + $0xc8] sm:$0xff]
      %v1418 = vld [vmem:[%s1 + $0xd0] sm:$0xff]
      %v1419 = vld [vmem:[%s1 + $0xd8] sm:$0xff]
      %v1420 = vld [vmem:[%s2] sm:$0xff]
      %v1421 = vld [vmem:[%s2 + $0x8] sm:$0xff]
      %v1422 = vld [vmem:[%s2 + $0x10] sm:$0xff]
      %v1423 = vld [vmem:[%s2 + $0x18] sm:$0xff]
      %1425 = vset.pattern.permute.xlu0 0
      %1426 = vperm.xlu0 %1425, %v1420
      %v1427 = vpop.permute.xlu0 %1426
      %1430 = vset.pattern.permute.xlu0 0
      %1431 = vperm.xlu0 %1430, %v1421
      %v1432 = vpop.permute.xlu0 %1431
      %1435 = vset.pattern.permute.xlu0 0
      %1436 = vperm.xlu0 %1435, %v1422
      %v1437 = vpop.permute.xlu0 %1436
      %1440 = vset.pattern.permute.xlu0 0
      %1441 = vperm.xlu0 %1440, %v1423
      %v1442 = vpop.permute.xlu0 %1441
      %vm1444 = vcmask 261120
      %v1446 = vsel %vm1444, %v1398, 0
      %v1449 = vsel %vm1444, %v1405, 0
      %v1452 = vsel %vm1444, %v1412, 0
      %v1455 = vsel %vm1444, %v1419, 0
      %1457 = vmatprep.subr.mxu0 %v201
      %1458 = vmatpush1.msra.mxu0 %v200
      %1459 = vmatprep.subr.mxu0 %v203
      %1460 = vmatpush1.msra.mxu0 %v202
      %1461 = vmatprep.subr.mxu0 %v205
      %1462 = vmatpush1.msra.mxu0 %v204
      %1463 = vmatprep.subr.mxu0 %v207
      %1464 = vmatpush1.msra.mxu0 %v206
      %1465 = vmatprep.subr.mxu0 %v274
      %1466 = vmatpush1.msra.mxu0 %v273
      %1467 = vmatprep.subr.mxu0 %v276
      %1468 = vmatpush1.msra.mxu0 %v275
      %1469 = vmatprep.subr.mxu0 %v278
      %1470 = vmatpush1.msra.mxu0 %v277
      %1471 = vmatprep.subr.mxu0 %v280
      %1472 = vmatpush1.msra.mxu0 %v279
      %1473 = vmatprep.subr.mxu0 %v1213
      %1474 = vmatpush1.msra.mxu0 %v1212
      %1475 = vmatprep.subr.mxu0 %v1215
      %1476 = vmatpush1.msra.mxu0 %v1214
      %1477 = vmatprep.subr.mxu0 %v1217
      %1478 = vmatpush1.msra.mxu0 %v1216
      %1479 = vmatprep.subr.mxu0 %v1219
      %1480 = vmatpush1.msra.mxu0 %v1218
      %1481 = vmatprep.subr.mxu0 %v335
      %1482 = vmatpush1.msra.mxu0 %v334
      %1483 = vmatprep.subr.mxu0 %v337
      %1484 = vmatpush1.msra.mxu0 %v336
      %1485 = vmatprep.subr.mxu0 %v339
      %1486 = vmatpush1.msra.mxu0 %v338
      %1487 = vmatprep.subr.mxu0 %v341
      %1488 = vmatpush1.msra.mxu0 %v340
      %1489 = vmatprep.subr.mxu0 %v396
      %1490 = vmatpush1.msra.mxu0 %v395
      %1491 = vmatprep.subr.mxu0 %v398
      %1492 = vmatpush1.msra.mxu0 %v397
      %1493 = vmatprep.subr.mxu0 %v400
      %1494 = vmatpush1.msra.mxu0 %v399
      %1495 = vmatprep.subr.mxu0 %v402
      %1496 = vmatpush1.msra.mxu0 %v401
      %1497 = vmatprep.subr.mxu0 %v445
      %1498 = vmatpush1.msra.mxu0 %v444
      %1499 = vmatprep.subr.mxu0 %v447
      %1500 = vmatpush1.msra.mxu0 %v446
      %1501 = vmatprep.subr.mxu0 %v449
      %1502 = vmatpush1.msra.mxu0 %v448
      %1503 = vmatprep.subr.mxu0 %v451
      %1504 = vmatpush1.msra.mxu0 %v450
      %1505 = vmatprep.subr.mxu0 %v494
      %1506 = vmatpush1.msra.mxu0 %v493
      %1507 = vmatprep.subr.mxu0 %v496
      %1508 = vmatpush1.msra.mxu0 %v495
      %1509 = vmatprep.subr.mxu0 %v498
      %1510 = vmatpush1.msra.mxu0 %v497
      %1511 = vmatprep.subr.mxu0 %v500
      %1512 = vmatpush1.msra.mxu0 %v499
      %1513 = vmatprep.subr.mxu0 %v1254
      %1514 = vmatpush1.msra.mxu0 %v1253
      %1515 = vmatprep.subr.mxu0 %v1256
      %1516 = vmatpush1.msra.mxu0 %v1255
      %1517 = vmatprep.subr.mxu0 %v1258
      %1518 = vmatpush1.msra.mxu0 %v1257
      %1519 = vmatprep.subr.mxu0 %v1260
      %1520 = vmatpush1.msra.mxu0 %v1259
      %1521 = vmatprep.mubr.f32.mxu0 %v1393
      %1522 = vmatmul.mubr.f32.gmra.mrb[0].mxu0 %v1392
      %v1523 = vpop.f32.mrb[0].mxu0
      %v1524 = vadd.f32 %v1427, %v1523
      %v1525 = vpop.f32.mrb[0].mxu0
      %v1526 = vadd.f32 %v1427, %v1525
      %1527 = vmatprep.mubr.f32.mxu0 %v1400
      %1528 = vmatmul.mubr.f32.gmra.mrb[0].mxu0 %v1399
      %v1529 = vpop.f32.mrb[0].mxu0
      %v1530 = vadd.f32 %v1432, %v1529
      %v1531 = vpop.f32.mrb[0].mxu0
      %v1532 = vadd.f32 %v1432, %v1531
      %1533 = vmatprep.mubr.f32.mxu0 %v1407
      %1534 = vmatmul.mubr.f32.gmra.mrb[0].mxu0 %v1406
      %v1535 = vpop.f32.mrb[0].mxu0
      %v1536 = vadd.f32 %v1437, %v1535
      %v1537 = vpop.f32.mrb[0].mxu0
      %v1538 = vadd.f32 %v1437, %v1537
      %1539 = vmatprep.mubr.f32.mxu0 %v1414
      %1540 = vmatmul.mubr.f32.gmra.mrb[0].mxu0 %v1413
      %v1541 = vpop.f32.mrb[0].mxu0
      %v1542 = vadd.f32 %v1442, %v1541
      %v1543 = vpop.f32.mrb[0].mxu0
      %v1544 = vadd.f32 %v1442, %v1543
      %1545 = vdwg.mxu0
      %1546 = vmatprep.subr.mxu0 %v543
      %1547 = vmatpush1.msra.mxu0 %v542
      %1548 = vmatprep.subr.mxu0 %v545
      %1549 = vmatpush1.msra.mxu0 %v544
      %1550 = vmatprep.subr.mxu0 %v547
      %1551 = vmatpush1.msra.mxu0 %v546
      %1552 = vmatprep.subr.mxu0 %v549
      %1553 = vmatpush1.msra.mxu0 %v548
      %1554 = vmatprep.subr.mxu0 %v592
      %1555 = vmatpush1.msra.mxu0 %v591
      %1556 = vmatprep.subr.mxu0 %v594
      %1557 = vmatpush1.msra.mxu0 %v593
      %1558 = vmatprep.subr.mxu0 %v596
      %1559 = vmatpush1.msra.mxu0 %v595
      %1560 = vmatprep.subr.mxu0 %v598
      %1561 = vmatpush1.msra.mxu0 %v597
      %1562 = vmatprep.subr.mxu0 %v641
      %1563 = vmatpush1.msra.mxu0 %v640
      %1564 = vmatprep.subr.mxu0 %v643
      %1565 = vmatpush1.msra.mxu0 %v642
      %1566 = vmatprep.subr.mxu0 %v645
      %1567 = vmatpush1.msra.mxu0 %v644
      %1568 = vmatprep.subr.mxu0 %v647
      %1569 = vmatpush1.msra.mxu0 %v646
      %1570 = vmatprep.subr.mxu0 %v690
      %1571 = vmatpush1.msra.mxu0 %v689
      %1572 = vmatprep.subr.mxu0 %v692
      %1573 = vmatpush1.msra.mxu0 %v691
      %1574 = vmatprep.subr.mxu0 %v694
      %1575 = vmatpush1.msra.mxu0 %v693
      %1576 = vmatprep.subr.mxu0 %v696
      %1577 = vmatpush1.msra.mxu0 %v695
      %1578 = vmatprep.subr.mxu0 %v1295
      %1579 = vmatpush1.msra.mxu0 %v1294
      %1580 = vmatprep.subr.mxu0 %v1297
      %1581 = vmatpush1.msra.mxu0 %v1296
      %1582 = vmatprep.subr.mxu0 %v1299
      %1583 = vmatpush1.msra.mxu0 %v1298
      %1584 = vmatprep.subr.mxu0 %v1301
      %1585 = vmatpush1.msra.mxu0 %v1300
      %1586 = vmatprep.subr.mxu0 %v739
      %1587 = vmatpush1.msra.mxu0 %v738
      %1588 = vmatprep.subr.mxu0 %v741
      %1589 = vmatpush1.msra.mxu0 %v740
      %1590 = vmatprep.subr.mxu0 %v743
      %1591 = vmatpush1.msra.mxu0 %v742
      %1592 = vmatprep.subr.mxu0 %v745
      %1593 = vmatpush1.msra.mxu0 %v744
      %1594 = vmatprep.subr.mxu0 %v788
      %1595 = vmatpush1.msra.mxu0 %v787
      %1596 = vmatprep.subr.mxu0 %v790
      %1597 = vmatpush1.msra.mxu0 %v789
      %1598 = vmatprep.subr.mxu0 %v792
      %1599 = vmatpush1.msra.mxu0 %v791
      %1600 = vmatprep.subr.mxu0 %v794
      %1601 = vmatpush1.msra.mxu0 %v793
      %1602 = vmatprep.subr.mxu0 %v837
      %1603 = vmatpush1.msra.mxu0 %v836
      %1604 = vmatprep.subr.mxu0 %v839
      %1605 = vmatpush1.msra.mxu0 %v838
      %1606 = vmatprep.subr.mxu0 %v841
      %1607 = vmatpush1.msra.mxu0 %v840
      %1608 = vmatprep.subr.mxu0 %v843
      %1609 = vmatpush1.msra.mxu0 %v842
      %1610 = vmatprep.mubr.f32.mxu0 %v1395
      %1611 = vmatmul.mubr.f32.gmra.mrb[0].mxu0 %v1394
      %v1612 = vpop.f32.mrb[0].mxu0
      %v1613 = vadd.f32 %v1524, %v1612
      %v1614 = vpop.f32.mrb[0].mxu0
      %v1615 = vadd.f32 %v1526, %v1614
      %1616 = vmatprep.mubr.f32.mxu0 %v1402
      %1617 = vmatmul.mubr.f32.gmra.mrb[0].mxu0 %v1401
      %v1618 = vpop.f32.mrb[0].mxu0
      %v1619 = vadd.f32 %v1530, %v1618
      %v1620 = vpop.f32.mrb[0].mxu0
      %v1621 = vadd.f32 %v1532, %v1620
      %1622 = vmatprep.mubr.f32.mxu0 %v1409
      %1623 = vmatmul.mubr.f32.gmra.mrb[0].mxu0 %v1408
      %v1624 = vpop.f32.mrb[0].mxu0
      %v1625 = vadd.f32 %v1536, %v1624
      %v1626 = vpop.f32.mrb[0].mxu0
      %v1627 = vadd.f32 %v1538, %v1626
      %1628 = vmatprep.mubr.f32.mxu0 %v1416
      %1629 = vmatmul.mubr.f32.gmra.mrb[0].mxu0 %v1415
      %v1630 = vpop.f32.mrb[0].mxu0
      %v1631 = vadd.f32 %v1542, %v1630
      %v1632 = vpop.f32.mrb[0].mxu0
      %v1633 = vadd.f32 %v1544, %v1632
      %1634 = vdwg.mxu0
      %1635 = vmatprep.subr.mxu0 %v886
      %1636 = vmatpush1.msra.mxu0 %v885
      %1637 = vmatprep.subr.mxu0 %v888
      %1638 = vmatpush1.msra.mxu0 %v887
      %1639 = vmatprep.subr.mxu0 %v890
      %1640 = vmatpush1.msra.mxu0 %v889
      %1641 = vmatprep.subr.mxu0 %v892
      %1642 = vmatpush1.msra.mxu0 %v891
      %1643 = vmatprep.subr.mxu0 %v1336
      %1644 = vmatpush1.msra.mxu0 %v1335
      %1645 = vmatprep.subr.mxu0 %v1338
      %1646 = vmatpush1.msra.mxu0 %v1337
      %1647 = vmatprep.subr.mxu0 %v1340
      %1648 = vmatpush1.msra.mxu0 %v1339
      %1649 = vmatprep.subr.mxu0 %v1342
      %1650 = vmatpush1.msra.mxu0 %v1341
      %1651 = vmatprep.subr.mxu0 %v935
      %1652 = vmatpush1.msra.mxu0 %v934
      %1653 = vmatprep.subr.mxu0 %v937
      %1654 = vmatpush1.msra.mxu0 %v936
      %1655 = vmatprep.subr.mxu0 %v939
      %1656 = vmatpush1.msra.mxu0 %v938
      %1657 = vmatprep.subr.mxu0 %v941
      %1658 = vmatpush1.msra.mxu0 %v940
      %1659 = vmatprep.subr.mxu0 %v984
      %1660 = vmatpush1.msra.mxu0 %v983
      %1661 = vmatprep.subr.mxu0 %v986
      %1662 = vmatpush1.msra.mxu0 %v985
      %1663 = vmatprep.subr.mxu0 %v988
      %1664 = vmatpush1.msra.mxu0 %v987
      %1665 = vmatprep.subr.mxu0 %v990
      %1666 = vmatpush1.msra.mxu0 %v989
      %1667 = vmatprep.subr.mxu0 %v1033
      %1668 = vmatpush1.msra.mxu0 %v1032
      %1669 = vmatprep.subr.mxu0 %v1035
      %1670 = vmatpush1.msra.mxu0 %v1034
      %1671 = vmatprep.subr.mxu0 %v1037
      %1672 = vmatpush1.msra.mxu0 %v1036
      %1673 = vmatprep.subr.mxu0 %v1039
      %1674 = vmatpush1.msra.mxu0 %v1038
      %1675 = vmatprep.subr.mxu0 %v1082
      %1676 = vmatpush1.msra.mxu0 %v1081
      %1677 = vmatprep.subr.mxu0 %v1084
      %1678 = vmatpush1.msra.mxu0 %v1083
      %1679 = vmatprep.subr.mxu0 %v1086
      %1680 = vmatpush1.msra.mxu0 %v1085
      %1681 = vmatprep.subr.mxu0 %v1088
      %1682 = vmatpush1.msra.mxu0 %v1087
      %1683 = vmatprep.subr.mxu0 %v1377
      %1684 = vmatpush1.msra.mxu0 %v1376
      %1685 = vmatprep.subr.mxu0 %v1379
      %1686 = vmatpush1.msra.mxu0 %v1378
      %1687 = vmatprep.subr.mxu0 %v1381
      %1688 = vmatpush1.msra.mxu0 %v1380
      %1689 = vmatprep.subr.mxu0 %v1383
      %1690 = vmatpush1.msra.mxu0 %v1382
      %1691 = vmatprep.subr.mxu0 %v1131
      %1692 = vmatpush1.msra.mxu0 %v1130
      %1693 = vmatprep.subr.mxu0 %v1133
      %1694 = vmatpush1.msra.mxu0 %v1132
      %1695 = vmatprep.subr.mxu0 %v1135
      %1696 = vmatpush1.msra.mxu0 %v1134
      %1697 = vmatprep.subr.mxu0 %v1137
      %1698 = vmatpush1.msra.mxu0 %v1136
      %1699 = vmatprep.mubr.f32.mxu0 %v1397
      %1700 = vmatmul.mubr.f32.gmra.mrb[0].mxu0 %v1396
      %v1701 = vpop.f32.mrb[0].mxu0
      %v1702 = vadd.f32 %v1613, %v1701
      %v1703 = vpop.f32.mrb[0].mxu0
      %v1704 = vadd.f32 %v1615, %v1703
      %1705 = vmatprep.mubr.f32.mxu0 %v1404
      %1706 = vmatmul.mubr.f32.gmra.mrb[0].mxu0 %v1403
      %v1707 = vpop.f32.mrb[0].mxu0
      %v1708 = vadd.f32 %v1619, %v1707
      %v1709 = vpop.f32.mrb[0].mxu0
      %v1710 = vadd.f32 %v1621, %v1709
      %1711 = vmatprep.mubr.f32.mxu0 %v1411
      %1712 = vmatmul.mubr.f32.gmra.mrb[0].mxu0 %v1410
      %v1713 = vpop.f32.mrb[0].mxu0
      %v1714 = vadd.f32 %v1625, %v1713
      %v1715 = vpop.f32.mrb[0].mxu0
      %v1716 = vadd.f32 %v1627, %v1715
      %1717 = vmatprep.mubr.f32.mxu0 %v1418
      %1718 = vmatmul.mubr.f32.gmra.mrb[0].mxu0 %v1417
      %v1719 = vpop.f32.mrb[0].mxu0
      %v1720 = vadd.f32 %v1631, %v1719
      %v1721 = vpop.f32.mrb[0].mxu0
      %v1722 = vadd.f32 %v1633, %v1721
      %1723 = vdwg.mxu0
      %1724 = vmatprep.subr.mxu0 %v1180
      %1725 = vmatpush1.msra.mxu0 %v1179
      %1726 = vmatprep.subr.mxu0 %v1182
      %1727 = vmatpush1.msra.mxu0 %v1181
      %1728 = vmatprep.subr.mxu0 %v1184
      %1729 = vmatpush1.msra.mxu0 %v1183
      %1730 = vmatprep.subr.mxu0 %v1186
      %1731 = vmatpush1.msra.mxu0 %v1185
      %1732 = vmatprep.subr.mxu0 0.0
      %1733 = vmatpush1.msra.mxu0 0.0
      %1734 = vmatprep.subr.mxu0 0.0
      %1735 = vmatpush1.msra.mxu0 0.0
      %1736 = vmatprep.subr.mxu0 0.0
      %1737 = vmatpush1.msra.mxu0 0.0
      %1738 = vmatprep.subr.mxu0 0.0
      %1739 = vmatpush1.msra.mxu0 0.0
      %1740 = vmatprep.subr.mxu0 0.0
      %1741 = vmatpush1.msra.mxu0 0.0
      %1742 = vmatprep.subr.mxu0 0.0
      %1743 = vmatpush1.msra.mxu0 0.0
      %1744 = vmatprep.subr.mxu0 0.0
      %1745 = vmatpush1.msra.mxu0 0.0
      %1746 = vmatprep.subr.mxu0 0.0
      %1747 = vmatpush1.msra.mxu0 0.0
      %1748 = vmatprep.subr.mxu0 0.0
      %1749 = vmatpush1.msra.mxu0 0.0
      %1750 = vmatprep.subr.mxu0 0.0
      %1751 = vmatpush1.msra.mxu0 0.0
      %1752 = vmatprep.subr.mxu0 0.0
      %1753 = vmatpush1.msra.mxu0 0.0
      %1754 = vmatprep.subr.mxu0 0.0
      %1755 = vmatpush1.msra.mxu0 0.0
      %1756 = vmatprep.subr.mxu0 0.0
      %1757 = vmatpush1.msra.mxu0 0.0
      %1758 = vmatprep.subr.mxu0 0.0
      %1759 = vmatpush1.msra.mxu0 0.0
      %1760 = vmatprep.subr.mxu0 0.0
      %1761 = vmatpush1.msra.mxu0 0.0
      %1762 = vmatprep.subr.mxu0 0.0
      %1763 = vmatpush1.msra.mxu0 0.0
      %1764 = vmatprep.subr.mxu0 0.0
      %1765 = vmatpush1.msra.mxu0 0.0
      %1766 = vmatprep.subr.mxu0 0.0
      %1767 = vmatpush1.msra.mxu0 0.0
      %1768 = vmatprep.subr.mxu0 0.0
      %1769 = vmatpush1.msra.mxu0 0.0
      %1770 = vmatprep.subr.mxu0 0.0
      %1771 = vmatpush1.msra.mxu0 0.0
      %1772 = vmatprep.subr.mxu0 0.0
      %1773 = vmatpush1.msra.mxu0 0.0
      %1774 = vmatprep.subr.mxu0 0.0
      %1775 = vmatpush1.msra.mxu0 0.0
      %1776 = vmatprep.subr.mxu0 0.0
      %1777 = vmatpush1.msra.mxu0 0.0
      %1778 = vmatprep.subr.mxu0 0.0
      %1779 = vmatpush1.msra.mxu0 0.0
      %1780 = vmatprep.subr.mxu0 0.0
      %1781 = vmatpush1.msra.mxu0 0.0
      %1782 = vmatprep.subr.mxu0 0.0
      %1783 = vmatpush1.msra.mxu0 0.0
      %1784 = vmatprep.subr.mxu0 0.0
      %1785 = vmatpush1.msra.mxu0 0.0
      %1786 = vmatprep.subr.mxu0 0.0
      %1787 = vmatpush1.msra.mxu0 0.0
      %1788 = vmatprep.mubr.f32.mxu0 0.0
      %1789 = vmatmul.mubr.f32.gmra.mrb[0].mxu0 %v1446
      %v1790 = vpop.f32.mrb[0].mxu0
      %v1791 = vadd.f32 %v1702, %v1790
      %v1792 = vpop.f32.mrb[0].mxu0
      %v1793 = vadd.f32 %v1704, %v1792
      %1794 = vmatprep.mubr.f32.mxu0 0.0
      %1795 = vmatmul.mubr.f32.gmra.mrb[0].mxu0 %v1449
      %v1796 = vpop.f32.mrb[0].mxu0
      %v1797 = vadd.f32 %v1708, %v1796
      %v1798 = vpop.f32.mrb[0].mxu0
      %v1799 = vadd.f32 %v1710, %v1798
      %1800 = vmatprep.mubr.f32.mxu0 0.0
      %1801 = vmatmul.mubr.f32.gmra.mrb[0].mxu0 %v1452
      %v1802 = vpop.f32.mrb[0].mxu0
      %v1803 = vadd.f32 %v1714, %v1802
      %v1804 = vpop.f32.mrb[0].mxu0
      %v1805 = vadd.f32 %v1716, %v1804
      %1806 = vmatprep.mubr.f32.mxu0 0.0
      %1807 = vmatmul.mubr.f32.gmra.mrb[0].mxu0 %v1455
      %v1808 = vpop.f32.mrb[0].mxu0
      %v1809 = vadd.f32 %v1720, %v1808
      %v1810 = vpop.f32.mrb[0].mxu0
      %v1811 = vadd.f32 %v1722, %v1810
      %1812 = vdwg.mxu0
      %1813 = vst [vmem:[%s170] sm:$0xff] %v1791
      %1814 = vst [vmem:[%s170 + $0x8] sm:$0xff] %v1793
      %1815 = vst [vmem:[%s170 + $0x10] sm:$0xff] %v1797
      %1816 = vst [vmem:[%s170 + $0x18] sm:$0xff] %v1799
      %1817 = vst [vmem:[%s170 + $0x20] sm:$0xff] %v1803
      %1818 = vst [vmem:[%s170 + $0x28] sm:$0xff] %v1805
      %1819 = vst [vmem:[%s170 + $0x30] sm:$0xff] %v1809
      %1820 = vst [vmem:[%s170 + $0x38] sm:$0xff] %v1811
      %p1821 = scmp.lt.s32.totalorder %s14, 1
      %s1822 = scalar_select %p1821, %s14, 1
      %s1823 = smul.addr %s1822, 8
      %s1824 = smul.addr %s1823, 8
      %s1825 = scalar_lea.vmem %s3, %s1824
      // Predicated region
      $region33: #{forward.5} parent=31 // pred_check
        %p1826 = pneg %p100
      $region34: #{forward.5} parent=31 // pred_check_branch
        %1828 = sbr.rel (%p1826) target = $region36
      $region35: #{forward.5} parent=31 // pred_region
        _
      $region36: #{forward.5} parent=31 // pred_fallthru
        _
    $region32: #{forward.5} parent=5 // pred_fallthru
      _
    %p1829 = scmp.le.s32.totalorder 2, %s9
    // Predicated region
    $region37: #{forward.5} parent=5 // pred_check
      %p1830 = pneg %p1829
    $region38: #{forward.5} parent=5 // pred_check_branch
      %1832 = sbr.rel (%p1830) target = $region40
    $region39: #{forward.5} parent=5 // pred_region
      %s1833 = ssub.s32 %s9, 2
      // Predicated region
      $region41: #{forward.5} parent=39 // pred_check
        %p1834 = pneg %p106
      $region42: #{forward.5} parent=39 // pred_check_branch
        %1836 = sbr.rel (%p1834) target = $region44
      $region43: #{forward.5} parent=39 // pred_region
        %p1837 = scmp.lt.s32.totalorder %s15, 1
        %s1838 = scalar_select %p1837, %s15, 1
        %s1839 = smul.addr %s1838, 8
        %s1840 = smul.addr %s1839, 8
        %s1841 = scalar_lea.vmem %s3, %s1840
      $region44: #{forward.5} parent=39 // pred_fallthru
        _
    $region40: #{forward.5} parent=5 // pred_fallthru
      _
  $region6: #{forward.5} parent=0 // loop_footer
    %s13 = sadd.s32 1, %s9
  $region7: #{forward.5} parent=0 // loop_footer_branch
    %8 = sbr.rel target = $region3
  $region8: #{forward.5} parent=0 // loop_exit
    _

// kernel: forward.6
$region0: #{forward.6}
  #allocation0 [shape = 'u32[]', space=smem, size = 0x4, offset = 0x4, fixed_abs, tag = 'smem constant byte address 0x4 - core index']
  #allocation1 [shape = 'u32[144,128]{1,0:T(1,128)}', space=vmem, size = 0x12000, scoped, tag = 'internal scratch']
  %s0 = inlined_call_operand.vmem [shape: f32[2,32,100], index: 0, kind: input, shape index: {}]
  %s1 = inlined_call_operand.vmem [shape: f32[64,800], index: 1, kind: input, shape index: {}]
  %s2 = inlined_call_operand.vmem [shape: f32[64,1], index: 2, kind: input, shape index: {}]
  %s3 = inlined_call_operand.vmem [shape: f32[2,64,64], index: 3, kind: output, shape index: {}]
  %s4 = sld [smem:[#allocation0]]
  $region45: #{forward.6} parent=0
    _
  %s6 = ssub.s32 1, %s4
  %s7 = scalar_select 0, %s6, %s4
  loop: start=0, step=1, limit=4
  $region2: #{forward.6} parent=0 // loop_pre_header
    _
  $region3: #{forward.6} parent=0 // loop_header
    %s9 = sphi 0, %s13
    %p10 = scmp.ge.s32.totalorder %s9, 4
    %s19 = sphi 0, %s21
    %s22 = sphi 0, %s19
    %s23 = sphi 0, %s22
    %s39 = sphi 0, %s23
    %s43 = sphi 0, %s43
    %s45 = sphi 0, %s43
    %s46 = sphi 0, %s45
    %s60 = sphi 0, %s46
    %s64 = sphi 0, %s64
    %s66 = sphi 0, %s64
    %s67 = sphi 0, %s66
    %s81 = sphi 0, %s67
    %s87 = sphi 0, %s89
    %s90 = sphi 0, %s87
    %s91 = sphi 0, %s90
    %s107 = sphi 0, %s91
  $region4: #{forward.6} parent=0 // loop_header_branch
    %12 = sbr.rel (%p10) target = $region8
  $region5: #{forward.6} parent=0 // loop_body
    %s14 = ssub.s32 %s9, 1
    %s15 = ssub.s32 %s9, 2
    %s16 = sadd.s32 %s9, 1
    %s17 = ssub.s32 %s9, %s16
    %p18 = scmp.eq.s32.totalorder %s17, 0
    %s20 = sadd.s32 %s19, 1
    %s21 = scalar_select %p18, %s19, %s20
    %p24 = pneg %p18
    %p25 = scmp.eq.s32.totalorder %s9, 1
    %p26 = por %p24, %p25
    %p27 = scmp.ne.s32.totalorder %s19, %s22
    %p28 = scmp.eq.s32.totalorder %s9, 0
    %p29 = por %p27, %p28
    %p30 = scmp.ne.s32.totalorder %s19, %s22
    %p31 = scmp.eq.s32.totalorder %s14, 1
    %p32 = por %p30, %p31
    %p33 = scmp.ne.s32.totalorder %s22, %s23
    %p34 = scmp.eq.s32.totalorder %s14, 0
    %p35 = por %p33, %p34
    %p36 = scmp.ne.s32.totalorder %s22, %s23
    %p37 = scmp.eq.s32.totalorder %s15, 1
    %p38 = por %p36, %p37
    %p40 = scmp.ne.s32.totalorder %s23, %s39
    %p41 = scmp.eq.s32.totalorder %s15, 0
    %p42 = por %p40, %p41
    %s44 = sadd.s32 %s43, 1
    %p47 = scmp.eq.s32.totalorder %s9, 1
    %p48 = scmp.ne.s32.totalorder %s43, %s45
    %p49 = scmp.eq.s32.totalorder %s9, 0
    %p50 = por %p48, %p49
    %p51 = scmp.ne.s32.totalorder %s43, %s45
    %p52 = scmp.eq.s32.totalorder %s14, 1
    %p53 = por %p51, %p52
    %p54 = scmp.ne.s32.totalorder %s45, %s46
    %p55 = scmp.eq.s32.totalorder %s14, 0
    %p56 = por %p54, %p55
    %p57 = scmp.ne.s32.totalorder %s45, %s46
    %p58 = scmp.eq.s32.totalorder %s15, 1
    %p59 = por %p57, %p58
    %p61 = scmp.ne.s32.totalorder %s46, %s60
    %p62 = scmp.eq.s32.totalorder %s15, 0
    %p63 = por %p61, %p62
    %s65 = sadd.s32 %s64, 1
    %p68 = scmp.eq.s32.totalorder %s9, 1
    %p69 = scmp.ne.s32.totalorder %s64, %s66
    %p70 = scmp.eq.s32.totalorder %s9, 0
    %p71 = por %p69, %p70
    %p72 = scmp.ne.s32.totalorder %s64, %s66
    %p73 = scmp.eq.s32.totalorder %s14, 1
    %p74 = por %p72, %p73
    %p75 = scmp.ne.s32.totalorder %s66, %s67
    %p76 = scmp.eq.s32.totalorder %s14, 0
    %p77 = por %p75, %p76
    %p78 = scmp.ne.s32.totalorder %s66, %s67
    %p79 = scmp.eq.s32.totalorder %s15, 1
    %p80 = por %p78, %p79
    %p82 = scmp.ne.s32.totalorder %s67, %s81
    %p83 = scmp.eq.s32.totalorder %s15, 0
    %p84 = por %p82, %p83
    %s85 = ssub.s32 %s9, %s16
    %p86 = scmp.eq.s32.totalorder %s85, 0
    %s88 = sadd.s32 %s87, 1
    %s89 = scalar_select %p86, %s87, %s88
    %p92 = pneg %p86
    %p93 = scmp.eq.s32.totalorder %s9, 1
    %p94 = por %p92, %p93
    %p95 = scmp.ne.s32.totalorder %s87, %s90
    %p96 = scmp.eq.s32.totalorder %s9, 0
    %p97 = por %p95, %p96
    %p98 = scmp.ne.s32.totalorder %s87, %s90
    %p99 = scmp.eq.s32.totalorder %s14, 1
    %p100 = por %p98, %p99
    %p101 = scmp.ne.s32.totalorder %s90, %s91
    %p102 = scmp.eq.s32.totalorder %s14, 0
    %p103 = por %p101, %p102
    %p104 = scmp.ne.s32.totalorder %s90, %s91
    %p105 = scmp.eq.s32.totalorder %s15, 1
    %p106 = por %p104, %p105
    %p108 = scmp.ne.s32.totalorder %s91, %s107
    %p109 = scmp.eq.s32.totalorder %s15, 0
    %p110 = por %p108, %p109
    %p111 = scmp.le.s32.totalorder 1, %s9
    %p112 = scmp.lt.s32.totalorder %s9, 3
    %p113 = pnand %p111, %p112
    %p114 = pneg %p113
    // Predicated region
    $region9: #{forward.6} parent=5 // pred_check
      _
    $region10: #{forward.6} parent=5 // pred_check_branch
      %116 = sbr.rel (%p113) target = $region12
    $region11: #{forward.6} parent=5 // pred_region
      %s117 = ssub.s32 %s9, 1
      // Predicated region
      $region13: #{forward.6} parent=11 // pred_check
        %p118 = pneg %p56
      $region14: #{forward.6} parent=11 // pred_check_branch
        %120 = sbr.rel (%p118) target = $region16
      $region15: #{forward.6} parent=11 // pred_region
        _
      $region16: #{forward.6} parent=11 // pred_fallthru
        _
      // Predicated region
      $region17: #{forward.6} parent=11 // pred_check
        %p121 = pneg %p77
      $region18: #{forward.6} parent=11 // pred_check_branch
        %123 = sbr.rel (%p121) target = $region20
      $region19: #{forward.6} parent=11 // pred_region
        _
      $region20: #{forward.6} parent=11 // pred_fallthru
        _
    $region12: #{forward.6} parent=5 // pred_fallthru
      _
    %p124 = scmp.lt.s32.totalorder %s9, 2
    // Predicated region
    $region21: #{forward.6} parent=5 // pred_check
      %p125 = pneg %p124
    $region22: #{forward.6} parent=5 // pred_check_branch
      %127 = sbr.rel (%p125) target = $region24
    $region23: #{forward.6} parent=5 // pred_region
      // Predicated region
      $region25: #{forward.6} parent=23 // pred_check
        %p128 = pneg %p29
      $region26: #{forward.6} parent=23 // pred_check_branch
        %130 = sbr.rel (%p128) target = $region28
      $region27: #{forward.6} parent=23 // pred_region
        %p131 = scmp.lt.s32.totalorder %s9, 1
        %s132 = scalar_select %p131, %s9, 1
        %s133 = smul.addr %s132, 4
        %s134 = smul.addr %s133, 8
        %s135 = scalar_lea.vmem %s0, %s134
      $region28: #{forward.6} parent=23 // pred_fallthru
        _
    $region24: #{forward.6} parent=5 // pred_fallthru
      _
    %p136 = scmp.le.s32.totalorder 1, %s9
    %p137 = scmp.lt.s32.totalorder %s9, 3
    %p138 = pnand %p136, %p137
    %p139 = pneg %p138
    // Predicated region
    $region29: #{forward.6} parent=5 // pred_check
      _
    $region30: #{forward.6} parent=5 // pred_check_branch
      %141 = sbr.rel (%p138) target = $region32
    $region31: #{forward.6} parent=5 // pred_region
      %s142 = ssub.s32 %s9, 1
      %p143 = scmp.lt.s32.totalorder %s14, 1
      %s144 = scalar_select %p143, %s14, 1
      %s145 = smul.addr %s144, 4
      %s146 = smul.addr %s145, 8
      %s147 = scalar_lea.vmem %s0, %s146
      %p148 = pneg %p35
      %p149 = pneg %p32
      %p150 = pneg %p56
      %p151 = pneg %p53
      %p152 = pneg %p77
      %p153 = pneg %p74
      %p154 = pneg %p103
      %p155 = pneg %p100
      %p156 = scmp.lt.s32.totalorder %s14, 1
      %s157 = scalar_select %p156, %s14, 1
      %s158 = smul.addr %s157, 8
      %s159 = smul.addr %s158, 8
      %s160 = scalar_lea.vmem %s3, %s159
      %p161 = scmp.lt.s32.totalorder %s14, 1
      %s162 = scalar_select %p161, %s14, 1
      %s163 = smul.addr %s162, 4
      %s164 = smul.addr %s163, 8
      %s165 = scalar_lea.vmem %s0, %s164
      %p166 = scmp.lt.s32.totalorder %s14, 1
      %s167 = scalar_select %p166, %s14, 1
      %s168 = smul.addr %s167, 8
      %s169 = smul.addr %s168, 8
      %s170 = scalar_lea.vmem %s3, %s169
      %v171 = vld [vmem:[%s165] sm:$0xff]
      %v172 = vld [vmem:[%s165 + $0x8] sm:$0xff]
      %v173 = vld [vmem:[%s165 + $0x10] sm:$0xff]
      %v174 = vld [vmem:[%s165 + $0x18] sm:$0xff]
      %v175 = vlaneseq
      %v176 = vand.u32 %v175, 127
      %v177 = vand.u32 %v176, 7
      %v178 = vadd.s32 %v177, 4294967294
      %vm179 = vcmp.ge.s32.totalorder %v178, 0
      %vm180 = vcmp.lt.s32.totalorder %v178, 8
      %vm181 = vmand %vm179, %vm180
      %v182 = vsel %vm181, 1, 0
      %vm183 = vcmp.eq.s32.totalorder %v182, 1
      %v184 = vsel %vm183, %v171, 0.0
      %v185 = vsel %vm183, %v172, 0.0
      %v186 = vsel %vm183, %v173, 0.0
      %v187 = vsel %vm183, %v174, 0.0
      %v188 = vadd.s32 %v177, 4294967295
      %vm189 = vcmp.ge.s32.totalorder %v188, 0
      %vm190 = vcmp.lt.s32.totalorder %v188, 8
      %vm191 = vmand %vm189, %vm190
      %v192 = vsel %vm191, 1, 0
      %vm193 = vcmp.eq.s32.totalorder %v192, 1
      %198 = vrot.lane.b32.xlu0 %v171, 127
      %v199 = vpop.permute.xlu0 %198
      %200 = vrot.lane.b32.xlu0 %v172, 127
      %v201 = vpop.permute.xlu0 %200
      %202 = vrot.lane.b32.xlu0 %v173, 127
      %v203 = vpop.permute.xlu0 %202
      %204 = vrot.lane.b32.xlu0 %v174, 127
      %v205 = vpop.permute.xlu0 %204
      %v210 = vsel %vm193, %v199, 0.0
      %v211 = vsel %vm193, %v201, 0.0
      %v212 = vsel %vm193, %v203, 0.0
      %v213 = vsel %vm193, %v205, 0.0
      %v214 = vadd.s32 %v177, 1
      %vm215 = vcmp.ge.s32.totalorder %v214, 0
      %vm216 = vcmp.lt.s32.totalorder %v214, 8
      %vm217 = vmand %vm215, %vm216
      %v218 = vsel %vm217, 1, 0
      %vm219 = vcmp.eq.s32.totalorder %v218, 1
      %220 = vrot.lane.b32.xlu0 %v171, 125
      %v221 = vpop.permute.xlu0 %220
      %222 = vrot.lane.b32.xlu0 %v172, 125
      %v223 = vpop.permute.xlu0 %222
      %224 = vrot.lane.b32.xlu0 %v173, 125
      %v225 = vpop.permute.xlu0 %224
      %226 = vrot.lane.b32.xlu0 %v174, 125
      %v227 = vpop.permute.xlu0 %226
      %v232 = vsel %vm219, %v221, 0.0
      %v233 = vsel %vm219, %v223, 0.0
      %v234 = vsel %vm219, %v225, 0.0
      %v235 = vsel %vm219, %v227, 0.0
      %v236 = vadd.s32 %v177, 2
      %vm237 = vcmp.ge.s32.totalorder %v236, 0
      %vm238 = vcmp.lt.s32.totalorder %v236, 8
      %vm239 = vmand %vm237, %vm238
      %v240 = vsel %vm239, 1, 0
      %vm241 = vcmp.eq.s32.totalorder %v240, 1
      %242 = vrot.lane.b32.xlu0 %v171, 124
      %v243 = vpop.permute.xlu0 %242
      %244 = vrot.lane.b32.xlu0 %v172, 124
      %v245 = vpop.permute.xlu0 %244
      %246 = vrot.lane.b32.xlu0 %v173, 124
      %v247 = vpop.permute.xlu0 %246
      %248 = vrot.lane.b32.xlu0 %v174, 124
      %v249 = vpop.permute.xlu0 %248
      %v254 = vsel %vm241, %v243, 0.0
      %v255 = vsel %vm241, %v245, 0.0
      %v256 = vsel %vm241, %v247, 0.0
      %v257 = vsel %vm241, %v249, 0.0
      %258 = vrot.lane.b32.xlu0 %v171, 120
      %v259 = vpop.permute.xlu0 %258
      %260 = vrot.lane.b32.xlu0 %v172, 120
      %v261 = vpop.permute.xlu0 %260
      %262 = vrot.lane.b32.xlu0 %v173, 120
      %v263 = vpop.permute.xlu0 %262
      %264 = vrot.lane.b32.xlu0 %v174, 120
      %v265 = vpop.permute.xlu0 %264
      %v270 = vsel %vm183, %v259, 0.0
      %v271 = vsel %vm183, %v261, 0.0
      %v272 = vsel %vm183, %v263, 0.0
      %v273 = vsel %vm183, %v265, 0.0
      %274 = vrot.lane.b32.xlu0 %v171, 119
      %v275 = vpop.permute.xlu0 %274
      %276 = vrot.lane.b32.xlu0 %v172, 119
      %v277 = vpop.permute.xlu0 %276
      %278 = vrot.lane.b32.xlu0 %v173, 119
      %v279 = vpop.permute.xlu0 %278
      %280 = vrot.lane.b32.xlu0 %v174, 119
      %v281 = vpop.permute.xlu0 %280
      %v286 = vsel %vm193, %v275, 0.0
      %v287 = vsel %vm193, %v277, 0.0
      %v288 = vsel %vm193, %v279, 0.0
      %v289 = vsel %vm193, %v281, 0.0
      %290 = vrot.lane.b32.xlu0 %v171, 117
      %v291 = vpop.permute.xlu0 %290
      %292 = vrot.lane.b32.xlu0 %v172, 117
      %v293 = vpop.permute.xlu0 %292
      %294 = vrot.lane.b32.xlu0 %v173, 117
      %v295 = vpop.permute.xlu0 %294
      %296 = vrot.lane.b32.xlu0 %v174, 117
      %v297 = vpop.permute.xlu0 %296
      %v302 = vsel %vm219, %v291, 0.0
      %v303 = vsel %vm219, %v293, 0.0
      %v304 = vsel %vm219, %v295, 0.0
      %v305 = vsel %vm219, %v297, 0.0
      %306 = vrot.lane.b32.xlu0 %v171, 116
      %v307 = vpop.permute.xlu0 %306
      %308 = vrot.lane.b32.xlu0 %v172, 116
      %v309 = vpop.permute.xlu0 %308
      %310 = vrot.lane.b32.xlu0 %v173, 116
      %v311 = vpop.permute.xlu0 %310
      %312 = vrot.lane.b32.xlu0 %v174, 116
      %v313 = vpop.permute.xlu0 %312
      %v318 = vsel %vm241, %v307, 0.0
      %v319 = vsel %vm241, %v309, 0.0
      %v320 = vsel %vm241, %v311, 0.0
      %v321 = vsel %vm241, %v313, 0.0
      %322 = vrot.lane.b32.xlu0 %v171, 112
      %v323 = vpop.permute.xlu0 %322
      %324 = vrot.lane.b32.xlu0 %v172, 112
      %v325 = vpop.permute.xlu0 %324
      %326 = vrot.lane.b32.xlu0 %v173, 112
      %v327 = vpop.permute.xlu0 %326
      %328 = vrot.lane.b32.xlu0 %v174, 112
      %v329 = vpop.permute.xlu0 %328
      %v334 = vsel %vm183, %v323, 0.0
      %v335 = vsel %vm183, %v325, 0.0
      %v336 = vsel %vm183, %v327, 0.0
      %v337 = vsel %vm183, %v329, 0.0
      %338 = vrot.lane.b32.xlu0 %v171, 111
      %v339 = vpop.permute.xlu0 %338
      %340 = vrot.lane.b32.xlu0 %v172, 111
      %v341 = vpop.permute.xlu0 %340
      %342 = vrot.lane.b32.xlu0 %v173, 111
      %v343 = vpop.permute.xlu0 %342
      %344 = vrot.lane.b32.xlu0 %v174, 111
      %v345 = vpop.permute.xlu0 %344
      %v350 = vsel %vm193, %v339, 0.0
      %v351 = vsel %vm193, %v341, 0.0
      %v352 = vsel %vm193, %v343, 0.0
      %v353 = vsel %vm193, %v345, 0.0
      %354 = vrot.lane.b32.xlu0 %v171, 109
      %v355 = vpop.permute.xlu0 %354
      %356 = vrot.lane.b32.xlu0 %v172, 109
      %v357 = vpop.permute.xlu0 %356
      %358 = vrot.lane.b32.xlu0 %v173, 109
      %v359 = vpop.permute.xlu0 %358
      %360 = vrot.lane.b32.xlu0 %v174, 109
      %v361 = vpop.permute.xlu0 %360
      %v366 = vsel %vm219, %v355, 0.0
      %v367 = vsel %vm219, %v357, 0.0
      %v368 = vsel %vm219, %v359, 0.0
      %v369 = vsel %vm219, %v361, 0.0
      %370 = vrot.lane.b32.xlu0 %v171, 108
      %v371 = vpop.permute.xlu0 %370
      %372 = vrot.lane.b32.xlu0 %v172, 108
      %v373 = vpop.permute.xlu0 %372
      %374 = vrot.lane.b32.xlu0 %v173, 108
      %v375 = vpop.permute.xlu0 %374
      %376 = vrot.lane.b32.xlu0 %v174, 108
      %v377 = vpop.permute.xlu0 %376
      %v382 = vsel %vm241, %v371, 0.0
      %v383 = vsel %vm241, %v373, 0.0
      %v384 = vsel %vm241, %v375, 0.0
      %v385 = vsel %vm241, %v377, 0.0
      %386 = vrot.lane.b32.xlu0 %v171, 104
      %v387 = vpop.permute.xlu0 %386
      %388 = vrot.lane.b32.xlu0 %v172, 104
      %v389 = vpop.permute.xlu0 %388
      %390 = vrot.lane.b32.xlu0 %v173, 104
      %v391 = vpop.permute.xlu0 %390
      %392 = vrot.lane.b32.xlu0 %v174, 104
      %v393 = vpop.permute.xlu0 %392
      %v398 = vsel %vm183, %v387, 0.0
      %v399 = vsel %vm183, %v389, 0.0
      %v400 = vsel %vm183, %v391, 0.0
      %v401 = vsel %vm183, %v393, 0.0
      %402 = vrot.lane.b32.xlu0 %v171, 103
      %v403 = vpop.permute.xlu0 %402
      %404 = vrot.lane.b32.xlu0 %v172, 103
      %v405 = vpop.permute.xlu0 %404
      %406 = vrot.lane.b32.xlu0 %v173, 103
      %v407 = vpop.permute.xlu0 %406
      %408 = vrot.lane.b32.xlu0 %v174, 103
      %v409 = vpop.permute.xlu0 %408
      %v414 = vsel %vm193, %v403, 0.0
      %v415 = vsel %vm193, %v405, 0.0
      %v416 = vsel %vm193, %v407, 0.0
      %v417 = vsel %vm193, %v409, 0.0
      %418 = vrot.lane.b32.xlu0 %v171, 101
      %v419 = vpop.permute.xlu0 %418
      %420 = vrot.lane.b32.xlu0 %v172, 101
      %v421 = vpop.permute.xlu0 %420
      %422 = vrot.lane.b32.xlu0 %v173, 101
      %v423 = vpop.permute.xlu0 %422
      %424 = vrot.lane.b32.xlu0 %v174, 101
      %v425 = vpop.permute.xlu0 %424
      %v430 = vsel %vm219, %v419, 0.0
      %v431 = vsel %vm219, %v421, 0.0
      %v432 = vsel %vm219, %v423, 0.0
      %v433 = vsel %vm219, %v425, 0.0
      %434 = vrot.lane.b32.xlu0 %v171, 100
      %v435 = vpop.permute.xlu0 %434
      %436 = vrot.lane.b32.xlu0 %v172, 100
      %v437 = vpop.permute.xlu0 %436
      %438 = vrot.lane.b32.xlu0 %v173, 100
      %v439 = vpop.permute.xlu0 %438
      %440 = vrot.lane.b32.xlu0 %v174, 100
      %v441 = vpop.permute.xlu0 %440
      %v446 = vsel %vm241, %v435, 0.0
      %v447 = vsel %vm241, %v437, 0.0
      %v448 = vsel %vm241, %v439, 0.0
      %v449 = vsel %vm241, %v441, 0.0
      %450 = vrot.lane.b32.xlu0 %v171, 96
      %v451 = vpop.permute.xlu0 %450
      %452 = vrot.lane.b32.xlu0 %v172, 96
      %v453 = vpop.permute.xlu0 %452
      %454 = vrot.lane.b32.xlu0 %v173, 96
      %v455 = vpop.permute.xlu0 %454
      %456 = vrot.lane.b32.xlu0 %v174, 96
      %v457 = vpop.permute.xlu0 %456
      %v462 = vsel %vm183, %v451, 0.0
      %v463 = vsel %vm183, %v453, 0.0
      %v464 = vsel %vm183, %v455, 0.0
      %v465 = vsel %vm183, %v457, 0.0
      %466 = vrot.lane.b32.xlu0 %v171, 95
      %v467 = vpop.permute.xlu0 %466
      %468 = vrot.lane.b32.xlu0 %v172, 95
      %v469 = vpop.permute.xlu0 %468
      %470 = vrot.lane.b32.xlu0 %v173, 95
      %v471 = vpop.permute.xlu0 %470
      %472 = vrot.lane.b32.xlu0 %v174, 95
      %v473 = vpop.permute.xlu0 %472
      %v478 = vsel %vm193, %v467, 0.0
      %v479 = vsel %vm193, %v469, 0.0
      %v480 = vsel %vm193, %v471, 0.0
      %v481 = vsel %vm193, %v473, 0.0
      %482 = vrot.lane.b32.xlu0 %v171, 93
      %v483 = vpop.permute.xlu0 %482
      %484 = vrot.lane.b32.xlu0 %v172, 93
      %v485 = vpop.permute.xlu0 %484
      %486 = vrot.lane.b32.xlu0 %v173, 93
      %v487 = vpop.permute.xlu0 %486
      %488 = vrot.lane.b32.xlu0 %v174, 93
      %v489 = vpop.permute.xlu0 %488
      %v494 = vsel %vm219, %v483, 0.0
      %v495 = vsel %vm219, %v485, 0.0
      %v496 = vsel %vm219, %v487, 0.0
      %v497 = vsel %vm219, %v489, 0.0
      %498 = vrot.lane.b32.xlu0 %v171, 92
      %v499 = vpop.permute.xlu0 %498
      %500 = vrot.lane.b32.xlu0 %v172, 92
      %v501 = vpop.permute.xlu0 %500
      %502 = vrot.lane.b32.xlu0 %v173, 92
      %v503 = vpop.permute.xlu0 %502
      %504 = vrot.lane.b32.xlu0 %v174, 92
      %v505 = vpop.permute.xlu0 %504
      %v510 = vsel %vm241, %v499, 0.0
      %v511 = vsel %vm241, %v501, 0.0
      %v512 = vsel %vm241, %v503, 0.0
      %v513 = vsel %vm241, %v505, 0.0
      %514 = vrot.lane.b32.xlu0 %v171, 126
      %v515 = vpop.permute.xlu0 %514
      %516 = vrot.lane.b32.xlu0 %v172, 126
      %v517 = vpop.permute.xlu0 %516
      %518 = vrot.lane.b32.xlu0 %v173, 126
      %v519 = vpop.permute.xlu0 %518
      %520 = vrot.lane.b32.xlu0 %v174, 126
      %v521 = vpop.permute.xlu0 %520
      %526 = vrot.lane.b32.xlu0 %v171, 118
      %v527 = vpop.permute.xlu0 %526
      %528 = vrot.lane.b32.xlu0 %v172, 118
      %v529 = vpop.permute.xlu0 %528
      %530 = vrot.lane.b32.xlu0 %v173, 118
      %v531 = vpop.permute.xlu0 %530
      %532 = vrot.lane.b32.xlu0 %v174, 118
      %v533 = vpop.permute.xlu0 %532
      %538 = vrot.lane.b32.xlu0 %v171, 110
      %v539 = vpop.permute.xlu0 %538
      %540 = vrot.lane.b32.xlu0 %v172, 110
      %v541 = vpop.permute.xlu0 %540
      %542 = vrot.lane.b32.xlu0 %v173, 110
      %v543 = vpop.permute.xlu0 %542
      %544 = vrot.lane.b32.xlu0 %v174, 110
      %v545 = vpop.permute.xlu0 %544
      %550 = vrot.lane.b32.xlu0 %v171, 102
      %v551 = vpop.permute.xlu0 %550
      %552 = vrot.lane.b32.xlu0 %v172, 102
      %v553 = vpop.permute.xlu0 %552
      %554 = vrot.lane.b32.xlu0 %v173, 102
      %v555 = vpop.permute.xlu0 %554
      %556 = vrot.lane.b32.xlu0 %v174, 102
      %v557 = vpop.permute.xlu0 %556
      %562 = vrot.lane.b32.xlu0 %v171, 94
      %v563 = vpop.permute.xlu0 %562
      %564 = vrot.lane.b32.xlu0 %v172, 94
      %v565 = vpop.permute.xlu0 %564
      %566 = vrot.lane.b32.xlu0 %v173, 94
      %v567 = vpop.permute.xlu0 %566
      %568 = vrot.lane.b32.xlu0 %v174, 94
      %v569 = vpop.permute.xlu0 %568
      %v574 = vld [vmem:[%s1] sm:$0xff]
      %v575 = vld [vmem:[%s1 + $0x8] sm:$0xff]
      %v576 = vld [vmem:[%s1 + $0x10] sm:$0xff]
      %v577 = vld [vmem:[%s1 + $0x18] sm:$0xff]
      %v578 = vld [vmem:[%s1 + $0x20] sm:$0xff]
      %v579 = vld [vmem:[%s1 + $0x28] sm:$0xff]
      %v580 = vld [vmem:[%s1 + $0x30] sm:$0xff]
      %v581 = vld [vmem:[%s1 + $0x38] sm:$0xff]
      %v582 = vld [vmem:[%s1 + $0x40] sm:$0xff]
      %v583 = vld [vmem:[%s1 + $0x48] sm:$0xff]
      %v584 = vld [vmem:[%s1 + $0x50] sm:$0xff]
      %v585 = vld [vmem:[%s1 + $0x58] sm:$0xff]
      %v586 = vld [vmem:[%s1 + $0x60] sm:$0xff]
      %v587 = vld [vmem:[%s1 + $0x68] sm:$0xff]
      %v588 = vld [vmem:[%s1 + $0x70] sm:$0xff]
      %v589 = vld [vmem:[%s1 + $0x78] sm:$0xff]
      %v590 = vld [vmem:[%s1 + $0x80] sm:$0xff]
      %v591 = vld [vmem:[%s1 + $0x88] sm:$0xff]
      %v592 = vld [vmem:[%s1 + $0x90] sm:$0xff]
      %v593 = vld [vmem:[%s1 + $0x98] sm:$0xff]
      %v594 = vld [vmem:[%s1 + $0xa0] sm:$0xff]
      %v595 = vld [vmem:[%s1 + $0xa8] sm:$0xff]
      %v596 = vld [vmem:[%s1 + $0xb0] sm:$0xff]
      %v597 = vld [vmem:[%s1 + $0xb8] sm:$0xff]
      %v598 = vld [vmem:[%s1 + $0xc0] sm:$0xff]
      %v599 = vld [vmem:[%s1 + $0xc8] sm:$0xff]
      %v600 = vld [vmem:[%s1 + $0xd0] sm:$0xff]
      %v601 = vld [vmem:[%s1 + $0xd8] sm:$0xff]
      %v602 = vld [vmem:[%s1 + $0xe0] sm:$0xff]
      %v603 = vld [vmem:[%s1 + $0xe8] sm:$0xff]
      %v604 = vld [vmem:[%s1 + $0xf0] sm:$0xff]
      %v605 = vld [vmem:[%s1 + $0xf8] sm:$0xff]
      %v606 = vld [vmem:[%s1 + $0x100] sm:$0xff]
      %v607 = vld [vmem:[%s1 + $0x108] sm:$0xff]
      %v608 = vld [vmem:[%s1 + $0x110] sm:$0xff]
      %v609 = vld [vmem:[%s1 + $0x118] sm:$0xff]
      %v610 = vld [vmem:[%s1 + $0x120] sm:$0xff]
      %v611 = vld [vmem:[%s1 + $0x128] sm:$0xff]
      %v612 = vld [vmem:[%s1 + $0x130] sm:$0xff]
      %v613 = vld [vmem:[%s1 + $0x138] sm:$0xff]
      %v614 = vld [vmem:[%s1 + $0x140] sm:$0xff]
      %v615 = vld [vmem:[%s1 + $0x148] sm:$0xff]
      %v616 = vld [vmem:[%s1 + $0x150] sm:$0xff]
      %v617 = vld [vmem:[%s1 + $0x158] sm:$0xff]
      %v618 = vld [vmem:[%s1 + $0x160] sm:$0xff]
      %v619 = vld [vmem:[%s1 + $0x168] sm:$0xff]
      %v620 = vld [vmem:[%s1 + $0x170] sm:$0xff]
      %v621 = vld [vmem:[%s1 + $0x178] sm:$0xff]
      %v622 = vld [vmem:[%s1 + $0x180] sm:$0xff]
      %v623 = vld [vmem:[%s1 + $0x188] sm:$0xff]
      %v624 = vld [vmem:[%s1 + $0x190] sm:$0xff]
      %v625 = vld [vmem:[%s1 + $0x198] sm:$0xff]
      %v626 = vld [vmem:[%s1 + $0x1a0] sm:$0xff]
      %v627 = vld [vmem:[%s1 + $0x1a8] sm:$0xff]
      %v628 = vld [vmem:[%s1 + $0x1b0] sm:$0xff]
      %v629 = vld [vmem:[%s1 + $0x1b8] sm:$0xff]
      %v630 = vld [vmem:[%s2] sm:$0xff]
      %v631 = vld [vmem:[%s2 + $0x8] sm:$0xff]
      %v632 = vld [vmem:[%s2 + $0x10] sm:$0xff]
      %v633 = vld [vmem:[%s2 + $0x18] sm:$0xff]
      %v634 = vld [vmem:[%s2 + $0x20] sm:$0xff]
      %v635 = vld [vmem:[%s2 + $0x28] sm:$0xff]
      %v636 = vld [vmem:[%s2 + $0x30] sm:$0xff]
      %v637 = vld [vmem:[%s2 + $0x38] sm:$0xff]
      %639 = vset.pattern.permute.xlu0 0
      %640 = vperm.xlu0 %639, %v630
      %v641 = vpop.permute.xlu0 %640
      %644 = vset.pattern.permute.xlu0 0
      %645 = vperm.xlu0 %644, %v631
      %v646 = vpop.permute.xlu0 %645
      %649 = vset.pattern.permute.xlu0 0
      %650 = vperm.xlu0 %649, %v632
      %v651 = vpop.permute.xlu0 %650
      %654 = vset.pattern.permute.xlu0 0
      %655 = vperm.xlu0 %654, %v633
      %v656 = vpop.permute.xlu0 %655
      %659 = vset.pattern.permute.xlu0 0
      %660 = vperm.xlu0 %659, %v634
      %v661 = vpop.permute.xlu0 %660
      %664 = vset.pattern.permute.xlu0 0
      %665 = vperm.xlu0 %664, %v635
      %v666 = vpop.permute.xlu0 %665
      %669 = vset.pattern.permute.xlu0 0
      %670 = vperm.xlu0 %669, %v636
      %v671 = vpop.permute.xlu0 %670
      %674 = vset.pattern.permute.xlu0 0
      %675 = vperm.xlu0 %674, %v637
      %v676 = vpop.permute.xlu0 %675
      %vm678 = vcmask 261120
      %v680 = vsel %vm678, %v580, 0
      %v683 = vsel %vm678, %v587, 0
      %v686 = vsel %vm678, %v594, 0
      %v689 = vsel %vm678, %v601, 0
      %v692 = vsel %vm678, %v608, 0
      %v695 = vsel %vm678, %v615, 0
      %v698 = vsel %vm678, %v622, 0
      %v701 = vsel %vm678, %v629, 0
      %703 = vmatprep.subr.mxu0 0.0
      %704 = vmatpush1.msra.mxu0 %v184
      %705 = vmatprep.subr.mxu0 0.0
      %706 = vmatpush1.msra.mxu0 %v185
      %707 = vmatprep.subr.mxu0 0.0
      %708 = vmatpush1.msra.mxu0 %v186
      %709 = vmatprep.subr.mxu0 0.0
      %710 = vmatpush1.msra.mxu0 %v187
      %711 = vmatprep.subr.mxu0 0.0
      %712 = vmatpush1.msra.mxu0 %v210
      %713 = vmatprep.subr.mxu0 0.0
      %714 = vmatpush1.msra.mxu0 %v211
      %715 = vmatprep.subr.mxu0 0.0
      %716 = vmatpush1.msra.mxu0 %v212
      %717 = vmatprep.subr.mxu0 0.0
      %718 = vmatpush1.msra.mxu0 %v213
      %719 = vmatprep.subr.mxu0 0.0
      %720 = vmatpush1.msra.mxu0 %v515
      %721 = vmatprep.subr.mxu0 0.0
      %722 = vmatpush1.msra.mxu0 %v517
      %723 = vmatprep.subr.mxu0 0.0
      %724 = vmatpush1.msra.mxu0 %v519
      %725 = vmatprep.subr.mxu0 0.0
      %726 = vmatpush1.msra.mxu0 %v521
      %727 = vmatprep.subr.mxu0 0.0
      %728 = vmatpush1.msra.mxu0 %v232
      %729 = vmatprep.subr.mxu0 0.0
      %730 = vmatpush1.msra.mxu0 %v233
      %731 = vmatprep.subr.mxu0 0.0
      %732 = vmatpush1.msra.mxu0 %v234
      %733 = vmatprep.subr.mxu0 0.0
      %734 = vmatpush1.msra.mxu0 %v235
      %735 = vmatprep.subr.mxu0 0.0
      %736 = vmatpush1.msra.mxu0 %v254
      %737 = vmatprep.subr.mxu0 0.0
      %738 = vmatpush1.msra.mxu0 %v255
      %739 = vmatprep.subr.mxu0 0.0
      %740 = vmatpush1.msra.mxu0 %v256
      %741 = vmatprep.subr.mxu0 0.0
      %742 = vmatpush1.msra.mxu0 %v257
      %743 = vmatprep.subr.mxu0 0.0
      %744 = vmatpush1.msra.mxu0 %v270
      %745 = vmatprep.subr.mxu0 0.0
      %746 = vmatpush1.msra.mxu0 %v271
      %747 = vmatprep.subr.mxu0 0.0
      %748 = vmatpush1.msra.mxu0 %v272
      %749 = vmatprep.subr.mxu0 0.0
      %750 = vmatpush1.msra.mxu0 %v273
      %751 = vmatprep.subr.mxu0 0.0
      %752 = vmatpush1.msra.mxu0 %v286
      %753 = vmatprep.subr.mxu0 0.0
      %754 = vmatpush1.msra.mxu0 %v287
      %755 = vmatprep.subr.mxu0 0.0
      %756 = vmatpush1.msra.mxu0 %v288
      %757 = vmatprep.subr.mxu0 0.0
      %758 = vmatpush1.msra.mxu0 %v289
      %759 = vmatprep.subr.mxu0 0.0
      %760 = vmatpush1.msra.mxu0 %v527
      %761 = vmatprep.subr.mxu0 0.0
      %762 = vmatpush1.msra.mxu0 %v529
      %763 = vmatprep.subr.mxu0 0.0
      %764 = vmatpush1.msra.mxu0 %v531
      %765 = vmatprep.subr.mxu0 0.0
      %766 = vmatpush1.msra.mxu0 %v533
      %767 = vmatprep.mubr.f32.mxu0 %v575
      %768 = vmatmul.mubr.f32.gmra.mrb[0].mxu0 %v574
      %v769 = vpop.f32.mrb[0].mxu0
      %v770 = vadd.f32 %v641, %v769
      %v771 = vpop.f32.mrb[0].mxu0
      %772 = vmatprep.mubr.f32.mxu0 %v582
      %773 = vmatmul.mubr.f32.gmra.mrb[0].mxu0 %v581
      %v774 = vpop.f32.mrb[0].mxu0
      %v775 = vadd.f32 %v646, %v774
      %v776 = vpop.f32.mrb[0].mxu0
      %777 = vmatprep.mubr.f32.mxu0 %v589
      %778 = vmatmul.mubr.f32.gmra.mrb[0].mxu0 %v588
      %v779 = vpop.f32.mrb[0].mxu0
      %v780 = vadd.f32 %v651, %v779
      %v781 = vpop.f32.mrb[0].mxu0
      %782 = vmatprep.mubr.f32.mxu0 %v596
      %783 = vmatmul.mubr.f32.gmra.mrb[0].mxu0 %v595
      %v784 = vpop.f32.mrb[0].mxu0
      %v785 = vadd.f32 %v656, %v784
      %v786 = vpop.f32.mrb[0].mxu0
      %787 = vmatprep.mubr.f32.mxu0 %v603
      %788 = vmatmul.mubr.f32.gmra.mrb[0].mxu0 %v602
      %v789 = vpop.f32.mrb[0].mxu0
      %v790 = vadd.f32 %v661, %v789
      %v791 = vpop.f32.mrb[0].mxu0
      %792 = vmatprep.mubr.f32.mxu0 %v610
      %793 = vmatmul.mubr.f32.gmra.mrb[0].mxu0 %v609
      %v794 = vpop.f32.mrb[0].mxu0
      %v795 = vadd.f32 %v666, %v794
      %v796 = vpop.f32.mrb[0].mxu0
      %797 = vmatprep.mubr.f32.mxu0 %v617
      %798 = vmatmul.mubr.f32.gmra.mrb[0].mxu0 %v616
      %v799 = vpop.f32.mrb[0].mxu0
      %v800 = vadd.f32 %v671, %v799
      %v801 = vpop.f32.mrb[0].mxu0
      %802 = vmatprep.mubr.f32.mxu0 %v624
      %803 = vmatmul.mubr.f32.gmra.mrb[0].mxu0 %v623
      %v804 = vpop.f32.mrb[0].mxu0
      %v805 = vadd.f32 %v676, %v804
      %v806 = vpop.f32.mrb[0].mxu0
      %807 = vdwg.mxu0
      %808 = vmatprep.subr.mxu0 0.0
      %809 = vmatpush1.msra.mxu0 %v302
      %810 = vmatprep.subr.mxu0 0.0
      %811 = vmatpush1.msra.mxu0 %v303
      %812 = vmatprep.subr.mxu0 0.0
      %813 = vmatpush1.msra.mxu0 %v304
      %814 = vmatprep.subr.mxu0 0.0
      %815 = vmatpush1.msra.mxu0 %v305
      %816 = vmatprep.subr.mxu0 0.0
      %817 = vmatpush1.msra.mxu0 %v318
      %818 = vmatprep.subr.mxu0 0.0
      %819 = vmatpush1.msra.mxu0 %v319
      %820 = vmatprep.subr.mxu0 0.0
      %821 = vmatpush1.msra.mxu0 %v320
      %822 = vmatprep.subr.mxu0 0.0
      %823 = vmatpush1.msra.mxu0 %v321
      %824 = vmatprep.subr.mxu0 0.0
      %825 = vmatpush1.msra.mxu0 %v334
      %826 = vmatprep.subr.mxu0 0.0
      %827 = vmatpush1.msra.mxu0 %v335
      %828 = vmatprep.subr.mxu0 0.0
      %829 = vmatpush1.msra.mxu0 %v336
      %830 = vmatprep.subr.mxu0 0.0
      %831 = vmatpush1.msra.mxu0 %v337
      %832 = vmatprep.subr.mxu0 0.0
      %833 = vmatpush1.msra.mxu0 %v350
      %834 = vmatprep.subr.mxu0 0.0
      %835 = vmatpush1.msra.mxu0 %v351
      %836 = vmatprep.subr.mxu0 0.0
      %837 = vmatpush1.msra.mxu0 %v352
      %838 = vmatprep.subr.mxu0 0.0
      %839 = vmatpush1.msra.mxu0 %v353
      %840 = vmatprep.subr.mxu0 0.0
      %841 = vmatpush1.msra.mxu0 %v539
      %842 = vmatprep.subr.mxu0 0.0
      %843 = vmatpush1.msra.mxu0 %v541
      %844 = vmatprep.subr.mxu0 0.0
      %845 = vmatpush1.msra.mxu0 %v543
      %846 = vmatprep.subr.mxu0 0.0
      %847 = vmatpush1.msra.mxu0 %v545
      %848 = vmatprep.subr.mxu0 0.0
      %849 = vmatpush1.msra.mxu0 %v366
      %850 = vmatprep.subr.mxu0 0.0
      %851 = vmatpush1.msra.mxu0 %v367
      %852 = vmatprep.subr.mxu0 0.0
      %853 = vmatpush1.msra.mxu0 %v368
      %854 = vmatprep.subr.mxu0 0.0
      %855 = vmatpush1.msra.mxu0 %v369
      %856 = vmatprep.subr.mxu0 0.0
      %857 = vmatpush1.msra.mxu0 %v382
      %858 = vmatprep.subr.mxu0 0.0
      %859 = vmatpush1.msra.mxu0 %v383
      %860 = vmatprep.subr.mxu0 0.0
      %861 = vmatpush1.msra.mxu0 %v384
      %862 = vmatprep.subr.mxu0 0.0
      %863 = vmatpush1.msra.mxu0 %v385
      %864 = vmatprep.subr.mxu0 0.0
      %865 = vmatpush1.msra.mxu0 %v398
      %866 = vmatprep.subr.mxu0 0.0
      %867 = vmatpush1.msra.mxu0 %v399
      %868 = vmatprep.subr.mxu0 0.0
      %869 = vmatpush1.msra.mxu0 %v400
      %870 = vmatprep.subr.mxu0 0.0
      %871 = vmatpush1.msra.mxu0 %v401
      %872 = vmatprep.mubr.f32.mxu0 %v577
      %873 = vmatmul.mubr.f32.gmra.mrb[0].mxu0 %v576
      %v874 = vpop.f32.mrb[0].mxu0
      %v875 = vadd.f32 %v770, %v874
      %v876 = vpop.f32.mrb[0].mxu0
      %877 = vmatprep.mubr.f32.mxu0 %v584
      %878 = vmatmul.mubr.f32.gmra.mrb[0].mxu0 %v583
      %v879 = vpop.f32.mrb[0].mxu0
      %v880 = vadd.f32 %v775, %v879
      %v881 = vpop.f32.mrb[0].mxu0
      %882 = vmatprep.mubr.f32.mxu0 %v591
      %883 = vmatmul.mubr.f32.gmra.mrb[0].mxu0 %v590
      %v884 = vpop.f32.mrb[0].mxu0
      %v885 = vadd.f32 %v780, %v884
      %v886 = vpop.f32.mrb[0].mxu0
      %887 = vmatprep.mubr.f32.mxu0 %v598
      %888 = vmatmul.mubr.f32.gmra.mrb[0].mxu0 %v597
      %v889 = vpop.f32.mrb[0].mxu0
      %v890 = vadd.f32 %v785, %v889
      %v891 = vpop.f32.mrb[0].mxu0
      %892 = vmatprep.mubr.f32.mxu0 %v605
      %893 = vmatmul.mubr.f32.gmra.mrb[0].mxu0 %v604
      %v894 = vpop.f32.mrb[0].mxu0
      %v895 = vadd.f32 %v790, %v894
      %v896 = vpop.f32.mrb[0].mxu0
      %897 = vmatprep.mubr.f32.mxu0 %v612
      %898 = vmatmul.mubr.f32.gmra.mrb[0].mxu0 %v611
      %v899 = vpop.f32.mrb[0].mxu0
      %v900 = vadd.f32 %v795, %v899
      %v901 = vpop.f32.mrb[0].mxu0
      %902 = vmatprep.mubr.f32.mxu0 %v619
      %903 = vmatmul.mubr.f32.gmra.mrb[0].mxu0 %v618
      %v904 = vpop.f32.mrb[0].mxu0
      %v905 = vadd.f32 %v800, %v904
      %v906 = vpop.f32.mrb[0].mxu0
      %907 = vmatprep.mubr.f32.mxu0 %v626
      %908 = vmatmul.mubr.f32.gmra.mrb[0].mxu0 %v625
      %v909 = vpop.f32.mrb[0].mxu0
      %v910 = vadd.f32 %v805, %v909
      %v911 = vpop.f32.mrb[0].mxu0
      %912 = vdwg.mxu0
      %913 = vmatprep.subr.mxu0 0.0
      %914 = vmatpush1.msra.mxu0 %v414
      %915 = vmatprep.subr.mxu0 0.0
      %916 = vmatpush1.msra.mxu0 %v415
      %917 = vmatprep.subr.mxu0 0.0
      %918 = vmatpush1.msra.mxu0 %v416
      %919 = vmatprep.subr.mxu0 0.0
      %920 = vmatpush1.msra.mxu0 %v417
      %921 = vmatprep.subr.mxu0 0.0
      %922 = vmatpush1.msra.mxu0 %v551
      %923 = vmatprep.subr.mxu0 0.0
      %924 = vmatpush1.msra.mxu0 %v553
      %925 = vmatprep.subr.mxu0 0.0
      %926 = vmatpush1.msra.mxu0 %v555
      %927 = vmatprep.subr.mxu0 0.0
      %928 = vmatpush1.msra.mxu0 %v557
      %929 = vmatprep.subr.mxu0 0.0
      %930 = vmatpush1.msra.mxu0 %v430
      %931 = vmatprep.subr.mxu0 0.0
      %932 = vmatpush1.msra.mxu0 %v431
      %933 = vmatprep.subr.mxu0 0.0
      %934 = vmatpush1.msra.mxu0 %v432
      %935 = vmatprep.subr.mxu0 0.0
      %936 = vmatpush1.msra.mxu0 %v433
      %937 = vmatprep.subr.mxu0 0.0
      %938 = vmatpush1.msra.mxu0 %v446
      %939 = vmatprep.subr.mxu0 0.0
      %940 = vmatpush1.msra.mxu0 %v447
      %941 = vmatprep.subr.mxu0 0.0
      %942 = vmatpush1.msra.mxu0 %v448
      %943 = vmatprep.subr.mxu0 0.0
      %944 = vmatpush1.msra.mxu0 %v449
      %945 = vmatprep.subr.mxu0 0.0
      %946 = vmatpush1.msra.mxu0 %v462
      %947 = vmatprep.subr.mxu0 0.0
      %948 = vmatpush1.msra.mxu0 %v463
      %949 = vmatprep.subr.mxu0 0.0
      %950 = vmatpush1.msra.mxu0 %v464
      %951 = vmatprep.subr.mxu0 0.0
      %952 = vmatpush1.msra.mxu0 %v465
      %953 = vmatprep.subr.mxu0 0.0
      %954 = vmatpush1.msra.mxu0 %v478
      %955 = vmatprep.subr.mxu0 0.0
      %956 = vmatpush1.msra.mxu0 %v479
      %957 = vmatprep.subr.mxu0 0.0
      %958 = vmatpush1.msra.mxu0 %v480
      %959 = vmatprep.subr.mxu0 0.0
      %960 = vmatpush1.msra.mxu0 %v481
      %961 = vmatprep.subr.mxu0 0.0
      %962 = vmatpush1.msra.mxu0 %v563
      %963 = vmatprep.subr.mxu0 0.0
      %964 = vmatpush1.msra.mxu0 %v565
      %965 = vmatprep.subr.mxu0 0.0
      %966 = vmatpush1.msra.mxu0 %v567
      %967 = vmatprep.subr.mxu0 0.0
      %968 = vmatpush1.msra.mxu0 %v569
      %969 = vmatprep.subr.mxu0 0.0
      %970 = vmatpush1.msra.mxu0 %v494
      %971 = vmatprep.subr.mxu0 0.0
      %972 = vmatpush1.msra.mxu0 %v495
      %973 = vmatprep.subr.mxu0 0.0
      %974 = vmatpush1.msra.mxu0 %v496
      %975 = vmatprep.subr.mxu0 0.0
      %976 = vmatpush1.msra.mxu0 %v497
      %977 = vmatprep.mubr.f32.mxu0 %v579
      %978 = vmatmul.mubr.f32.gmra.mrb[0].mxu0 %v578
      %v979 = vpop.f32.mrb[0].mxu0
      %v980 = vadd.f32 %v875, %v979
      %v981 = vpop.f32.mrb[0].mxu0
      %982 = vmatprep.mubr.f32.mxu0 %v586
      %983 = vmatmul.mubr.f32.gmra.mrb[0].mxu0 %v585
      %v984 = vpop.f32.mrb[0].mxu0
      %v985 = vadd.f32 %v880, %v984
      %v986 = vpop.f32.mrb[0].mxu0
      %987 = vmatprep.mubr.f32.mxu0 %v593
      %988 = vmatmul.mubr.f32.gmra.mrb[0].mxu0 %v592
      %v989 = vpop.f32.mrb[0].mxu0
      %v990 = vadd.f32 %v885, %v989
      %v991 = vpop.f32.mrb[0].mxu0
      %992 = vmatprep.mubr.f32.mxu0 %v600
      %993 = vmatmul.mubr.f32.gmra.mrb[0].mxu0 %v599
      %v994 = vpop.f32.mrb[0].mxu0
      %v995 = vadd.f32 %v890, %v994
      %v996 = vpop.f32.mrb[0].mxu0
      %997 = vmatprep.mubr.f32.mxu0 %v607
      %998 = vmatmul.mubr.f32.gmra.mrb[0].mxu0 %v606
      %v999 = vpop.f32.mrb[0].mxu0
      %v1000 = vadd.f32 %v895, %v999
      %v1001 = vpop.f32.mrb[0].mxu0
      %1002 = vmatprep.mubr.f32.mxu0 %v614
      %1003 = vmatmul.mubr.f32.gmra.mrb[0].mxu0 %v613
      %v1004 = vpop.f32.mrb[0].mxu0
      %v1005 = vadd.f32 %v900, %v1004
      %v1006 = vpop.f32.mrb[0].mxu0
      %1007 = vmatprep.mubr.f32.mxu0 %v621
      %1008 = vmatmul.mubr.f32.gmra.mrb[0].mxu0 %v620
      %v1009 = vpop.f32.mrb[0].mxu0
      %v1010 = vadd.f32 %v905, %v1009
      %v1011 = vpop.f32.mrb[0].mxu0
      %1012 = vmatprep.mubr.f32.mxu0 %v628
      %1013 = vmatmul.mubr.f32.gmra.mrb[0].mxu0 %v627
      %v1014 = vpop.f32.mrb[0].mxu0
      %v1015 = vadd.f32 %v910, %v1014
      %v1016 = vpop.f32.mrb[0].mxu0
      %1017 = vdwg.mxu0
      %1018 = vmatprep.subr.mxu0 0.0
      %1019 = vmatpush1.msra.mxu0 %v510
      %1020 = vmatprep.subr.mxu0 0.0
      %1021 = vmatpush1.msra.mxu0 %v511
      %1022 = vmatprep.subr.mxu0 0.0
      %1023 = vmatpush1.msra.mxu0 %v512
      %1024 = vmatprep.subr.mxu0 0.0
      %1025 = vmatpush1.msra.mxu0 %v513
      %1026 = vmatprep.subr.mxu0 0.0
      %1027 = vmatpush1.msra.mxu0 0.0
      %1028 = vmatprep.subr.mxu0 0.0
      %1029 = vmatpush1.msra.mxu0 0.0
      %1030 = vmatprep.subr.mxu0 0.0
      %1031 = vmatpush1.msra.mxu0 0.0
      %1032 = vmatprep.subr.mxu0 0.0
      %1033 = vmatpush1.msra.mxu0 0.0
      %1034 = vmatprep.subr.mxu0 0.0
      %1035 = vmatpush1.msra.mxu0 0.0
      %1036 = vmatprep.subr.mxu0 0.0
      %1037 = vmatpush1.msra.mxu0 0.0
      %1038 = vmatprep.subr.mxu0 0.0
      %1039 = vmatpush1.msra.mxu0 0.0
      %1040 = vmatprep.subr.mxu0 0.0
      %1041 = vmatpush1.msra.mxu0 0.0
      %1042 = vmatprep.subr.mxu0 0.0
      %1043 = vmatpush1.msra.mxu0 0.0
      %1044 = vmatprep.subr.mxu0 0.0
      %1045 = vmatpush1.msra.mxu0 0.0
      %1046 = vmatprep.subr.mxu0 0.0
      %1047 = vmatpush1.msra.mxu0 0.0
      %1048 = vmatprep.subr.mxu0 0.0
      %1049 = vmatpush1.msra.mxu0 0.0
      %1050 = vmatprep.subr.mxu0 0.0
      %1051 = vmatpush1.msra.mxu0 0.0
      %1052 = vmatprep.subr.mxu0 0.0
      %1053 = vmatpush1.msra.mxu0 0.0
      %1054 = vmatprep.subr.mxu0 0.0
      %1055 = vmatpush1.msra.mxu0 0.0
      %1056 = vmatprep.subr.mxu0 0.0
      %1057 = vmatpush1.msra.mxu0 0.0
      %1058 = vmatprep.subr.mxu0 0.0
      %1059 = vmatpush1.msra.mxu0 0.0
      %1060 = vmatprep.subr.mxu0 0.0
      %1061 = vmatpush1.msra.mxu0 0.0
      %1062 = vmatprep.subr.mxu0 0.0
      %1063 = vmatpush1.msra.mxu0 0.0
      %1064 = vmatprep.subr.mxu0 0.0
      %1065 = vmatpush1.msra.mxu0 0.0
      %1066 = vmatprep.subr.mxu0 0.0
      %1067 = vmatpush1.msra.mxu0 0.0
      %1068 = vmatprep.subr.mxu0 0.0
      %1069 = vmatpush1.msra.mxu0 0.0
      %1070 = vmatprep.subr.mxu0 0.0
      %1071 = vmatpush1.msra.mxu0 0.0
      %1072 = vmatprep.subr.mxu0 0.0
      %1073 = vmatpush1.msra.mxu0 0.0
      %1074 = vmatprep.subr.mxu0 0.0
      %1075 = vmatpush1.msra.mxu0 0.0
      %1076 = vmatprep.subr.mxu0 0.0
      %1077 = vmatpush1.msra.mxu0 0.0
      %1078 = vmatprep.subr.mxu0 0.0
      %1079 = vmatpush1.msra.mxu0 0.0
      %1080 = vmatprep.subr.mxu0 0.0
      %1081 = vmatpush1.msra.mxu0 0.0
      %1082 = vmatprep.mubr.f32.mxu0 0.0
      %1083 = vmatmul.mubr.f32.gmra.mrb[0].mxu0 %v680
      %v1084 = vpop.f32.mrb[0].mxu0
      %v1085 = vadd.f32 %v980, %v1084
      %v1086 = vpop.f32.mrb[0].mxu0
      %1087 = vmatprep.mubr.f32.mxu0 0.0
      %1088 = vmatmul.mubr.f32.gmra.mrb[0].mxu0 %v683
      %v1089 = vpop.f32.mrb[0].mxu0
      %v1090 = vadd.f32 %v985, %v1089
      %v1091 = vpop.f32.mrb[0].mxu0
      %1092 = vmatprep.mubr.f32.mxu0 0.0
      %1093 = vmatmul.mubr.f32.gmra.mrb[0].mxu0 %v686
      %v1094 = vpop.f32.mrb[0].mxu0
      %v1095 = vadd.f32 %v990, %v1094
      %v1096 = vpop.f32.mrb[0].mxu0
      %1097 = vmatprep.mubr.f32.mxu0 0.0
      %1098 = vmatmul.mubr.f32.gmra.mrb[0].mxu0 %v689
      %v1099 = vpop.f32.mrb[0].mxu0
      %v1100 = vadd.f32 %v995, %v1099
      %v1101 = vpop.f32.mrb[0].mxu0
      %1102 = vmatprep.mubr.f32.mxu0 0.0
      %1103 = vmatmul.mubr.f32.gmra.mrb[0].mxu0 %v692
      %v1104 = vpop.f32.mrb[0].mxu0
      %v1105 = vadd.f32 %v1000, %v1104
      %v1106 = vpop.f32.mrb[0].mxu0
      %1107 = vmatprep.mubr.f32.mxu0 0.0
      %1108 = vmatmul.mubr.f32.gmra.mrb[0].mxu0 %v695
      %v1109 = vpop.f32.mrb[0].mxu0
      %v1110 = vadd.f32 %v1005, %v1109
      %v1111 = vpop.f32.mrb[0].mxu0
      %1112 = vmatprep.mubr.f32.mxu0 0.0
      %1113 = vmatmul.mubr.f32.gmra.mrb[0].mxu0 %v698
      %v1114 = vpop.f32.mrb[0].mxu0
      %v1115 = vadd.f32 %v1010, %v1114
      %v1116 = vpop.f32.mrb[0].mxu0
      %1117 = vmatprep.mubr.f32.mxu0 0.0
      %1118 = vmatmul.mubr.f32.gmra.mrb[0].mxu0 %v701
      %v1119 = vpop.f32.mrb[0].mxu0
      %v1120 = vadd.f32 %v1015, %v1119
      %v1121 = vpop.f32.mrb[0].mxu0
      %1122 = vdwg.mxu0
      %vm1123 = vcmask 523264
      %1124 = vst.msk [vmem:[%s170] sm:$0xff] %vm1123, %v1085
      %1125 = vst.msk [vmem:[%s170 + $0x8] sm:$0xff] %vm1123, %v1090
      %1126 = vst.msk [vmem:[%s170 + $0x10] sm:$0xff] %vm1123, %v1095
      %1127 = vst.msk [vmem:[%s170 + $0x18] sm:$0xff] %vm1123, %v1100
      %1128 = vst.msk [vmem:[%s170 + $0x20] sm:$0xff] %vm1123, %v1105
      %1129 = vst.msk [vmem:[%s170 + $0x28] sm:$0xff] %vm1123, %v1110
      %1130 = vst.msk [vmem:[%s170 + $0x30] sm:$0xff] %vm1123, %v1115
      %1131 = vst.msk [vmem:[%s170 + $0x38] sm:$0xff] %vm1123, %v1120
      %p1132 = scmp.lt.s32.totalorder %s14, 1
      %s1133 = scalar_select %p1132, %s14, 1
      %s1134 = smul.addr %s1133, 8
      %s1135 = smul.addr %s1134, 8
      %s1136 = scalar_lea.vmem %s3, %s1135
      // Predicated region
      $region33: #{forward.6} parent=31 // pred_check
        %p1137 = pneg %p100
      $region34: #{forward.6} parent=31 // pred_check_branch
        %1139 = sbr.rel (%p1137) target = $region36
      $region35: #{forward.6} parent=31 // pred_region
        _
      $region36: #{forward.6} parent=31 // pred_fallthru
        _
    $region32: #{forward.6} parent=5 // pred_fallthru
      _
    %p1140 = scmp.le.s32.totalorder 2, %s9
    // Predicated region
    $region37: #{forward.6} parent=5 // pred_check
      %p1141 = pneg %p1140
    $region38: #{forward.6} parent=5 // pred_check_branch
      %1143 = sbr.rel (%p1141) target = $region40
    $region39: #{forward.6} parent=5 // pred_region
      %s1144 = ssub.s32 %s9, 2
      // Predicated region
      $region41: #{forward.6} parent=39 // pred_check
        %p1145 = pneg %p106
      $region42: #{forward.6} parent=39 // pred_check_branch
        %1147 = sbr.rel (%p1145) target = $region44
      $region43: #{forward.6} parent=39 // pred_region
        %p1148 = scmp.lt.s32.totalorder %s15, 1
        %s1149 = scalar_select %p1148, %s15, 1
        %s1150 = smul.addr %s1149, 8
        %s1151 = smul.addr %s1150, 8
        %s1152 = scalar_lea.vmem %s3, %s1151
      $region44: #{forward.6} parent=39 // pred_fallthru
        _
    $region40: #{forward.6} parent=5 // pred_fallthru
      _
  $region6: #{forward.6} parent=0 // loop_footer
    %s13 = sadd.s32 1, %s9
  $region7: #{forward.6} parent=0 // loop_footer_branch
    %8 = sbr.rel target = $region3
  $region8: #{forward.6} parent=0 // loop_exit
    _

// kernel: forward.7
$region0: #{forward.7}
  #allocation0 [shape = 'u32[]', space=smem, size = 0x4, offset = 0x4, fixed_abs, tag = 'smem constant byte address 0x4 - core index']
  #allocation1 [shape = 'u32[144,128]{1,0:T(1,128)}', space=vmem, size = 0x12000, scoped, tag = 'internal scratch']
  %s0 = inlined_call_operand.vmem [shape: f32[2,1024], index: 0, kind: input, shape index: {}]
  %s1 = inlined_call_operand.vmem [shape: f32[1024,64], index: 1, kind: input, shape index: {}]
  %s2 = inlined_call_operand.vmem [shape: f32[1,64], index: 2, kind: input, shape index: {}]
  %s3 = inlined_call_operand.vmem [shape: f32[64,10], index: 3, kind: input, shape index: {}]
  %s4 = inlined_call_operand.vmem [shape: f32[1,10], index: 4, kind: input, shape index: {}]
  %s5 = inlined_call_operand.hbm [shape: f32[2,10], index: 5, kind: output, shape index: {}]
  %s6 = sld [smem:[#allocation0]]
  $region30: #{forward.7} parent=0
    _
  %s8 = ssub.s32 1, %s6
  %s9 = scalar_select 0, %s8, %s6
  $region1: #{forward.7} parent=0
    #allocation2 [shape = 'u8[1024]{0}', space=vmem, size = 0x400, scoped, tag = 'output window, operand 0, single buffered']
    #allocation3 [shape = 's32[1]{0}', space=sflag, size = 0x4, scoped, tag = 'scoped memory for forward.7']
    %10 = vsyncpa [#allocation3], 0
    // Predicated region
    $region2: #{forward.7} parent=1 // pred_check
      _
    $region3: #{forward.7} parent=1 // pred_check_branch
      %12 = sbr.rel (0) target = $region5
    $region4: #{forward.7} parent=1 // pred_region
      _
    $region5: #{forward.7} parent=1 // pred_fallthru
      _
    // Predicated region
    $region6: #{forward.7} parent=1 // pred_check
      _
    $region7: #{forward.7} parent=1 // pred_check_branch
      %14 = sbr.rel (0) target = $region9
    $region8: #{forward.7} parent=1 // pred_region
      _
    $region9: #{forward.7} parent=1 // pred_fallthru
      _
    // Predicated region
    $region10: #{forward.7} parent=1 // pred_check
      _
    $region11: #{forward.7} parent=1 // pred_check_branch
      %16 = sbr.rel (0) target = $region13
    $region12: #{forward.7} parent=1 // pred_region
      _
    $region13: #{forward.7} parent=1 // pred_fallthru
      _
    // Predicated region
    $region14: #{forward.7} parent=1 // pred_check
      _
    $region15: #{forward.7} parent=1 // pred_check_branch
      %18 = sbr.rel (0) target = $region17
    $region16: #{forward.7} parent=1 // pred_region
      _
    $region17: #{forward.7} parent=1 // pred_fallthru
      _
    // Predicated region
    $region18: #{forward.7} parent=1 // pred_check
      _
    $region19: #{forward.7} parent=1 // pred_check_branch
      %20 = sbr.rel (0) target = $region21
    $region20: #{forward.7} parent=1 // pred_region
      _
    $region21: #{forward.7} parent=1 // pred_fallthru
      _
    %v21 = vld [vmem:[%s0] sm:$0xff]
    %v22 = vld [vmem:[%s0 + $0x8] sm:$0xff]
    %v23 = vld [vmem:[%s1] sm:$0xff]
    %v24 = vld [vmem:[%s1 + $0x8] sm:$0xff]
    %v25 = vld [vmem:[%s1 + $0x10] sm:$0xff]
    %v26 = vld [vmem:[%s1 + $0x18] sm:$0xff]
    %v27 = vld [vmem:[%s1 + $0x20] sm:$0xff]
    %v28 = vld [vmem:[%s1 + $0x28] sm:$0xff]
    %v29 = vld [vmem:[%s1 + $0x30] sm:$0xff]
    %v30 = vld [vmem:[%s1 + $0x38] sm:$0xff]
    %v31 = vld [vmem:[%s1 + $0x40] sm:$0xff]
    %v32 = vld [vmem:[%s1 + $0x48] sm:$0xff]
    %v33 = vld [vmem:[%s1 + $0x50] sm:$0xff]
    %v34 = vld [vmem:[%s1 + $0x58] sm:$0xff]
    %v35 = vld [vmem:[%s1 + $0x60] sm:$0xff]
    %v36 = vld [vmem:[%s1 + $0x68] sm:$0xff]
    %v37 = vld [vmem:[%s1 + $0x70] sm:$0xff]
    %v38 = vld [vmem:[%s1 + $0x78] sm:$0xff]
    %v39 = vld [vmem:[%s1 + $0x80] sm:$0xff]
    %v40 = vld [vmem:[%s1 + $0x88] sm:$0xff]
    %v41 = vld [vmem:[%s1 + $0x90] sm:$0xff]
    %v42 = vld [vmem:[%s1 + $0x98] sm:$0xff]
    %v43 = vld [vmem:[%s1 + $0xa0] sm:$0xff]
    %v44 = vld [vmem:[%s1 + $0xa8] sm:$0xff]
    %v45 = vld [vmem:[%s1 + $0xb0] sm:$0xff]
    %v46 = vld [vmem:[%s1 + $0xb8] sm:$0xff]
    %v47 = vld [vmem:[%s1 + $0xc0] sm:$0xff]
    %v48 = vld [vmem:[%s1 + $0xc8] sm:$0xff]
    %v49 = vld [vmem:[%s1 + $0xd0] sm:$0xff]
    %v50 = vld [vmem:[%s1 + $0xd8] sm:$0xff]
    %v51 = vld [vmem:[%s1 + $0xe0] sm:$0xff]
    %v52 = vld [vmem:[%s1 + $0xe8] sm:$0xff]
    %v53 = vld [vmem:[%s1 + $0xf0] sm:$0xff]
    %v54 = vld [vmem:[%s1 + $0xf8] sm:$0xff]
    %v55 = vld [vmem:[%s1 + $0x100] sm:$0xff]
    %v56 = vld [vmem:[%s1 + $0x108] sm:$0xff]
    %v57 = vld [vmem:[%s1 + $0x110] sm:$0xff]
    %v58 = vld [vmem:[%s1 + $0x118] sm:$0xff]
    %v59 = vld [vmem:[%s1 + $0x120] sm:$0xff]
    %v60 = vld [vmem:[%s1 + $0x128] sm:$0xff]
    %v61 = vld [vmem:[%s1 + $0x130] sm:$0xff]
    %v62 = vld [vmem:[%s1 + $0x138] sm:$0xff]
    %v63 = vld [vmem:[%s1 + $0x140] sm:$0xff]
    %v64 = vld [vmem:[%s1 + $0x148] sm:$0xff]
    %v65 = vld [vmem:[%s1 + $0x150] sm:$0xff]
    %v66 = vld [vmem:[%s1 + $0x158] sm:$0xff]
    %v67 = vld [vmem:[%s1 + $0x160] sm:$0xff]
    %v68 = vld [vmem:[%s1 + $0x168] sm:$0xff]
    %v69 = vld [vmem:[%s1 + $0x170] sm:$0xff]
    %v70 = vld [vmem:[%s1 + $0x178] sm:$0xff]
    %v71 = vld [vmem:[%s1 + $0x180] sm:$0xff]
    %v72 = vld [vmem:[%s1 + $0x188] sm:$0xff]
    %v73 = vld [vmem:[%s1 + $0x190] sm:$0xff]
    %v74 = vld [vmem:[%s1 + $0x198] sm:$0xff]
    %v75 = vld [vmem:[%s1 + $0x1a0] sm:$0xff]
    %v76 = vld [vmem:[%s1 + $0x1a8] sm:$0xff]
    %v77 = vld [vmem:[%s1 + $0x1b0] sm:$0xff]
    %v78 = vld [vmem:[%s1 + $0x1b8] sm:$0xff]
    %v79 = vld [vmem:[%s1 + $0x1c0] sm:$0xff]
    %v80 = vld [vmem:[%s1 + $0x1c8] sm:$0xff]
    %v81 = vld [vmem:[%s1 + $0x1d0] sm:$0xff]
    %v82 = vld [vmem:[%s1 + $0x1d8] sm:$0xff]
    %v83 = vld [vmem:[%s1 + $0x1e0] sm:$0xff]
    %v84 = vld [vmem:[%s1 + $0x1e8] sm:$0xff]
    %v85 = vld [vmem:[%s1 + $0x1f0] sm:$0xff]
    %v86 = vld [vmem:[%s1 + $0x1f8] sm:$0xff]
    %v87 = vld [vmem:[%s1 + $0x200] sm:$0xff]
    %v88 = vld [vmem:[%s1 + $0x208] sm:$0xff]
    %v89 = vld [vmem:[%s1 + $0x210] sm:$0xff]
    %v90 = vld [vmem:[%s1 + $0x218] sm:$0xff]
    %v91 = vld [vmem:[%s1 + $0x220] sm:$0xff]
    %v92 = vld [vmem:[%s1 + $0x228] sm:$0xff]
    %v93 = vld [vmem:[%s1 + $0x230] sm:$0xff]
    %v94 = vld [vmem:[%s1 + $0x238] sm:$0xff]
    %v95 = vld [vmem:[%s1 + $0x240] sm:$0xff]
    %v96 = vld [vmem:[%s1 + $0x248] sm:$0xff]
    %v97 = vld [vmem:[%s1 + $0x250] sm:$0xff]
    %v98 = vld [vmem:[%s1 + $0x258] sm:$0xff]
    %v99 = vld [vmem:[%s1 + $0x260] sm:$0xff]
    %v100 = vld [vmem:[%s1 + $0x268] sm:$0xff]
    %v101 = vld [vmem:[%s1 + $0x270] sm:$0xff]
    %v102 = vld [vmem:[%s1 + $0x278] sm:$0xff]
    %v103 = vld [vmem:[%s1 + $0x280] sm:$0xff]
    %v104 = vld [vmem:[%s1 + $0x288] sm:$0xff]
    %v105 = vld [vmem:[%s1 + $0x290] sm:$0xff]
    %v106 = vld [vmem:[%s1 + $0x298] sm:$0xff]
    %v107 = vld [vmem:[%s1 + $0x2a0] sm:$0xff]
    %v108 = vld [vmem:[%s1 + $0x2a8] sm:$0xff]
    %v109 = vld [vmem:[%s1 + $0x2b0] sm:$0xff]
    %v110 = vld [vmem:[%s1 + $0x2b8] sm:$0xff]
    %v111 = vld [vmem:[%s1 + $0x2c0] sm:$0xff]
    %v112 = vld [vmem:[%s1 + $0x2c8] sm:$0xff]
    %v113 = vld [vmem:[%s1 + $0x2d0] sm:$0xff]
    %v114 = vld [vmem:[%s1 + $0x2d8] sm:$0xff]
    %v115 = vld [vmem:[%s1 + $0x2e0] sm:$0xff]
    %v116 = vld [vmem:[%s1 + $0x2e8] sm:$0xff]
    %v117 = vld [vmem:[%s1 + $0x2f0] sm:$0xff]
    %v118 = vld [vmem:[%s1 + $0x2f8] sm:$0xff]
    %v119 = vld [vmem:[%s1 + $0x300] sm:$0xff]
    %v120 = vld [vmem:[%s1 + $0x308] sm:$0xff]
    %v121 = vld [vmem:[%s1 + $0x310] sm:$0xff]
    %v122 = vld [vmem:[%s1 + $0x318] sm:$0xff]
    %v123 = vld [vmem:[%s1 + $0x320] sm:$0xff]
    %v124 = vld [vmem:[%s1 + $0x328] sm:$0xff]
    %v125 = vld [vmem:[%s1 + $0x330] sm:$0xff]
    %v126 = vld [vmem:[%s1 + $0x338] sm:$0xff]
    %v127 = vld [vmem:[%s1 + $0x340] sm:$0xff]
    %v128 = vld [vmem:[%s1 + $0x348] sm:$0xff]
    %v129 = vld [vmem:[%s1 + $0x350] sm:$0xff]
    %v130 = vld [vmem:[%s1 + $0x358] sm:$0xff]
    %v131 = vld [vmem:[%s1 + $0x360] sm:$0xff]
    %v132 = vld [vmem:[%s1 + $0x368] sm:$0xff]
    %v133 = vld [vmem:[%s1 + $0x370] sm:$0xff]
    %v134 = vld [vmem:[%s1 + $0x378] sm:$0xff]
    %v135 = vld [vmem:[%s1 + $0x380] sm:$0xff]
    %v136 = vld [vmem:[%s1 + $0x388] sm:$0xff]
    %v137 = vld [vmem:[%s1 + $0x390] sm:$0xff]
    %v138 = vld [vmem:[%s1 + $0x398] sm:$0xff]
    %v139 = vld [vmem:[%s1 + $0x3a0] sm:$0xff]
    %v140 = vld [vmem:[%s1 + $0x3a8] sm:$0xff]
    %v141 = vld [vmem:[%s1 + $0x3b0] sm:$0xff]
    %v142 = vld [vmem:[%s1 + $0x3b8] sm:$0xff]
    %v143 = vld [vmem:[%s1 + $0x3c0] sm:$0xff]
    %v144 = vld [vmem:[%s1 + $0x3c8] sm:$0xff]
    %v145 = vld [vmem:[%s1 + $0x3d0] sm:$0xff]
    %v146 = vld [vmem:[%s1 + $0x3d8] sm:$0xff]
    %v147 = vld [vmem:[%s1 + $0x3e0] sm:$0xff]
    %v148 = vld [vmem:[%s1 + $0x3e8] sm:$0xff]
    %v149 = vld [vmem:[%s1 + $0x3f0] sm:$0xff]
    %v150 = vld [vmem:[%s1 + $0x3f8] sm:$0xff]
    %v151 = vld [vmem:[%s2] sm:$0x1]
    %v153 = vlaneseq
    %v154 = vshrl.u32 %v153, 7
    %v155 = vsub.s32 0, %v154
    %v156 = vrot.slane %v151, %v155
    %v160 = vcombine.high %v21, %v21
    %v162 = vunpack.c.l.s4 1983009808
    %v163 = vunpack.c.0.s8 %v162
    %v164 = vlaneseq
    %v165 = vshrl.u32 %v164, 7
    %v166 = vsub.s32 %v163, %v165
    %v167 = vrot.slane %v21, %v166
    %v169 = vunpack.c.l.s4 1983009808
    %v170 = vunpack.c.0.s8 %v169
    %v171 = vlaneseq
    %v172 = vshrl.u32 %v171, 7
    %v173 = vsub.s32 %v170, %v172
    %v174 = vrot.slane %v160, %v173
    %v175 = vcombine.high %v167, %v167
    %v176 = vcombine.high %v174, %v174
    %v177 = vcombine.high %v22, %v22
    %v179 = vunpack.c.l.s4 1983009808
    %v180 = vunpack.c.0.s8 %v179
    %v181 = vlaneseq
    %v182 = vshrl.u32 %v181, 7
    %v183 = vsub.s32 %v180, %v182
    %v184 = vrot.slane %v22, %v183
    %v186 = vunpack.c.l.s4 1983009808
    %v187 = vunpack.c.0.s8 %v186
    %v188 = vlaneseq
    %v189 = vshrl.u32 %v188, 7
    %v190 = vsub.s32 %v187, %v189
    %v191 = vrot.slane %v177, %v190
    %v192 = vcombine.high %v184, %v184
    %v193 = vcombine.high %v191, %v191
    %202 = vmatprep.subr.mxu0 0.0
    %203 = vmatpush1.msra.mxu0 %v23
    %204 = vmatprep.subr.mxu0 0.0
    %205 = vmatpush1.msra.mxu0 %v24
    %206 = vmatprep.subr.mxu0 0.0
    %207 = vmatpush1.msra.mxu0 %v25
    %208 = vmatprep.subr.mxu0 0.0
    %209 = vmatpush1.msra.mxu0 %v26
    %210 = vmatprep.subr.mxu0 0.0
    %211 = vmatpush1.msra.mxu0 %v27
    %212 = vmatprep.subr.mxu0 0.0
    %213 = vmatpush1.msra.mxu0 %v28
    %214 = vmatprep.subr.mxu0 0.0
    %215 = vmatpush1.msra.mxu0 %v29
    %216 = vmatprep.subr.mxu0 0.0
    %217 = vmatpush1.msra.mxu0 %v30
    %218 = vmatprep.subr.mxu0 0.0
    %219 = vmatpush1.msra.mxu0 %v31
    %220 = vmatprep.subr.mxu0 0.0
    %221 = vmatpush1.msra.mxu0 %v32
    %222 = vmatprep.subr.mxu0 0.0
    %223 = vmatpush1.msra.mxu0 %v33
    %224 = vmatprep.subr.mxu0 0.0
    %225 = vmatpush1.msra.mxu0 %v34
    %226 = vmatprep.subr.mxu0 0.0
    %227 = vmatpush1.msra.mxu0 %v35
    %228 = vmatprep.subr.mxu0 0.0
    %229 = vmatpush1.msra.mxu0 %v36
    %230 = vmatprep.subr.mxu0 0.0
    %231 = vmatpush1.msra.mxu0 %v37
    %232 = vmatprep.subr.mxu0 0.0
    %233 = vmatpush1.msra.mxu0 %v38
    %234 = vmatprep.subr.mxu0 0.0
    %235 = vmatpush1.msra.mxu0 %v39
    %236 = vmatprep.subr.mxu0 0.0
    %237 = vmatpush1.msra.mxu0 %v40
    %238 = vmatprep.subr.mxu0 0.0
    %239 = vmatpush1.msra.mxu0 %v41
    %240 = vmatprep.subr.mxu0 0.0
    %241 = vmatpush1.msra.mxu0 %v42
    %242 = vmatprep.subr.mxu0 0.0
    %243 = vmatpush1.msra.mxu0 %v43
    %244 = vmatprep.subr.mxu0 0.0
    %245 = vmatpush1.msra.mxu0 %v44
    %246 = vmatprep.subr.mxu0 0.0
    %247 = vmatpush1.msra.mxu0 %v45
    %248 = vmatprep.subr.mxu0 0.0
    %249 = vmatpush1.msra.mxu0 %v46
    %250 = vmatprep.subr.mxu0 0.0
    %251 = vmatpush1.msra.mxu0 %v47
    %252 = vmatprep.subr.mxu0 0.0
    %253 = vmatpush1.msra.mxu0 %v48
    %254 = vmatprep.subr.mxu0 0.0
    %255 = vmatpush1.msra.mxu0 %v49
    %256 = vmatprep.subr.mxu0 0.0
    %257 = vmatpush1.msra.mxu0 %v50
    %258 = vmatprep.subr.mxu0 0.0
    %259 = vmatpush1.msra.mxu0 %v51
    %260 = vmatprep.subr.mxu0 0.0
    %261 = vmatpush1.msra.mxu0 %v52
    %262 = vmatprep.subr.mxu0 0.0
    %263 = vmatpush1.msra.mxu0 %v53
    %264 = vmatprep.subr.mxu0 0.0
    %265 = vmatpush1.msra.mxu0 %v54
    %266 = vmatprep.mubr.f32.mxu0 %v175
    %267 = vmatmul.mubr.f32.gmra.mrb[0].mxu0 %v167
    %v268 = vpop.f32.mrb[0].mxu0
    %v269 = vadd.f32 %v156, %v268
    %v270 = vpop.f32.mrb[0].mxu0
    %271 = vdwg.mxu0
    %272 = vmatprep.subr.mxu0 0.0
    %273 = vmatpush1.msra.mxu0 %v55
    %274 = vmatprep.subr.mxu0 0.0
    %275 = vmatpush1.msra.mxu0 %v56
    %276 = vmatprep.subr.mxu0 0.0
    %277 = vmatpush1.msra.mxu0 %v57
    %278 = vmatprep.subr.mxu0 0.0
    %279 = vmatpush1.msra.mxu0 %v58
    %280 = vmatprep.subr.mxu0 0.0
    %281 = vmatpush1.msra.mxu0 %v59
    %282 = vmatprep.subr.mxu0 0.0
    %283 = vmatpush1.msra.mxu0 %v60
    %284 = vmatprep.subr.mxu0 0.0
    %285 = vmatpush1.msra.mxu0 %v61
    %286 = vmatprep.subr.mxu0 0.0
    %287 = vmatpush1.msra.mxu0 %v62
    %288 = vmatprep.subr.mxu0 0.0
    %289 = vmatpush1.msra.mxu0 %v63
    %290 = vmatprep.subr.mxu0 0.0
    %291 = vmatpush1.msra.mxu0 %v64
    %292 = vmatprep.subr.mxu0 0.0
    %293 = vmatpush1.msra.mxu0 %v65
    %294 = vmatprep.subr.mxu0 0.0
    %295 = vmatpush1.msra.mxu0 %v66
    %296 = vmatprep.subr.mxu0 0.0
    %297 = vmatpush1.msra.mxu0 %v67
    %298 = vmatprep.subr.mxu0 0.0
    %299 = vmatpush1.msra.mxu0 %v68
    %300 = vmatprep.subr.mxu0 0.0
    %301 = vmatpush1.msra.mxu0 %v69
    %302 = vmatprep.subr.mxu0 0.0
    %303 = vmatpush1.msra.mxu0 %v70
    %304 = vmatprep.subr.mxu0 0.0
    %305 = vmatpush1.msra.mxu0 %v71
    %306 = vmatprep.subr.mxu0 0.0
    %307 = vmatpush1.msra.mxu0 %v72
    %308 = vmatprep.subr.mxu0 0.0
    %309 = vmatpush1.msra.mxu0 %v73
    %310 = vmatprep.subr.mxu0 0.0
    %311 = vmatpush1.msra.mxu0 %v74
    %312 = vmatprep.subr.mxu0 0.0
    %313 = vmatpush1.msra.mxu0 %v75
    %314 = vmatprep.subr.mxu0 0.0
    %315 = vmatpush1.msra.mxu0 %v76
    %316 = vmatprep.subr.mxu0 0.0
    %317 = vmatpush1.msra.mxu0 %v77
    %318 = vmatprep.subr.mxu0 0.0
    %319 = vmatpush1.msra.mxu0 %v78
    %320 = vmatprep.subr.mxu0 0.0
    %321 = vmatpush1.msra.mxu0 %v79
    %322 = vmatprep.subr.mxu0 0.0
    %323 = vmatpush1.msra.mxu0 %v80
    %324 = vmatprep.subr.mxu0 0.0
    %325 = vmatpush1.msra.mxu0 %v81
    %326 = vmatprep.subr.mxu0 0.0
    %327 = vmatpush1.msra.mxu0 %v82
    %328 = vmatprep.subr.mxu0 0.0
    %329 = vmatpush1.msra.mxu0 %v83
    %330 = vmatprep.subr.mxu0 0.0
    %331 = vmatpush1.msra.mxu0 %v84
    %332 = vmatprep.subr.mxu0 0.0
    %333 = vmatpush1.msra.mxu0 %v85
    %334 = vmatprep.subr.mxu0 0.0
    %335 = vmatpush1.msra.mxu0 %v86
    %336 = vmatprep.mubr.f32.mxu0 %v176
    %337 = vmatmul.mubr.f32.gmra.mrb[0].mxu0 %v174
    %v338 = vpop.f32.mrb[0].mxu0
    %v339 = vadd.f32 %v269, %v338
    %v340 = vpop.f32.mrb[0].mxu0
    %341 = vdwg.mxu0
    %342 = vmatprep.subr.mxu0 0.0
    %343 = vmatpush1.msra.mxu0 %v87
    %344 = vmatprep.subr.mxu0 0.0
    %345 = vmatpush1.msra.mxu0 %v88
    %346 = vmatprep.subr.mxu0 0.0
    %347 = vmatpush1.msra.mxu0 %v89
    %348 = vmatprep.subr.mxu0 0.0
    %349 = vmatpush1.msra.mxu0 %v90
    %350 = vmatprep.subr.mxu0 0.0
    %351 = vmatpush1.msra.mxu0 %v91
    %352 = vmatprep.subr.mxu0 0.0
    %353 = vmatpush1.msra.mxu0 %v92
    %354 = vmatprep.subr.mxu0 0.0
    %355 = vmatpush1.msra.mxu0 %v93
    %356 = vmatprep.subr.mxu0 0.0
    %357 = vmatpush1.msra.mxu0 %v94
    %358 = vmatprep.subr.mxu0 0.0
    %359 = vmatpush1.msra.mxu0 %v95
    %360 = vmatprep.subr.mxu0 0.0
    %361 = vmatpush1.msra.mxu0 %v96
    %362 = vmatprep.subr.mxu0 0.0
    %363 = vmatpush1.msra.mxu0 %v97
    %364 = vmatprep.subr.mxu0 0.0
    %365 = vmatpush1.msra.mxu0 %v98
    %366 = vmatprep.subr.mxu0 0.0
    %367 = vmatpush1.msra.mxu0 %v99
    %368 = vmatprep.subr.mxu0 0.0
    %369 = vmatpush1.msra.mxu0 %v100
    %370 = vmatprep.subr.mxu0 0.0
    %371 = vmatpush1.msra.mxu0 %v101
    %372 = vmatprep.subr.mxu0 0.0
    %373 = vmatpush1.msra.mxu0 %v102
    %374 = vmatprep.subr.mxu0 0.0
    %375 = vmatpush1.msra.mxu0 %v103
    %376 = vmatprep.subr.mxu0 0.0
    %377 = vmatpush1.msra.mxu0 %v104
    %378 = vmatprep.subr.mxu0 0.0
    %379 = vmatpush1.msra.mxu0 %v105
    %380 = vmatprep.subr.mxu0 0.0
    %381 = vmatpush1.msra.mxu0 %v106
    %382 = vmatprep.subr.mxu0 0.0
    %383 = vmatpush1.msra.mxu0 %v107
    %384 = vmatprep.subr.mxu0 0.0
    %385 = vmatpush1.msra.mxu0 %v108
    %386 = vmatprep.subr.mxu0 0.0
    %387 = vmatpush1.msra.mxu0 %v109
    %388 = vmatprep.subr.mxu0 0.0
    %389 = vmatpush1.msra.mxu0 %v110
    %390 = vmatprep.subr.mxu0 0.0
    %391 = vmatpush1.msra.mxu0 %v111
    %392 = vmatprep.subr.mxu0 0.0
    %393 = vmatpush1.msra.mxu0 %v112
    %394 = vmatprep.subr.mxu0 0.0
    %395 = vmatpush1.msra.mxu0 %v113
    %396 = vmatprep.subr.mxu0 0.0
    %397 = vmatpush1.msra.mxu0 %v114
    %398 = vmatprep.subr.mxu0 0.0
    %399 = vmatpush1.msra.mxu0 %v115
    %400 = vmatprep.subr.mxu0 0.0
    %401 = vmatpush1.msra.mxu0 %v116
    %402 = vmatprep.subr.mxu0 0.0
    %403 = vmatpush1.msra.mxu0 %v117
    %404 = vmatprep.subr.mxu0 0.0
    %405 = vmatpush1.msra.mxu0 %v118
    %406 = vmatprep.mubr.f32.mxu0 %v192
    %407 = vmatmul.mubr.f32.gmra.mrb[0].mxu0 %v184
    %v408 = vpop.f32.mrb[0].mxu0
    %v409 = vadd.f32 %v339, %v408
    %v410 = vpop.f32.mrb[0].mxu0
    %411 = vdwg.mxu0
    %412 = vmatprep.subr.mxu0 0.0
    %413 = vmatpush1.msra.mxu0 %v119
    %414 = vmatprep.subr.mxu0 0.0
    %415 = vmatpush1.msra.mxu0 %v120
    %416 = vmatprep.subr.mxu0 0.0
    %417 = vmatpush1.msra.mxu0 %v121
    %418 = vmatprep.subr.mxu0 0.0
    %419 = vmatpush1.msra.mxu0 %v122
    %420 = vmatprep.subr.mxu0 0.0
    %421 = vmatpush1.msra.mxu0 %v123
    %422 = vmatprep.subr.mxu0 0.0
    %423 = vmatpush1.msra.mxu0 %v124
    %424 = vmatprep.subr.mxu0 0.0
    %425 = vmatpush1.msra.mxu0 %v125
    %426 = vmatprep.subr.mxu0 0.0
    %427 = vmatpush1.msra.mxu0 %v126
    %428 = vmatprep.subr.mxu0 0.0
    %429 = vmatpush1.msra.mxu0 %v127
    %430 = vmatprep.subr.mxu0 0.0
    %431 = vmatpush1.msra.mxu0 %v128
    %432 = vmatprep.subr.mxu0 0.0
    %433 = vmatpush1.msra.mxu0 %v129
    %434 = vmatprep.subr.mxu0 0.0
    %435 = vmatpush1.msra.mxu0 %v130
    %436 = vmatprep.subr.mxu0 0.0
    %437 = vmatpush1.msra.mxu0 %v131
    %438 = vmatprep.subr.mxu0 0.0
    %439 = vmatpush1.msra.mxu0 %v132
    %440 = vmatprep.subr.mxu0 0.0
    %441 = vmatpush1.msra.mxu0 %v133
    %442 = vmatprep.subr.mxu0 0.0
    %443 = vmatpush1.msra.mxu0 %v134
    %444 = vmatprep.subr.mxu0 0.0
    %445 = vmatpush1.msra.mxu0 %v135
    %446 = vmatprep.subr.mxu0 0.0
    %447 = vmatpush1.msra.mxu0 %v136
    %448 = vmatprep.subr.mxu0 0.0
    %449 = vmatpush1.msra.mxu0 %v137
    %450 = vmatprep.subr.mxu0 0.0
    %451 = vmatpush1.msra.mxu0 %v138
    %452 = vmatprep.subr.mxu0 0.0
    %453 = vmatpush1.msra.mxu0 %v139
    %454 = vmatprep.subr.mxu0 0.0
    %455 = vmatpush1.msra.mxu0 %v140
    %456 = vmatprep.subr.mxu0 0.0
    %457 = vmatpush1.msra.mxu0 %v141
    %458 = vmatprep.subr.mxu0 0.0
    %459 = vmatpush1.msra.mxu0 %v142
    %460 = vmatprep.subr.mxu0 0.0
    %461 = vmatpush1.msra.mxu0 %v143
    %462 = vmatprep.subr.mxu0 0.0
    %463 = vmatpush1.msra.mxu0 %v144
    %464 = vmatprep.subr.mxu0 0.0
    %465 = vmatpush1.msra.mxu0 %v145
    %466 = vmatprep.subr.mxu0 0.0
    %467 = vmatpush1.msra.mxu0 %v146
    %468 = vmatprep.subr.mxu0 0.0
    %469 = vmatpush1.msra.mxu0 %v147
    %470 = vmatprep.subr.mxu0 0.0
    %471 = vmatpush1.msra.mxu0 %v148
    %472 = vmatprep.subr.mxu0 0.0
    %473 = vmatpush1.msra.mxu0 %v149
    %474 = vmatprep.subr.mxu0 0.0
    %475 = vmatpush1.msra.mxu0 %v150
    %476 = vmatprep.mubr.f32.mxu0 %v193
    %477 = vmatmul.mubr.f32.gmra.mrb[0].mxu0 %v191
    %v478 = vpop.f32.mrb[0].mxu0
    %v479 = vadd.f32 %v409, %v478
    %v480 = vpop.f32.mrb[0].mxu0
    %481 = vdwg.mxu0
    %v482 = vld [vmem:[%s3] sm:$0xff]
    %v483 = vld [vmem:[%s3 + $0x8] sm:$0xff]
    %v484 = vld [vmem:[%s3 + $0x10] sm:$0xff]
    %v485 = vld [vmem:[%s3 + $0x18] sm:$0xff]
    %v486 = vld [vmem:[%s3 + $0x20] sm:$0xff]
    %v487 = vld [vmem:[%s3 + $0x28] sm:$0xff]
    %v488 = vld [vmem:[%s3 + $0x30] sm:$0xff]
    %v489 = vld [vmem:[%s3 + $0x38] sm:$0xff]
    %v490 = vld [vmem:[%s4] sm:$0x1]
    %v492 = vlaneseq
    %v493 = vshrl.u32 %v492, 7
    %v494 = vsub.s32 0, %v493
    %v495 = vrot.slane %v490, %v494
    %vm497 = vcmask 523264
    %v499 = vsel %vm497, %v479, 0
    %501 = vmatprep.subr.mxu0 0.0
    %502 = vmatpush1.msra.mxu0 %v482
    %503 = vmatprep.subr.mxu0 0.0
    %504 = vmatpush1.msra.mxu0 %v483
    %505 = vmatprep.subr.mxu0 0.0
    %506 = vmatpush1.msra.mxu0 %v484
    %507 = vmatprep.subr.mxu0 0.0
    %508 = vmatpush1.msra.mxu0 %v485
    %509 = vmatprep.subr.mxu0 0.0
    %510 = vmatpush1.msra.mxu0 %v486
    %511 = vmatprep.subr.mxu0 0.0
    %512 = vmatpush1.msra.mxu0 %v487
    %513 = vmatprep.subr.mxu0 0.0
    %514 = vmatpush1.msra.mxu0 %v488
    %515 = vmatprep.subr.mxu0 0.0
    %516 = vmatpush1.msra.mxu0 %v489
    %517 = vmatprep.subr.mxu0 0.0
    %518 = vmatpush1.msra.mxu0 0.0
    %519 = vmatprep.subr.mxu0 0.0
    %520 = vmatpush1.msra.mxu0 0.0
    %521 = vmatprep.subr.mxu0 0.0
    %522 = vmatpush1.msra.mxu0 0.0
    %523 = vmatprep.subr.mxu0 0.0
    %524 = vmatpush1.msra.mxu0 0.0
    %525 = vmatprep.subr.mxu0 0.0
    %526 = vmatpush1.msra.mxu0 0.0
    %527 = vmatprep.subr.mxu0 0.0
    %528 = vmatpush1.msra.mxu0 0.0
    %529 = vmatprep.subr.mxu0 0.0
    %530 = vmatpush1.msra.mxu0 0.0
    %531 = vmatprep.subr.mxu0 0.0
    %532 = vmatpush1.msra.mxu0 0.0
    %533 = vmatprep.subr.mxu0 0.0
    %534 = vmatpush1.msra.mxu0 0.0
    %535 = vmatprep.subr.mxu0 0.0
    %536 = vmatpush1.msra.mxu0 0.0
    %537 = vmatprep.subr.mxu0 0.0
    %538 = vmatpush1.msra.mxu0 0.0
    %539 = vmatprep.subr.mxu0 0.0
    %540 = vmatpush1.msra.mxu0 0.0
    %541 = vmatprep.subr.mxu0 0.0
    %542 = vmatpush1.msra.mxu0 0.0
    %543 = vmatprep.subr.mxu0 0.0
    %544 = vmatpush1.msra.mxu0 0.0
    %545 = vmatprep.subr.mxu0 0.0
    %546 = vmatpush1.msra.mxu0 0.0
    %547 = vmatprep.subr.mxu0 0.0
    %548 = vmatpush1.msra.mxu0 0.0
    %549 = vmatprep.subr.mxu0 0.0
    %550 = vmatpush1.msra.mxu0 0.0
    %551 = vmatprep.subr.mxu0 0.0
    %552 = vmatpush1.msra.mxu0 0.0
    %553 = vmatprep.subr.mxu0 0.0
    %554 = vmatpush1.msra.mxu0 0.0
    %555 = vmatprep.subr.mxu0 0.0
    %556 = vmatpush1.msra.mxu0 0.0
    %557 = vmatprep.subr.mxu0 0.0
    %558 = vmatpush1.msra.mxu0 0.0
    %559 = vmatprep.subr.mxu0 0.0
    %560 = vmatpush1.msra.mxu0 0.0
    %561 = vmatprep.subr.mxu0 0.0
    %562 = vmatpush1.msra.mxu0 0.0
    %563 = vmatprep.subr.mxu0 0.0
    %564 = vmatpush1.msra.mxu0 0.0
    %565 = vmatprep.mubr.f32.mxu0 0.0
    %566 = vmatmul.mubr.f32.gmra.mrb[0].mxu0 %v499
    %v567 = vpop.f32.mrb[0].mxu0
    %v568 = vadd.f32 %v495, %v567
    %v569 = vpop.f32.mrb[0].mxu0
    %570 = vdwg.mxu0
    %vm571 = vcmask 74752
    %572 = vst.msk [vmem:[#allocation2] sm:$0x3] %vm571, %v568
    // Predicated region
    $region22: #{forward.7} parent=1 // pred_check
      _
    $region23: #{forward.7} parent=1 // pred_check_branch
      %574 = sbr.rel (0) target = $region25
    $region24: #{forward.7} parent=1 // pred_region
      %s576 = ssub.s32 32, 32
      %577 = vsyncadd [#allocation3], %s576
      %s579 = sshll.u32 [#allocation2], 4
      %s580 = int_to_ptr.vmem [resolvable:$true] %s579
      %582 = dma.vmem_to_hbm [thread:$0]  %s580, 32, %s5, [#allocation3]
    $region25: #{forward.7} parent=1 // pred_fallthru
      _
    // Predicated region
    $region26: #{forward.7} parent=1 // pred_check
      _
    $region27: #{forward.7} parent=1 // pred_check_branch
      %584 = sbr.rel (0) target = $region29
    $region28: #{forward.7} parent=1 // pred_region
      %585 = dma.done [#allocation3], 32
    $region29: #{forward.7} parent=1 // pred_fallthru
      _
    %586 = vsyncpa [#allocation3], 1

</llo_original>
